<compile_context>
chip_gen: v6e
topology: v6e:2x2x1
jax: 0.10.0
libtpu: 0.0.40
codegen_flags: <defaults>
</compile_context>

<pallas_src>
import functools

import jax
import jax.numpy as jnp
from jax.experimental import pallas as pl
from jax.experimental.pallas import tpu as pltpu


# ----------------------------- Pallas kernel --------------------------------


def _conv3x3_bn_kernel(*refs, stride, conv_cin, relu_cols, residual_mode):
    # refs (in order):
    #   x_ref:     (Nb, H, W, Cx)          bf16.  Conv reads channels
    #                                      [0:conv_cin]; if residual_mode ==
    #                                      "packed", channels
    #                                      [conv_cin:conv_cin+Cout] are the
    #                                      residual (stride must be 1).
    #   w_ref:     (9*conv_cin, Cout)      bf16, im2col-packed weights.
    #   scale_ref: (1, Cout)               f32, gamma / sqrt(var + eps).
    #   bias_ref:  (1, Cout)               f32, (conv_b - mean)*scale + beta.
    #  [sc_ref:    (Nb, Hout, Wout, Cout)  bf16]  only if residual_mode=="separate"
    #   o_ref:     (Nb, Hout, Wout, Cout)
    #   pad_ref:   (Nb, H+2, W+2, conv_cin)    bf16 VMEM scratch (zero halo)
    #   col_ref:   (Nb*Hout*Wout, 9*conv_cin)  bf16 VMEM scratch (im2col)
    if residual_mode == "separate":
        x_ref, w_ref, scale_ref, bias_ref, sc_ref, o_ref, pad_ref, col_ref = refs
    else:
        x_ref, w_ref, scale_ref, bias_ref, o_ref, pad_ref, col_ref = refs
        sc_ref = None

    nb, H, W, _ = x_ref.shape
    _, Hout, Wout, Cout = o_ref.shape
    cin = conv_cin

    xv = x_ref[...]                                    # (Nb, H, W, Cx) bf16

    # Zero only the 1-px halo ring; the interior is fully overwritten below.
    zrow = jnp.zeros((nb, 1, W + 2, cin), pad_ref.dtype)
    zcol = jnp.zeros((nb, H + 2, 1, cin), pad_ref.dtype)
    pad_ref[:, pl.ds(0, 1), :, :] = zrow
    pad_ref[:, pl.ds(H + 1, 1), :, :] = zrow
    pad_ref[:, :, pl.ds(0, 1), :] = zcol
    pad_ref[:, :, pl.ds(W + 1, 1), :] = zcol
    pad_ref[:, pl.ds(1, H), pl.ds(1, W), :] = xv[:, :, :, :cin]

    # im2col: pack the 9 (strided) taps into one (Nb*Hout*Wout, 9*cin) matrix.
    for dy in range(3):
        for dx in range(3):
            t = dy * 3 + dx
            if stride == 1:
                patch = pad_ref[:, pl.ds(dy, Hout), pl.ds(dx, Wout), :]
            else:
                patch = pad_ref[:, pl.ds(dy, Hout, stride),
                                pl.ds(dx, Wout, stride), :]
            col_ref[:, t * cin:(t + 1) * cin] = patch.reshape(
                nb * Hout * Wout, cin)

    # Single MXU matmul, K = 9*cin, bf16 operands, f32 accumulation.
    acc = jnp.dot(col_ref[...], w_ref[...],
                  preferred_element_type=jnp.float32)  # (Nb*Hout*Wout, Cout)

    # f32 epilogue: BN, (lane-masked) ReLU, fused residual add + final ReLU.
    y = acc * scale_ref[0] + bias_ref[0]
    if relu_cols >= Cout:
        y = jnp.maximum(y, 0.0)
    elif relu_cols > 0:
        lane = jax.lax.broadcasted_iota(jnp.int32, y.shape, 1)
        y = jnp.where(lane < relu_cols, jnp.maximum(y, 0.0), y)

    if residual_mode == "packed":
        res = xv[:, :, :, cin:cin + Cout].astype(jnp.float32)
        y = jnp.maximum(y + res.reshape(nb * Hout * Wout, Cout), 0.0)
    elif residual_mode == "separate":
        res = sc_ref[...].astype(jnp.float32)
        y = jnp.maximum(y + res.reshape(nb * Hout * Wout, Cout), 0.0)

    o_ref[...] = y.reshape(nb, Hout, Wout, Cout).astype(o_ref.dtype)


# ------------------------------ wrapper --------------------------------------


def _pick_images_per_step(n):
    """Batch images per grid step (amortize per-step overhead on single-TC
    v5e/v6e) while keeping >= 2 parallel grid steps for v7x's two TCs."""
    if n <= 2:
        return 1
    for nb in range(n // 2, 0, -1):
        if n % nb == 0:
            return nb
    return 1


def conv3x3_bn(x_nhwc, w, scale, bias, *, stride=1, conv_cin, relu_cols,
               residual_mode="none", residual=None, out_dtype=jnp.float32):
    """Fused conv3x3(pad=1, stride) + BN(eval) [+ ReLU] [+ residual add + ReLU].

    x_nhwc: (N, H, W, Cx).  w: (9*conv_cin, Cout).
    residual_mode: "none" | "packed" (residual = channels [conv_cin:] of x)
                   | "separate" (residual passed as (N, Hout, Wout, Cout)).
    """
    N, H, W, Cx = x_nhwc.shape
    Cout = w.shape[-1]
    Hout = (H + 2 - 3) // stride + 1
    Wout = (W + 2 - 3) // stride + 1
    if residual_mode == "packed":
        assert stride == 1 and Cx >= conv_cin + Cout
    nb = _pick_images_per_step(N)

    kern = functools.partial(_conv3x3_bn_kernel, stride=stride,
                             conv_cin=conv_cin, relu_cols=relu_cols,
                             residual_mode=residual_mode)

    in_specs = [
        pl.BlockSpec((nb, H, W, Cx), lambda n: (n, 0, 0, 0)),
        pl.BlockSpec((9 * conv_cin, Cout), lambda n: (0, 0)),
        pl.BlockSpec((1, Cout), lambda n: (0, 0)),
        pl.BlockSpec((1, Cout), lambda n: (0, 0)),
    ]
    args = [x_nhwc.astype(jnp.bfloat16), w.astype(jnp.bfloat16),
            scale.astype(jnp.float32), bias.astype(jnp.float32)]
    if residual_mode == "separate":
        in_specs.append(pl.BlockSpec((nb, Hout, Wout, Cout),
                                     lambda n: (n, 0, 0, 0)))
        args.append(residual.astype(jnp.bfloat16))

    return pl.pallas_call(
        kern,
        out_shape=jax.ShapeDtypeStruct((N, Hout, Wout, Cout), out_dtype),
        grid_spec=pltpu.PrefetchScalarGridSpec(
            num_scalar_prefetch=0,
            grid=(N // nb,),
            in_specs=in_specs,
            out_specs=pl.BlockSpec((nb, Hout, Wout, Cout),
                                   lambda n: (n, 0, 0, 0)),
            scratch_shapes=[
                pltpu.VMEM((nb, H + 2, W + 2, conv_cin), jnp.bfloat16),   # pad
                pltpu.VMEM((nb * Hout * Wout, 9 * conv_cin), jnp.bfloat16),  # im2col
            ],
        ),
        compiler_params=pltpu.CompilerParams(
            dimension_semantics=("parallel",),
            vmem_limit_bytes=32 * 1024 * 1024,
        ),
    )(*args)


# -------------------------- parameters & forward ----------------------------


def _fold_bn(conv_bias, gamma, beta, mean, var, eps=1e-5):
    scale = gamma / jnp.sqrt(var + eps)
    bias = (conv_bias - mean) * scale + beta
    return scale.reshape(1, -1), bias.reshape(1, -1)


def _make_conv_bn_params(key, cin, cout):
    k_w, k_b, k_g, k_be, k_m, k_v = jax.random.split(key, 6)
    # PyTorch layout (Cout, Cin, 3, 3) -> (ky, kx, Cin, Cout) -> (9*Cin, Cout);
    # K index = (ky*3 + kx)*Cin + cin, matching the kernel's im2col packing.
    w_pt = 0.1 * jax.random.normal(k_w, (cout, cin, 3, 3), jnp.float32)
    w = jnp.transpose(w_pt, (2, 3, 1, 0)).reshape(9 * cin, cout)
    conv_b = 0.1 * jax.random.normal(k_b, (cout,), jnp.float32)
    gamma = 1.0 + 0.1 * jax.random.normal(k_g, (cout,), jnp.float32)
    beta = 0.1 * jax.random.normal(k_be, (cout,), jnp.float32)
    mean = 0.1 * jax.random.normal(k_m, (cout,), jnp.float32)
    var = jax.random.uniform(k_v, (cout,), jnp.float32, 0.5, 1.5)
    scale, bias = _fold_bn(conv_b, gamma, beta, mean, var)
    return w, scale, bias


def init_residual_basic(key, in_feature, plane, stride=1, expansion=1):
    k1, k2, k3 = jax.random.split(key, 3)
    params = {}
    params["w1"], params["scale1"], params["bias1"] = _make_conv_bn_params(
        k1, in_feature, plane)
    params["w2"], params["scale2"], params["bias2"] = _make_conv_bn_params(
        k2, plane, plane * expansion)
    if stride != 1 or plane * expansion != in_feature:
        params["wsc"], params["scalesc"], params["biassc"] = _make_conv_bn_params(
            k3, in_feature, plane * expansion)
    return params


def residual_basic_forward(x_nchw, params, *, stride=1):
    """Forward pass matching residual_basic.forward (BN in eval mode)."""
    x = jnp.transpose(x_nchw, (0, 2, 3, 1)).astype(jnp.bfloat16)   # NHWC bf16
    cin = x.shape[-1]
    c1 = params["w1"].shape[-1]
    cout = params["w2"].shape[-1]

    if "wsc" in params:
        # Fused kernel 1: relu(bn1(conv1(x))) || bn_sc(conv_sc(x)) computed in
        # one pass (weights concatenated along Cout, ReLU masked to the conv1
        # columns), emitted as one packed bf16 tensor (N, Hout, Wout, c1+cout).
        w_cat = jnp.concatenate([params["w1"], params["wsc"]], axis=1)
        s_cat = jnp.concatenate([params["scale1"], params["scalesc"]], axis=1)
        b_cat = jnp.concatenate([params["bias1"], params["biassc"]], axis=1)
        packed = conv3x3_bn(x, w_cat, s_cat, b_cat, stride=stride,
                            conv_cin=cin, relu_cols=c1,
                            residual_mode="none", out_dtype=jnp.bfloat16)
        # Fused kernel 2: relu(relu(bn2(conv2(bn1))) + shortcut); conv input is
        # channels [:c1] of `packed`, the residual is channels [c1:].
        result = conv3x3_bn(packed, params["w2"], params["scale2"],
                            params["bias2"], stride=1, conv_cin=c1,
                            relu_cols=cout, residual_mode="packed",
                            out_dtype=jnp.float32)
    else:
        bn1 = conv3x3_bn(x, params["w1"], params["scale1"], params["bias1"],
                         stride=stride, conv_cin=cin, relu_cols=c1,
                         residual_mode="none", out_dtype=jnp.bfloat16)
        result = conv3x3_bn(bn1, params["w2"], params["scale2"],
                            params["bias2"], stride=1, conv_cin=c1,
                            relu_cols=cout, residual_mode="separate",
                            residual=x, out_dtype=jnp.float32)
    return jnp.transpose(result, (0, 3, 1, 2))                      # -> NCHW


# ------------------------------ reference ------------------------------------


def reference_forward(x_nchw, params, *, stride=1):
    """Pure-JAX f32 reference of residual_basic.forward (eval-mode BN)."""
    x = jnp.transpose(x_nchw, (0, 2, 3, 1)).astype(jnp.float32)

    def conv_bn(inp, w, scale, bias, s):
        cin = w.shape[0] // 9
        w_hwio = w.reshape(3, 3, cin, w.shape[-1])
        y = jax.lax.conv_general_dilated(
            inp, w_hwio, window_strides=(s, s), padding=[(1, 1), (1, 1)],
            dimension_numbers=("NHWC", "HWIO", "NHWC"))
        return y * scale.reshape(1, 1, 1, -1) + bias.reshape(1, 1, 1, -1)

    bn1 = jax.nn.relu(conv_bn(x, params["w1"], params["scale1"],
                              params["bias1"], stride))
    bn2 = jax.nn.relu(conv_bn(bn1, params["w2"], params["scale2"],
                              params["bias2"], 1))
    if "wsc" in params:
        sc = conv_bn(x, params["wsc"], params["scalesc"], params["biassc"],
                     stride)
    else:
        sc = x
    out = jax.nn.relu(bn2 + sc)
    return jnp.transpose(out, (0, 3, 1, 2))


# --------------------------------- main --------------------------------------


if __name__ == "__main__":
    key = jax.random.PRNGKey(0)
    k_x, k_p = jax.random.split(key)

    N, Cin, H, W = 2, 4, 16, 16
    plane = 8        # plane != in_feature -> shortcut is conv+bn (as in PyTorch)
    stride = 1

    x_nchw = jax.random.normal(k_x, (N, Cin, H, W), jnp.float32)
    params = init_residual_basic(k_p, Cin, plane, stride=stride)

    fwd = jax.jit(functools.partial(residual_basic_forward, stride=stride))
    out = jax.block_until_ready(fwd(x_nchw, params))

    assert out.shape == (N, plane, H, W), out.shape
    assert bool(jnp.all(out >= 0.0))  # final ReLU

    ref = reference_forward(x_nchw, params, stride=stride)
    max_err = float(jnp.max(jnp.abs(out - ref)))
    assert max_err < 0.15, f"max abs err vs f32 reference: {max_err}"

    print("KERNEL_OK")
</pallas_src>

<mosaic_0001>
module attributes {stable_mosaic.version = 11 : i64} {
  func.func @_conv3x3_bn_kernel(%arg0: i32, %arg1: memref<1x16x16x16xbf16, #tpu.memory_space<vmem>>, %arg2: memref<72x8xbf16, #tpu.memory_space<vmem>>, %arg3: memref<1x8xf32, #tpu.memory_space<vmem>>, %arg4: memref<1x8xf32, #tpu.memory_space<vmem>>, %arg5: memref<1x16x16x8xf32, #tpu.memory_space<vmem>>, %arg6: memref<1x18x18x8xbf16, #tpu.memory_space<vmem>>, %arg7: memref<256x72xbf16, #tpu.memory_space<vmem>>) attributes {dimension_semantics = [#tpu.dimension_semantics<parallel>], iteration_bounds = array<i64: 2>, scalar_prefetch = 0 : i64, scratch_operands = 2 : i64, tpu.core_type = #tpu.core_type<tc>, window_params = [{transform_indices = @transform_0, window_bounds = array<i64: 1, 16, 16, 16>}, {pipeline_mode = #tpu.pipeline_mode<synchronous>, transform_indices = @transform_1, window_bounds = array<i64: 72, 8>}, {pipeline_mode = #tpu.pipeline_mode<synchronous>, transform_indices = @transform_2, window_bounds = array<i64: 1, 8>}, {pipeline_mode = #tpu.pipeline_mode<synchronous>, transform_indices = @transform_3, window_bounds = array<i64: 1, 8>}, {transform_indices = @transform_4, window_bounds = array<i64: 1, 16, 16, 8>}]} {
    %c0 = arith.constant 0 : index
    %c0_0 = arith.constant 0 : index
    %c0_1 = arith.constant 0 : index
    %c0_2 = arith.constant 0 : index
    %0 = vector.load %arg1[%c0, %c0_0, %c0_1, %c0_2] : memref<1x16x16x16xbf16, #tpu.memory_space<vmem>>, vector<1x16x16x16xbf16>
    %cst = arith.constant 0.000000e+00 : bf16
    %1 = vector.broadcast %cst : bf16 to vector<1x1x18x8xbf16>
    %cst_3 = arith.constant 0.000000e+00 : bf16
    %2 = vector.broadcast %cst_3 : bf16 to vector<1x18x1x8xbf16>
    %c0_4 = arith.constant 0 : index
    %c0_5 = arith.constant 0 : index
    %c0_6 = arith.constant 0 : index
    %c0_7 = arith.constant 0 : index
    %3 = vector.load %arg6[%c0_4, %c0_5, %c0_6, %c0_7] : memref<1x18x18x8xbf16, #tpu.memory_space<vmem>>, vector<1x1x18x8xbf16>
    tpu.vector_store %arg6[%c0_4, %c0_5, %c0_6, %c0_7], %1 {strides = array<i32>} : memref<1x18x18x8xbf16, #tpu.memory_space<vmem>>, vector<1x1x18x8xbf16>,
    %c0_8 = arith.constant 0 : index
    %c17 = arith.constant 17 : index
    %c0_9 = arith.constant 0 : index
    %c0_10 = arith.constant 0 : index
    %4 = vector.load %arg6[%c0_8, %c17, %c0_9, %c0_10] : memref<1x18x18x8xbf16, #tpu.memory_space<vmem>>, vector<1x1x18x8xbf16>
    tpu.vector_store %arg6[%c0_8, %c17, %c0_9, %c0_10], %1 {strides = array<i32>} : memref<1x18x18x8xbf16, #tpu.memory_space<vmem>>, vector<1x1x18x8xbf16>,
    %c0_11 = arith.constant 0 : index
    %c0_12 = arith.constant 0 : index
    %c0_13 = arith.constant 0 : index
    %c0_14 = arith.constant 0 : index
    %5 = vector.load %arg6[%c0_11, %c0_12, %c0_13, %c0_14] : memref<1x18x18x8xbf16, #tpu.memory_space<vmem>>, vector<1x18x1x8xbf16>
    tpu.vector_store %arg6[%c0_11, %c0_12, %c0_13, %c0_14], %2 {strides = array<i32>} : memref<1x18x18x8xbf16, #tpu.memory_space<vmem>>, vector<1x18x1x8xbf16>,
    %c0_15 = arith.constant 0 : index
    %c0_16 = arith.constant 0 : index
    %c17_17 = arith.constant 17 : index
    %c0_18 = arith.constant 0 : index
    %6 = vector.load %arg6[%c0_15, %c0_16, %c17_17, %c0_18] : memref<1x18x18x8xbf16, #tpu.memory_space<vmem>>, vector<1x18x1x8xbf16>
    tpu.vector_store %arg6[%c0_15, %c0_16, %c17_17, %c0_18], %2 {strides = array<i32>} : memref<1x18x18x8xbf16, #tpu.memory_space<vmem>>, vector<1x18x1x8xbf16>,
    %7 = vector.extract_strided_slice %0 {offsets = [0, 0, 0, 0], sizes = [1, 16, 16, 8], strides = [1, 1, 1, 1]} : vector<1x16x16x16xbf16> to vector<1x16x16x8xbf16>
    %c0_19 = arith.constant 0 : index
    %c1 = arith.constant 1 : index
    %c1_20 = arith.constant 1 : index
    %c0_21 = arith.constant 0 : index
    %8 = vector.load %arg6[%c0_19, %c1, %c1_20, %c0_21] : memref<1x18x18x8xbf16, #tpu.memory_space<vmem>>, vector<1x16x16x8xbf16>
    tpu.vector_store %arg6[%c0_19, %c1, %c1_20, %c0_21], %7 {strides = array<i32>} : memref<1x18x18x8xbf16, #tpu.memory_space<vmem>>, vector<1x16x16x8xbf16>,
    %c0_22 = arith.constant 0 : index
    %c0_23 = arith.constant 0 : index
    %c0_24 = arith.constant 0 : index
    %c0_25 = arith.constant 0 : index
    %9 = vector.load %arg6[%c0_22, %c0_23, %c0_24, %c0_25] : memref<1x18x18x8xbf16, #tpu.memory_space<vmem>>, vector<1x16x16x8xbf16>
    %10 = vector.shape_cast %9 : vector<1x16x16x8xbf16> to vector<256x8xbf16>
    %c0_26 = arith.constant 0 : index
    %c0_27 = arith.constant 0 : index
    %11 = vector.load %arg7[%c0_26, %c0_27] : memref<256x72xbf16, #tpu.memory_space<vmem>>, vector<256x8xbf16>
    tpu.vector_store %arg7[%c0_26, %c0_27], %10 {strides = array<i32>} : memref<256x72xbf16, #tpu.memory_space<vmem>>, vector<256x8xbf16>,
    %c0_28 = arith.constant 0 : index
    %c0_29 = arith.constant 0 : index
    %c1_30 = arith.constant 1 : index
    %c0_31 = arith.constant 0 : index
    %12 = vector.load %arg6[%c0_28, %c0_29, %c1_30, %c0_31] : memref<1x18x18x8xbf16, #tpu.memory_space<vmem>>, vector<1x16x16x8xbf16>
    %13 = vector.shape_cast %12 : vector<1x16x16x8xbf16> to vector<256x8xbf16>
    %c0_32 = arith.constant 0 : index
    %c8 = arith.constant 8 : index
    %14 = vector.load %arg7[%c0_32, %c8] : memref<256x72xbf16, #tpu.memory_space<vmem>>, vector<256x8xbf16>
    tpu.vector_store %arg7[%c0_32, %c8], %13 {strides = array<i32>} : memref<256x72xbf16, #tpu.memory_space<vmem>>, vector<256x8xbf16>,
    %c0_33 = arith.constant 0 : index
    %c0_34 = arith.constant 0 : index
    %c2 = arith.constant 2 : index
    %c0_35 = arith.constant 0 : index
    %15 = vector.load %arg6[%c0_33, %c0_34, %c2, %c0_35] : memref<1x18x18x8xbf16, #tpu.memory_space<vmem>>, vector<1x16x16x8xbf16>
    %16 = vector.shape_cast %15 : vector<1x16x16x8xbf16> to vector<256x8xbf16>
    %c0_36 = arith.constant 0 : index
    %c16 = arith.constant 16 : index
    %17 = vector.load %arg7[%c0_36, %c16] : memref<256x72xbf16, #tpu.memory_space<vmem>>, vector<256x8xbf16>
    tpu.vector_store %arg7[%c0_36, %c16], %16 {strides = array<i32>} : memref<256x72xbf16, #tpu.memory_space<vmem>>, vector<256x8xbf16>,
    %c0_37 = arith.constant 0 : index
    %c1_38 = arith.constant 1 : index
    %c0_39 = arith.constant 0 : index
    %c0_40 = arith.constant 0 : index
    %18 = vector.load %arg6[%c0_37, %c1_38, %c0_39, %c0_40] : memref<1x18x18x8xbf16, #tpu.memory_space<vmem>>, vector<1x16x16x8xbf16>
    %19 = vector.shape_cast %18 : vector<1x16x16x8xbf16> to vector<256x8xbf16>
    %c0_41 = arith.constant 0 : index
    %c24 = arith.constant 24 : index
    %20 = vector.load %arg7[%c0_41, %c24] : memref<256x72xbf16, #tpu.memory_space<vmem>>, vector<256x8xbf16>
    tpu.vector_store %arg7[%c0_41, %c24], %19 {strides = array<i32>} : memref<256x72xbf16, #tpu.memory_space<vmem>>, vector<256x8xbf16>,
    %c0_42 = arith.constant 0 : index
    %c1_43 = arith.constant 1 : index
    %c1_44 = arith.constant 1 : index
    %c0_45 = arith.constant 0 : index
    %21 = vector.load %arg6[%c0_42, %c1_43, %c1_44, %c0_45] : memref<1x18x18x8xbf16, #tpu.memory_space<vmem>>, vector<1x16x16x8xbf16>
    %22 = vector.shape_cast %21 : vector<1x16x16x8xbf16> to vector<256x8xbf16>
    %c0_46 = arith.constant 0 : index
    %c32 = arith.constant 32 : index
    %23 = vector.load %arg7[%c0_46, %c32] : memref<256x72xbf16, #tpu.memory_space<vmem>>, vector<256x8xbf16>
    tpu.vector_store %arg7[%c0_46, %c32], %22 {strides = array<i32>} : memref<256x72xbf16, #tpu.memory_space<vmem>>, vector<256x8xbf16>,
    %c0_47 = arith.constant 0 : index
    %c1_48 = arith.constant 1 : index
    %c2_49 = arith.constant 2 : index
    %c0_50 = arith.constant 0 : index
    %24 = vector.load %arg6[%c0_47, %c1_48, %c2_49, %c0_50] : memref<1x18x18x8xbf16, #tpu.memory_space<vmem>>, vector<1x16x16x8xbf16>
    %25 = vector.shape_cast %24 : vector<1x16x16x8xbf16> to vector<256x8xbf16>
    %c0_51 = arith.constant 0 : index
    %c40 = arith.constant 40 : index
    %26 = vector.load %arg7[%c0_51, %c40] : memref<256x72xbf16, #tpu.memory_space<vmem>>, vector<256x8xbf16>
    tpu.vector_store %arg7[%c0_51, %c40], %25 {strides = array<i32>} : memref<256x72xbf16, #tpu.memory_space<vmem>>, vector<256x8xbf16>,
    %c0_52 = arith.constant 0 : index
    %c2_53 = arith.constant 2 : index
    %c0_54 = arith.constant 0 : index
    %c0_55 = arith.constant 0 : index
    %27 = vector.load %arg6[%c0_52, %c2_53, %c0_54, %c0_55] : memref<1x18x18x8xbf16, #tpu.memory_space<vmem>>, vector<1x16x16x8xbf16>
    %28 = vector.shape_cast %27 : vector<1x16x16x8xbf16> to vector<256x8xbf16>
    %c0_56 = arith.constant 0 : index
    %c48 = arith.constant 48 : index
    %29 = vector.load %arg7[%c0_56, %c48] : memref<256x72xbf16, #tpu.memory_space<vmem>>, vector<256x8xbf16>
    tpu.vector_store %arg7[%c0_56, %c48], %28 {strides = array<i32>} : memref<256x72xbf16, #tpu.memory_space<vmem>>, vector<256x8xbf16>,
    %c0_57 = arith.constant 0 : index
    %c2_58 = arith.constant 2 : index
    %c1_59 = arith.constant 1 : index
    %c0_60 = arith.constant 0 : index
    %30 = vector.load %arg6[%c0_57, %c2_58, %c1_59, %c0_60] : memref<1x18x18x8xbf16, #tpu.memory_space<vmem>>, vector<1x16x16x8xbf16>
    %31 = vector.shape_cast %30 : vector<1x16x16x8xbf16> to vector<256x8xbf16>
    %c0_61 = arith.constant 0 : index
    %c56 = arith.constant 56 : index
    %32 = vector.load %arg7[%c0_61, %c56] : memref<256x72xbf16, #tpu.memory_space<vmem>>, vector<256x8xbf16>
    tpu.vector_store %arg7[%c0_61, %c56], %31 {strides = array<i32>} : memref<256x72xbf16, #tpu.memory_space<vmem>>, vector<256x8xbf16>,
    %c0_62 = arith.constant 0 : index
    %c2_63 = arith.constant 2 : index
    %c2_64 = arith.constant 2 : index
    %c0_65 = arith.constant 0 : index
    %33 = vector.load %arg6[%c0_62, %c2_63, %c2_64, %c0_65] : memref<1x18x18x8xbf16, #tpu.memory_space<vmem>>, vector<1x16x16x8xbf16>
    %34 = vector.shape_cast %33 : vector<1x16x16x8xbf16> to vector<256x8xbf16>
    %c0_66 = arith.constant 0 : index
    %c64 = arith.constant 64 : index
    %35 = vector.load %arg7[%c0_66, %c64] : memref<256x72xbf16, #tpu.memory_space<vmem>>, vector<256x8xbf16>
    tpu.vector_store %arg7[%c0_66, %c64], %34 {strides = array<i32>} : memref<256x72xbf16, #tpu.memory_space<vmem>>, vector<256x8xbf16>,
    %c0_67 = arith.constant 0 : index
    %c0_68 = arith.constant 0 : index
    %36 = vector.load %arg7[%c0_67, %c0_68] : memref<256x72xbf16, #tpu.memory_space<vmem>>, vector<256x72xbf16>
    %c0_69 = arith.constant 0 : index
    %c0_70 = arith.constant 0 : index
    %37 = vector.load %arg2[%c0_69, %c0_70] : memref<72x8xbf16, #tpu.memory_space<vmem>>, vector<72x8xbf16>
    %cst_71 = arith.constant dense<0.000000e+00> : vector<256x8xf32>
    %38 = tpu.matmul %36, %37, %cst_71 {dimension_numbers = #tpu.dot_dimension_numbers<[1], [0], [0], [1], [0, 0, 1, 1], [], []>} : vector<256x72xbf16>, vector<72x8xbf16>, vector<256x8xf32> -> vector<256x8xf32>
    %c0_72 = arith.constant 0 : index
    %c0_73 = arith.constant 0 : index
    %39 = vector.load %arg3[%c0_72, %c0_73] : memref<1x8xf32, #tpu.memory_space<vmem>>, vector<1x8xf32>
    %40 = vector.shape_cast %39 : vector<1x8xf32> to vector<8xf32>
    %41 = vector.shape_cast %40 : vector<8xf32> to vector<1x8xf32>
    %42 = vector.broadcast %41 : vector<1x8xf32> to vector<256x8xf32>
    %43 = arith.mulf %38, %42 : vector<256x8xf32>
    %c0_74 = arith.constant 0 : index
    %c0_75 = arith.constant 0 : index
    %44 = vector.load %arg4[%c0_74, %c0_75] : memref<1x8xf32, #tpu.memory_space<vmem>>, vector<1x8xf32>
    %45 = vector.shape_cast %44 : vector<1x8xf32> to vector<8xf32>
    %46 = vector.shape_cast %45 : vector<8xf32> to vector<1x8xf32>
    %47 = vector.broadcast %46 : vector<1x8xf32> to vector<256x8xf32>
    %48 = arith.addf %43, %47 : vector<256x8xf32>
    %cst_76 = arith.constant 0.000000e+00 : f32
    %49 = vector.broadcast %cst_76 : f32 to vector<256x8xf32>
    %50 = arith.maximumf %48, %49 : vector<256x8xf32>
    %51 = vector.extract_strided_slice %0 {offsets = [0, 0, 0, 8], sizes = [1, 16, 16, 8], strides = [1, 1, 1, 1]} : vector<1x16x16x16xbf16> to vector<1x16x16x8xbf16>
    %52 = arith.extf %51 : vector<1x16x16x8xbf16> to vector<1x16x16x8xf32>
    %53 = vector.shape_cast %52 : vector<1x16x16x8xf32> to vector<256x8xf32>
    %54 = arith.addf %50, %53 : vector<256x8xf32>
    %cst_77 = arith.constant 0.000000e+00 : f32
    %55 = vector.broadcast %cst_77 : f32 to vector<256x8xf32>
    %56 = arith.maximumf %54, %55 : vector<256x8xf32>
    %57 = vector.shape_cast %56 : vector<256x8xf32> to vector<1x16x16x8xf32>
    %c0_78 = arith.constant 0 : index
    %c0_79 = arith.constant 0 : index
    %c0_80 = arith.constant 0 : index
    %c0_81 = arith.constant 0 : index
    %58 = vector.load %arg5[%c0_78, %c0_79, %c0_80, %c0_81] : memref<1x16x16x8xf32, #tpu.memory_space<vmem>>, vector<1x16x16x8xf32>
    tpu.vector_store %arg5[%c0_78, %c0_79, %c0_80, %c0_81], %57 {strides = array<i32>} : memref<1x16x16x8xf32, #tpu.memory_space<vmem>>, vector<1x16x16x8xf32>,
    return
  }
  func.func @transform_0(%arg0: i32) -> (i32, i32, i32, i32) {
    %c0_i32 = arith.constant 0 : i32
    %c0_i32_0 = arith.constant 0 : i32
    %c0_i32_1 = arith.constant 0 : i32
    %c0_i32_2 = arith.constant 0 : i32
    return %arg0, %c0_i32, %c0_i32_0, %c0_i32_1 : i32, i32, i32, i32
  }
  func.func @transform_1(%arg0: i32) -> (i32, i32) {
    %c0_i32 = arith.constant 0 : i32
    %c0_i32_0 = arith.constant 0 : i32
    %c0_i32_1 = arith.constant 0 : i32
    return %c0_i32, %c0_i32_0 : i32, i32
  }
  func.func @transform_2(%arg0: i32) -> (i32, i32) {
    %c0_i32 = arith.constant 0 : i32
    %c0_i32_0 = arith.constant 0 : i32
    %c0_i32_1 = arith.constant 0 : i32
    return %c0_i32, %c0_i32_0 : i32, i32
  }
  func.func @transform_3(%arg0: i32) -> (i32, i32) {
    %c0_i32 = arith.constant 0 : i32
    %c0_i32_0 = arith.constant 0 : i32
    %c0_i32_1 = arith.constant 0 : i32
    return %c0_i32, %c0_i32_0 : i32, i32
  }
  func.func @transform_4(%arg0: i32) -> (i32, i32, i32, i32) {
    %c0_i32 = arith.constant 0 : i32
    %c0_i32_0 = arith.constant 0 : i32
    %c0_i32_1 = arith.constant 0 : i32
    %c0_i32_2 = arith.constant 0 : i32
    return %arg0, %c0_i32, %c0_i32_0, %c0_i32_1 : i32, i32, i32, i32
  }
}

module attributes {stable_mosaic.version = 11 : i64} {
  func.func @_conv3x3_bn_kernel(%arg0: i32, %arg1: memref<1x16x16x4xbf16, #tpu.memory_space<vmem>>, %arg2: memref<36x16xbf16, #tpu.memory_space<vmem>>, %arg3: memref<1x16xf32, #tpu.memory_space<vmem>>, %arg4: memref<1x16xf32, #tpu.memory_space<vmem>>, %arg5: memref<1x16x16x16xbf16, #tpu.memory_space<vmem>>, %arg6: memref<1x18x18x4xbf16, #tpu.memory_space<vmem>>, %arg7: memref<256x36xbf16, #tpu.memory_space<vmem>>) attributes {dimension_semantics = [#tpu.dimension_semantics<parallel>], iteration_bounds = array<i64: 2>, scalar_prefetch = 0 : i64, scratch_operands = 2 : i64, tpu.core_type = #tpu.core_type<tc>, window_params = [{transform_indices = @transform_0, window_bounds = array<i64: 1, 16, 16, 4>}, {pipeline_mode = #tpu.pipeline_mode<synchronous>, transform_indices = @transform_1, window_bounds = array<i64: 36, 16>}, {pipeline_mode = #tpu.pipeline_mode<synchronous>, transform_indices = @transform_2, window_bounds = array<i64: 1, 16>}, {pipeline_mode = #tpu.pipeline_mode<synchronous>, transform_indices = @transform_3, window_bounds = array<i64: 1, 16>}, {transform_indices = @transform_4, window_bounds = array<i64: 1, 16, 16, 16>}]} {
    %c0 = arith.constant 0 : index
    %c0_0 = arith.constant 0 : index
    %c0_1 = arith.constant 0 : index
    %c0_2 = arith.constant 0 : index
    %0 = vector.load %arg1[%c0, %c0_0, %c0_1, %c0_2] : memref<1x16x16x4xbf16, #tpu.memory_space<vmem>>, vector<1x16x16x4xbf16>
    %cst = arith.constant 0.000000e+00 : bf16
    %1 = vector.broadcast %cst : bf16 to vector<1x1x18x4xbf16>
    %cst_3 = arith.constant 0.000000e+00 : bf16
    %2 = vector.broadcast %cst_3 : bf16 to vector<1x18x1x4xbf16>
    %c0_4 = arith.constant 0 : index
    %c0_5 = arith.constant 0 : index
    %c0_6 = arith.constant 0 : index
    %c0_7 = arith.constant 0 : index
    %3 = vector.load %arg6[%c0_4, %c0_5, %c0_6, %c0_7] : memref<1x18x18x4xbf16, #tpu.memory_space<vmem>>, vector<1x1x18x4xbf16>
    tpu.vector_store %arg6[%c0_4, %c0_5, %c0_6, %c0_7], %1 {strides = array<i32>} : memref<1x18x18x4xbf16, #tpu.memory_space<vmem>>, vector<1x1x18x4xbf16>,
    %c0_8 = arith.constant 0 : index
    %c17 = arith.constant 17 : index
    %c0_9 = arith.constant 0 : index
    %c0_10 = arith.constant 0 : index
    %4 = vector.load %arg6[%c0_8, %c17, %c0_9, %c0_10] : memref<1x18x18x4xbf16, #tpu.memory_space<vmem>>, vector<1x1x18x4xbf16>
    tpu.vector_store %arg6[%c0_8, %c17, %c0_9, %c0_10], %1 {strides = array<i32>} : memref<1x18x18x4xbf16, #tpu.memory_space<vmem>>, vector<1x1x18x4xbf16>,
    %c0_11 = arith.constant 0 : index
    %c0_12 = arith.constant 0 : index
    %c0_13 = arith.constant 0 : index
    %c0_14 = arith.constant 0 : index
    %5 = vector.load %arg6[%c0_11, %c0_12, %c0_13, %c0_14] : memref<1x18x18x4xbf16, #tpu.memory_space<vmem>>, vector<1x18x1x4xbf16>
    tpu.vector_store %arg6[%c0_11, %c0_12, %c0_13, %c0_14], %2 {strides = array<i32>} : memref<1x18x18x4xbf16, #tpu.memory_space<vmem>>, vector<1x18x1x4xbf16>,
    %c0_15 = arith.constant 0 : index
    %c0_16 = arith.constant 0 : index
    %c17_17 = arith.constant 17 : index
    %c0_18 = arith.constant 0 : index
    %6 = vector.load %arg6[%c0_15, %c0_16, %c17_17, %c0_18] : memref<1x18x18x4xbf16, #tpu.memory_space<vmem>>, vector<1x18x1x4xbf16>
    tpu.vector_store %arg6[%c0_15, %c0_16, %c17_17, %c0_18], %2 {strides = array<i32>} : memref<1x18x18x4xbf16, #tpu.memory_space<vmem>>, vector<1x18x1x4xbf16>,
    %c0_19 = arith.constant 0 : index
    %c1 = arith.constant 1 : index
    %c1_20 = arith.constant 1 : index
    %c0_21 = arith.constant 0 : index
    %7 = vector.load %arg6[%c0_19, %c1, %c1_20, %c0_21] : memref<1x18x18x4xbf16, #tpu.memory_space<vmem>>, vector<1x16x16x4xbf16>
    tpu.vector_store %arg6[%c0_19, %c1, %c1_20, %c0_21], %0 {strides = array<i32>} : memref<1x18x18x4xbf16, #tpu.memory_space<vmem>>, vector<1x16x16x4xbf16>,
    %c0_22 = arith.constant 0 : index
    %c0_23 = arith.constant 0 : index
    %c0_24 = arith.constant 0 : index
    %c0_25 = arith.constant 0 : index
    %8 = vector.load %arg6[%c0_22, %c0_23, %c0_24, %c0_25] : memref<1x18x18x4xbf16, #tpu.memory_space<vmem>>, vector<1x16x16x4xbf16>
    %9 = vector.shape_cast %8 : vector<1x16x16x4xbf16> to vector<256x4xbf16>
    %c0_26 = arith.constant 0 : index
    %c0_27 = arith.constant 0 : index
    %10 = vector.load %arg7[%c0_26, %c0_27] : memref<256x36xbf16, #tpu.memory_space<vmem>>, vector<256x4xbf16>
    tpu.vector_store %arg7[%c0_26, %c0_27], %9 {strides = array<i32>} : memref<256x36xbf16, #tpu.memory_space<vmem>>, vector<256x4xbf16>,
    %c0_28 = arith.constant 0 : index
    %c0_29 = arith.constant 0 : index
    %c1_30 = arith.constant 1 : index
    %c0_31 = arith.constant 0 : index
    %11 = vector.load %arg6[%c0_28, %c0_29, %c1_30, %c0_31] : memref<1x18x18x4xbf16, #tpu.memory_space<vmem>>, vector<1x16x16x4xbf16>
    %12 = vector.shape_cast %11 : vector<1x16x16x4xbf16> to vector<256x4xbf16>
    %c0_32 = arith.constant 0 : index
    %c4 = arith.constant 4 : index
    %13 = vector.load %arg7[%c0_32, %c4] : memref<256x36xbf16, #tpu.memory_space<vmem>>, vector<256x4xbf16>
    tpu.vector_store %arg7[%c0_32, %c4], %12 {strides = array<i32>} : memref<256x36xbf16, #tpu.memory_space<vmem>>, vector<256x4xbf16>,
    %c0_33 = arith.constant 0 : index
    %c0_34 = arith.constant 0 : index
    %c2 = arith.constant 2 : index
    %c0_35 = arith.constant 0 : index
    %14 = vector.load %arg6[%c0_33, %c0_34, %c2, %c0_35] : memref<1x18x18x4xbf16, #tpu.memory_space<vmem>>, vector<1x16x16x4xbf16>
    %15 = vector.shape_cast %14 : vector<1x16x16x4xbf16> to vector<256x4xbf16>
    %c0_36 = arith.constant 0 : index
    %c8 = arith.constant 8 : index
    %16 = vector.load %arg7[%c0_36, %c8] : memref<256x36xbf16, #tpu.memory_space<vmem>>, vector<256x4xbf16>
    tpu.vector_store %arg7[%c0_36, %c8], %15 {strides = array<i32>} : memref<256x36xbf16, #tpu.memory_space<vmem>>, vector<256x4xbf16>,
    %c0_37 = arith.constant 0 : index
    %c1_38 = arith.constant 1 : index
    %c0_39 = arith.constant 0 : index
    %c0_40 = arith.constant 0 : index
    %17 = vector.load %arg6[%c0_37, %c1_38, %c0_39, %c0_40] : memref<1x18x18x4xbf16, #tpu.memory_space<vmem>>, vector<1x16x16x4xbf16>
    %18 = vector.shape_cast %17 : vector<1x16x16x4xbf16> to vector<256x4xbf16>
    %c0_41 = arith.constant 0 : index
    %c12 = arith.constant 12 : index
    %19 = vector.load %arg7[%c0_41, %c12] : memref<256x36xbf16, #tpu.memory_space<vmem>>, vector<256x4xbf16>
    tpu.vector_store %arg7[%c0_41, %c12], %18 {strides = array<i32>} : memref<256x36xbf16, #tpu.memory_space<vmem>>, vector<256x4xbf16>,
    %c0_42 = arith.constant 0 : index
    %c1_43 = arith.constant 1 : index
    %c1_44 = arith.constant 1 : index
    %c0_45 = arith.constant 0 : index
    %20 = vector.load %arg6[%c0_42, %c1_43, %c1_44, %c0_45] : memref<1x18x18x4xbf16, #tpu.memory_space<vmem>>, vector<1x16x16x4xbf16>
    %21 = vector.shape_cast %20 : vector<1x16x16x4xbf16> to vector<256x4xbf16>
    %c0_46 = arith.constant 0 : index
    %c16 = arith.constant 16 : index
    %22 = vector.load %arg7[%c0_46, %c16] : memref<256x36xbf16, #tpu.memory_space<vmem>>, vector<256x4xbf16>
    tpu.vector_store %arg7[%c0_46, %c16], %21 {strides = array<i32>} : memref<256x36xbf16, #tpu.memory_space<vmem>>, vector<256x4xbf16>,
    %c0_47 = arith.constant 0 : index
    %c1_48 = arith.constant 1 : index
    %c2_49 = arith.constant 2 : index
    %c0_50 = arith.constant 0 : index
    %23 = vector.load %arg6[%c0_47, %c1_48, %c2_49, %c0_50] : memref<1x18x18x4xbf16, #tpu.memory_space<vmem>>, vector<1x16x16x4xbf16>
    %24 = vector.shape_cast %23 : vector<1x16x16x4xbf16> to vector<256x4xbf16>
    %c0_51 = arith.constant 0 : index
    %c20 = arith.constant 20 : index
    %25 = vector.load %arg7[%c0_51, %c20] : memref<256x36xbf16, #tpu.memory_space<vmem>>, vector<256x4xbf16>
    tpu.vector_store %arg7[%c0_51, %c20], %24 {strides = array<i32>} : memref<256x36xbf16, #tpu.memory_space<vmem>>, vector<256x4xbf16>,
    %c0_52 = arith.constant 0 : index
    %c2_53 = arith.constant 2 : index
    %c0_54 = arith.constant 0 : index
    %c0_55 = arith.constant 0 : index
    %26 = vector.load %arg6[%c0_52, %c2_53, %c0_54, %c0_55] : memref<1x18x18x4xbf16, #tpu.memory_space<vmem>>, vector<1x16x16x4xbf16>
    %27 = vector.shape_cast %26 : vector<1x16x16x4xbf16> to vector<256x4xbf16>
    %c0_56 = arith.constant 0 : index
    %c24 = arith.constant 24 : index
    %28 = vector.load %arg7[%c0_56, %c24] : memref<256x36xbf16, #tpu.memory_space<vmem>>, vector<256x4xbf16>
    tpu.vector_store %arg7[%c0_56, %c24], %27 {strides = array<i32>} : memref<256x36xbf16, #tpu.memory_space<vmem>>, vector<256x4xbf16>,
    %c0_57 = arith.constant 0 : index
    %c2_58 = arith.constant 2 : index
    %c1_59 = arith.constant 1 : index
    %c0_60 = arith.constant 0 : index
    %29 = vector.load %arg6[%c0_57, %c2_58, %c1_59, %c0_60] : memref<1x18x18x4xbf16, #tpu.memory_space<vmem>>, vector<1x16x16x4xbf16>
    %30 = vector.shape_cast %29 : vector<1x16x16x4xbf16> to vector<256x4xbf16>
    %c0_61 = arith.constant 0 : index
    %c28 = arith.constant 28 : index
    %31 = vector.load %arg7[%c0_61, %c28] : memref<256x36xbf16, #tpu.memory_space<vmem>>, vector<256x4xbf16>
    tpu.vector_store %arg7[%c0_61, %c28], %30 {strides = array<i32>} : memref<256x36xbf16, #tpu.memory_space<vmem>>, vector<256x4xbf16>,
    %c0_62 = arith.constant 0 : index
    %c2_63 = arith.constant 2 : index
    %c2_64 = arith.constant 2 : index
    %c0_65 = arith.constant 0 : index
    %32 = vector.load %arg6[%c0_62, %c2_63, %c2_64, %c0_65] : memref<1x18x18x4xbf16, #tpu.memory_space<vmem>>, vector<1x16x16x4xbf16>
    %33 = vector.shape_cast %32 : vector<1x16x16x4xbf16> to vector<256x4xbf16>
    %c0_66 = arith.constant 0 : index
    %c32 = arith.constant 32 : index
    %34 = vector.load %arg7[%c0_66, %c32] : memref<256x36xbf16, #tpu.memory_space<vmem>>, vector<256x4xbf16>
    tpu.vector_store %arg7[%c0_66, %c32], %33 {strides = array<i32>} : memref<256x36xbf16, #tpu.memory_space<vmem>>, vector<256x4xbf16>,
    %c0_67 = arith.constant 0 : index
    %c0_68 = arith.constant 0 : index
    %35 = vector.load %arg7[%c0_67, %c0_68] : memref<256x36xbf16, #tpu.memory_space<vmem>>, vector<256x36xbf16>
    %c0_69 = arith.constant 0 : index
    %c0_70 = arith.constant 0 : index
    %36 = vector.load %arg2[%c0_69, %c0_70] : memref<36x16xbf16, #tpu.memory_space<vmem>>, vector<36x16xbf16>
    %cst_71 = arith.constant dense<0.000000e+00> : vector<256x16xf32>
    %37 = tpu.matmul %35, %36, %cst_71 {dimension_numbers = #tpu.dot_dimension_numbers<[1], [0], [0], [1], [0, 0, 1, 1], [], []>} : vector<256x36xbf16>, vector<36x16xbf16>, vector<256x16xf32> -> vector<256x16xf32>
    %c0_72 = arith.constant 0 : index
    %c0_73 = arith.constant 0 : index
    %38 = vector.load %arg3[%c0_72, %c0_73] : memref<1x16xf32, #tpu.memory_space<vmem>>, vector<1x16xf32>
    %39 = vector.shape_cast %38 : vector<1x16xf32> to vector<16xf32>
    %40 = vector.shape_cast %39 : vector<16xf32> to vector<1x16xf32>
    %41 = vector.broadcast %40 : vector<1x16xf32> to vector<256x16xf32>
    %42 = arith.mulf %37, %41 : vector<256x16xf32>
    %c0_74 = arith.constant 0 : index
    %c0_75 = arith.constant 0 : index
    %43 = vector.load %arg4[%c0_74, %c0_75] : memref<1x16xf32, #tpu.memory_space<vmem>>, vector<1x16xf32>
    %44 = vector.shape_cast %43 : vector<1x16xf32> to vector<16xf32>
    %45 = vector.shape_cast %44 : vector<16xf32> to vector<1x16xf32>
    %46 = vector.broadcast %45 : vector<1x16xf32> to vector<256x16xf32>
    %47 = arith.addf %42, %46 : vector<256x16xf32>
    %48 = tpu.iota {dimensions = array<i32: 1>} : vector<256x16xi32>
    %c8_i32 = arith.constant 8 : i32
    %49 = vector.broadcast %c8_i32 : i32 to vector<256x16xi32>
    %50 = arith.cmpi slt, %48, %49 : vector<256x16xi32>
    %cst_76 = arith.constant 0.000000e+00 : f32
    %51 = vector.broadcast %cst_76 : f32 to vector<256x16xf32>
    %52 = arith.maximumf %47, %51 : vector<256x16xf32>
    %53 = arith.select %50, %52, %47 : vector<256x16xi1>, vector<256x16xf32>
    %54 = vector.shape_cast %53 : vector<256x16xf32> to vector<1x16x16x16xf32>
    %55 = arith.truncf %54 : vector<1x16x16x16xf32> to vector<1x16x16x16xbf16>
    %c0_77 = arith.constant 0 : index
    %c0_78 = arith.constant 0 : index
    %c0_79 = arith.constant 0 : index
    %c0_80 = arith.constant 0 : index
    %56 = vector.load %arg5[%c0_77, %c0_78, %c0_79, %c0_80] : memref<1x16x16x16xbf16, #tpu.memory_space<vmem>>, vector<1x16x16x16xbf16>
    tpu.vector_store %arg5[%c0_77, %c0_78, %c0_79, %c0_80], %55 {strides = array<i32>} : memref<1x16x16x16xbf16, #tpu.memory_space<vmem>>, vector<1x16x16x16xbf16>,
    return
  }
  func.func @transform_0(%arg0: i32) -> (i32, i32, i32, i32) {
    %c0_i32 = arith.constant 0 : i32
    %c0_i32_0 = arith.constant 0 : i32
    %c0_i32_1 = arith.constant 0 : i32
    %c0_i32_2 = arith.constant 0 : i32
    return %arg0, %c0_i32, %c0_i32_0, %c0_i32_1 : i32, i32, i32, i32
  }
  func.func @transform_1(%arg0: i32) -> (i32, i32) {
    %c0_i32 = arith.constant 0 : i32
    %c0_i32_0 = arith.constant 0 : i32
    %c0_i32_1 = arith.constant 0 : i32
    return %c0_i32, %c0_i32_0 : i32, i32
  }
  func.func @transform_2(%arg0: i32) -> (i32, i32) {
    %c0_i32 = arith.constant 0 : i32
    %c0_i32_0 = arith.constant 0 : i32
    %c0_i32_1 = arith.constant 0 : i32
    return %c0_i32, %c0_i32_0 : i32, i32
  }
  func.func @transform_3(%arg0: i32) -> (i32, i32) {
    %c0_i32 = arith.constant 0 : i32
    %c0_i32_0 = arith.constant 0 : i32
    %c0_i32_1 = arith.constant 0 : i32
    return %c0_i32, %c0_i32_0 : i32, i32
  }
  func.func @transform_4(%arg0: i32) -> (i32, i32, i32, i32) {
    %c0_i32 = arith.constant 0 : i32
    %c0_i32_0 = arith.constant 0 : i32
    %c0_i32_1 = arith.constant 0 : i32
    %c0_i32_2 = arith.constant 0 : i32
    return %arg0, %c0_i32, %c0_i32_0, %c0_i32_1 : i32, i32, i32, i32
  }
}

</mosaic_0001>

<llo_original>
// kernel: residual_basic_forward.3
$region0: #{residual_basic_forward.3}
  #allocation0 [shape = 'u32[]', space=smem, size = 0x4, offset = 0x4, fixed_abs, tag = 'smem constant byte address 0x4 - core index']
  #allocation1 [shape = 'u32[144,128]{1,0:T(1,128)}', space=vmem, size = 0x12000, scoped, tag = 'internal scratch']
  #allocation2 [shape = 'bf16[1,18,18,8]{3,2,1,0:T(8,128)(2,1)}', space=vmem, size = 0x1b000, scoped, tag = 'scratch operand']
  #allocation3 [shape = 'bf16[256,72]{1,0:T(8,128)(2,1)}', space=vmem, size = 0x10000, scoped, tag = 'scratch operand']
  %s0 = inlined_call_operand.vmem [shape: bf16[2,16,16,16], index: 0, kind: input, shape index: {}]
  %s1 = inlined_call_operand.vmem [shape: bf16[72,8], index: 1, kind: input, shape index: {}]
  %s2 = inlined_call_operand.vmem [shape: f32[1,8], index: 2, kind: input, shape index: {}]
  %s3 = inlined_call_operand.vmem [shape: f32[1,8], index: 3, kind: input, shape index: {}]
  %s4 = inlined_call_operand.vmem [shape: f32[2,16,16,8], index: 4, kind: output, shape index: {}]
  %s5 = sld [smem:[#allocation0]]
  $region49: #{residual_basic_forward.3} parent=0
    _
  %s7 = ssub.s32 1, %s5
  %s8 = scalar_select 0, %s7, %s5
  loop: start=0, step=1, limit=4
  $region2: #{residual_basic_forward.3} parent=0 // loop_pre_header
    _
  $region3: #{residual_basic_forward.3} parent=0 // loop_header
    %s10 = sphi 0, %s14
    %p11 = scmp.ge.s32.totalorder %s10, 4
    %s20 = sphi 0, %s22
    %s23 = sphi 0, %s20
    %s24 = sphi 0, %s23
    %s40 = sphi 0, %s24
    %s44 = sphi 0, %s44
    %s46 = sphi 0, %s44
    %s47 = sphi 0, %s46
    %s61 = sphi 0, %s47
    %s65 = sphi 0, %s65
    %s67 = sphi 0, %s65
    %s68 = sphi 0, %s67
    %s82 = sphi 0, %s68
    %s86 = sphi 0, %s86
    %s88 = sphi 0, %s86
    %s89 = sphi 0, %s88
    %s103 = sphi 0, %s89
    %s109 = sphi 0, %s111
    %s112 = sphi 0, %s109
    %s113 = sphi 0, %s112
    %s129 = sphi 0, %s113
  $region4: #{residual_basic_forward.3} parent=0 // loop_header_branch
    %13 = sbr.rel (%p11) target = $region8
  $region5: #{residual_basic_forward.3} parent=0 // loop_body
    %s15 = ssub.s32 %s10, 1
    %s16 = ssub.s32 %s10, 2
    %s17 = sadd.s32 %s10, 1
    %s18 = ssub.s32 %s10, %s17
    %p19 = scmp.eq.s32.totalorder %s18, 0
    %s21 = sadd.s32 %s20, 1
    %s22 = scalar_select %p19, %s20, %s21
    %p25 = pneg %p19
    %p26 = scmp.eq.s32.totalorder %s10, 1
    %p27 = por %p25, %p26
    %p28 = scmp.ne.s32.totalorder %s20, %s23
    %p29 = scmp.eq.s32.totalorder %s10, 0
    %p30 = por %p28, %p29
    %p31 = scmp.ne.s32.totalorder %s20, %s23
    %p32 = scmp.eq.s32.totalorder %s15, 1
    %p33 = por %p31, %p32
    %p34 = scmp.ne.s32.totalorder %s23, %s24
    %p35 = scmp.eq.s32.totalorder %s15, 0
    %p36 = por %p34, %p35
    %p37 = scmp.ne.s32.totalorder %s23, %s24
    %p38 = scmp.eq.s32.totalorder %s16, 1
    %p39 = por %p37, %p38
    %p41 = scmp.ne.s32.totalorder %s24, %s40
    %p42 = scmp.eq.s32.totalorder %s16, 0
    %p43 = por %p41, %p42
    %s45 = sadd.s32 %s44, 1
    %p48 = scmp.eq.s32.totalorder %s10, 1
    %p49 = scmp.ne.s32.totalorder %s44, %s46
    %p50 = scmp.eq.s32.totalorder %s10, 0
    %p51 = por %p49, %p50
    %p52 = scmp.ne.s32.totalorder %s44, %s46
    %p53 = scmp.eq.s32.totalorder %s15, 1
    %p54 = por %p52, %p53
    %p55 = scmp.ne.s32.totalorder %s46, %s47
    %p56 = scmp.eq.s32.totalorder %s15, 0
    %p57 = por %p55, %p56
    %p58 = scmp.ne.s32.totalorder %s46, %s47
    %p59 = scmp.eq.s32.totalorder %s16, 1
    %p60 = por %p58, %p59
    %p62 = scmp.ne.s32.totalorder %s47, %s61
    %p63 = scmp.eq.s32.totalorder %s16, 0
    %p64 = por %p62, %p63
    %s66 = sadd.s32 %s65, 1
    %p69 = scmp.eq.s32.totalorder %s10, 1
    %p70 = scmp.ne.s32.totalorder %s65, %s67
    %p71 = scmp.eq.s32.totalorder %s10, 0
    %p72 = por %p70, %p71
    %p73 = scmp.ne.s32.totalorder %s65, %s67
    %p74 = scmp.eq.s32.totalorder %s15, 1
    %p75 = por %p73, %p74
    %p76 = scmp.ne.s32.totalorder %s67, %s68
    %p77 = scmp.eq.s32.totalorder %s15, 0
    %p78 = por %p76, %p77
    %p79 = scmp.ne.s32.totalorder %s67, %s68
    %p80 = scmp.eq.s32.totalorder %s16, 1
    %p81 = por %p79, %p80
    %p83 = scmp.ne.s32.totalorder %s68, %s82
    %p84 = scmp.eq.s32.totalorder %s16, 0
    %p85 = por %p83, %p84
    %s87 = sadd.s32 %s86, 1
    %p90 = scmp.eq.s32.totalorder %s10, 1
    %p91 = scmp.ne.s32.totalorder %s86, %s88
    %p92 = scmp.eq.s32.totalorder %s10, 0
    %p93 = por %p91, %p92
    %p94 = scmp.ne.s32.totalorder %s86, %s88
    %p95 = scmp.eq.s32.totalorder %s15, 1
    %p96 = por %p94, %p95
    %p97 = scmp.ne.s32.totalorder %s88, %s89
    %p98 = scmp.eq.s32.totalorder %s15, 0
    %p99 = por %p97, %p98
    %p100 = scmp.ne.s32.totalorder %s88, %s89
    %p101 = scmp.eq.s32.totalorder %s16, 1
    %p102 = por %p100, %p101
    %p104 = scmp.ne.s32.totalorder %s89, %s103
    %p105 = scmp.eq.s32.totalorder %s16, 0
    %p106 = por %p104, %p105
    %s107 = ssub.s32 %s10, %s17
    %p108 = scmp.eq.s32.totalorder %s107, 0
    %s110 = sadd.s32 %s109, 1
    %s111 = scalar_select %p108, %s109, %s110
    %p114 = pneg %p108
    %p115 = scmp.eq.s32.totalorder %s10, 1
    %p116 = por %p114, %p115
    %p117 = scmp.ne.s32.totalorder %s109, %s112
    %p118 = scmp.eq.s32.totalorder %s10, 0
    %p119 = por %p117, %p118
    %p120 = scmp.ne.s32.totalorder %s109, %s112
    %p121 = scmp.eq.s32.totalorder %s15, 1
    %p122 = por %p120, %p121
    %p123 = scmp.ne.s32.totalorder %s112, %s113
    %p124 = scmp.eq.s32.totalorder %s15, 0
    %p125 = por %p123, %p124
    %p126 = scmp.ne.s32.totalorder %s112, %s113
    %p127 = scmp.eq.s32.totalorder %s16, 1
    %p128 = por %p126, %p127
    %p130 = scmp.ne.s32.totalorder %s113, %s129
    %p131 = scmp.eq.s32.totalorder %s16, 0
    %p132 = por %p130, %p131
    %p133 = scmp.le.s32.totalorder 1, %s10
    %p134 = scmp.lt.s32.totalorder %s10, 3
    %p135 = pnand %p133, %p134
    %p136 = pneg %p135
    // Predicated region
    $region9: #{residual_basic_forward.3} parent=5 // pred_check
      _
    $region10: #{residual_basic_forward.3} parent=5 // pred_check_branch
      %138 = sbr.rel (%p135) target = $region12
    $region11: #{residual_basic_forward.3} parent=5 // pred_region
      %s139 = ssub.s32 %s10, 1
      // Predicated region
      $region13: #{residual_basic_forward.3} parent=11 // pred_check
        %p140 = pneg %p57
      $region14: #{residual_basic_forward.3} parent=11 // pred_check_branch
        %142 = sbr.rel (%p140) target = $region16
      $region15: #{residual_basic_forward.3} parent=11 // pred_region
        _
      $region16: #{residual_basic_forward.3} parent=11 // pred_fallthru
        _
      // Predicated region
      $region17: #{residual_basic_forward.3} parent=11 // pred_check
        %p143 = pneg %p78
      $region18: #{residual_basic_forward.3} parent=11 // pred_check_branch
        %145 = sbr.rel (%p143) target = $region20
      $region19: #{residual_basic_forward.3} parent=11 // pred_region
        _
      $region20: #{residual_basic_forward.3} parent=11 // pred_fallthru
        _
      // Predicated region
      $region21: #{residual_basic_forward.3} parent=11 // pred_check
        %p146 = pneg %p99
      $region22: #{residual_basic_forward.3} parent=11 // pred_check_branch
        %148 = sbr.rel (%p146) target = $region24
      $region23: #{residual_basic_forward.3} parent=11 // pred_region
        _
      $region24: #{residual_basic_forward.3} parent=11 // pred_fallthru
        _
    $region12: #{residual_basic_forward.3} parent=5 // pred_fallthru
      _
    %p149 = scmp.lt.s32.totalorder %s10, 2
    // Predicated region
    $region25: #{residual_basic_forward.3} parent=5 // pred_check
      %p150 = pneg %p149
    $region26: #{residual_basic_forward.3} parent=5 // pred_check_branch
      %152 = sbr.rel (%p150) target = $region28
    $region27: #{residual_basic_forward.3} parent=5 // pred_region
      // Predicated region
      $region29: #{residual_basic_forward.3} parent=27 // pred_check
        %p153 = pneg %p30
      $region30: #{residual_basic_forward.3} parent=27 // pred_check_branch
        %155 = sbr.rel (%p153) target = $region32
      $region31: #{residual_basic_forward.3} parent=27 // pred_region
        %p156 = scmp.lt.s32.totalorder %s10, 1
        %s157 = scalar_select %p156, %s10, 1
        %s158 = smul.addr %s157, 32
        %s159 = smul.addr %s158, 4
        %s160 = scalar_lea.vmem %s0, %s159
      $region32: #{residual_basic_forward.3} parent=27 // pred_fallthru
        _
    $region28: #{residual_basic_forward.3} parent=5 // pred_fallthru
      _
    %p161 = scmp.le.s32.totalorder 1, %s10
    %p162 = scmp.lt.s32.totalorder %s10, 3
    %p163 = pnand %p161, %p162
    %p164 = pneg %p163
    // Predicated region
    $region33: #{residual_basic_forward.3} parent=5 // pred_check
      _
    $region34: #{residual_basic_forward.3} parent=5 // pred_check_branch
      %166 = sbr.rel (%p163) target = $region36
    $region35: #{residual_basic_forward.3} parent=5 // pred_region
      %s167 = ssub.s32 %s10, 1
      %p168 = scmp.lt.s32.totalorder %s15, 1
      %s169 = scalar_select %p168, %s15, 1
      %s170 = smul.addr %s169, 32
      %s171 = smul.addr %s170, 4
      %s172 = scalar_lea.vmem %s0, %s171
      %p173 = pneg %p36
      %p174 = pneg %p33
      %p175 = pneg %p57
      %p176 = pneg %p54
      %p177 = pneg %p78
      %p178 = pneg %p75
      %p179 = pneg %p99
      %p180 = pneg %p96
      %p181 = pneg %p125
      %p182 = pneg %p122
      %p183 = scmp.lt.s32.totalorder %s15, 1
      %s184 = scalar_select %p183, %s15, 1
      %s185 = smul.addr %s184, 32
      %s186 = smul.addr %s185, 8
      %s187 = scalar_lea.vmem %s4, %s186
      %p188 = scmp.lt.s32.totalorder %s15, 1
      %s189 = scalar_select %p188, %s15, 1
      %s190 = smul.addr %s189, 32
      %s191 = smul.addr %s190, 4
      %s192 = scalar_lea.vmem %s0, %s191
      %p193 = scmp.lt.s32.totalorder %s15, 1
      %s194 = scalar_select %p193, %s15, 1
      %s195 = smul.addr %s194, 32
      %s196 = smul.addr %s195, 8
      %s197 = scalar_lea.vmem %s4, %s196
      %v199 = vld [vmem:[%s192] sm:$0xf]
      %v200 = vld [vmem:[%s192 + $0x4] sm:$0xf]
      %v201 = vld [vmem:[%s192 + $0x8] sm:$0xf]
      %v202 = vld [vmem:[%s192 + $0xc] sm:$0xf]
      %v203 = vld [vmem:[%s192 + $0x10] sm:$0xf]
      %v204 = vld [vmem:[%s192 + $0x14] sm:$0xf]
      %v205 = vld [vmem:[%s192 + $0x18] sm:$0xf]
      %v206 = vld [vmem:[%s192 + $0x1c] sm:$0xf]
      %v207 = vld [vmem:[%s192 + $0x20] sm:$0xf]
      %v208 = vld [vmem:[%s192 + $0x24] sm:$0xf]
      %v209 = vld [vmem:[%s192 + $0x28] sm:$0xf]
      %v210 = vld [vmem:[%s192 + $0x2c] sm:$0xf]
      %v211 = vld [vmem:[%s192 + $0x30] sm:$0xf]
      %v212 = vld [vmem:[%s192 + $0x34] sm:$0xf]
      %v213 = vld [vmem:[%s192 + $0x38] sm:$0xf]
      %v214 = vld [vmem:[%s192 + $0x3c] sm:$0xf]
      %v215 = vld [vmem:[%s192 + $0x40] sm:$0xf]
      %v216 = vld [vmem:[%s192 + $0x44] sm:$0xf]
      %v217 = vld [vmem:[%s192 + $0x48] sm:$0xf]
      %v218 = vld [vmem:[%s192 + $0x4c] sm:$0xf]
      %v219 = vld [vmem:[%s192 + $0x50] sm:$0xf]
      %v220 = vld [vmem:[%s192 + $0x54] sm:$0xf]
      %v221 = vld [vmem:[%s192 + $0x58] sm:$0xf]
      %v222 = vld [vmem:[%s192 + $0x5c] sm:$0xf]
      %v223 = vld [vmem:[%s192 + $0x60] sm:$0xf]
      %v224 = vld [vmem:[%s192 + $0x64] sm:$0xf]
      %v225 = vld [vmem:[%s192 + $0x68] sm:$0xf]
      %v226 = vld [vmem:[%s192 + $0x6c] sm:$0xf]
      %v227 = vld [vmem:[%s192 + $0x70] sm:$0xf]
      %v228 = vld [vmem:[%s192 + $0x74] sm:$0xf]
      %v229 = vld [vmem:[%s192 + $0x78] sm:$0xf]
      %v230 = vld [vmem:[%s192 + $0x7c] sm:$0xf]
      %vm231 = vcmask 60416
      %232 = vst.msk [vmem:[#allocation2] sm:$0xf] %vm231, 0
      %233 = vst.msk [vmem:[#allocation2 + $0x4] sm:$0xf] %vm231, 0
      %vm234 = vcmask 57344
      %235 = vst.msk [vmem:[#allocation2 + $0x8] sm:$0x1] %vm234, 0
      %s236 = scalar_lea.vmem [#allocation2], 204
      %237 = vst.msk [vmem:[%s236] sm:$0xf] %vm231, 0
      %238 = vst.msk [vmem:[%s236 + $0x4] sm:$0xf] %vm231, 0
      %239 = vst.msk [vmem:[%s236 + $0x8] sm:$0x1] %vm234, 0
      %vm240 = vcmask 57344
      %vm241 = vsmask.f32 256
      %vm242 = vmand %vm240, %vm241
      %v243 = vld [vmem:[#allocation2] sm:$0x1]
      %v244 = vsel %vm242, 0, %v243
      %245 = vst [vmem:[#allocation2] sm:$0x1] %v244
      %v246 = vld [vmem:[#allocation2 + $0xc] sm:$0x1]
      %v247 = vsel %vm242, 0, %v246
      %248 = vst [vmem:[#allocation2 + $0xc] sm:$0x1] %v247
      %v249 = vld [vmem:[#allocation2 + $0x18] sm:$0x1]
      %v250 = vsel %vm242, 0, %v249
      %251 = vst [vmem:[#allocation2 + $0x18] sm:$0x1] %v250
      %v252 = vld [vmem:[#allocation2 + $0x24] sm:$0x1]
      %v253 = vsel %vm242, 0, %v252
      %254 = vst [vmem:[#allocation2 + $0x24] sm:$0x1] %v253
      %v255 = vld [vmem:[#allocation2 + $0x30] sm:$0x1]
      %v256 = vsel %vm242, 0, %v255
      %257 = vst [vmem:[#allocation2 + $0x30] sm:$0x1] %v256
      %v258 = vld [vmem:[#allocation2 + $0x3c] sm:$0x1]
      %v259 = vsel %vm242, 0, %v258
      %260 = vst [vmem:[#allocation2 + $0x3c] sm:$0x1] %v259
      %v261 = vld [vmem:[#allocation2 + $0x48] sm:$0x1]
      %v262 = vsel %vm242, 0, %v261
      %263 = vst [vmem:[#allocation2 + $0x48] sm:$0x1] %v262
      %v264 = vld [vmem:[#allocation2 + $0x54] sm:$0x1]
      %v265 = vsel %vm242, 0, %v264
      %266 = vst [vmem:[#allocation2 + $0x54] sm:$0x1] %v265
      %v267 = vld [vmem:[#allocation2 + $0x60] sm:$0x1]
      %v268 = vsel %vm242, 0, %v267
      %269 = vst [vmem:[#allocation2 + $0x60] sm:$0x1] %v268
      %v270 = vld [vmem:[#allocation2 + $0x6c] sm:$0x1]
      %v271 = vsel %vm242, 0, %v270
      %272 = vst [vmem:[#allocation2 + $0x6c] sm:$0x1] %v271
      %v273 = vld [vmem:[#allocation2 + $0x78] sm:$0x1]
      %v274 = vsel %vm242, 0, %v273
      %275 = vst [vmem:[#allocation2 + $0x78] sm:$0x1] %v274
      %v276 = vld [vmem:[#allocation2 + $0x84] sm:$0x1]
      %v277 = vsel %vm242, 0, %v276
      %278 = vst [vmem:[#allocation2 + $0x84] sm:$0x1] %v277
      %v279 = vld [vmem:[#allocation2 + $0x90] sm:$0x1]
      %v280 = vsel %vm242, 0, %v279
      %281 = vst [vmem:[#allocation2 + $0x90] sm:$0x1] %v280
      %v282 = vld [vmem:[#allocation2 + $0x9c] sm:$0x1]
      %v283 = vsel %vm242, 0, %v282
      %284 = vst [vmem:[#allocation2 + $0x9c] sm:$0x1] %v283
      %v285 = vld [vmem:[#allocation2 + $0xa8] sm:$0x1]
      %v286 = vsel %vm242, 0, %v285
      %287 = vst [vmem:[#allocation2 + $0xa8] sm:$0x1] %v286
      %v288 = vld [vmem:[#allocation2 + $0xb4] sm:$0x1]
      %v289 = vsel %vm242, 0, %v288
      %290 = vst [vmem:[#allocation2 + $0xb4] sm:$0x1] %v289
      %v291 = vld [vmem:[#allocation2 + $0xc0] sm:$0x1]
      %v292 = vsel %vm242, 0, %v291
      %293 = vst [vmem:[#allocation2 + $0xc0] sm:$0x1] %v292
      %v294 = vld [vmem:[#allocation2 + $0xcc] sm:$0x1]
      %v295 = vsel %vm242, 0, %v294
      %296 = vst [vmem:[#allocation2 + $0xcc] sm:$0x1] %v295
      %vm297 = vsmask.f32 7938
      %vm298 = vmand %vm240, %vm297
      %v299 = vld [vmem:[#allocation2 + $0x8] sm:$0x1]
      %v300 = vsel %vm298, 0, %v299
      %301 = vst [vmem:[#allocation2 + $0x8] sm:$0x1] %v300
      %v302 = vld [vmem:[#allocation2 + $0x14] sm:$0x1]
      %v303 = vsel %vm298, 0, %v302
      %304 = vst [vmem:[#allocation2 + $0x14] sm:$0x1] %v303
      %v305 = vld [vmem:[#allocation2 + $0x20] sm:$0x1]
      %v306 = vsel %vm298, 0, %v305
      %307 = vst [vmem:[#allocation2 + $0x20] sm:$0x1] %v306
      %v308 = vld [vmem:[#allocation2 + $0x2c] sm:$0x1]
      %v309 = vsel %vm298, 0, %v308
      %310 = vst [vmem:[#allocation2 + $0x2c] sm:$0x1] %v309
      %v311 = vld [vmem:[#allocation2 + $0x38] sm:$0x1]
      %v312 = vsel %vm298, 0, %v311
      %313 = vst [vmem:[#allocation2 + $0x38] sm:$0x1] %v312
      %v314 = vld [vmem:[#allocation2 + $0x44] sm:$0x1]
      %v315 = vsel %vm298, 0, %v314
      %316 = vst [vmem:[#allocation2 + $0x44] sm:$0x1] %v315
      %v317 = vld [vmem:[#allocation2 + $0x50] sm:$0x1]
      %v318 = vsel %vm298, 0, %v317
      %319 = vst [vmem:[#allocation2 + $0x50] sm:$0x1] %v318
      %v320 = vld [vmem:[#allocation2 + $0x5c] sm:$0x1]
      %v321 = vsel %vm298, 0, %v320
      %322 = vst [vmem:[#allocation2 + $0x5c] sm:$0x1] %v321
      %v323 = vld [vmem:[#allocation2 + $0x68] sm:$0x1]
      %v324 = vsel %vm298, 0, %v323
      %325 = vst [vmem:[#allocation2 + $0x68] sm:$0x1] %v324
      %v326 = vld [vmem:[#allocation2 + $0x74] sm:$0x1]
      %v327 = vsel %vm298, 0, %v326
      %328 = vst [vmem:[#allocation2 + $0x74] sm:$0x1] %v327
      %v329 = vld [vmem:[#allocation2 + $0x80] sm:$0x1]
      %v330 = vsel %vm298, 0, %v329
      %331 = vst [vmem:[#allocation2 + $0x80] sm:$0x1] %v330
      %v332 = vld [vmem:[#allocation2 + $0x8c] sm:$0x1]
      %v333 = vsel %vm298, 0, %v332
      %334 = vst [vmem:[#allocation2 + $0x8c] sm:$0x1] %v333
      %v335 = vld [vmem:[#allocation2 + $0x98] sm:$0x1]
      %v336 = vsel %vm298, 0, %v335
      %337 = vst [vmem:[#allocation2 + $0x98] sm:$0x1] %v336
      %v338 = vld [vmem:[#allocation2 + $0xa4] sm:$0x1]
      %v339 = vsel %vm298, 0, %v338
      %340 = vst [vmem:[#allocation2 + $0xa4] sm:$0x1] %v339
      %v341 = vld [vmem:[#allocation2 + $0xb0] sm:$0x1]
      %v342 = vsel %vm298, 0, %v341
      %343 = vst [vmem:[#allocation2 + $0xb0] sm:$0x1] %v342
      %v344 = vld [vmem:[#allocation2 + $0xbc] sm:$0x1]
      %v345 = vsel %vm298, 0, %v344
      %346 = vst [vmem:[#allocation2 + $0xbc] sm:$0x1] %v345
      %v347 = vld [vmem:[#allocation2 + $0xc8] sm:$0x1]
      %v348 = vsel %vm298, 0, %v347
      %349 = vst [vmem:[#allocation2 + $0xc8] sm:$0x1] %v348
      %v350 = vld [vmem:[#allocation2 + $0xd4] sm:$0x1]
      %v351 = vsel %vm298, 0, %v350
      %352 = vst [vmem:[#allocation2 + $0xd4] sm:$0x1] %v351
      %vm353 = vsmask.f32 4368
      %vm354 = vmor %vm241, %vm353
      %v356 = vshrl.u32 %v199, 16
      %v358 = vrot.slane %v356, 7
      %v359 = vshll.u32 %v199, 16
      %v361 = vor.u32 %v358, %v359
      %v362 = vrot.slane %v358, 4
      %v364 = vshrl.u32 %v200, 16
      %v366 = vrot.slane %v364, 7
      %v367 = vshll.u32 %v200, 16
      %v369 = vor.u32 %v366, %v367
      %v370 = vsel %vm354, %v362, %v369
      %v371 = vrot.slane %v366, 4
      %v373 = vshrl.u32 %v201, 16
      %v375 = vrot.slane %v373, 7
      %v376 = vshll.u32 %v201, 16
      %v378 = vor.u32 %v375, %v376
      %v379 = vrot.slane %v375, 4
      %v381 = vshrl.u32 %v202, 16
      %v383 = vrot.slane %v381, 7
      %v384 = vshll.u32 %v202, 16
      %v386 = vor.u32 %v383, %v384
      %v387 = vsel %vm354, %v379, %v386
      %v388 = vrot.slane %v383, 4
      %v390 = vshrl.u32 %v203, 16
      %v392 = vrot.slane %v390, 7
      %v393 = vshll.u32 %v203, 16
      %v395 = vor.u32 %v392, %v393
      %v396 = vrot.slane %v392, 4
      %v398 = vshrl.u32 %v204, 16
      %v400 = vrot.slane %v398, 7
      %v401 = vshll.u32 %v204, 16
      %v403 = vor.u32 %v400, %v401
      %v404 = vsel %vm354, %v396, %v403
      %v405 = vrot.slane %v400, 4
      %v407 = vshrl.u32 %v205, 16
      %v409 = vrot.slane %v407, 7
      %v410 = vshll.u32 %v205, 16
      %v412 = vor.u32 %v409, %v410
      %v413 = vrot.slane %v409, 4
      %v415 = vshrl.u32 %v206, 16
      %v417 = vrot.slane %v415, 7
      %v418 = vshll.u32 %v206, 16
      %v420 = vor.u32 %v417, %v418
      %v421 = vsel %vm354, %v413, %v420
      %v422 = vrot.slane %v417, 4
      %v424 = vshrl.u32 %v207, 16
      %v426 = vrot.slane %v424, 7
      %v427 = vshll.u32 %v207, 16
      %v429 = vor.u32 %v426, %v427
      %v430 = vrot.slane %v426, 4
      %v432 = vshrl.u32 %v208, 16
      %v434 = vrot.slane %v432, 7
      %v435 = vshll.u32 %v208, 16
      %v437 = vor.u32 %v434, %v435
      %v438 = vsel %vm354, %v430, %v437
      %v439 = vrot.slane %v434, 4
      %v441 = vshrl.u32 %v209, 16
      %v443 = vrot.slane %v441, 7
      %v444 = vshll.u32 %v209, 16
      %v446 = vor.u32 %v443, %v444
      %v447 = vrot.slane %v443, 4
      %v449 = vshrl.u32 %v210, 16
      %v451 = vrot.slane %v449, 7
      %v452 = vshll.u32 %v210, 16
      %v454 = vor.u32 %v451, %v452
      %v455 = vsel %vm354, %v447, %v454
      %v456 = vrot.slane %v451, 4
      %v458 = vshrl.u32 %v211, 16
      %v460 = vrot.slane %v458, 7
      %v461 = vshll.u32 %v211, 16
      %v463 = vor.u32 %v460, %v461
      %v464 = vrot.slane %v460, 4
      %v466 = vshrl.u32 %v212, 16
      %v468 = vrot.slane %v466, 7
      %v469 = vshll.u32 %v212, 16
      %v471 = vor.u32 %v468, %v469
      %v472 = vsel %vm354, %v464, %v471
      %v473 = vrot.slane %v468, 4
      %v475 = vshrl.u32 %v213, 16
      %v477 = vrot.slane %v475, 7
      %v478 = vshll.u32 %v213, 16
      %v480 = vor.u32 %v477, %v478
      %v481 = vrot.slane %v477, 4
      %v483 = vshrl.u32 %v214, 16
      %v485 = vrot.slane %v483, 7
      %v486 = vshll.u32 %v214, 16
      %v488 = vor.u32 %v485, %v486
      %v489 = vsel %vm354, %v481, %v488
      %v490 = vrot.slane %v485, 4
      %v492 = vshrl.u32 %v215, 16
      %v494 = vrot.slane %v492, 7
      %v495 = vshll.u32 %v215, 16
      %v497 = vor.u32 %v494, %v495
      %v498 = vrot.slane %v494, 4
      %v500 = vshrl.u32 %v216, 16
      %v502 = vrot.slane %v500, 7
      %v503 = vshll.u32 %v216, 16
      %v505 = vor.u32 %v502, %v503
      %v506 = vsel %vm354, %v498, %v505
      %v507 = vrot.slane %v502, 4
      %v509 = vshrl.u32 %v217, 16
      %v511 = vrot.slane %v509, 7
      %v512 = vshll.u32 %v217, 16
      %v514 = vor.u32 %v511, %v512
      %v515 = vrot.slane %v511, 4
      %v517 = vshrl.u32 %v218, 16
      %v519 = vrot.slane %v517, 7
      %v520 = vshll.u32 %v218, 16
      %v522 = vor.u32 %v519, %v520
      %v523 = vsel %vm354, %v515, %v522
      %v524 = vrot.slane %v519, 4
      %v526 = vshrl.u32 %v219, 16
      %v528 = vrot.slane %v526, 7
      %v529 = vshll.u32 %v219, 16
      %v531 = vor.u32 %v528, %v529
      %v532 = vrot.slane %v528, 4
      %v534 = vshrl.u32 %v220, 16
      %v536 = vrot.slane %v534, 7
      %v537 = vshll.u32 %v220, 16
      %v539 = vor.u32 %v536, %v537
      %v540 = vsel %vm354, %v532, %v539
      %v541 = vrot.slane %v536, 4
      %v543 = vshrl.u32 %v221, 16
      %v545 = vrot.slane %v543, 7
      %v546 = vshll.u32 %v221, 16
      %v548 = vor.u32 %v545, %v546
      %v549 = vrot.slane %v545, 4
      %v551 = vshrl.u32 %v222, 16
      %v553 = vrot.slane %v551, 7
      %v554 = vshll.u32 %v222, 16
      %v556 = vor.u32 %v553, %v554
      %v557 = vsel %vm354, %v549, %v556
      %v558 = vrot.slane %v553, 4
      %v560 = vshrl.u32 %v223, 16
      %v562 = vrot.slane %v560, 7
      %v563 = vshll.u32 %v223, 16
      %v565 = vor.u32 %v562, %v563
      %v566 = vrot.slane %v562, 4
      %v568 = vshrl.u32 %v224, 16
      %v570 = vrot.slane %v568, 7
      %v571 = vshll.u32 %v224, 16
      %v573 = vor.u32 %v570, %v571
      %v574 = vsel %vm354, %v566, %v573
      %v575 = vrot.slane %v570, 4
      %v577 = vshrl.u32 %v225, 16
      %v579 = vrot.slane %v577, 7
      %v580 = vshll.u32 %v225, 16
      %v582 = vor.u32 %v579, %v580
      %v583 = vrot.slane %v579, 4
      %v585 = vshrl.u32 %v226, 16
      %v587 = vrot.slane %v585, 7
      %v588 = vshll.u32 %v226, 16
      %v590 = vor.u32 %v587, %v588
      %v591 = vsel %vm354, %v583, %v590
      %v592 = vrot.slane %v587, 4
      %v594 = vshrl.u32 %v227, 16
      %v596 = vrot.slane %v594, 7
      %v597 = vshll.u32 %v227, 16
      %v599 = vor.u32 %v596, %v597
      %v600 = vrot.slane %v596, 4
      %v602 = vshrl.u32 %v228, 16
      %v604 = vrot.slane %v602, 7
      %v605 = vshll.u32 %v228, 16
      %v607 = vor.u32 %v604, %v605
      %v608 = vsel %vm354, %v600, %v607
      %v609 = vrot.slane %v604, 4
      %v611 = vshrl.u32 %v229, 16
      %v613 = vrot.slane %v611, 7
      %v614 = vshll.u32 %v229, 16
      %v616 = vor.u32 %v613, %v614
      %v617 = vrot.slane %v613, 4
      %v619 = vshrl.u32 %v230, 16
      %v621 = vrot.slane %v619, 7
      %v622 = vshll.u32 %v230, 16
      %v624 = vor.u32 %v621, %v622
      %v625 = vsel %vm354, %v617, %v624
      %v626 = vrot.slane %v621, 4
      %s675 = scalar_lea.vmem [#allocation2], 12
      %vm676 = vcmask 60416
      %vm677 = vmand %vm676, %vm297
      %v678 = vld [vmem:[%s675] sm:$0xf]
      %v679 = vsel %vm677, %v361, %v678
      %680 = vst [vmem:[%s675] sm:$0xf] %v679
      %681 = vst.msk [vmem:[%s675 + $0x4] sm:$0xf] %vm231, %v370
      %v682 = vld [vmem:[%s675 + $0x8] sm:$0x1]
      %v683 = vsel %vm242, %v371, %v682
      %684 = vst [vmem:[%s675 + $0x8] sm:$0x1] %v683
      %v685 = vld [vmem:[%s675 + $0xc] sm:$0xf]
      %v686 = vsel %vm677, %v378, %v685
      %687 = vst [vmem:[%s675 + $0xc] sm:$0xf] %v686
      %688 = vst.msk [vmem:[%s675 + $0x10] sm:$0xf] %vm231, %v387
      %v689 = vld [vmem:[%s675 + $0x14] sm:$0x1]
      %v690 = vsel %vm242, %v388, %v689
      %691 = vst [vmem:[%s675 + $0x14] sm:$0x1] %v690
      %v692 = vld [vmem:[%s675 + $0x18] sm:$0xf]
      %v693 = vsel %vm677, %v395, %v692
      %694 = vst [vmem:[%s675 + $0x18] sm:$0xf] %v693
      %695 = vst.msk [vmem:[%s675 + $0x1c] sm:$0xf] %vm231, %v404
      %v696 = vld [vmem:[%s675 + $0x20] sm:$0x1]
      %v697 = vsel %vm242, %v405, %v696
      %698 = vst [vmem:[%s675 + $0x20] sm:$0x1] %v697
      %v699 = vld [vmem:[%s675 + $0x24] sm:$0xf]
      %v700 = vsel %vm677, %v412, %v699
      %701 = vst [vmem:[%s675 + $0x24] sm:$0xf] %v700
      %702 = vst.msk [vmem:[%s675 + $0x28] sm:$0xf] %vm231, %v421
      %v703 = vld [vmem:[%s675 + $0x2c] sm:$0x1]
      %v704 = vsel %vm242, %v422, %v703
      %705 = vst [vmem:[%s675 + $0x2c] sm:$0x1] %v704
      %v706 = vld [vmem:[%s675 + $0x30] sm:$0xf]
      %v707 = vsel %vm677, %v429, %v706
      %708 = vst [vmem:[%s675 + $0x30] sm:$0xf] %v707
      %709 = vst.msk [vmem:[%s675 + $0x34] sm:$0xf] %vm231, %v438
      %v710 = vld [vmem:[%s675 + $0x38] sm:$0x1]
      %v711 = vsel %vm242, %v439, %v710
      %712 = vst [vmem:[%s675 + $0x38] sm:$0x1] %v711
      %v713 = vld [vmem:[%s675 + $0x3c] sm:$0xf]
      %v714 = vsel %vm677, %v446, %v713
      %715 = vst [vmem:[%s675 + $0x3c] sm:$0xf] %v714
      %716 = vst.msk [vmem:[%s675 + $0x40] sm:$0xf] %vm231, %v455
      %v717 = vld [vmem:[%s675 + $0x44] sm:$0x1]
      %v718 = vsel %vm242, %v456, %v717
      %719 = vst [vmem:[%s675 + $0x44] sm:$0x1] %v718
      %v720 = vld [vmem:[%s675 + $0x48] sm:$0xf]
      %v721 = vsel %vm677, %v463, %v720
      %722 = vst [vmem:[%s675 + $0x48] sm:$0xf] %v721
      %723 = vst.msk [vmem:[%s675 + $0x4c] sm:$0xf] %vm231, %v472
      %v724 = vld [vmem:[%s675 + $0x50] sm:$0x1]
      %v725 = vsel %vm242, %v473, %v724
      %726 = vst [vmem:[%s675 + $0x50] sm:$0x1] %v725
      %v727 = vld [vmem:[%s675 + $0x54] sm:$0xf]
      %v728 = vsel %vm677, %v480, %v727
      %729 = vst [vmem:[%s675 + $0x54] sm:$0xf] %v728
      %730 = vst.msk [vmem:[%s675 + $0x58] sm:$0xf] %vm231, %v489
      %v731 = vld [vmem:[%s675 + $0x5c] sm:$0x1]
      %v732 = vsel %vm242, %v490, %v731
      %733 = vst [vmem:[%s675 + $0x5c] sm:$0x1] %v732
      %v734 = vld [vmem:[%s675 + $0x60] sm:$0xf]
      %v735 = vsel %vm677, %v497, %v734
      %736 = vst [vmem:[%s675 + $0x60] sm:$0xf] %v735
      %737 = vst.msk [vmem:[%s675 + $0x64] sm:$0xf] %vm231, %v506
      %v738 = vld [vmem:[%s675 + $0x68] sm:$0x1]
      %v739 = vsel %vm242, %v507, %v738
      %740 = vst [vmem:[%s675 + $0x68] sm:$0x1] %v739
      %v741 = vld [vmem:[%s675 + $0x6c] sm:$0xf]
      %v742 = vsel %vm677, %v514, %v741
      %743 = vst [vmem:[%s675 + $0x6c] sm:$0xf] %v742
      %744 = vst.msk [vmem:[%s675 + $0x70] sm:$0xf] %vm231, %v523
      %v745 = vld [vmem:[%s675 + $0x74] sm:$0x1]
      %v746 = vsel %vm242, %v524, %v745
      %747 = vst [vmem:[%s675 + $0x74] sm:$0x1] %v746
      %v748 = vld [vmem:[%s675 + $0x78] sm:$0xf]
      %v749 = vsel %vm677, %v531, %v748
      %750 = vst [vmem:[%s675 + $0x78] sm:$0xf] %v749
      %751 = vst.msk [vmem:[%s675 + $0x7c] sm:$0xf] %vm231, %v540
      %v752 = vld [vmem:[%s675 + $0x80] sm:$0x1]
      %v753 = vsel %vm242, %v541, %v752
      %754 = vst [vmem:[%s675 + $0x80] sm:$0x1] %v753
      %v755 = vld [vmem:[%s675 + $0x84] sm:$0xf]
      %v756 = vsel %vm677, %v548, %v755
      %757 = vst [vmem:[%s675 + $0x84] sm:$0xf] %v756
      %758 = vst.msk [vmem:[%s675 + $0x88] sm:$0xf] %vm231, %v557
      %v759 = vld [vmem:[%s675 + $0x8c] sm:$0x1]
      %v760 = vsel %vm242, %v558, %v759
      %761 = vst [vmem:[%s675 + $0x8c] sm:$0x1] %v760
      %v762 = vld [vmem:[%s675 + $0x90] sm:$0xf]
      %v763 = vsel %vm677, %v565, %v762
      %764 = vst [vmem:[%s675 + $0x90] sm:$0xf] %v763
      %765 = vst.msk [vmem:[%s675 + $0x94] sm:$0xf] %vm231, %v574
      %v766 = vld [vmem:[%s675 + $0x98] sm:$0x1]
      %v767 = vsel %vm242, %v575, %v766
      %768 = vst [vmem:[%s675 + $0x98] sm:$0x1] %v767
      %v769 = vld [vmem:[%s675 + $0x9c] sm:$0xf]
      %v770 = vsel %vm677, %v582, %v769
      %771 = vst [vmem:[%s675 + $0x9c] sm:$0xf] %v770
      %772 = vst.msk [vmem:[%s675 + $0xa0] sm:$0xf] %vm231, %v591
      %v773 = vld [vmem:[%s675 + $0xa4] sm:$0x1]
      %v774 = vsel %vm242, %v592, %v773
      %775 = vst [vmem:[%s675 + $0xa4] sm:$0x1] %v774
      %v776 = vld [vmem:[%s675 + $0xa8] sm:$0xf]
      %v777 = vsel %vm677, %v599, %v776
      %778 = vst [vmem:[%s675 + $0xa8] sm:$0xf] %v777
      %779 = vst.msk [vmem:[%s675 + $0xac] sm:$0xf] %vm231, %v608
      %v780 = vld [vmem:[%s675 + $0xb0] sm:$0x1]
      %v781 = vsel %vm242, %v609, %v780
      %782 = vst [vmem:[%s675 + $0xb0] sm:$0x1] %v781
      %v783 = vld [vmem:[%s675 + $0xb4] sm:$0xf]
      %v784 = vsel %vm677, %v616, %v783
      %785 = vst [vmem:[%s675 + $0xb4] sm:$0xf] %v784
      %786 = vst.msk [vmem:[%s675 + $0xb8] sm:$0xf] %vm231, %v625
      %v787 = vld [vmem:[%s675 + $0xbc] sm:$0x1]
      %v788 = vsel %vm242, %v626, %v787
      %789 = vst [vmem:[%s675 + $0xbc] sm:$0x1] %v788
      %v790 = vld [vmem:[#allocation2] sm:$0xf]
      %v791 = vld [vmem:[#allocation2 + $0x4] sm:$0xf]
      %v792 = vld [vmem:[#allocation2 + $0xc] sm:$0xf]
      %v793 = vld [vmem:[#allocation2 + $0x10] sm:$0xf]
      %v794 = vld [vmem:[#allocation2 + $0x18] sm:$0xf]
      %v795 = vld [vmem:[#allocation2 + $0x1c] sm:$0xf]
      %v796 = vld [vmem:[#allocation2 + $0x24] sm:$0xf]
      %v797 = vld [vmem:[#allocation2 + $0x28] sm:$0xf]
      %v798 = vld [vmem:[#allocation2 + $0x30] sm:$0xf]
      %v799 = vld [vmem:[#allocation2 + $0x34] sm:$0xf]
      %v800 = vld [vmem:[#allocation2 + $0x3c] sm:$0xf]
      %v801 = vld [vmem:[#allocation2 + $0x40] sm:$0xf]
      %v802 = vld [vmem:[#allocation2 + $0x48] sm:$0xf]
      %v803 = vld [vmem:[#allocation2 + $0x4c] sm:$0xf]
      %v804 = vld [vmem:[#allocation2 + $0x54] sm:$0xf]
      %v805 = vld [vmem:[#allocation2 + $0x58] sm:$0xf]
      %v806 = vld [vmem:[#allocation2 + $0x60] sm:$0xf]
      %v807 = vld [vmem:[#allocation2 + $0x64] sm:$0xf]
      %v808 = vld [vmem:[#allocation2 + $0x6c] sm:$0xf]
      %v809 = vld [vmem:[#allocation2 + $0x70] sm:$0xf]
      %v810 = vld [vmem:[#allocation2 + $0x78] sm:$0xf]
      %v811 = vld [vmem:[#allocation2 + $0x7c] sm:$0xf]
      %v812 = vld [vmem:[#allocation2 + $0x84] sm:$0xf]
      %v813 = vld [vmem:[#allocation2 + $0x88] sm:$0xf]
      %v814 = vld [vmem:[#allocation2 + $0x90] sm:$0xf]
      %v815 = vld [vmem:[#allocation2 + $0x94] sm:$0xf]
      %v816 = vld [vmem:[#allocation2 + $0x9c] sm:$0xf]
      %v817 = vld [vmem:[#allocation2 + $0xa0] sm:$0xf]
      %v818 = vld [vmem:[#allocation2 + $0xa8] sm:$0xf]
      %v819 = vld [vmem:[#allocation2 + $0xac] sm:$0xf]
      %v820 = vld [vmem:[#allocation2 + $0xb4] sm:$0xf]
      %v821 = vld [vmem:[#allocation2 + $0xb8] sm:$0xf]
      %822 = vst.msk [vmem:[#allocation3] sm:$0xf] %vm231, %v790
      %823 = vst.msk [vmem:[#allocation3 + $0x4] sm:$0xf] %vm231, %v791
      %824 = vst.msk [vmem:[#allocation3 + $0x8] sm:$0xf] %vm231, %v792
      %825 = vst.msk [vmem:[#allocation3 + $0xc] sm:$0xf] %vm231, %v793
      %826 = vst.msk [vmem:[#allocation3 + $0x10] sm:$0xf] %vm231, %v794
      %827 = vst.msk [vmem:[#allocation3 + $0x14] sm:$0xf] %vm231, %v795
      %828 = vst.msk [vmem:[#allocation3 + $0x18] sm:$0xf] %vm231, %v796
      %829 = vst.msk [vmem:[#allocation3 + $0x1c] sm:$0xf] %vm231, %v797
      %830 = vst.msk [vmem:[#allocation3 + $0x20] sm:$0xf] %vm231, %v798
      %831 = vst.msk [vmem:[#allocation3 + $0x24] sm:$0xf] %vm231, %v799
      %832 = vst.msk [vmem:[#allocation3 + $0x28] sm:$0xf] %vm231, %v800
      %833 = vst.msk [vmem:[#allocation3 + $0x2c] sm:$0xf] %vm231, %v801
      %834 = vst.msk [vmem:[#allocation3 + $0x30] sm:$0xf] %vm231, %v802
      %835 = vst.msk [vmem:[#allocation3 + $0x34] sm:$0xf] %vm231, %v803
      %836 = vst.msk [vmem:[#allocation3 + $0x38] sm:$0xf] %vm231, %v804
      %837 = vst.msk [vmem:[#allocation3 + $0x3c] sm:$0xf] %vm231, %v805
      %838 = vst.msk [vmem:[#allocation3 + $0x40] sm:$0xf] %vm231, %v806
      %839 = vst.msk [vmem:[#allocation3 + $0x44] sm:$0xf] %vm231, %v807
      %840 = vst.msk [vmem:[#allocation3 + $0x48] sm:$0xf] %vm231, %v808
      %841 = vst.msk [vmem:[#allocation3 + $0x4c] sm:$0xf] %vm231, %v809
      %842 = vst.msk [vmem:[#allocation3 + $0x50] sm:$0xf] %vm231, %v810
      %843 = vst.msk [vmem:[#allocation3 + $0x54] sm:$0xf] %vm231, %v811
      %844 = vst.msk [vmem:[#allocation3 + $0x58] sm:$0xf] %vm231, %v812
      %845 = vst.msk [vmem:[#allocation3 + $0x5c] sm:$0xf] %vm231, %v813
      %846 = vst.msk [vmem:[#allocation3 + $0x60] sm:$0xf] %vm231, %v814
      %847 = vst.msk [vmem:[#allocation3 + $0x64] sm:$0xf] %vm231, %v815
      %848 = vst.msk [vmem:[#allocation3 + $0x68] sm:$0xf] %vm231, %v816
      %849 = vst.msk [vmem:[#allocation3 + $0x6c] sm:$0xf] %vm231, %v817
      %850 = vst.msk [vmem:[#allocation3 + $0x70] sm:$0xf] %vm231, %v818
      %851 = vst.msk [vmem:[#allocation3 + $0x74] sm:$0xf] %vm231, %v819
      %852 = vst.msk [vmem:[#allocation3 + $0x78] sm:$0xf] %vm231, %v820
      %853 = vst.msk [vmem:[#allocation3 + $0x7c] sm:$0xf] %vm231, %v821
      %v854 = vld [vmem:[#allocation2] sm:$0xf]
      %v855 = vld [vmem:[#allocation2 + $0x4] sm:$0xf]
      %v856 = vld [vmem:[#allocation2 + $0x8] sm:$0x1]
      %v857 = vld [vmem:[#allocation2 + $0xc] sm:$0xf]
      %v858 = vld [vmem:[#allocation2 + $0x10] sm:$0xf]
      %v859 = vld [vmem:[#allocation2 + $0x14] sm:$0x1]
      %v860 = vld [vmem:[#allocation2 + $0x18] sm:$0xf]
      %v861 = vld [vmem:[#allocation2 + $0x1c] sm:$0xf]
      %v862 = vld [vmem:[#allocation2 + $0x20] sm:$0x1]
      %v863 = vld [vmem:[#allocation2 + $0x24] sm:$0xf]
      %v864 = vld [vmem:[#allocation2 + $0x28] sm:$0xf]
      %v865 = vld [vmem:[#allocation2 + $0x2c] sm:$0x1]
      %v866 = vld [vmem:[#allocation2 + $0x30] sm:$0xf]
      %v867 = vld [vmem:[#allocation2 + $0x34] sm:$0xf]
      %v868 = vld [vmem:[#allocation2 + $0x38] sm:$0x1]
      %v869 = vld [vmem:[#allocation2 + $0x3c] sm:$0xf]
      %v870 = vld [vmem:[#allocation2 + $0x40] sm:$0xf]
      %v871 = vld [vmem:[#allocation2 + $0x44] sm:$0x1]
      %v872 = vld [vmem:[#allocation2 + $0x48] sm:$0xf]
      %v873 = vld [vmem:[#allocation2 + $0x4c] sm:$0xf]
      %v874 = vld [vmem:[#allocation2 + $0x50] sm:$0x1]
      %v875 = vld [vmem:[#allocation2 + $0x54] sm:$0xf]
      %v876 = vld [vmem:[#allocation2 + $0x58] sm:$0xf]
      %v877 = vld [vmem:[#allocation2 + $0x5c] sm:$0x1]
      %v878 = vld [vmem:[#allocation2 + $0x60] sm:$0xf]
      %v879 = vld [vmem:[#allocation2 + $0x64] sm:$0xf]
      %v880 = vld [vmem:[#allocation2 + $0x68] sm:$0x1]
      %v881 = vld [vmem:[#allocation2 + $0x6c] sm:$0xf]
      %v882 = vld [vmem:[#allocation2 + $0x70] sm:$0xf]
      %v883 = vld [vmem:[#allocation2 + $0x74] sm:$0x1]
      %v884 = vld [vmem:[#allocation2 + $0x78] sm:$0xf]
      %v885 = vld [vmem:[#allocation2 + $0x7c] sm:$0xf]
      %v886 = vld [vmem:[#allocation2 + $0x80] sm:$0x1]
      %v887 = vld [vmem:[#allocation2 + $0x84] sm:$0xf]
      %v888 = vld [vmem:[#allocation2 + $0x88] sm:$0xf]
      %v889 = vld [vmem:[#allocation2 + $0x8c] sm:$0x1]
      %v890 = vld [vmem:[#allocation2 + $0x90] sm:$0xf]
      %v891 = vld [vmem:[#allocation2 + $0x94] sm:$0xf]
      %v892 = vld [vmem:[#allocation2 + $0x98] sm:$0x1]
      %v893 = vld [vmem:[#allocation2 + $0x9c] sm:$0xf]
      %v894 = vld [vmem:[#allocation2 + $0xa0] sm:$0xf]
      %v895 = vld [vmem:[#allocation2 + $0xa4] sm:$0x1]
      %v896 = vld [vmem:[#allocation2 + $0xa8] sm:$0xf]
      %v897 = vld [vmem:[#allocation2 + $0xac] sm:$0xf]
      %v898 = vld [vmem:[#allocation2 + $0xb0] sm:$0x1]
      %v899 = vld [vmem:[#allocation2 + $0xb4] sm:$0xf]
      %v900 = vld [vmem:[#allocation2 + $0xb8] sm:$0xf]
      %v901 = vld [vmem:[#allocation2 + $0xbc] sm:$0x1]
      %vm902 = vsmask.f32 3328
      %vm903 = vsmask.f32 7440
      %vm904 = vmor %vm902, %vm903
      %v906 = vshrl.u32 %v854, 16
      %v908 = vrot.slane %v906, 4
      %v909 = vshll.u32 %v854, 16
      %v911 = vrot.slane %v909, 5
      %v912 = vor.u32 %v908, %v911
      %v913 = vrot.slane %v912, 4
      %v915 = vshll.u32 %v855, 16
      %v917 = vrot.slane %v915, 5
      %v918 = vsel %vm904, %v913, %v917
      %v919 = vshrl.u32 %v855, 16
      %v921 = vrot.slane %v919, 4
      %v922 = vor.u32 %v921, %v917
      %v923 = vrot.slane %v922, 4
      %v925 = vshll.u32 %v856, 16
      %v927 = vrot.slane %v925, 5
      %v928 = vsel %vm904, %v923, %v927
      %v930 = vshrl.u32 %v857, 16
      %v932 = vrot.slane %v930, 4
      %v933 = vshll.u32 %v857, 16
      %v935 = vrot.slane %v933, 5
      %v936 = vor.u32 %v932, %v935
      %v937 = vrot.slane %v936, 4
      %v939 = vshll.u32 %v858, 16
      %v941 = vrot.slane %v939, 5
      %v942 = vsel %vm904, %v937, %v941
      %v943 = vshrl.u32 %v858, 16
      %v945 = vrot.slane %v943, 4
      %v946 = vor.u32 %v945, %v941
      %v947 = vrot.slane %v946, 4
      %v949 = vshll.u32 %v859, 16
      %v951 = vrot.slane %v949, 5
      %v952 = vsel %vm904, %v947, %v951
      %v954 = vshrl.u32 %v860, 16
      %v956 = vrot.slane %v954, 4
      %v957 = vshll.u32 %v860, 16
      %v959 = vrot.slane %v957, 5
      %v960 = vor.u32 %v956, %v959
      %v961 = vrot.slane %v960, 4
      %v963 = vshll.u32 %v861, 16
      %v965 = vrot.slane %v963, 5
      %v966 = vsel %vm904, %v961, %v965
      %v967 = vshrl.u32 %v861, 16
      %v969 = vrot.slane %v967, 4
      %v970 = vor.u32 %v969, %v965
      %v971 = vrot.slane %v970, 4
      %v973 = vshll.u32 %v862, 16
      %v975 = vrot.slane %v973, 5
      %v976 = vsel %vm904, %v971, %v975
      %v978 = vshrl.u32 %v863, 16
      %v980 = vrot.slane %v978, 4
      %v981 = vshll.u32 %v863, 16
      %v983 = vrot.slane %v981, 5
      %v984 = vor.u32 %v980, %v983
      %v985 = vrot.slane %v984, 4
      %v987 = vshll.u32 %v864, 16
      %v989 = vrot.slane %v987, 5
      %v990 = vsel %vm904, %v985, %v989
      %v991 = vshrl.u32 %v864, 16
      %v993 = vrot.slane %v991, 4
      %v994 = vor.u32 %v993, %v989
      %v995 = vrot.slane %v994, 4
      %v997 = vshll.u32 %v865, 16
      %v999 = vrot.slane %v997, 5
      %v1000 = vsel %vm904, %v995, %v999
      %v1002 = vshrl.u32 %v866, 16
      %v1004 = vrot.slane %v1002, 4
      %v1005 = vshll.u32 %v866, 16
      %v1007 = vrot.slane %v1005, 5
      %v1008 = vor.u32 %v1004, %v1007
      %v1009 = vrot.slane %v1008, 4
      %v1011 = vshll.u32 %v867, 16
      %v1013 = vrot.slane %v1011, 5
      %v1014 = vsel %vm904, %v1009, %v1013
      %v1015 = vshrl.u32 %v867, 16
      %v1017 = vrot.slane %v1015, 4
      %v1018 = vor.u32 %v1017, %v1013
      %v1019 = vrot.slane %v1018, 4
      %v1021 = vshll.u32 %v868, 16
      %v1023 = vrot.slane %v1021, 5
      %v1024 = vsel %vm904, %v1019, %v1023
      %v1026 = vshrl.u32 %v869, 16
      %v1028 = vrot.slane %v1026, 4
      %v1029 = vshll.u32 %v869, 16
      %v1031 = vrot.slane %v1029, 5
      %v1032 = vor.u32 %v1028, %v1031
      %v1033 = vrot.slane %v1032, 4
      %v1035 = vshll.u32 %v870, 16
      %v1037 = vrot.slane %v1035, 5
      %v1038 = vsel %vm904, %v1033, %v1037
      %v1039 = vshrl.u32 %v870, 16
      %v1041 = vrot.slane %v1039, 4
      %v1042 = vor.u32 %v1041, %v1037
      %v1043 = vrot.slane %v1042, 4
      %v1045 = vshll.u32 %v871, 16
      %v1047 = vrot.slane %v1045, 5
      %v1048 = vsel %vm904, %v1043, %v1047
      %v1050 = vshrl.u32 %v872, 16
      %v1052 = vrot.slane %v1050, 4
      %v1053 = vshll.u32 %v872, 16
      %v1055 = vrot.slane %v1053, 5
      %v1056 = vor.u32 %v1052, %v1055
      %v1057 = vrot.slane %v1056, 4
      %v1059 = vshll.u32 %v873, 16
      %v1061 = vrot.slane %v1059, 5
      %v1062 = vsel %vm904, %v1057, %v1061
      %v1063 = vshrl.u32 %v873, 16
      %v1065 = vrot.slane %v1063, 4
      %v1066 = vor.u32 %v1065, %v1061
      %v1067 = vrot.slane %v1066, 4
      %v1069 = vshll.u32 %v874, 16
      %v1071 = vrot.slane %v1069, 5
      %v1072 = vsel %vm904, %v1067, %v1071
      %v1074 = vshrl.u32 %v875, 16
      %v1076 = vrot.slane %v1074, 4
      %v1077 = vshll.u32 %v875, 16
      %v1079 = vrot.slane %v1077, 5
      %v1080 = vor.u32 %v1076, %v1079
      %v1081 = vrot.slane %v1080, 4
      %v1083 = vshll.u32 %v876, 16
      %v1085 = vrot.slane %v1083, 5
      %v1086 = vsel %vm904, %v1081, %v1085
      %v1087 = vshrl.u32 %v876, 16
      %v1089 = vrot.slane %v1087, 4
      %v1090 = vor.u32 %v1089, %v1085
      %v1091 = vrot.slane %v1090, 4
      %v1093 = vshll.u32 %v877, 16
      %v1095 = vrot.slane %v1093, 5
      %v1096 = vsel %vm904, %v1091, %v1095
      %v1098 = vshrl.u32 %v878, 16
      %v1100 = vrot.slane %v1098, 4
      %v1101 = vshll.u32 %v878, 16
      %v1103 = vrot.slane %v1101, 5
      %v1104 = vor.u32 %v1100, %v1103
      %v1105 = vrot.slane %v1104, 4
      %v1107 = vshll.u32 %v879, 16
      %v1109 = vrot.slane %v1107, 5
      %v1110 = vsel %vm904, %v1105, %v1109
      %v1111 = vshrl.u32 %v879, 16
      %v1113 = vrot.slane %v1111, 4
      %v1114 = vor.u32 %v1113, %v1109
      %v1115 = vrot.slane %v1114, 4
      %v1117 = vshll.u32 %v880, 16
      %v1119 = vrot.slane %v1117, 5
      %v1120 = vsel %vm904, %v1115, %v1119
      %v1122 = vshrl.u32 %v881, 16
      %v1124 = vrot.slane %v1122, 4
      %v1125 = vshll.u32 %v881, 16
      %v1127 = vrot.slane %v1125, 5
      %v1128 = vor.u32 %v1124, %v1127
      %v1129 = vrot.slane %v1128, 4
      %v1131 = vshll.u32 %v882, 16
      %v1133 = vrot.slane %v1131, 5
      %v1134 = vsel %vm904, %v1129, %v1133
      %v1135 = vshrl.u32 %v882, 16
      %v1137 = vrot.slane %v1135, 4
      %v1138 = vor.u32 %v1137, %v1133
      %v1139 = vrot.slane %v1138, 4
      %v1141 = vshll.u32 %v883, 16
      %v1143 = vrot.slane %v1141, 5
      %v1144 = vsel %vm904, %v1139, %v1143
      %v1146 = vshrl.u32 %v884, 16
      %v1148 = vrot.slane %v1146, 4
      %v1149 = vshll.u32 %v884, 16
      %v1151 = vrot.slane %v1149, 5
      %v1152 = vor.u32 %v1148, %v1151
      %v1153 = vrot.slane %v1152, 4
      %v1155 = vshll.u32 %v885, 16
      %v1157 = vrot.slane %v1155, 5
      %v1158 = vsel %vm904, %v1153, %v1157
      %v1159 = vshrl.u32 %v885, 16
      %v1161 = vrot.slane %v1159, 4
      %v1162 = vor.u32 %v1161, %v1157
      %v1163 = vrot.slane %v1162, 4
      %v1165 = vshll.u32 %v886, 16
      %v1167 = vrot.slane %v1165, 5
      %v1168 = vsel %vm904, %v1163, %v1167
      %v1170 = vshrl.u32 %v887, 16
      %v1172 = vrot.slane %v1170, 4
      %v1173 = vshll.u32 %v887, 16
      %v1175 = vrot.slane %v1173, 5
      %v1176 = vor.u32 %v1172, %v1175
      %v1177 = vrot.slane %v1176, 4
      %v1179 = vshll.u32 %v888, 16
      %v1181 = vrot.slane %v1179, 5
      %v1182 = vsel %vm904, %v1177, %v1181
      %v1183 = vshrl.u32 %v888, 16
      %v1185 = vrot.slane %v1183, 4
      %v1186 = vor.u32 %v1185, %v1181
      %v1187 = vrot.slane %v1186, 4
      %v1189 = vshll.u32 %v889, 16
      %v1191 = vrot.slane %v1189, 5
      %v1192 = vsel %vm904, %v1187, %v1191
      %v1194 = vshrl.u32 %v890, 16
      %v1196 = vrot.slane %v1194, 4
      %v1197 = vshll.u32 %v890, 16
      %v1199 = vrot.slane %v1197, 5
      %v1200 = vor.u32 %v1196, %v1199
      %v1201 = vrot.slane %v1200, 4
      %v1203 = vshll.u32 %v891, 16
      %v1205 = vrot.slane %v1203, 5
      %v1206 = vsel %vm904, %v1201, %v1205
      %v1207 = vshrl.u32 %v891, 16
      %v1209 = vrot.slane %v1207, 4
      %v1210 = vor.u32 %v1209, %v1205
      %v1211 = vrot.slane %v1210, 4
      %v1213 = vshll.u32 %v892, 16
      %v1215 = vrot.slane %v1213, 5
      %v1216 = vsel %vm904, %v1211, %v1215
      %v1218 = vshrl.u32 %v893, 16
      %v1220 = vrot.slane %v1218, 4
      %v1221 = vshll.u32 %v893, 16
      %v1223 = vrot.slane %v1221, 5
      %v1224 = vor.u32 %v1220, %v1223
      %v1225 = vrot.slane %v1224, 4
      %v1227 = vshll.u32 %v894, 16
      %v1229 = vrot.slane %v1227, 5
      %v1230 = vsel %vm904, %v1225, %v1229
      %v1231 = vshrl.u32 %v894, 16
      %v1233 = vrot.slane %v1231, 4
      %v1234 = vor.u32 %v1233, %v1229
      %v1235 = vrot.slane %v1234, 4
      %v1237 = vshll.u32 %v895, 16
      %v1239 = vrot.slane %v1237, 5
      %v1240 = vsel %vm904, %v1235, %v1239
      %v1242 = vshrl.u32 %v896, 16
      %v1244 = vrot.slane %v1242, 4
      %v1245 = vshll.u32 %v896, 16
      %v1247 = vrot.slane %v1245, 5
      %v1248 = vor.u32 %v1244, %v1247
      %v1249 = vrot.slane %v1248, 4
      %v1251 = vshll.u32 %v897, 16
      %v1253 = vrot.slane %v1251, 5
      %v1254 = vsel %vm904, %v1249, %v1253
      %v1255 = vshrl.u32 %v897, 16
      %v1257 = vrot.slane %v1255, 4
      %v1258 = vor.u32 %v1257, %v1253
      %v1259 = vrot.slane %v1258, 4
      %v1261 = vshll.u32 %v898, 16
      %v1263 = vrot.slane %v1261, 5
      %v1264 = vsel %vm904, %v1259, %v1263
      %v1266 = vshrl.u32 %v899, 16
      %v1268 = vrot.slane %v1266, 4
      %v1269 = vshll.u32 %v899, 16
      %v1271 = vrot.slane %v1269, 5
      %v1272 = vor.u32 %v1268, %v1271
      %v1273 = vrot.slane %v1272, 4
      %v1275 = vshll.u32 %v900, 16
      %v1277 = vrot.slane %v1275, 5
      %v1278 = vsel %vm904, %v1273, %v1277
      %v1279 = vshrl.u32 %v900, 16
      %v1281 = vrot.slane %v1279, 4
      %v1282 = vor.u32 %v1281, %v1277
      %v1283 = vrot.slane %v1282, 4
      %v1285 = vshll.u32 %v901, 16
      %v1287 = vrot.slane %v1285, 5
      %v1288 = vsel %vm904, %v1283, %v1287
      %1289 = vrot.lane.b32.xlu0 %v918, 8
      %v1290 = vpop.permute.xlu0 %1289
      %1291 = vrot.lane.b32.xlu0 %v928, 8
      %v1292 = vpop.permute.xlu0 %1291
      %1293 = vrot.lane.b32.xlu0 %v942, 8
      %v1294 = vpop.permute.xlu0 %1293
      %1295 = vrot.lane.b32.xlu0 %v952, 8
      %v1296 = vpop.permute.xlu0 %1295
      %1297 = vrot.lane.b32.xlu0 %v966, 8
      %v1298 = vpop.permute.xlu0 %1297
      %1299 = vrot.lane.b32.xlu0 %v976, 8
      %v1300 = vpop.permute.xlu0 %1299
      %1301 = vrot.lane.b32.xlu0 %v990, 8
      %v1302 = vpop.permute.xlu0 %1301
      %1303 = vrot.lane.b32.xlu0 %v1000, 8
      %v1304 = vpop.permute.xlu0 %1303
      %1305 = vrot.lane.b32.xlu0 %v1014, 8
      %v1306 = vpop.permute.xlu0 %1305
      %1307 = vrot.lane.b32.xlu0 %v1024, 8
      %v1308 = vpop.permute.xlu0 %1307
      %1309 = vrot.lane.b32.xlu0 %v1038, 8
      %v1310 = vpop.permute.xlu0 %1309
      %1311 = vrot.lane.b32.xlu0 %v1048, 8
      %v1312 = vpop.permute.xlu0 %1311
      %1313 = vrot.lane.b32.xlu0 %v1062, 8
      %v1314 = vpop.permute.xlu0 %1313
      %1315 = vrot.lane.b32.xlu0 %v1072, 8
      %v1316 = vpop.permute.xlu0 %1315
      %1317 = vrot.lane.b32.xlu0 %v1086, 8
      %v1318 = vpop.permute.xlu0 %1317
      %1319 = vrot.lane.b32.xlu0 %v1096, 8
      %v1320 = vpop.permute.xlu0 %1319
      %1321 = vrot.lane.b32.xlu0 %v1110, 8
      %v1322 = vpop.permute.xlu0 %1321
      %1323 = vrot.lane.b32.xlu0 %v1120, 8
      %v1324 = vpop.permute.xlu0 %1323
      %1325 = vrot.lane.b32.xlu0 %v1134, 8
      %v1326 = vpop.permute.xlu0 %1325
      %1327 = vrot.lane.b32.xlu0 %v1144, 8
      %v1328 = vpop.permute.xlu0 %1327
      %1329 = vrot.lane.b32.xlu0 %v1158, 8
      %v1330 = vpop.permute.xlu0 %1329
      %1331 = vrot.lane.b32.xlu0 %v1168, 8
      %v1332 = vpop.permute.xlu0 %1331
      %1333 = vrot.lane.b32.xlu0 %v1182, 8
      %v1334 = vpop.permute.xlu0 %1333
      %1335 = vrot.lane.b32.xlu0 %v1192, 8
      %v1336 = vpop.permute.xlu0 %1335
      %1337 = vrot.lane.b32.xlu0 %v1206, 8
      %v1338 = vpop.permute.xlu0 %1337
      %1339 = vrot.lane.b32.xlu0 %v1216, 8
      %v1340 = vpop.permute.xlu0 %1339
      %1341 = vrot.lane.b32.xlu0 %v1230, 8
      %v1342 = vpop.permute.xlu0 %1341
      %1343 = vrot.lane.b32.xlu0 %v1240, 8
      %v1344 = vpop.permute.xlu0 %1343
      %1345 = vrot.lane.b32.xlu0 %v1254, 8
      %v1346 = vpop.permute.xlu0 %1345
      %1347 = vrot.lane.b32.xlu0 %v1264, 8
      %v1348 = vpop.permute.xlu0 %1347
      %1349 = vrot.lane.b32.xlu0 %v1278, 8
      %v1350 = vpop.permute.xlu0 %1349
      %1351 = vrot.lane.b32.xlu0 %v1288, 8
      %v1352 = vpop.permute.xlu0 %1351
      %vm1385 = vcmask 126016
      %1386 = vst.msk [vmem:[#allocation3] sm:$0xf] %vm1385, %v1290
      %1387 = vst.msk [vmem:[#allocation3 + $0x4] sm:$0xf] %vm1385, %v1292
      %1388 = vst.msk [vmem:[#allocation3 + $0x8] sm:$0xf] %vm1385, %v1294
      %1389 = vst.msk [vmem:[#allocation3 + $0xc] sm:$0xf] %vm1385, %v1296
      %1390 = vst.msk [vmem:[#allocation3 + $0x10] sm:$0xf] %vm1385, %v1298
      %1391 = vst.msk [vmem:[#allocation3 + $0x14] sm:$0xf] %vm1385, %v1300
      %1392 = vst.msk [vmem:[#allocation3 + $0x18] sm:$0xf] %vm1385, %v1302
      %1393 = vst.msk [vmem:[#allocation3 + $0x1c] sm:$0xf] %vm1385, %v1304
      %1394 = vst.msk [vmem:[#allocation3 + $0x20] sm:$0xf] %vm1385, %v1306
      %1395 = vst.msk [vmem:[#allocation3 + $0x24] sm:$0xf] %vm1385, %v1308
      %1396 = vst.msk [vmem:[#allocation3 + $0x28] sm:$0xf] %vm1385, %v1310
      %1397 = vst.msk [vmem:[#allocation3 + $0x2c] sm:$0xf] %vm1385, %v1312
      %1398 = vst.msk [vmem:[#allocation3 + $0x30] sm:$0xf] %vm1385, %v1314
      %1399 = vst.msk [vmem:[#allocation3 + $0x34] sm:$0xf] %vm1385, %v1316
      %1400 = vst.msk [vmem:[#allocation3 + $0x38] sm:$0xf] %vm1385, %v1318
      %1401 = vst.msk [vmem:[#allocation3 + $0x3c] sm:$0xf] %vm1385, %v1320
      %1402 = vst.msk [vmem:[#allocation3 + $0x40] sm:$0xf] %vm1385, %v1322
      %1403 = vst.msk [vmem:[#allocation3 + $0x44] sm:$0xf] %vm1385, %v1324
      %1404 = vst.msk [vmem:[#allocation3 + $0x48] sm:$0xf] %vm1385, %v1326
      %1405 = vst.msk [vmem:[#allocation3 + $0x4c] sm:$0xf] %vm1385, %v1328
      %1406 = vst.msk [vmem:[#allocation3 + $0x50] sm:$0xf] %vm1385, %v1330
      %1407 = vst.msk [vmem:[#allocation3 + $0x54] sm:$0xf] %vm1385, %v1332
      %1408 = vst.msk [vmem:[#allocation3 + $0x58] sm:$0xf] %vm1385, %v1334
      %1409 = vst.msk [vmem:[#allocation3 + $0x5c] sm:$0xf] %vm1385, %v1336
      %1410 = vst.msk [vmem:[#allocation3 + $0x60] sm:$0xf] %vm1385, %v1338
      %1411 = vst.msk [vmem:[#allocation3 + $0x64] sm:$0xf] %vm1385, %v1340
      %1412 = vst.msk [vmem:[#allocation3 + $0x68] sm:$0xf] %vm1385, %v1342
      %1413 = vst.msk [vmem:[#allocation3 + $0x6c] sm:$0xf] %vm1385, %v1344
      %1414 = vst.msk [vmem:[#allocation3 + $0x70] sm:$0xf] %vm1385, %v1346
      %1415 = vst.msk [vmem:[#allocation3 + $0x74] sm:$0xf] %vm1385, %v1348
      %1416 = vst.msk [vmem:[#allocation3 + $0x78] sm:$0xf] %vm1385, %v1350
      %1417 = vst.msk [vmem:[#allocation3 + $0x7c] sm:$0xf] %vm1385, %v1352
      %v1418 = vld [vmem:[#allocation2] sm:$0xe]
      %v1419 = vld [vmem:[#allocation2 + $0x4] sm:$0xf]
      %v1420 = vld [vmem:[#allocation2 + $0x8] sm:$0x1]
      %v1421 = vld [vmem:[#allocation2 + $0xc] sm:$0xe]
      %v1422 = vld [vmem:[#allocation2 + $0x10] sm:$0xf]
      %v1423 = vld [vmem:[#allocation2 + $0x14] sm:$0x1]
      %v1424 = vld [vmem:[#allocation2 + $0x18] sm:$0xe]
      %v1425 = vld [vmem:[#allocation2 + $0x1c] sm:$0xf]
      %v1426 = vld [vmem:[#allocation2 + $0x20] sm:$0x1]
      %v1427 = vld [vmem:[#allocation2 + $0x24] sm:$0xe]
      %v1428 = vld [vmem:[#allocation2 + $0x28] sm:$0xf]
      %v1429 = vld [vmem:[#allocation2 + $0x2c] sm:$0x1]
      %v1430 = vld [vmem:[#allocation2 + $0x30] sm:$0xe]
      %v1431 = vld [vmem:[#allocation2 + $0x34] sm:$0xf]
      %v1432 = vld [vmem:[#allocation2 + $0x38] sm:$0x1]
      %v1433 = vld [vmem:[#allocation2 + $0x3c] sm:$0xe]
      %v1434 = vld [vmem:[#allocation2 + $0x40] sm:$0xf]
      %v1435 = vld [vmem:[#allocation2 + $0x44] sm:$0x1]
      %v1436 = vld [vmem:[#allocation2 + $0x48] sm:$0xe]
      %v1437 = vld [vmem:[#allocation2 + $0x4c] sm:$0xf]
      %v1438 = vld [vmem:[#allocation2 + $0x50] sm:$0x1]
      %v1439 = vld [vmem:[#allocation2 + $0x54] sm:$0xe]
      %v1440 = vld [vmem:[#allocation2 + $0x58] sm:$0xf]
      %v1441 = vld [vmem:[#allocation2 + $0x5c] sm:$0x1]
      %v1442 = vld [vmem:[#allocation2 + $0x60] sm:$0xe]
      %v1443 = vld [vmem:[#allocation2 + $0x64] sm:$0xf]
      %v1444 = vld [vmem:[#allocation2 + $0x68] sm:$0x1]
      %v1445 = vld [vmem:[#allocation2 + $0x6c] sm:$0xe]
      %v1446 = vld [vmem:[#allocation2 + $0x70] sm:$0xf]
      %v1447 = vld [vmem:[#allocation2 + $0x74] sm:$0x1]
      %v1448 = vld [vmem:[#allocation2 + $0x78] sm:$0xe]
      %v1449 = vld [vmem:[#allocation2 + $0x7c] sm:$0xf]
      %v1450 = vld [vmem:[#allocation2 + $0x80] sm:$0x1]
      %v1451 = vld [vmem:[#allocation2 + $0x84] sm:$0xe]
      %v1452 = vld [vmem:[#allocation2 + $0x88] sm:$0xf]
      %v1453 = vld [vmem:[#allocation2 + $0x8c] sm:$0x1]
      %v1454 = vld [vmem:[#allocation2 + $0x90] sm:$0xe]
      %v1455 = vld [vmem:[#allocation2 + $0x94] sm:$0xf]
      %v1456 = vld [vmem:[#allocation2 + $0x98] sm:$0x1]
      %v1457 = vld [vmem:[#allocation2 + $0x9c] sm:$0xe]
      %v1458 = vld [vmem:[#allocation2 + $0xa0] sm:$0xf]
      %v1459 = vld [vmem:[#allocation2 + $0xa4] sm:$0x1]
      %v1460 = vld [vmem:[#allocation2 + $0xa8] sm:$0xe]
      %v1461 = vld [vmem:[#allocation2 + $0xac] sm:$0xf]
      %v1462 = vld [vmem:[#allocation2 + $0xb0] sm:$0x1]
      %v1463 = vld [vmem:[#allocation2 + $0xb4] sm:$0xe]
      %v1464 = vld [vmem:[#allocation2 + $0xb8] sm:$0xf]
      %v1465 = vld [vmem:[#allocation2 + $0xbc] sm:$0x1]
      %vm1514 = vcmask 1042432
      %vm1515 = vcmask 1046532
      %vm1516 = vmor %vm1514, %vm1515
      %v1517 = vrot.slane %v1418, 5
      %v1518 = vrot.slane %v1517, 4
      %v1519 = vrot.slane %v1419, 5
      %v1520 = vsel %vm1516, %v1518, %v1519
      %v1521 = vrot.slane %v1519, 4
      %v1522 = vrot.slane %v1420, 5
      %v1523 = vsel %vm1516, %v1521, %v1522
      %v1524 = vrot.slane %v1421, 5
      %v1525 = vrot.slane %v1524, 4
      %v1526 = vrot.slane %v1422, 5
      %v1527 = vsel %vm1516, %v1525, %v1526
      %v1528 = vrot.slane %v1526, 4
      %v1529 = vrot.slane %v1423, 5
      %v1530 = vsel %vm1516, %v1528, %v1529
      %v1531 = vrot.slane %v1424, 5
      %v1532 = vrot.slane %v1531, 4
      %v1533 = vrot.slane %v1425, 5
      %v1534 = vsel %vm1516, %v1532, %v1533
      %v1535 = vrot.slane %v1533, 4
      %v1536 = vrot.slane %v1426, 5
      %v1537 = vsel %vm1516, %v1535, %v1536
      %v1538 = vrot.slane %v1427, 5
      %v1539 = vrot.slane %v1538, 4
      %v1540 = vrot.slane %v1428, 5
      %v1541 = vsel %vm1516, %v1539, %v1540
      %v1542 = vrot.slane %v1540, 4
      %v1543 = vrot.slane %v1429, 5
      %v1544 = vsel %vm1516, %v1542, %v1543
      %v1545 = vrot.slane %v1430, 5
      %v1546 = vrot.slane %v1545, 4
      %v1547 = vrot.slane %v1431, 5
      %v1548 = vsel %vm1516, %v1546, %v1547
      %v1549 = vrot.slane %v1547, 4
      %v1550 = vrot.slane %v1432, 5
      %v1551 = vsel %vm1516, %v1549, %v1550
      %v1552 = vrot.slane %v1433, 5
      %v1553 = vrot.slane %v1552, 4
      %v1554 = vrot.slane %v1434, 5
      %v1555 = vsel %vm1516, %v1553, %v1554
      %v1556 = vrot.slane %v1554, 4
      %v1557 = vrot.slane %v1435, 5
      %v1558 = vsel %vm1516, %v1556, %v1557
      %v1559 = vrot.slane %v1436, 5
      %v1560 = vrot.slane %v1559, 4
      %v1561 = vrot.slane %v1437, 5
      %v1562 = vsel %vm1516, %v1560, %v1561
      %v1563 = vrot.slane %v1561, 4
      %v1564 = vrot.slane %v1438, 5
      %v1565 = vsel %vm1516, %v1563, %v1564
      %v1566 = vrot.slane %v1439, 5
      %v1567 = vrot.slane %v1566, 4
      %v1568 = vrot.slane %v1440, 5
      %v1569 = vsel %vm1516, %v1567, %v1568
      %v1570 = vrot.slane %v1568, 4
      %v1571 = vrot.slane %v1441, 5
      %v1572 = vsel %vm1516, %v1570, %v1571
      %v1573 = vrot.slane %v1442, 5
      %v1574 = vrot.slane %v1573, 4
      %v1575 = vrot.slane %v1443, 5
      %v1576 = vsel %vm1516, %v1574, %v1575
      %v1577 = vrot.slane %v1575, 4
      %v1578 = vrot.slane %v1444, 5
      %v1579 = vsel %vm1516, %v1577, %v1578
      %v1580 = vrot.slane %v1445, 5
      %v1581 = vrot.slane %v1580, 4
      %v1582 = vrot.slane %v1446, 5
      %v1583 = vsel %vm1516, %v1581, %v1582
      %v1584 = vrot.slane %v1582, 4
      %v1585 = vrot.slane %v1447, 5
      %v1586 = vsel %vm1516, %v1584, %v1585
      %v1587 = vrot.slane %v1448, 5
      %v1588 = vrot.slane %v1587, 4
      %v1589 = vrot.slane %v1449, 5
      %v1590 = vsel %vm1516, %v1588, %v1589
      %v1591 = vrot.slane %v1589, 4
      %v1592 = vrot.slane %v1450, 5
      %v1593 = vsel %vm1516, %v1591, %v1592
      %v1594 = vrot.slane %v1451, 5
      %v1595 = vrot.slane %v1594, 4
      %v1596 = vrot.slane %v1452, 5
      %v1597 = vsel %vm1516, %v1595, %v1596
      %v1598 = vrot.slane %v1596, 4
      %v1599 = vrot.slane %v1453, 5
      %v1600 = vsel %vm1516, %v1598, %v1599
      %v1601 = vrot.slane %v1454, 5
      %v1602 = vrot.slane %v1601, 4
      %v1603 = vrot.slane %v1455, 5
      %v1604 = vsel %vm1516, %v1602, %v1603
      %v1605 = vrot.slane %v1603, 4
      %v1606 = vrot.slane %v1456, 5
      %v1607 = vsel %vm1516, %v1605, %v1606
      %v1608 = vrot.slane %v1457, 5
      %v1609 = vrot.slane %v1608, 4
      %v1610 = vrot.slane %v1458, 5
      %v1611 = vsel %vm1516, %v1609, %v1610
      %v1612 = vrot.slane %v1610, 4
      %v1613 = vrot.slane %v1459, 5
      %v1614 = vsel %vm1516, %v1612, %v1613
      %v1615 = vrot.slane %v1460, 5
      %v1616 = vrot.slane %v1615, 4
      %v1617 = vrot.slane %v1461, 5
      %v1618 = vsel %vm1516, %v1616, %v1617
      %v1619 = vrot.slane %v1617, 4
      %v1620 = vrot.slane %v1462, 5
      %v1621 = vsel %vm1516, %v1619, %v1620
      %v1622 = vrot.slane %v1463, 5
      %v1623 = vrot.slane %v1622, 4
      %v1624 = vrot.slane %v1464, 5
      %v1625 = vsel %vm1516, %v1623, %v1624
      %v1626 = vrot.slane %v1624, 4
      %v1627 = vrot.slane %v1465, 5
      %v1628 = vsel %vm1516, %v1626, %v1627
      %1629 = vrot.lane.b32.xlu0 %v1520, 16
      %v1630 = vpop.permute.xlu0 %1629
      %1631 = vrot.lane.b32.xlu0 %v1523, 16
      %v1632 = vpop.permute.xlu0 %1631
      %1633 = vrot.lane.b32.xlu0 %v1527, 16
      %v1634 = vpop.permute.xlu0 %1633
      %1635 = vrot.lane.b32.xlu0 %v1530, 16
      %v1636 = vpop.permute.xlu0 %1635
      %1637 = vrot.lane.b32.xlu0 %v1534, 16
      %v1638 = vpop.permute.xlu0 %1637
      %1639 = vrot.lane.b32.xlu0 %v1537, 16
      %v1640 = vpop.permute.xlu0 %1639
      %1641 = vrot.lane.b32.xlu0 %v1541, 16
      %v1642 = vpop.permute.xlu0 %1641
      %1643 = vrot.lane.b32.xlu0 %v1544, 16
      %v1644 = vpop.permute.xlu0 %1643
      %1645 = vrot.lane.b32.xlu0 %v1548, 16
      %v1646 = vpop.permute.xlu0 %1645
      %1647 = vrot.lane.b32.xlu0 %v1551, 16
      %v1648 = vpop.permute.xlu0 %1647
      %1649 = vrot.lane.b32.xlu0 %v1555, 16
      %v1650 = vpop.permute.xlu0 %1649
      %1651 = vrot.lane.b32.xlu0 %v1558, 16
      %v1652 = vpop.permute.xlu0 %1651
      %1653 = vrot.lane.b32.xlu0 %v1562, 16
      %v1654 = vpop.permute.xlu0 %1653
      %1655 = vrot.lane.b32.xlu0 %v1565, 16
      %v1656 = vpop.permute.xlu0 %1655
      %1657 = vrot.lane.b32.xlu0 %v1569, 16
      %v1658 = vpop.permute.xlu0 %1657
      %1659 = vrot.lane.b32.xlu0 %v1572, 16
      %v1660 = vpop.permute.xlu0 %1659
      %1661 = vrot.lane.b32.xlu0 %v1576, 16
      %v1662 = vpop.permute.xlu0 %1661
      %1663 = vrot.lane.b32.xlu0 %v1579, 16
      %v1664 = vpop.permute.xlu0 %1663
      %1665 = vrot.lane.b32.xlu0 %v1583, 16
      %v1666 = vpop.permute.xlu0 %1665
      %1667 = vrot.lane.b32.xlu0 %v1586, 16
      %v1668 = vpop.permute.xlu0 %1667
      %1669 = vrot.lane.b32.xlu0 %v1590, 16
      %v1670 = vpop.permute.xlu0 %1669
      %1671 = vrot.lane.b32.xlu0 %v1593, 16
      %v1672 = vpop.permute.xlu0 %1671
      %1673 = vrot.lane.b32.xlu0 %v1597, 16
      %v1674 = vpop.permute.xlu0 %1673
      %1675 = vrot.lane.b32.xlu0 %v1600, 16
      %v1676 = vpop.permute.xlu0 %1675
      %1677 = vrot.lane.b32.xlu0 %v1604, 16
      %v1678 = vpop.permute.xlu0 %1677
      %1679 = vrot.lane.b32.xlu0 %v1607, 16
      %v1680 = vpop.permute.xlu0 %1679
      %1681 = vrot.lane.b32.xlu0 %v1611, 16
      %v1682 = vpop.permute.xlu0 %1681
      %1683 = vrot.lane.b32.xlu0 %v1614, 16
      %v1684 = vpop.permute.xlu0 %1683
      %1685 = vrot.lane.b32.xlu0 %v1618, 16
      %v1686 = vpop.permute.xlu0 %1685
      %1687 = vrot.lane.b32.xlu0 %v1621, 16
      %v1688 = vpop.permute.xlu0 %1687
      %1689 = vrot.lane.b32.xlu0 %v1625, 16
      %v1690 = vpop.permute.xlu0 %1689
      %1691 = vrot.lane.b32.xlu0 %v1628, 16
      %v1692 = vpop.permute.xlu0 %1691
      %vm1725 = vcmask 191616
      %1726 = vst.msk [vmem:[#allocation3] sm:$0xf] %vm1725, %v1630
      %1727 = vst.msk [vmem:[#allocation3 + $0x4] sm:$0xf] %vm1725, %v1632
      %1728 = vst.msk [vmem:[#allocation3 + $0x8] sm:$0xf] %vm1725, %v1634
      %1729 = vst.msk [vmem:[#allocation3 + $0xc] sm:$0xf] %vm1725, %v1636
      %1730 = vst.msk [vmem:[#allocation3 + $0x10] sm:$0xf] %vm1725, %v1638
      %1731 = vst.msk [vmem:[#allocation3 + $0x14] sm:$0xf] %vm1725, %v1640
      %1732 = vst.msk [vmem:[#allocation3 + $0x18] sm:$0xf] %vm1725, %v1642
      %1733 = vst.msk [vmem:[#allocation3 + $0x1c] sm:$0xf] %vm1725, %v1644
      %1734 = vst.msk [vmem:[#allocation3 + $0x20] sm:$0xf] %vm1725, %v1646
      %1735 = vst.msk [vmem:[#allocation3 + $0x24] sm:$0xf] %vm1725, %v1648
      %1736 = vst.msk [vmem:[#allocation3 + $0x28] sm:$0xf] %vm1725, %v1650
      %1737 = vst.msk [vmem:[#allocation3 + $0x2c] sm:$0xf] %vm1725, %v1652
      %1738 = vst.msk [vmem:[#allocation3 + $0x30] sm:$0xf] %vm1725, %v1654
      %1739 = vst.msk [vmem:[#allocation3 + $0x34] sm:$0xf] %vm1725, %v1656
      %1740 = vst.msk [vmem:[#allocation3 + $0x38] sm:$0xf] %vm1725, %v1658
      %1741 = vst.msk [vmem:[#allocation3 + $0x3c] sm:$0xf] %vm1725, %v1660
      %1742 = vst.msk [vmem:[#allocation3 + $0x40] sm:$0xf] %vm1725, %v1662
      %1743 = vst.msk [vmem:[#allocation3 + $0x44] sm:$0xf] %vm1725, %v1664
      %1744 = vst.msk [vmem:[#allocation3 + $0x48] sm:$0xf] %vm1725, %v1666
      %1745 = vst.msk [vmem:[#allocation3 + $0x4c] sm:$0xf] %vm1725, %v1668
      %1746 = vst.msk [vmem:[#allocation3 + $0x50] sm:$0xf] %vm1725, %v1670
      %1747 = vst.msk [vmem:[#allocation3 + $0x54] sm:$0xf] %vm1725, %v1672
      %1748 = vst.msk [vmem:[#allocation3 + $0x58] sm:$0xf] %vm1725, %v1674
      %1749 = vst.msk [vmem:[#allocation3 + $0x5c] sm:$0xf] %vm1725, %v1676
      %1750 = vst.msk [vmem:[#allocation3 + $0x60] sm:$0xf] %vm1725, %v1678
      %1751 = vst.msk [vmem:[#allocation3 + $0x64] sm:$0xf] %vm1725, %v1680
      %1752 = vst.msk [vmem:[#allocation3 + $0x68] sm:$0xf] %vm1725, %v1682
      %1753 = vst.msk [vmem:[#allocation3 + $0x6c] sm:$0xf] %vm1725, %v1684
      %1754 = vst.msk [vmem:[#allocation3 + $0x70] sm:$0xf] %vm1725, %v1686
      %1755 = vst.msk [vmem:[#allocation3 + $0x74] sm:$0xf] %vm1725, %v1688
      %1756 = vst.msk [vmem:[#allocation3 + $0x78] sm:$0xf] %vm1725, %v1690
      %1757 = vst.msk [vmem:[#allocation3 + $0x7c] sm:$0xf] %vm1725, %v1692
      %v1758 = vld [vmem:[%s675] sm:$0xf]
      %v1759 = vld [vmem:[%s675 + $0x4] sm:$0xf]
      %v1760 = vld [vmem:[%s675 + $0xc] sm:$0xf]
      %v1761 = vld [vmem:[%s675 + $0x10] sm:$0xf]
      %v1762 = vld [vmem:[%s675 + $0x18] sm:$0xf]
      %v1763 = vld [vmem:[%s675 + $0x1c] sm:$0xf]
      %v1764 = vld [vmem:[%s675 + $0x24] sm:$0xf]
      %v1765 = vld [vmem:[%s675 + $0x28] sm:$0xf]
      %v1766 = vld [vmem:[%s675 + $0x30] sm:$0xf]
      %v1767 = vld [vmem:[%s675 + $0x34] sm:$0xf]
      %v1768 = vld [vmem:[%s675 + $0x3c] sm:$0xf]
      %v1769 = vld [vmem:[%s675 + $0x40] sm:$0xf]
      %v1770 = vld [vmem:[%s675 + $0x48] sm:$0xf]
      %v1771 = vld [vmem:[%s675 + $0x4c] sm:$0xf]
      %v1772 = vld [vmem:[%s675 + $0x54] sm:$0xf]
      %v1773 = vld [vmem:[%s675 + $0x58] sm:$0xf]
      %v1774 = vld [vmem:[%s675 + $0x60] sm:$0xf]
      %v1775 = vld [vmem:[%s675 + $0x64] sm:$0xf]
      %v1776 = vld [vmem:[%s675 + $0x6c] sm:$0xf]
      %v1777 = vld [vmem:[%s675 + $0x70] sm:$0xf]
      %v1778 = vld [vmem:[%s675 + $0x78] sm:$0xf]
      %v1779 = vld [vmem:[%s675 + $0x7c] sm:$0xf]
      %v1780 = vld [vmem:[%s675 + $0x84] sm:$0xf]
      %v1781 = vld [vmem:[%s675 + $0x88] sm:$0xf]
      %v1782 = vld [vmem:[%s675 + $0x90] sm:$0xf]
      %v1783 = vld [vmem:[%s675 + $0x94] sm:$0xf]
      %v1784 = vld [vmem:[%s675 + $0x9c] sm:$0xf]
      %v1785 = vld [vmem:[%s675 + $0xa0] sm:$0xf]
      %v1786 = vld [vmem:[%s675 + $0xa8] sm:$0xf]
      %v1787 = vld [vmem:[%s675 + $0xac] sm:$0xf]
      %v1788 = vld [vmem:[%s675 + $0xb4] sm:$0xf]
      %v1789 = vld [vmem:[%s675 + $0xb8] sm:$0xf]
      %1822 = vrot.lane.b32.xlu0 %v1758, 24
      %v1823 = vpop.permute.xlu0 %1822
      %1824 = vrot.lane.b32.xlu0 %v1759, 24
      %v1825 = vpop.permute.xlu0 %1824
      %1826 = vrot.lane.b32.xlu0 %v1760, 24
      %v1827 = vpop.permute.xlu0 %1826
      %1828 = vrot.lane.b32.xlu0 %v1761, 24
      %v1829 = vpop.permute.xlu0 %1828
      %1830 = vrot.lane.b32.xlu0 %v1762, 24
      %v1831 = vpop.permute.xlu0 %1830
      %1832 = vrot.lane.b32.xlu0 %v1763, 24
      %v1833 = vpop.permute.xlu0 %1832
      %1834 = vrot.lane.b32.xlu0 %v1764, 24
      %v1835 = vpop.permute.xlu0 %1834
      %1836 = vrot.lane.b32.xlu0 %v1765, 24
      %v1837 = vpop.permute.xlu0 %1836
      %1838 = vrot.lane.b32.xlu0 %v1766, 24
      %v1839 = vpop.permute.xlu0 %1838
      %1840 = vrot.lane.b32.xlu0 %v1767, 24
      %v1841 = vpop.permute.xlu0 %1840
      %1842 = vrot.lane.b32.xlu0 %v1768, 24
      %v1843 = vpop.permute.xlu0 %1842
      %1844 = vrot.lane.b32.xlu0 %v1769, 24
      %v1845 = vpop.permute.xlu0 %1844
      %1846 = vrot.lane.b32.xlu0 %v1770, 24
      %v1847 = vpop.permute.xlu0 %1846
      %1848 = vrot.lane.b32.xlu0 %v1771, 24
      %v1849 = vpop.permute.xlu0 %1848
      %1850 = vrot.lane.b32.xlu0 %v1772, 24
      %v1851 = vpop.permute.xlu0 %1850
      %1852 = vrot.lane.b32.xlu0 %v1773, 24
      %v1853 = vpop.permute.xlu0 %1852
      %1854 = vrot.lane.b32.xlu0 %v1774, 24
      %v1855 = vpop.permute.xlu0 %1854
      %1856 = vrot.lane.b32.xlu0 %v1775, 24
      %v1857 = vpop.permute.xlu0 %1856
      %1858 = vrot.lane.b32.xlu0 %v1776, 24
      %v1859 = vpop.permute.xlu0 %1858
      %1860 = vrot.lane.b32.xlu0 %v1777, 24
      %v1861 = vpop.permute.xlu0 %1860
      %1862 = vrot.lane.b32.xlu0 %v1778, 24
      %v1863 = vpop.permute.xlu0 %1862
      %1864 = vrot.lane.b32.xlu0 %v1779, 24
      %v1865 = vpop.permute.xlu0 %1864
      %1866 = vrot.lane.b32.xlu0 %v1780, 24
      %v1867 = vpop.permute.xlu0 %1866
      %1868 = vrot.lane.b32.xlu0 %v1781, 24
      %v1869 = vpop.permute.xlu0 %1868
      %1870 = vrot.lane.b32.xlu0 %v1782, 24
      %v1871 = vpop.permute.xlu0 %1870
      %1872 = vrot.lane.b32.xlu0 %v1783, 24
      %v1873 = vpop.permute.xlu0 %1872
      %1874 = vrot.lane.b32.xlu0 %v1784, 24
      %v1875 = vpop.permute.xlu0 %1874
      %1876 = vrot.lane.b32.xlu0 %v1785, 24
      %v1877 = vpop.permute.xlu0 %1876
      %1878 = vrot.lane.b32.xlu0 %v1786, 24
      %v1879 = vpop.permute.xlu0 %1878
      %1880 = vrot.lane.b32.xlu0 %v1787, 24
      %v1881 = vpop.permute.xlu0 %1880
      %1882 = vrot.lane.b32.xlu0 %v1788, 24
      %v1883 = vpop.permute.xlu0 %1882
      %1884 = vrot.lane.b32.xlu0 %v1789, 24
      %v1885 = vpop.permute.xlu0 %1884
      %vm1918 = vcmask 257216
      %1919 = vst.msk [vmem:[#allocation3] sm:$0xf] %vm1918, %v1823
      %1920 = vst.msk [vmem:[#allocation3 + $0x4] sm:$0xf] %vm1918, %v1825
      %1921 = vst.msk [vmem:[#allocation3 + $0x8] sm:$0xf] %vm1918, %v1827
      %1922 = vst.msk [vmem:[#allocation3 + $0xc] sm:$0xf] %vm1918, %v1829
      %1923 = vst.msk [vmem:[#allocation3 + $0x10] sm:$0xf] %vm1918, %v1831
      %1924 = vst.msk [vmem:[#allocation3 + $0x14] sm:$0xf] %vm1918, %v1833
      %1925 = vst.msk [vmem:[#allocation3 + $0x18] sm:$0xf] %vm1918, %v1835
      %1926 = vst.msk [vmem:[#allocation3 + $0x1c] sm:$0xf] %vm1918, %v1837
      %1927 = vst.msk [vmem:[#allocation3 + $0x20] sm:$0xf] %vm1918, %v1839
      %1928 = vst.msk [vmem:[#allocation3 + $0x24] sm:$0xf] %vm1918, %v1841
      %1929 = vst.msk [vmem:[#allocation3 + $0x28] sm:$0xf] %vm1918, %v1843
      %1930 = vst.msk [vmem:[#allocation3 + $0x2c] sm:$0xf] %vm1918, %v1845
      %1931 = vst.msk [vmem:[#allocation3 + $0x30] sm:$0xf] %vm1918, %v1847
      %1932 = vst.msk [vmem:[#allocation3 + $0x34] sm:$0xf] %vm1918, %v1849
      %1933 = vst.msk [vmem:[#allocation3 + $0x38] sm:$0xf] %vm1918, %v1851
      %1934 = vst.msk [vmem:[#allocation3 + $0x3c] sm:$0xf] %vm1918, %v1853
      %1935 = vst.msk [vmem:[#allocation3 + $0x40] sm:$0xf] %vm1918, %v1855
      %1936 = vst.msk [vmem:[#allocation3 + $0x44] sm:$0xf] %vm1918, %v1857
      %1937 = vst.msk [vmem:[#allocation3 + $0x48] sm:$0xf] %vm1918, %v1859
      %1938 = vst.msk [vmem:[#allocation3 + $0x4c] sm:$0xf] %vm1918, %v1861
      %1939 = vst.msk [vmem:[#allocation3 + $0x50] sm:$0xf] %vm1918, %v1863
      %1940 = vst.msk [vmem:[#allocation3 + $0x54] sm:$0xf] %vm1918, %v1865
      %1941 = vst.msk [vmem:[#allocation3 + $0x58] sm:$0xf] %vm1918, %v1867
      %1942 = vst.msk [vmem:[#allocation3 + $0x5c] sm:$0xf] %vm1918, %v1869
      %1943 = vst.msk [vmem:[#allocation3 + $0x60] sm:$0xf] %vm1918, %v1871
      %1944 = vst.msk [vmem:[#allocation3 + $0x64] sm:$0xf] %vm1918, %v1873
      %1945 = vst.msk [vmem:[#allocation3 + $0x68] sm:$0xf] %vm1918, %v1875
      %1946 = vst.msk [vmem:[#allocation3 + $0x6c] sm:$0xf] %vm1918, %v1877
      %1947 = vst.msk [vmem:[#allocation3 + $0x70] sm:$0xf] %vm1918, %v1879
      %1948 = vst.msk [vmem:[#allocation3 + $0x74] sm:$0xf] %vm1918, %v1881
      %1949 = vst.msk [vmem:[#allocation3 + $0x78] sm:$0xf] %vm1918, %v1883
      %1950 = vst.msk [vmem:[#allocation3 + $0x7c] sm:$0xf] %vm1918, %v1885
      %v1951 = vld [vmem:[%s675] sm:$0xf]
      %v1952 = vld [vmem:[%s675 + $0x4] sm:$0xf]
      %v1953 = vld [vmem:[%s675 + $0x8] sm:$0x1]
      %v1954 = vld [vmem:[%s675 + $0xc] sm:$0xf]
      %v1955 = vld [vmem:[%s675 + $0x10] sm:$0xf]
      %v1956 = vld [vmem:[%s675 + $0x14] sm:$0x1]
      %v1957 = vld [vmem:[%s675 + $0x18] sm:$0xf]
      %v1958 = vld [vmem:[%s675 + $0x1c] sm:$0xf]
      %v1959 = vld [vmem:[%s675 + $0x20] sm:$0x1]
      %v1960 = vld [vmem:[%s675 + $0x24] sm:$0xf]
      %v1961 = vld [vmem:[%s675 + $0x28] sm:$0xf]
      %v1962 = vld [vmem:[%s675 + $0x2c] sm:$0x1]
      %v1963 = vld [vmem:[%s675 + $0x30] sm:$0xf]
      %v1964 = vld [vmem:[%s675 + $0x34] sm:$0xf]
      %v1965 = vld [vmem:[%s675 + $0x38] sm:$0x1]
      %v1966 = vld [vmem:[%s675 + $0x3c] sm:$0xf]
      %v1967 = vld [vmem:[%s675 + $0x40] sm:$0xf]
      %v1968 = vld [vmem:[%s675 + $0x44] sm:$0x1]
      %v1969 = vld [vmem:[%s675 + $0x48] sm:$0xf]
      %v1970 = vld [vmem:[%s675 + $0x4c] sm:$0xf]
      %v1971 = vld [vmem:[%s675 + $0x50] sm:$0x1]
      %v1972 = vld [vmem:[%s675 + $0x54] sm:$0xf]
      %v1973 = vld [vmem:[%s675 + $0x58] sm:$0xf]
      %v1974 = vld [vmem:[%s675 + $0x5c] sm:$0x1]
      %v1975 = vld [vmem:[%s675 + $0x60] sm:$0xf]
      %v1976 = vld [vmem:[%s675 + $0x64] sm:$0xf]
      %v1977 = vld [vmem:[%s675 + $0x68] sm:$0x1]
      %v1978 = vld [vmem:[%s675 + $0x6c] sm:$0xf]
      %v1979 = vld [vmem:[%s675 + $0x70] sm:$0xf]
      %v1980 = vld [vmem:[%s675 + $0x74] sm:$0x1]
      %v1981 = vld [vmem:[%s675 + $0x78] sm:$0xf]
      %v1982 = vld [vmem:[%s675 + $0x7c] sm:$0xf]
      %v1983 = vld [vmem:[%s675 + $0x80] sm:$0x1]
      %v1984 = vld [vmem:[%s675 + $0x84] sm:$0xf]
      %v1985 = vld [vmem:[%s675 + $0x88] sm:$0xf]
      %v1986 = vld [vmem:[%s675 + $0x8c] sm:$0x1]
      %v1987 = vld [vmem:[%s675 + $0x90] sm:$0xf]
      %v1988 = vld [vmem:[%s675 + $0x94] sm:$0xf]
      %v1989 = vld [vmem:[%s675 + $0x98] sm:$0x1]
      %v1990 = vld [vmem:[%s675 + $0x9c] sm:$0xf]
      %v1991 = vld [vmem:[%s675 + $0xa0] sm:$0xf]
      %v1992 = vld [vmem:[%s675 + $0xa4] sm:$0x1]
      %v1993 = vld [vmem:[%s675 + $0xa8] sm:$0xf]
      %v1994 = vld [vmem:[%s675 + $0xac] sm:$0xf]
      %v1995 = vld [vmem:[%s675 + $0xb0] sm:$0x1]
      %v1996 = vld [vmem:[%s675 + $0xb4] sm:$0xf]
      %v1997 = vld [vmem:[%s675 + $0xb8] sm:$0xf]
      %v1998 = vld [vmem:[%s675 + $0xbc] sm:$0x1]
      %v2000 = vshrl.u32 %v1951, 16
      %v2002 = vrot.slane %v2000, 4
      %v2003 = vshll.u32 %v1951, 16
      %v2005 = vrot.slane %v2003, 5
      %v2006 = vor.u32 %v2002, %v2005
      %v2007 = vrot.slane %v2006, 4
      %v2009 = vshll.u32 %v1952, 16
      %v2011 = vrot.slane %v2009, 5
      %v2012 = vsel %vm904, %v2007, %v2011
      %v2013 = vshrl.u32 %v1952, 16
      %v2015 = vrot.slane %v2013, 4
      %v2016 = vor.u32 %v2015, %v2011
      %v2017 = vrot.slane %v2016, 4
      %v2019 = vshll.u32 %v1953, 16
      %v2021 = vrot.slane %v2019, 5
      %v2022 = vsel %vm904, %v2017, %v2021
      %v2024 = vshrl.u32 %v1954, 16
      %v2026 = vrot.slane %v2024, 4
      %v2027 = vshll.u32 %v1954, 16
      %v2029 = vrot.slane %v2027, 5
      %v2030 = vor.u32 %v2026, %v2029
      %v2031 = vrot.slane %v2030, 4
      %v2033 = vshll.u32 %v1955, 16
      %v2035 = vrot.slane %v2033, 5
      %v2036 = vsel %vm904, %v2031, %v2035
      %v2037 = vshrl.u32 %v1955, 16
      %v2039 = vrot.slane %v2037, 4
      %v2040 = vor.u32 %v2039, %v2035
      %v2041 = vrot.slane %v2040, 4
      %v2043 = vshll.u32 %v1956, 16
      %v2045 = vrot.slane %v2043, 5
      %v2046 = vsel %vm904, %v2041, %v2045
      %v2048 = vshrl.u32 %v1957, 16
      %v2050 = vrot.slane %v2048, 4
      %v2051 = vshll.u32 %v1957, 16
      %v2053 = vrot.slane %v2051, 5
      %v2054 = vor.u32 %v2050, %v2053
      %v2055 = vrot.slane %v2054, 4
      %v2057 = vshll.u32 %v1958, 16
      %v2059 = vrot.slane %v2057, 5
      %v2060 = vsel %vm904, %v2055, %v2059
      %v2061 = vshrl.u32 %v1958, 16
      %v2063 = vrot.slane %v2061, 4
      %v2064 = vor.u32 %v2063, %v2059
      %v2065 = vrot.slane %v2064, 4
      %v2067 = vshll.u32 %v1959, 16
      %v2069 = vrot.slane %v2067, 5
      %v2070 = vsel %vm904, %v2065, %v2069
      %v2072 = vshrl.u32 %v1960, 16
      %v2074 = vrot.slane %v2072, 4
      %v2075 = vshll.u32 %v1960, 16
      %v2077 = vrot.slane %v2075, 5
      %v2078 = vor.u32 %v2074, %v2077
      %v2079 = vrot.slane %v2078, 4
      %v2081 = vshll.u32 %v1961, 16
      %v2083 = vrot.slane %v2081, 5
      %v2084 = vsel %vm904, %v2079, %v2083
      %v2085 = vshrl.u32 %v1961, 16
      %v2087 = vrot.slane %v2085, 4
      %v2088 = vor.u32 %v2087, %v2083
      %v2089 = vrot.slane %v2088, 4
      %v2091 = vshll.u32 %v1962, 16
      %v2093 = vrot.slane %v2091, 5
      %v2094 = vsel %vm904, %v2089, %v2093
      %v2096 = vshrl.u32 %v1963, 16
      %v2098 = vrot.slane %v2096, 4
      %v2099 = vshll.u32 %v1963, 16
      %v2101 = vrot.slane %v2099, 5
      %v2102 = vor.u32 %v2098, %v2101
      %v2103 = vrot.slane %v2102, 4
      %v2105 = vshll.u32 %v1964, 16
      %v2107 = vrot.slane %v2105, 5
      %v2108 = vsel %vm904, %v2103, %v2107
      %v2109 = vshrl.u32 %v1964, 16
      %v2111 = vrot.slane %v2109, 4
      %v2112 = vor.u32 %v2111, %v2107
      %v2113 = vrot.slane %v2112, 4
      %v2115 = vshll.u32 %v1965, 16
      %v2117 = vrot.slane %v2115, 5
      %v2118 = vsel %vm904, %v2113, %v2117
      %v2120 = vshrl.u32 %v1966, 16
      %v2122 = vrot.slane %v2120, 4
      %v2123 = vshll.u32 %v1966, 16
      %v2125 = vrot.slane %v2123, 5
      %v2126 = vor.u32 %v2122, %v2125
      %v2127 = vrot.slane %v2126, 4
      %v2129 = vshll.u32 %v1967, 16
      %v2131 = vrot.slane %v2129, 5
      %v2132 = vsel %vm904, %v2127, %v2131
      %v2133 = vshrl.u32 %v1967, 16
      %v2135 = vrot.slane %v2133, 4
      %v2136 = vor.u32 %v2135, %v2131
      %v2137 = vrot.slane %v2136, 4
      %v2139 = vshll.u32 %v1968, 16
      %v2141 = vrot.slane %v2139, 5
      %v2142 = vsel %vm904, %v2137, %v2141
      %v2144 = vshrl.u32 %v1969, 16
      %v2146 = vrot.slane %v2144, 4
      %v2147 = vshll.u32 %v1969, 16
      %v2149 = vrot.slane %v2147, 5
      %v2150 = vor.u32 %v2146, %v2149
      %v2151 = vrot.slane %v2150, 4
      %v2153 = vshll.u32 %v1970, 16
      %v2155 = vrot.slane %v2153, 5
      %v2156 = vsel %vm904, %v2151, %v2155
      %v2157 = vshrl.u32 %v1970, 16
      %v2159 = vrot.slane %v2157, 4
      %v2160 = vor.u32 %v2159, %v2155
      %v2161 = vrot.slane %v2160, 4
      %v2163 = vshll.u32 %v1971, 16
      %v2165 = vrot.slane %v2163, 5
      %v2166 = vsel %vm904, %v2161, %v2165
      %v2168 = vshrl.u32 %v1972, 16
      %v2170 = vrot.slane %v2168, 4
      %v2171 = vshll.u32 %v1972, 16
      %v2173 = vrot.slane %v2171, 5
      %v2174 = vor.u32 %v2170, %v2173
      %v2175 = vrot.slane %v2174, 4
      %v2177 = vshll.u32 %v1973, 16
      %v2179 = vrot.slane %v2177, 5
      %v2180 = vsel %vm904, %v2175, %v2179
      %v2181 = vshrl.u32 %v1973, 16
      %v2183 = vrot.slane %v2181, 4
      %v2184 = vor.u32 %v2183, %v2179
      %v2185 = vrot.slane %v2184, 4
      %v2187 = vshll.u32 %v1974, 16
      %v2189 = vrot.slane %v2187, 5
      %v2190 = vsel %vm904, %v2185, %v2189
      %v2192 = vshrl.u32 %v1975, 16
      %v2194 = vrot.slane %v2192, 4
      %v2195 = vshll.u32 %v1975, 16
      %v2197 = vrot.slane %v2195, 5
      %v2198 = vor.u32 %v2194, %v2197
      %v2199 = vrot.slane %v2198, 4
      %v2201 = vshll.u32 %v1976, 16
      %v2203 = vrot.slane %v2201, 5
      %v2204 = vsel %vm904, %v2199, %v2203
      %v2205 = vshrl.u32 %v1976, 16
      %v2207 = vrot.slane %v2205, 4
      %v2208 = vor.u32 %v2207, %v2203
      %v2209 = vrot.slane %v2208, 4
      %v2211 = vshll.u32 %v1977, 16
      %v2213 = vrot.slane %v2211, 5
      %v2214 = vsel %vm904, %v2209, %v2213
      %v2216 = vshrl.u32 %v1978, 16
      %v2218 = vrot.slane %v2216, 4
      %v2219 = vshll.u32 %v1978, 16
      %v2221 = vrot.slane %v2219, 5
      %v2222 = vor.u32 %v2218, %v2221
      %v2223 = vrot.slane %v2222, 4
      %v2225 = vshll.u32 %v1979, 16
      %v2227 = vrot.slane %v2225, 5
      %v2228 = vsel %vm904, %v2223, %v2227
      %v2229 = vshrl.u32 %v1979, 16
      %v2231 = vrot.slane %v2229, 4
      %v2232 = vor.u32 %v2231, %v2227
      %v2233 = vrot.slane %v2232, 4
      %v2235 = vshll.u32 %v1980, 16
      %v2237 = vrot.slane %v2235, 5
      %v2238 = vsel %vm904, %v2233, %v2237
      %v2240 = vshrl.u32 %v1981, 16
      %v2242 = vrot.slane %v2240, 4
      %v2243 = vshll.u32 %v1981, 16
      %v2245 = vrot.slane %v2243, 5
      %v2246 = vor.u32 %v2242, %v2245
      %v2247 = vrot.slane %v2246, 4
      %v2249 = vshll.u32 %v1982, 16
      %v2251 = vrot.slane %v2249, 5
      %v2252 = vsel %vm904, %v2247, %v2251
      %v2253 = vshrl.u32 %v1982, 16
      %v2255 = vrot.slane %v2253, 4
      %v2256 = vor.u32 %v2255, %v2251
      %v2257 = vrot.slane %v2256, 4
      %v2259 = vshll.u32 %v1983, 16
      %v2261 = vrot.slane %v2259, 5
      %v2262 = vsel %vm904, %v2257, %v2261
      %v2264 = vshrl.u32 %v1984, 16
      %v2266 = vrot.slane %v2264, 4
      %v2267 = vshll.u32 %v1984, 16
      %v2269 = vrot.slane %v2267, 5
      %v2270 = vor.u32 %v2266, %v2269
      %v2271 = vrot.slane %v2270, 4
      %v2273 = vshll.u32 %v1985, 16
      %v2275 = vrot.slane %v2273, 5
      %v2276 = vsel %vm904, %v2271, %v2275
      %v2277 = vshrl.u32 %v1985, 16
      %v2279 = vrot.slane %v2277, 4
      %v2280 = vor.u32 %v2279, %v2275
      %v2281 = vrot.slane %v2280, 4
      %v2283 = vshll.u32 %v1986, 16
      %v2285 = vrot.slane %v2283, 5
      %v2286 = vsel %vm904, %v2281, %v2285
      %v2288 = vshrl.u32 %v1987, 16
      %v2290 = vrot.slane %v2288, 4
      %v2291 = vshll.u32 %v1987, 16
      %v2293 = vrot.slane %v2291, 5
      %v2294 = vor.u32 %v2290, %v2293
      %v2295 = vrot.slane %v2294, 4
      %v2297 = vshll.u32 %v1988, 16
      %v2299 = vrot.slane %v2297, 5
      %v2300 = vsel %vm904, %v2295, %v2299
      %v2301 = vshrl.u32 %v1988, 16
      %v2303 = vrot.slane %v2301, 4
      %v2304 = vor.u32 %v2303, %v2299
      %v2305 = vrot.slane %v2304, 4
      %v2307 = vshll.u32 %v1989, 16
      %v2309 = vrot.slane %v2307, 5
      %v2310 = vsel %vm904, %v2305, %v2309
      %v2312 = vshrl.u32 %v1990, 16
      %v2314 = vrot.slane %v2312, 4
      %v2315 = vshll.u32 %v1990, 16
      %v2317 = vrot.slane %v2315, 5
      %v2318 = vor.u32 %v2314, %v2317
      %v2319 = vrot.slane %v2318, 4
      %v2321 = vshll.u32 %v1991, 16
      %v2323 = vrot.slane %v2321, 5
      %v2324 = vsel %vm904, %v2319, %v2323
      %v2325 = vshrl.u32 %v1991, 16
      %v2327 = vrot.slane %v2325, 4
      %v2328 = vor.u32 %v2327, %v2323
      %v2329 = vrot.slane %v2328, 4
      %v2331 = vshll.u32 %v1992, 16
      %v2333 = vrot.slane %v2331, 5
      %v2334 = vsel %vm904, %v2329, %v2333
      %v2336 = vshrl.u32 %v1993, 16
      %v2338 = vrot.slane %v2336, 4
      %v2339 = vshll.u32 %v1993, 16
      %v2341 = vrot.slane %v2339, 5
      %v2342 = vor.u32 %v2338, %v2341
      %v2343 = vrot.slane %v2342, 4
      %v2345 = vshll.u32 %v1994, 16
      %v2347 = vrot.slane %v2345, 5
      %v2348 = vsel %vm904, %v2343, %v2347
      %v2349 = vshrl.u32 %v1994, 16
      %v2351 = vrot.slane %v2349, 4
      %v2352 = vor.u32 %v2351, %v2347
      %v2353 = vrot.slane %v2352, 4
      %v2355 = vshll.u32 %v1995, 16
      %v2357 = vrot.slane %v2355, 5
      %v2358 = vsel %vm904, %v2353, %v2357
      %v2360 = vshrl.u32 %v1996, 16
      %v2362 = vrot.slane %v2360, 4
      %v2363 = vshll.u32 %v1996, 16
      %v2365 = vrot.slane %v2363, 5
      %v2366 = vor.u32 %v2362, %v2365
      %v2367 = vrot.slane %v2366, 4
      %v2369 = vshll.u32 %v1997, 16
      %v2371 = vrot.slane %v2369, 5
      %v2372 = vsel %vm904, %v2367, %v2371
      %v2373 = vshrl.u32 %v1997, 16
      %v2375 = vrot.slane %v2373, 4
      %v2376 = vor.u32 %v2375, %v2371
      %v2377 = vrot.slane %v2376, 4
      %v2379 = vshll.u32 %v1998, 16
      %v2381 = vrot.slane %v2379, 5
      %v2382 = vsel %vm904, %v2377, %v2381
      %2383 = vrot.lane.b32.xlu0 %v2012, 32
      %v2384 = vpop.permute.xlu0 %2383
      %2385 = vrot.lane.b32.xlu0 %v2022, 32
      %v2386 = vpop.permute.xlu0 %2385
      %2387 = vrot.lane.b32.xlu0 %v2036, 32
      %v2388 = vpop.permute.xlu0 %2387
      %2389 = vrot.lane.b32.xlu0 %v2046, 32
      %v2390 = vpop.permute.xlu0 %2389
      %2391 = vrot.lane.b32.xlu0 %v2060, 32
      %v2392 = vpop.permute.xlu0 %2391
      %2393 = vrot.lane.b32.xlu0 %v2070, 32
      %v2394 = vpop.permute.xlu0 %2393
      %2395 = vrot.lane.b32.xlu0 %v2084, 32
      %v2396 = vpop.permute.xlu0 %2395
      %2397 = vrot.lane.b32.xlu0 %v2094, 32
      %v2398 = vpop.permute.xlu0 %2397
      %2399 = vrot.lane.b32.xlu0 %v2108, 32
      %v2400 = vpop.permute.xlu0 %2399
      %2401 = vrot.lane.b32.xlu0 %v2118, 32
      %v2402 = vpop.permute.xlu0 %2401
      %2403 = vrot.lane.b32.xlu0 %v2132, 32
      %v2404 = vpop.permute.xlu0 %2403
      %2405 = vrot.lane.b32.xlu0 %v2142, 32
      %v2406 = vpop.permute.xlu0 %2405
      %2407 = vrot.lane.b32.xlu0 %v2156, 32
      %v2408 = vpop.permute.xlu0 %2407
      %2409 = vrot.lane.b32.xlu0 %v2166, 32
      %v2410 = vpop.permute.xlu0 %2409
      %2411 = vrot.lane.b32.xlu0 %v2180, 32
      %v2412 = vpop.permute.xlu0 %2411
      %2413 = vrot.lane.b32.xlu0 %v2190, 32
      %v2414 = vpop.permute.xlu0 %2413
      %2415 = vrot.lane.b32.xlu0 %v2204, 32
      %v2416 = vpop.permute.xlu0 %2415
      %2417 = vrot.lane.b32.xlu0 %v2214, 32
      %v2418 = vpop.permute.xlu0 %2417
      %2419 = vrot.lane.b32.xlu0 %v2228, 32
      %v2420 = vpop.permute.xlu0 %2419
      %2421 = vrot.lane.b32.xlu0 %v2238, 32
      %v2422 = vpop.permute.xlu0 %2421
      %2423 = vrot.lane.b32.xlu0 %v2252, 32
      %v2424 = vpop.permute.xlu0 %2423
      %2425 = vrot.lane.b32.xlu0 %v2262, 32
      %v2426 = vpop.permute.xlu0 %2425
      %2427 = vrot.lane.b32.xlu0 %v2276, 32
      %v2428 = vpop.permute.xlu0 %2427
      %2429 = vrot.lane.b32.xlu0 %v2286, 32
      %v2430 = vpop.permute.xlu0 %2429
      %2431 = vrot.lane.b32.xlu0 %v2300, 32
      %v2432 = vpop.permute.xlu0 %2431
      %2433 = vrot.lane.b32.xlu0 %v2310, 32
      %v2434 = vpop.permute.xlu0 %2433
      %2435 = vrot.lane.b32.xlu0 %v2324, 32
      %v2436 = vpop.permute.xlu0 %2435
      %2437 = vrot.lane.b32.xlu0 %v2334, 32
      %v2438 = vpop.permute.xlu0 %2437
      %2439 = vrot.lane.b32.xlu0 %v2348, 32
      %v2440 = vpop.permute.xlu0 %2439
      %2441 = vrot.lane.b32.xlu0 %v2358, 32
      %v2442 = vpop.permute.xlu0 %2441
      %2443 = vrot.lane.b32.xlu0 %v2372, 32
      %v2444 = vpop.permute.xlu0 %2443
      %2445 = vrot.lane.b32.xlu0 %v2382, 32
      %v2446 = vpop.permute.xlu0 %2445
      %vm2479 = vcmask 322816
      %2480 = vst.msk [vmem:[#allocation3] sm:$0xf] %vm2479, %v2384
      %2481 = vst.msk [vmem:[#allocation3 + $0x4] sm:$0xf] %vm2479, %v2386
      %2482 = vst.msk [vmem:[#allocation3 + $0x8] sm:$0xf] %vm2479, %v2388
      %2483 = vst.msk [vmem:[#allocation3 + $0xc] sm:$0xf] %vm2479, %v2390
      %2484 = vst.msk [vmem:[#allocation3 + $0x10] sm:$0xf] %vm2479, %v2392
      %2485 = vst.msk [vmem:[#allocation3 + $0x14] sm:$0xf] %vm2479, %v2394
      %2486 = vst.msk [vmem:[#allocation3 + $0x18] sm:$0xf] %vm2479, %v2396
      %2487 = vst.msk [vmem:[#allocation3 + $0x1c] sm:$0xf] %vm2479, %v2398
      %2488 = vst.msk [vmem:[#allocation3 + $0x20] sm:$0xf] %vm2479, %v2400
      %2489 = vst.msk [vmem:[#allocation3 + $0x24] sm:$0xf] %vm2479, %v2402
      %2490 = vst.msk [vmem:[#allocation3 + $0x28] sm:$0xf] %vm2479, %v2404
      %2491 = vst.msk [vmem:[#allocation3 + $0x2c] sm:$0xf] %vm2479, %v2406
      %2492 = vst.msk [vmem:[#allocation3 + $0x30] sm:$0xf] %vm2479, %v2408
      %2493 = vst.msk [vmem:[#allocation3 + $0x34] sm:$0xf] %vm2479, %v2410
      %2494 = vst.msk [vmem:[#allocation3 + $0x38] sm:$0xf] %vm2479, %v2412
      %2495 = vst.msk [vmem:[#allocation3 + $0x3c] sm:$0xf] %vm2479, %v2414
      %2496 = vst.msk [vmem:[#allocation3 + $0x40] sm:$0xf] %vm2479, %v2416
      %2497 = vst.msk [vmem:[#allocation3 + $0x44] sm:$0xf] %vm2479, %v2418
      %2498 = vst.msk [vmem:[#allocation3 + $0x48] sm:$0xf] %vm2479, %v2420
      %2499 = vst.msk [vmem:[#allocation3 + $0x4c] sm:$0xf] %vm2479, %v2422
      %2500 = vst.msk [vmem:[#allocation3 + $0x50] sm:$0xf] %vm2479, %v2424
      %2501 = vst.msk [vmem:[#allocation3 + $0x54] sm:$0xf] %vm2479, %v2426
      %2502 = vst.msk [vmem:[#allocation3 + $0x58] sm:$0xf] %vm2479, %v2428
      %2503 = vst.msk [vmem:[#allocation3 + $0x5c] sm:$0xf] %vm2479, %v2430
      %2504 = vst.msk [vmem:[#allocation3 + $0x60] sm:$0xf] %vm2479, %v2432
      %2505 = vst.msk [vmem:[#allocation3 + $0x64] sm:$0xf] %vm2479, %v2434
      %2506 = vst.msk [vmem:[#allocation3 + $0x68] sm:$0xf] %vm2479, %v2436
      %2507 = vst.msk [vmem:[#allocation3 + $0x6c] sm:$0xf] %vm2479, %v2438
      %2508 = vst.msk [vmem:[#allocation3 + $0x70] sm:$0xf] %vm2479, %v2440
      %2509 = vst.msk [vmem:[#allocation3 + $0x74] sm:$0xf] %vm2479, %v2442
      %2510 = vst.msk [vmem:[#allocation3 + $0x78] sm:$0xf] %vm2479, %v2444
      %2511 = vst.msk [vmem:[#allocation3 + $0x7c] sm:$0xf] %vm2479, %v2446
      %v2512 = vld [vmem:[%s675] sm:$0xe]
      %v2513 = vld [vmem:[%s675 + $0x4] sm:$0xf]
      %v2514 = vld [vmem:[%s675 + $0x8] sm:$0x1]
      %v2515 = vld [vmem:[%s675 + $0xc] sm:$0xe]
      %v2516 = vld [vmem:[%s675 + $0x10] sm:$0xf]
      %v2517 = vld [vmem:[%s675 + $0x14] sm:$0x1]
      %v2518 = vld [vmem:[%s675 + $0x18] sm:$0xe]
      %v2519 = vld [vmem:[%s675 + $0x1c] sm:$0xf]
      %v2520 = vld [vmem:[%s675 + $0x20] sm:$0x1]
      %v2521 = vld [vmem:[%s675 + $0x24] sm:$0xe]
      %v2522 = vld [vmem:[%s675 + $0x28] sm:$0xf]
      %v2523 = vld [vmem:[%s675 + $0x2c] sm:$0x1]
      %v2524 = vld [vmem:[%s675 + $0x30] sm:$0xe]
      %v2525 = vld [vmem:[%s675 + $0x34] sm:$0xf]
      %v2526 = vld [vmem:[%s675 + $0x38] sm:$0x1]
      %v2527 = vld [vmem:[%s675 + $0x3c] sm:$0xe]
      %v2528 = vld [vmem:[%s675 + $0x40] sm:$0xf]
      %v2529 = vld [vmem:[%s675 + $0x44] sm:$0x1]
      %v2530 = vld [vmem:[%s675 + $0x48] sm:$0xe]
      %v2531 = vld [vmem:[%s675 + $0x4c] sm:$0xf]
      %v2532 = vld [vmem:[%s675 + $0x50] sm:$0x1]
      %v2533 = vld [vmem:[%s675 + $0x54] sm:$0xe]
      %v2534 = vld [vmem:[%s675 + $0x58] sm:$0xf]
      %v2535 = vld [vmem:[%s675 + $0x5c] sm:$0x1]
      %v2536 = vld [vmem:[%s675 + $0x60] sm:$0xe]
      %v2537 = vld [vmem:[%s675 + $0x64] sm:$0xf]
      %v2538 = vld [vmem:[%s675 + $0x68] sm:$0x1]
      %v2539 = vld [vmem:[%s675 + $0x6c] sm:$0xe]
      %v2540 = vld [vmem:[%s675 + $0x70] sm:$0xf]
      %v2541 = vld [vmem:[%s675 + $0x74] sm:$0x1]
      %v2542 = vld [vmem:[%s675 + $0x78] sm:$0xe]
      %v2543 = vld [vmem:[%s675 + $0x7c] sm:$0xf]
      %v2544 = vld [vmem:[%s675 + $0x80] sm:$0x1]
      %v2545 = vld [vmem:[%s675 + $0x84] sm:$0xe]
      %v2546 = vld [vmem:[%s675 + $0x88] sm:$0xf]
      %v2547 = vld [vmem:[%s675 + $0x8c] sm:$0x1]
      %v2548 = vld [vmem:[%s675 + $0x90] sm:$0xe]
      %v2549 = vld [vmem:[%s675 + $0x94] sm:$0xf]
      %v2550 = vld [vmem:[%s675 + $0x98] sm:$0x1]
      %v2551 = vld [vmem:[%s675 + $0x9c] sm:$0xe]
      %v2552 = vld [vmem:[%s675 + $0xa0] sm:$0xf]
      %v2553 = vld [vmem:[%s675 + $0xa4] sm:$0x1]
      %v2554 = vld [vmem:[%s675 + $0xa8] sm:$0xe]
      %v2555 = vld [vmem:[%s675 + $0xac] sm:$0xf]
      %v2556 = vld [vmem:[%s675 + $0xb0] sm:$0x1]
      %v2557 = vld [vmem:[%s675 + $0xb4] sm:$0xe]
      %v2558 = vld [vmem:[%s675 + $0xb8] sm:$0xf]
      %v2559 = vld [vmem:[%s675 + $0xbc] sm:$0x1]
      %v2608 = vrot.slane %v2512, 5
      %v2609 = vrot.slane %v2608, 4
      %v2610 = vrot.slane %v2513, 5
      %v2611 = vsel %vm1516, %v2609, %v2610
      %v2612 = vrot.slane %v2610, 4
      %v2613 = vrot.slane %v2514, 5
      %v2614 = vsel %vm1516, %v2612, %v2613
      %v2615 = vrot.slane %v2515, 5
      %v2616 = vrot.slane %v2615, 4
      %v2617 = vrot.slane %v2516, 5
      %v2618 = vsel %vm1516, %v2616, %v2617
      %v2619 = vrot.slane %v2617, 4
      %v2620 = vrot.slane %v2517, 5
      %v2621 = vsel %vm1516, %v2619, %v2620
      %v2622 = vrot.slane %v2518, 5
      %v2623 = vrot.slane %v2622, 4
      %v2624 = vrot.slane %v2519, 5
      %v2625 = vsel %vm1516, %v2623, %v2624
      %v2626 = vrot.slane %v2624, 4
      %v2627 = vrot.slane %v2520, 5
      %v2628 = vsel %vm1516, %v2626, %v2627
      %v2629 = vrot.slane %v2521, 5
      %v2630 = vrot.slane %v2629, 4
      %v2631 = vrot.slane %v2522, 5
      %v2632 = vsel %vm1516, %v2630, %v2631
      %v2633 = vrot.slane %v2631, 4
      %v2634 = vrot.slane %v2523, 5
      %v2635 = vsel %vm1516, %v2633, %v2634
      %v2636 = vrot.slane %v2524, 5
      %v2637 = vrot.slane %v2636, 4
      %v2638 = vrot.slane %v2525, 5
      %v2639 = vsel %vm1516, %v2637, %v2638
      %v2640 = vrot.slane %v2638, 4
      %v2641 = vrot.slane %v2526, 5
      %v2642 = vsel %vm1516, %v2640, %v2641
      %v2643 = vrot.slane %v2527, 5
      %v2644 = vrot.slane %v2643, 4
      %v2645 = vrot.slane %v2528, 5
      %v2646 = vsel %vm1516, %v2644, %v2645
      %v2647 = vrot.slane %v2645, 4
      %v2648 = vrot.slane %v2529, 5
      %v2649 = vsel %vm1516, %v2647, %v2648
      %v2650 = vrot.slane %v2530, 5
      %v2651 = vrot.slane %v2650, 4
      %v2652 = vrot.slane %v2531, 5
      %v2653 = vsel %vm1516, %v2651, %v2652
      %v2654 = vrot.slane %v2652, 4
      %v2655 = vrot.slane %v2532, 5
      %v2656 = vsel %vm1516, %v2654, %v2655
      %v2657 = vrot.slane %v2533, 5
      %v2658 = vrot.slane %v2657, 4
      %v2659 = vrot.slane %v2534, 5
      %v2660 = vsel %vm1516, %v2658, %v2659
      %v2661 = vrot.slane %v2659, 4
      %v2662 = vrot.slane %v2535, 5
      %v2663 = vsel %vm1516, %v2661, %v2662
      %v2664 = vrot.slane %v2536, 5
      %v2665 = vrot.slane %v2664, 4
      %v2666 = vrot.slane %v2537, 5
      %v2667 = vsel %vm1516, %v2665, %v2666
      %v2668 = vrot.slane %v2666, 4
      %v2669 = vrot.slane %v2538, 5
      %v2670 = vsel %vm1516, %v2668, %v2669
      %v2671 = vrot.slane %v2539, 5
      %v2672 = vrot.slane %v2671, 4
      %v2673 = vrot.slane %v2540, 5
      %v2674 = vsel %vm1516, %v2672, %v2673
      %v2675 = vrot.slane %v2673, 4
      %v2676 = vrot.slane %v2541, 5
      %v2677 = vsel %vm1516, %v2675, %v2676
      %v2678 = vrot.slane %v2542, 5
      %v2679 = vrot.slane %v2678, 4
      %v2680 = vrot.slane %v2543, 5
      %v2681 = vsel %vm1516, %v2679, %v2680
      %v2682 = vrot.slane %v2680, 4
      %v2683 = vrot.slane %v2544, 5
      %v2684 = vsel %vm1516, %v2682, %v2683
      %v2685 = vrot.slane %v2545, 5
      %v2686 = vrot.slane %v2685, 4
      %v2687 = vrot.slane %v2546, 5
      %v2688 = vsel %vm1516, %v2686, %v2687
      %v2689 = vrot.slane %v2687, 4
      %v2690 = vrot.slane %v2547, 5
      %v2691 = vsel %vm1516, %v2689, %v2690
      %v2692 = vrot.slane %v2548, 5
      %v2693 = vrot.slane %v2692, 4
      %v2694 = vrot.slane %v2549, 5
      %v2695 = vsel %vm1516, %v2693, %v2694
      %v2696 = vrot.slane %v2694, 4
      %v2697 = vrot.slane %v2550, 5
      %v2698 = vsel %vm1516, %v2696, %v2697
      %v2699 = vrot.slane %v2551, 5
      %v2700 = vrot.slane %v2699, 4
      %v2701 = vrot.slane %v2552, 5
      %v2702 = vsel %vm1516, %v2700, %v2701
      %v2703 = vrot.slane %v2701, 4
      %v2704 = vrot.slane %v2553, 5
      %v2705 = vsel %vm1516, %v2703, %v2704
      %v2706 = vrot.slane %v2554, 5
      %v2707 = vrot.slane %v2706, 4
      %v2708 = vrot.slane %v2555, 5
      %v2709 = vsel %vm1516, %v2707, %v2708
      %v2710 = vrot.slane %v2708, 4
      %v2711 = vrot.slane %v2556, 5
      %v2712 = vsel %vm1516, %v2710, %v2711
      %v2713 = vrot.slane %v2557, 5
      %v2714 = vrot.slane %v2713, 4
      %v2715 = vrot.slane %v2558, 5
      %v2716 = vsel %vm1516, %v2714, %v2715
      %v2717 = vrot.slane %v2715, 4
      %v2718 = vrot.slane %v2559, 5
      %v2719 = vsel %vm1516, %v2717, %v2718
      %2720 = vrot.lane.b32.xlu0 %v2611, 40
      %v2721 = vpop.permute.xlu0 %2720
      %2722 = vrot.lane.b32.xlu0 %v2614, 40
      %v2723 = vpop.permute.xlu0 %2722
      %2724 = vrot.lane.b32.xlu0 %v2618, 40
      %v2725 = vpop.permute.xlu0 %2724
      %2726 = vrot.lane.b32.xlu0 %v2621, 40
      %v2727 = vpop.permute.xlu0 %2726
      %2728 = vrot.lane.b32.xlu0 %v2625, 40
      %v2729 = vpop.permute.xlu0 %2728
      %2730 = vrot.lane.b32.xlu0 %v2628, 40
      %v2731 = vpop.permute.xlu0 %2730
      %2732 = vrot.lane.b32.xlu0 %v2632, 40
      %v2733 = vpop.permute.xlu0 %2732
      %2734 = vrot.lane.b32.xlu0 %v2635, 40
      %v2735 = vpop.permute.xlu0 %2734
      %2736 = vrot.lane.b32.xlu0 %v2639, 40
      %v2737 = vpop.permute.xlu0 %2736
      %2738 = vrot.lane.b32.xlu0 %v2642, 40
      %v2739 = vpop.permute.xlu0 %2738
      %2740 = vrot.lane.b32.xlu0 %v2646, 40
      %v2741 = vpop.permute.xlu0 %2740
      %2742 = vrot.lane.b32.xlu0 %v2649, 40
      %v2743 = vpop.permute.xlu0 %2742
      %2744 = vrot.lane.b32.xlu0 %v2653, 40
      %v2745 = vpop.permute.xlu0 %2744
      %2746 = vrot.lane.b32.xlu0 %v2656, 40
      %v2747 = vpop.permute.xlu0 %2746
      %2748 = vrot.lane.b32.xlu0 %v2660, 40
      %v2749 = vpop.permute.xlu0 %2748
      %2750 = vrot.lane.b32.xlu0 %v2663, 40
      %v2751 = vpop.permute.xlu0 %2750
      %2752 = vrot.lane.b32.xlu0 %v2667, 40
      %v2753 = vpop.permute.xlu0 %2752
      %2754 = vrot.lane.b32.xlu0 %v2670, 40
      %v2755 = vpop.permute.xlu0 %2754
      %2756 = vrot.lane.b32.xlu0 %v2674, 40
      %v2757 = vpop.permute.xlu0 %2756
      %2758 = vrot.lane.b32.xlu0 %v2677, 40
      %v2759 = vpop.permute.xlu0 %2758
      %2760 = vrot.lane.b32.xlu0 %v2681, 40
      %v2761 = vpop.permute.xlu0 %2760
      %2762 = vrot.lane.b32.xlu0 %v2684, 40
      %v2763 = vpop.permute.xlu0 %2762
      %2764 = vrot.lane.b32.xlu0 %v2688, 40
      %v2765 = vpop.permute.xlu0 %2764
      %2766 = vrot.lane.b32.xlu0 %v2691, 40
      %v2767 = vpop.permute.xlu0 %2766
      %2768 = vrot.lane.b32.xlu0 %v2695, 40
      %v2769 = vpop.permute.xlu0 %2768
      %2770 = vrot.lane.b32.xlu0 %v2698, 40
      %v2771 = vpop.permute.xlu0 %2770
      %2772 = vrot.lane.b32.xlu0 %v2702, 40
      %v2773 = vpop.permute.xlu0 %2772
      %2774 = vrot.lane.b32.xlu0 %v2705, 40
      %v2775 = vpop.permute.xlu0 %2774
      %2776 = vrot.lane.b32.xlu0 %v2709, 40
      %v2777 = vpop.permute.xlu0 %2776
      %2778 = vrot.lane.b32.xlu0 %v2712, 40
      %v2779 = vpop.permute.xlu0 %2778
      %2780 = vrot.lane.b32.xlu0 %v2716, 40
      %v2781 = vpop.permute.xlu0 %2780
      %2782 = vrot.lane.b32.xlu0 %v2719, 40
      %v2783 = vpop.permute.xlu0 %2782
      %vm2816 = vcmask 388416
      %2817 = vst.msk [vmem:[#allocation3] sm:$0xf] %vm2816, %v2721
      %2818 = vst.msk [vmem:[#allocation3 + $0x4] sm:$0xf] %vm2816, %v2723
      %2819 = vst.msk [vmem:[#allocation3 + $0x8] sm:$0xf] %vm2816, %v2725
      %2820 = vst.msk [vmem:[#allocation3 + $0xc] sm:$0xf] %vm2816, %v2727
      %2821 = vst.msk [vmem:[#allocation3 + $0x10] sm:$0xf] %vm2816, %v2729
      %2822 = vst.msk [vmem:[#allocation3 + $0x14] sm:$0xf] %vm2816, %v2731
      %2823 = vst.msk [vmem:[#allocation3 + $0x18] sm:$0xf] %vm2816, %v2733
      %2824 = vst.msk [vmem:[#allocation3 + $0x1c] sm:$0xf] %vm2816, %v2735
      %2825 = vst.msk [vmem:[#allocation3 + $0x20] sm:$0xf] %vm2816, %v2737
      %2826 = vst.msk [vmem:[#allocation3 + $0x24] sm:$0xf] %vm2816, %v2739
      %2827 = vst.msk [vmem:[#allocation3 + $0x28] sm:$0xf] %vm2816, %v2741
      %2828 = vst.msk [vmem:[#allocation3 + $0x2c] sm:$0xf] %vm2816, %v2743
      %2829 = vst.msk [vmem:[#allocation3 + $0x30] sm:$0xf] %vm2816, %v2745
      %2830 = vst.msk [vmem:[#allocation3 + $0x34] sm:$0xf] %vm2816, %v2747
      %2831 = vst.msk [vmem:[#allocation3 + $0x38] sm:$0xf] %vm2816, %v2749
      %2832 = vst.msk [vmem:[#allocation3 + $0x3c] sm:$0xf] %vm2816, %v2751
      %2833 = vst.msk [vmem:[#allocation3 + $0x40] sm:$0xf] %vm2816, %v2753
      %2834 = vst.msk [vmem:[#allocation3 + $0x44] sm:$0xf] %vm2816, %v2755
      %2835 = vst.msk [vmem:[#allocation3 + $0x48] sm:$0xf] %vm2816, %v2757
      %2836 = vst.msk [vmem:[#allocation3 + $0x4c] sm:$0xf] %vm2816, %v2759
      %2837 = vst.msk [vmem:[#allocation3 + $0x50] sm:$0xf] %vm2816, %v2761
      %2838 = vst.msk [vmem:[#allocation3 + $0x54] sm:$0xf] %vm2816, %v2763
      %2839 = vst.msk [vmem:[#allocation3 + $0x58] sm:$0xf] %vm2816, %v2765
      %2840 = vst.msk [vmem:[#allocation3 + $0x5c] sm:$0xf] %vm2816, %v2767
      %2841 = vst.msk [vmem:[#allocation3 + $0x60] sm:$0xf] %vm2816, %v2769
      %2842 = vst.msk [vmem:[#allocation3 + $0x64] sm:$0xf] %vm2816, %v2771
      %2843 = vst.msk [vmem:[#allocation3 + $0x68] sm:$0xf] %vm2816, %v2773
      %2844 = vst.msk [vmem:[#allocation3 + $0x6c] sm:$0xf] %vm2816, %v2775
      %2845 = vst.msk [vmem:[#allocation3 + $0x70] sm:$0xf] %vm2816, %v2777
      %2846 = vst.msk [vmem:[#allocation3 + $0x74] sm:$0xf] %vm2816, %v2779
      %2847 = vst.msk [vmem:[#allocation3 + $0x78] sm:$0xf] %vm2816, %v2781
      %2848 = vst.msk [vmem:[#allocation3 + $0x7c] sm:$0xf] %vm2816, %v2783
      %s2849 = scalar_lea.vmem [#allocation2], 24
      %v2850 = vld [vmem:[%s2849] sm:$0xf]
      %v2851 = vld [vmem:[%s2849 + $0x4] sm:$0xf]
      %v2852 = vld [vmem:[%s2849 + $0xc] sm:$0xf]
      %v2853 = vld [vmem:[%s2849 + $0x10] sm:$0xf]
      %v2854 = vld [vmem:[%s2849 + $0x18] sm:$0xf]
      %v2855 = vld [vmem:[%s2849 + $0x1c] sm:$0xf]
      %v2856 = vld [vmem:[%s2849 + $0x24] sm:$0xf]
      %v2857 = vld [vmem:[%s2849 + $0x28] sm:$0xf]
      %v2858 = vld [vmem:[%s2849 + $0x30] sm:$0xf]
      %v2859 = vld [vmem:[%s2849 + $0x34] sm:$0xf]
      %v2860 = vld [vmem:[%s2849 + $0x3c] sm:$0xf]
      %v2861 = vld [vmem:[%s2849 + $0x40] sm:$0xf]
      %v2862 = vld [vmem:[%s2849 + $0x48] sm:$0xf]
      %v2863 = vld [vmem:[%s2849 + $0x4c] sm:$0xf]
      %v2864 = vld [vmem:[%s2849 + $0x54] sm:$0xf]
      %v2865 = vld [vmem:[%s2849 + $0x58] sm:$0xf]
      %v2866 = vld [vmem:[%s2849 + $0x60] sm:$0xf]
      %v2867 = vld [vmem:[%s2849 + $0x64] sm:$0xf]
      %v2868 = vld [vmem:[%s2849 + $0x6c] sm:$0xf]
      %v2869 = vld [vmem:[%s2849 + $0x70] sm:$0xf]
      %v2870 = vld [vmem:[%s2849 + $0x78] sm:$0xf]
      %v2871 = vld [vmem:[%s2849 + $0x7c] sm:$0xf]
      %v2872 = vld [vmem:[%s2849 + $0x84] sm:$0xf]
      %v2873 = vld [vmem:[%s2849 + $0x88] sm:$0xf]
      %v2874 = vld [vmem:[%s2849 + $0x90] sm:$0xf]
      %v2875 = vld [vmem:[%s2849 + $0x94] sm:$0xf]
      %v2876 = vld [vmem:[%s2849 + $0x9c] sm:$0xf]
      %v2877 = vld [vmem:[%s2849 + $0xa0] sm:$0xf]
      %v2878 = vld [vmem:[%s2849 + $0xa8] sm:$0xf]
      %v2879 = vld [vmem:[%s2849 + $0xac] sm:$0xf]
      %v2880 = vld [vmem:[%s2849 + $0xb4] sm:$0xf]
      %v2881 = vld [vmem:[%s2849 + $0xb8] sm:$0xf]
      %2914 = vrot.lane.b32.xlu0 %v2850, 48
      %v2915 = vpop.permute.xlu0 %2914
      %2916 = vrot.lane.b32.xlu0 %v2851, 48
      %v2917 = vpop.permute.xlu0 %2916
      %2918 = vrot.lane.b32.xlu0 %v2852, 48
      %v2919 = vpop.permute.xlu0 %2918
      %2920 = vrot.lane.b32.xlu0 %v2853, 48
      %v2921 = vpop.permute.xlu0 %2920
      %2922 = vrot.lane.b32.xlu0 %v2854, 48
      %v2923 = vpop.permute.xlu0 %2922
      %2924 = vrot.lane.b32.xlu0 %v2855, 48
      %v2925 = vpop.permute.xlu0 %2924
      %2926 = vrot.lane.b32.xlu0 %v2856, 48
      %v2927 = vpop.permute.xlu0 %2926
      %2928 = vrot.lane.b32.xlu0 %v2857, 48
      %v2929 = vpop.permute.xlu0 %2928
      %2930 = vrot.lane.b32.xlu0 %v2858, 48
      %v2931 = vpop.permute.xlu0 %2930
      %2932 = vrot.lane.b32.xlu0 %v2859, 48
      %v2933 = vpop.permute.xlu0 %2932
      %2934 = vrot.lane.b32.xlu0 %v2860, 48
      %v2935 = vpop.permute.xlu0 %2934
      %2936 = vrot.lane.b32.xlu0 %v2861, 48
      %v2937 = vpop.permute.xlu0 %2936
      %2938 = vrot.lane.b32.xlu0 %v2862, 48
      %v2939 = vpop.permute.xlu0 %2938
      %2940 = vrot.lane.b32.xlu0 %v2863, 48
      %v2941 = vpop.permute.xlu0 %2940
      %2942 = vrot.lane.b32.xlu0 %v2864, 48
      %v2943 = vpop.permute.xlu0 %2942
      %2944 = vrot.lane.b32.xlu0 %v2865, 48
      %v2945 = vpop.permute.xlu0 %2944
      %2946 = vrot.lane.b32.xlu0 %v2866, 48
      %v2947 = vpop.permute.xlu0 %2946
      %2948 = vrot.lane.b32.xlu0 %v2867, 48
      %v2949 = vpop.permute.xlu0 %2948
      %2950 = vrot.lane.b32.xlu0 %v2868, 48
      %v2951 = vpop.permute.xlu0 %2950
      %2952 = vrot.lane.b32.xlu0 %v2869, 48
      %v2953 = vpop.permute.xlu0 %2952
      %2954 = vrot.lane.b32.xlu0 %v2870, 48
      %v2955 = vpop.permute.xlu0 %2954
      %2956 = vrot.lane.b32.xlu0 %v2871, 48
      %v2957 = vpop.permute.xlu0 %2956
      %2958 = vrot.lane.b32.xlu0 %v2872, 48
      %v2959 = vpop.permute.xlu0 %2958
      %2960 = vrot.lane.b32.xlu0 %v2873, 48
      %v2961 = vpop.permute.xlu0 %2960
      %2962 = vrot.lane.b32.xlu0 %v2874, 48
      %v2963 = vpop.permute.xlu0 %2962
      %2964 = vrot.lane.b32.xlu0 %v2875, 48
      %v2965 = vpop.permute.xlu0 %2964
      %2966 = vrot.lane.b32.xlu0 %v2876, 48
      %v2967 = vpop.permute.xlu0 %2966
      %2968 = vrot.lane.b32.xlu0 %v2877, 48
      %v2969 = vpop.permute.xlu0 %2968
      %2970 = vrot.lane.b32.xlu0 %v2878, 48
      %v2971 = vpop.permute.xlu0 %2970
      %2972 = vrot.lane.b32.xlu0 %v2879, 48
      %v2973 = vpop.permute.xlu0 %2972
      %2974 = vrot.lane.b32.xlu0 %v2880, 48
      %v2975 = vpop.permute.xlu0 %2974
      %2976 = vrot.lane.b32.xlu0 %v2881, 48
      %v2977 = vpop.permute.xlu0 %2976
      %vm3010 = vcmask 454016
      %3011 = vst.msk [vmem:[#allocation3] sm:$0xf] %vm3010, %v2915
      %3012 = vst.msk [vmem:[#allocation3 + $0x4] sm:$0xf] %vm3010, %v2917
      %3013 = vst.msk [vmem:[#allocation3 + $0x8] sm:$0xf] %vm3010, %v2919
      %3014 = vst.msk [vmem:[#allocation3 + $0xc] sm:$0xf] %vm3010, %v2921
      %3015 = vst.msk [vmem:[#allocation3 + $0x10] sm:$0xf] %vm3010, %v2923
      %3016 = vst.msk [vmem:[#allocation3 + $0x14] sm:$0xf] %vm3010, %v2925
      %3017 = vst.msk [vmem:[#allocation3 + $0x18] sm:$0xf] %vm3010, %v2927
      %3018 = vst.msk [vmem:[#allocation3 + $0x1c] sm:$0xf] %vm3010, %v2929
      %3019 = vst.msk [vmem:[#allocation3 + $0x20] sm:$0xf] %vm3010, %v2931
      %3020 = vst.msk [vmem:[#allocation3 + $0x24] sm:$0xf] %vm3010, %v2933
      %3021 = vst.msk [vmem:[#allocation3 + $0x28] sm:$0xf] %vm3010, %v2935
      %3022 = vst.msk [vmem:[#allocation3 + $0x2c] sm:$0xf] %vm3010, %v2937
      %3023 = vst.msk [vmem:[#allocation3 + $0x30] sm:$0xf] %vm3010, %v2939
      %3024 = vst.msk [vmem:[#allocation3 + $0x34] sm:$0xf] %vm3010, %v2941
      %3025 = vst.msk [vmem:[#allocation3 + $0x38] sm:$0xf] %vm3010, %v2943
      %3026 = vst.msk [vmem:[#allocation3 + $0x3c] sm:$0xf] %vm3010, %v2945
      %3027 = vst.msk [vmem:[#allocation3 + $0x40] sm:$0xf] %vm3010, %v2947
      %3028 = vst.msk [vmem:[#allocation3 + $0x44] sm:$0xf] %vm3010, %v2949
      %3029 = vst.msk [vmem:[#allocation3 + $0x48] sm:$0xf] %vm3010, %v2951
      %3030 = vst.msk [vmem:[#allocation3 + $0x4c] sm:$0xf] %vm3010, %v2953
      %3031 = vst.msk [vmem:[#allocation3 + $0x50] sm:$0xf] %vm3010, %v2955
      %3032 = vst.msk [vmem:[#allocation3 + $0x54] sm:$0xf] %vm3010, %v2957
      %3033 = vst.msk [vmem:[#allocation3 + $0x58] sm:$0xf] %vm3010, %v2959
      %3034 = vst.msk [vmem:[#allocation3 + $0x5c] sm:$0xf] %vm3010, %v2961
      %3035 = vst.msk [vmem:[#allocation3 + $0x60] sm:$0xf] %vm3010, %v2963
      %3036 = vst.msk [vmem:[#allocation3 + $0x64] sm:$0xf] %vm3010, %v2965
      %3037 = vst.msk [vmem:[#allocation3 + $0x68] sm:$0xf] %vm3010, %v2967
      %3038 = vst.msk [vmem:[#allocation3 + $0x6c] sm:$0xf] %vm3010, %v2969
      %3039 = vst.msk [vmem:[#allocation3 + $0x70] sm:$0xf] %vm3010, %v2971
      %3040 = vst.msk [vmem:[#allocation3 + $0x74] sm:$0xf] %vm3010, %v2973
      %3041 = vst.msk [vmem:[#allocation3 + $0x78] sm:$0xf] %vm3010, %v2975
      %3042 = vst.msk [vmem:[#allocation3 + $0x7c] sm:$0xf] %vm3010, %v2977
      %v3043 = vld [vmem:[%s2849] sm:$0xf]
      %v3044 = vld [vmem:[%s2849 + $0x4] sm:$0xf]
      %v3045 = vld [vmem:[%s2849 + $0x8] sm:$0x1]
      %v3046 = vld [vmem:[%s2849 + $0xc] sm:$0xf]
      %v3047 = vld [vmem:[%s2849 + $0x10] sm:$0xf]
      %v3048 = vld [vmem:[%s2849 + $0x14] sm:$0x1]
      %v3049 = vld [vmem:[%s2849 + $0x18] sm:$0xf]
      %v3050 = vld [vmem:[%s2849 + $0x1c] sm:$0xf]
      %v3051 = vld [vmem:[%s2849 + $0x20] sm:$0x1]
      %v3052 = vld [vmem:[%s2849 + $0x24] sm:$0xf]
      %v3053 = vld [vmem:[%s2849 + $0x28] sm:$0xf]
      %v3054 = vld [vmem:[%s2849 + $0x2c] sm:$0x1]
      %v3055 = vld [vmem:[%s2849 + $0x30] sm:$0xf]
      %v3056 = vld [vmem:[%s2849 + $0x34] sm:$0xf]
      %v3057 = vld [vmem:[%s2849 + $0x38] sm:$0x1]
      %v3058 = vld [vmem:[%s2849 + $0x3c] sm:$0xf]
      %v3059 = vld [vmem:[%s2849 + $0x40] sm:$0xf]
      %v3060 = vld [vmem:[%s2849 + $0x44] sm:$0x1]
      %v3061 = vld [vmem:[%s2849 + $0x48] sm:$0xf]
      %v3062 = vld [vmem:[%s2849 + $0x4c] sm:$0xf]
      %v3063 = vld [vmem:[%s2849 + $0x50] sm:$0x1]
      %v3064 = vld [vmem:[%s2849 + $0x54] sm:$0xf]
      %v3065 = vld [vmem:[%s2849 + $0x58] sm:$0xf]
      %v3066 = vld [vmem:[%s2849 + $0x5c] sm:$0x1]
      %v3067 = vld [vmem:[%s2849 + $0x60] sm:$0xf]
      %v3068 = vld [vmem:[%s2849 + $0x64] sm:$0xf]
      %v3069 = vld [vmem:[%s2849 + $0x68] sm:$0x1]
      %v3070 = vld [vmem:[%s2849 + $0x6c] sm:$0xf]
      %v3071 = vld [vmem:[%s2849 + $0x70] sm:$0xf]
      %v3072 = vld [vmem:[%s2849 + $0x74] sm:$0x1]
      %v3073 = vld [vmem:[%s2849 + $0x78] sm:$0xf]
      %v3074 = vld [vmem:[%s2849 + $0x7c] sm:$0xf]
      %v3075 = vld [vmem:[%s2849 + $0x80] sm:$0x1]
      %v3076 = vld [vmem:[%s2849 + $0x84] sm:$0xf]
      %v3077 = vld [vmem:[%s2849 + $0x88] sm:$0xf]
      %v3078 = vld [vmem:[%s2849 + $0x8c] sm:$0x1]
      %v3079 = vld [vmem:[%s2849 + $0x90] sm:$0xf]
      %v3080 = vld [vmem:[%s2849 + $0x94] sm:$0xf]
      %v3081 = vld [vmem:[%s2849 + $0x98] sm:$0x1]
      %v3082 = vld [vmem:[%s2849 + $0x9c] sm:$0xf]
      %v3083 = vld [vmem:[%s2849 + $0xa0] sm:$0xf]
      %v3084 = vld [vmem:[%s2849 + $0xa4] sm:$0x1]
      %v3085 = vld [vmem:[%s2849 + $0xa8] sm:$0xf]
      %v3086 = vld [vmem:[%s2849 + $0xac] sm:$0xf]
      %v3087 = vld [vmem:[%s2849 + $0xb0] sm:$0x1]
      %v3088 = vld [vmem:[%s2849 + $0xb4] sm:$0xf]
      %v3089 = vld [vmem:[%s2849 + $0xb8] sm:$0xf]
      %v3090 = vld [vmem:[%s2849 + $0xbc] sm:$0x1]
      %v3092 = vshrl.u32 %v3043, 16
      %v3094 = vrot.slane %v3092, 4
      %v3095 = vshll.u32 %v3043, 16
      %v3097 = vrot.slane %v3095, 5
      %v3098 = vor.u32 %v3094, %v3097
      %v3099 = vrot.slane %v3098, 4
      %v3101 = vshll.u32 %v3044, 16
      %v3103 = vrot.slane %v3101, 5
      %v3104 = vsel %vm904, %v3099, %v3103
      %v3105 = vshrl.u32 %v3044, 16
      %v3107 = vrot.slane %v3105, 4
      %v3108 = vor.u32 %v3107, %v3103
      %v3109 = vrot.slane %v3108, 4
      %v3111 = vshll.u32 %v3045, 16
      %v3113 = vrot.slane %v3111, 5
      %v3114 = vsel %vm904, %v3109, %v3113
      %v3116 = vshrl.u32 %v3046, 16
      %v3118 = vrot.slane %v3116, 4
      %v3119 = vshll.u32 %v3046, 16
      %v3121 = vrot.slane %v3119, 5
      %v3122 = vor.u32 %v3118, %v3121
      %v3123 = vrot.slane %v3122, 4
      %v3125 = vshll.u32 %v3047, 16
      %v3127 = vrot.slane %v3125, 5
      %v3128 = vsel %vm904, %v3123, %v3127
      %v3129 = vshrl.u32 %v3047, 16
      %v3131 = vrot.slane %v3129, 4
      %v3132 = vor.u32 %v3131, %v3127
      %v3133 = vrot.slane %v3132, 4
      %v3135 = vshll.u32 %v3048, 16
      %v3137 = vrot.slane %v3135, 5
      %v3138 = vsel %vm904, %v3133, %v3137
      %v3140 = vshrl.u32 %v3049, 16
      %v3142 = vrot.slane %v3140, 4
      %v3143 = vshll.u32 %v3049, 16
      %v3145 = vrot.slane %v3143, 5
      %v3146 = vor.u32 %v3142, %v3145
      %v3147 = vrot.slane %v3146, 4
      %v3149 = vshll.u32 %v3050, 16
      %v3151 = vrot.slane %v3149, 5
      %v3152 = vsel %vm904, %v3147, %v3151
      %v3153 = vshrl.u32 %v3050, 16
      %v3155 = vrot.slane %v3153, 4
      %v3156 = vor.u32 %v3155, %v3151
      %v3157 = vrot.slane %v3156, 4
      %v3159 = vshll.u32 %v3051, 16
      %v3161 = vrot.slane %v3159, 5
      %v3162 = vsel %vm904, %v3157, %v3161
      %v3164 = vshrl.u32 %v3052, 16
      %v3166 = vrot.slane %v3164, 4
      %v3167 = vshll.u32 %v3052, 16
      %v3169 = vrot.slane %v3167, 5
      %v3170 = vor.u32 %v3166, %v3169
      %v3171 = vrot.slane %v3170, 4
      %v3173 = vshll.u32 %v3053, 16
      %v3175 = vrot.slane %v3173, 5
      %v3176 = vsel %vm904, %v3171, %v3175
      %v3177 = vshrl.u32 %v3053, 16
      %v3179 = vrot.slane %v3177, 4
      %v3180 = vor.u32 %v3179, %v3175
      %v3181 = vrot.slane %v3180, 4
      %v3183 = vshll.u32 %v3054, 16
      %v3185 = vrot.slane %v3183, 5
      %v3186 = vsel %vm904, %v3181, %v3185
      %v3188 = vshrl.u32 %v3055, 16
      %v3190 = vrot.slane %v3188, 4
      %v3191 = vshll.u32 %v3055, 16
      %v3193 = vrot.slane %v3191, 5
      %v3194 = vor.u32 %v3190, %v3193
      %v3195 = vrot.slane %v3194, 4
      %v3197 = vshll.u32 %v3056, 16
      %v3199 = vrot.slane %v3197, 5
      %v3200 = vsel %vm904, %v3195, %v3199
      %v3201 = vshrl.u32 %v3056, 16
      %v3203 = vrot.slane %v3201, 4
      %v3204 = vor.u32 %v3203, %v3199
      %v3205 = vrot.slane %v3204, 4
      %v3207 = vshll.u32 %v3057, 16
      %v3209 = vrot.slane %v3207, 5
      %v3210 = vsel %vm904, %v3205, %v3209
      %v3212 = vshrl.u32 %v3058, 16
      %v3214 = vrot.slane %v3212, 4
      %v3215 = vshll.u32 %v3058, 16
      %v3217 = vrot.slane %v3215, 5
      %v3218 = vor.u32 %v3214, %v3217
      %v3219 = vrot.slane %v3218, 4
      %v3221 = vshll.u32 %v3059, 16
      %v3223 = vrot.slane %v3221, 5
      %v3224 = vsel %vm904, %v3219, %v3223
      %v3225 = vshrl.u32 %v3059, 16
      %v3227 = vrot.slane %v3225, 4
      %v3228 = vor.u32 %v3227, %v3223
      %v3229 = vrot.slane %v3228, 4
      %v3231 = vshll.u32 %v3060, 16
      %v3233 = vrot.slane %v3231, 5
      %v3234 = vsel %vm904, %v3229, %v3233
      %v3236 = vshrl.u32 %v3061, 16
      %v3238 = vrot.slane %v3236, 4
      %v3239 = vshll.u32 %v3061, 16
      %v3241 = vrot.slane %v3239, 5
      %v3242 = vor.u32 %v3238, %v3241
      %v3243 = vrot.slane %v3242, 4
      %v3245 = vshll.u32 %v3062, 16
      %v3247 = vrot.slane %v3245, 5
      %v3248 = vsel %vm904, %v3243, %v3247
      %v3249 = vshrl.u32 %v3062, 16
      %v3251 = vrot.slane %v3249, 4
      %v3252 = vor.u32 %v3251, %v3247
      %v3253 = vrot.slane %v3252, 4
      %v3255 = vshll.u32 %v3063, 16
      %v3257 = vrot.slane %v3255, 5
      %v3258 = vsel %vm904, %v3253, %v3257
      %v3260 = vshrl.u32 %v3064, 16
      %v3262 = vrot.slane %v3260, 4
      %v3263 = vshll.u32 %v3064, 16
      %v3265 = vrot.slane %v3263, 5
      %v3266 = vor.u32 %v3262, %v3265
      %v3267 = vrot.slane %v3266, 4
      %v3269 = vshll.u32 %v3065, 16
      %v3271 = vrot.slane %v3269, 5
      %v3272 = vsel %vm904, %v3267, %v3271
      %v3273 = vshrl.u32 %v3065, 16
      %v3275 = vrot.slane %v3273, 4
      %v3276 = vor.u32 %v3275, %v3271
      %v3277 = vrot.slane %v3276, 4
      %v3279 = vshll.u32 %v3066, 16
      %v3281 = vrot.slane %v3279, 5
      %v3282 = vsel %vm904, %v3277, %v3281
      %v3284 = vshrl.u32 %v3067, 16
      %v3286 = vrot.slane %v3284, 4
      %v3287 = vshll.u32 %v3067, 16
      %v3289 = vrot.slane %v3287, 5
      %v3290 = vor.u32 %v3286, %v3289
      %v3291 = vrot.slane %v3290, 4
      %v3293 = vshll.u32 %v3068, 16
      %v3295 = vrot.slane %v3293, 5
      %v3296 = vsel %vm904, %v3291, %v3295
      %v3297 = vshrl.u32 %v3068, 16
      %v3299 = vrot.slane %v3297, 4
      %v3300 = vor.u32 %v3299, %v3295
      %v3301 = vrot.slane %v3300, 4
      %v3303 = vshll.u32 %v3069, 16
      %v3305 = vrot.slane %v3303, 5
      %v3306 = vsel %vm904, %v3301, %v3305
      %v3308 = vshrl.u32 %v3070, 16
      %v3310 = vrot.slane %v3308, 4
      %v3311 = vshll.u32 %v3070, 16
      %v3313 = vrot.slane %v3311, 5
      %v3314 = vor.u32 %v3310, %v3313
      %v3315 = vrot.slane %v3314, 4
      %v3317 = vshll.u32 %v3071, 16
      %v3319 = vrot.slane %v3317, 5
      %v3320 = vsel %vm904, %v3315, %v3319
      %v3321 = vshrl.u32 %v3071, 16
      %v3323 = vrot.slane %v3321, 4
      %v3324 = vor.u32 %v3323, %v3319
      %v3325 = vrot.slane %v3324, 4
      %v3327 = vshll.u32 %v3072, 16
      %v3329 = vrot.slane %v3327, 5
      %v3330 = vsel %vm904, %v3325, %v3329
      %v3332 = vshrl.u32 %v3073, 16
      %v3334 = vrot.slane %v3332, 4
      %v3335 = vshll.u32 %v3073, 16
      %v3337 = vrot.slane %v3335, 5
      %v3338 = vor.u32 %v3334, %v3337
      %v3339 = vrot.slane %v3338, 4
      %v3341 = vshll.u32 %v3074, 16
      %v3343 = vrot.slane %v3341, 5
      %v3344 = vsel %vm904, %v3339, %v3343
      %v3345 = vshrl.u32 %v3074, 16
      %v3347 = vrot.slane %v3345, 4
      %v3348 = vor.u32 %v3347, %v3343
      %v3349 = vrot.slane %v3348, 4
      %v3351 = vshll.u32 %v3075, 16
      %v3353 = vrot.slane %v3351, 5
      %v3354 = vsel %vm904, %v3349, %v3353
      %v3356 = vshrl.u32 %v3076, 16
      %v3358 = vrot.slane %v3356, 4
      %v3359 = vshll.u32 %v3076, 16
      %v3361 = vrot.slane %v3359, 5
      %v3362 = vor.u32 %v3358, %v3361
      %v3363 = vrot.slane %v3362, 4
      %v3365 = vshll.u32 %v3077, 16
      %v3367 = vrot.slane %v3365, 5
      %v3368 = vsel %vm904, %v3363, %v3367
      %v3369 = vshrl.u32 %v3077, 16
      %v3371 = vrot.slane %v3369, 4
      %v3372 = vor.u32 %v3371, %v3367
      %v3373 = vrot.slane %v3372, 4
      %v3375 = vshll.u32 %v3078, 16
      %v3377 = vrot.slane %v3375, 5
      %v3378 = vsel %vm904, %v3373, %v3377
      %v3380 = vshrl.u32 %v3079, 16
      %v3382 = vrot.slane %v3380, 4
      %v3383 = vshll.u32 %v3079, 16
      %v3385 = vrot.slane %v3383, 5
      %v3386 = vor.u32 %v3382, %v3385
      %v3387 = vrot.slane %v3386, 4
      %v3389 = vshll.u32 %v3080, 16
      %v3391 = vrot.slane %v3389, 5
      %v3392 = vsel %vm904, %v3387, %v3391
      %v3393 = vshrl.u32 %v3080, 16
      %v3395 = vrot.slane %v3393, 4
      %v3396 = vor.u32 %v3395, %v3391
      %v3397 = vrot.slane %v3396, 4
      %v3399 = vshll.u32 %v3081, 16
      %v3401 = vrot.slane %v3399, 5
      %v3402 = vsel %vm904, %v3397, %v3401
      %v3404 = vshrl.u32 %v3082, 16
      %v3406 = vrot.slane %v3404, 4
      %v3407 = vshll.u32 %v3082, 16
      %v3409 = vrot.slane %v3407, 5
      %v3410 = vor.u32 %v3406, %v3409
      %v3411 = vrot.slane %v3410, 4
      %v3413 = vshll.u32 %v3083, 16
      %v3415 = vrot.slane %v3413, 5
      %v3416 = vsel %vm904, %v3411, %v3415
      %v3417 = vshrl.u32 %v3083, 16
      %v3419 = vrot.slane %v3417, 4
      %v3420 = vor.u32 %v3419, %v3415
      %v3421 = vrot.slane %v3420, 4
      %v3423 = vshll.u32 %v3084, 16
      %v3425 = vrot.slane %v3423, 5
      %v3426 = vsel %vm904, %v3421, %v3425
      %v3428 = vshrl.u32 %v3085, 16
      %v3430 = vrot.slane %v3428, 4
      %v3431 = vshll.u32 %v3085, 16
      %v3433 = vrot.slane %v3431, 5
      %v3434 = vor.u32 %v3430, %v3433
      %v3435 = vrot.slane %v3434, 4
      %v3437 = vshll.u32 %v3086, 16
      %v3439 = vrot.slane %v3437, 5
      %v3440 = vsel %vm904, %v3435, %v3439
      %v3441 = vshrl.u32 %v3086, 16
      %v3443 = vrot.slane %v3441, 4
      %v3444 = vor.u32 %v3443, %v3439
      %v3445 = vrot.slane %v3444, 4
      %v3447 = vshll.u32 %v3087, 16
      %v3449 = vrot.slane %v3447, 5
      %v3450 = vsel %vm904, %v3445, %v3449
      %v3452 = vshrl.u32 %v3088, 16
      %v3454 = vrot.slane %v3452, 4
      %v3455 = vshll.u32 %v3088, 16
      %v3457 = vrot.slane %v3455, 5
      %v3458 = vor.u32 %v3454, %v3457
      %v3459 = vrot.slane %v3458, 4
      %v3461 = vshll.u32 %v3089, 16
      %v3463 = vrot.slane %v3461, 5
      %v3464 = vsel %vm904, %v3459, %v3463
      %v3465 = vshrl.u32 %v3089, 16
      %v3467 = vrot.slane %v3465, 4
      %v3468 = vor.u32 %v3467, %v3463
      %v3469 = vrot.slane %v3468, 4
      %v3471 = vshll.u32 %v3090, 16
      %v3473 = vrot.slane %v3471, 5
      %v3474 = vsel %vm904, %v3469, %v3473
      %3475 = vrot.lane.b32.xlu0 %v3104, 56
      %v3476 = vpop.permute.xlu0 %3475
      %3477 = vrot.lane.b32.xlu0 %v3114, 56
      %v3478 = vpop.permute.xlu0 %3477
      %3479 = vrot.lane.b32.xlu0 %v3128, 56
      %v3480 = vpop.permute.xlu0 %3479
      %3481 = vrot.lane.b32.xlu0 %v3138, 56
      %v3482 = vpop.permute.xlu0 %3481
      %3483 = vrot.lane.b32.xlu0 %v3152, 56
      %v3484 = vpop.permute.xlu0 %3483
      %3485 = vrot.lane.b32.xlu0 %v3162, 56
      %v3486 = vpop.permute.xlu0 %3485
      %3487 = vrot.lane.b32.xlu0 %v3176, 56
      %v3488 = vpop.permute.xlu0 %3487
      %3489 = vrot.lane.b32.xlu0 %v3186, 56
      %v3490 = vpop.permute.xlu0 %3489
      %3491 = vrot.lane.b32.xlu0 %v3200, 56
      %v3492 = vpop.permute.xlu0 %3491
      %3493 = vrot.lane.b32.xlu0 %v3210, 56
      %v3494 = vpop.permute.xlu0 %3493
      %3495 = vrot.lane.b32.xlu0 %v3224, 56
      %v3496 = vpop.permute.xlu0 %3495
      %3497 = vrot.lane.b32.xlu0 %v3234, 56
      %v3498 = vpop.permute.xlu0 %3497
      %3499 = vrot.lane.b32.xlu0 %v3248, 56
      %v3500 = vpop.permute.xlu0 %3499
      %3501 = vrot.lane.b32.xlu0 %v3258, 56
      %v3502 = vpop.permute.xlu0 %3501
      %3503 = vrot.lane.b32.xlu0 %v3272, 56
      %v3504 = vpop.permute.xlu0 %3503
      %3505 = vrot.lane.b32.xlu0 %v3282, 56
      %v3506 = vpop.permute.xlu0 %3505
      %3507 = vrot.lane.b32.xlu0 %v3296, 56
      %v3508 = vpop.permute.xlu0 %3507
      %3509 = vrot.lane.b32.xlu0 %v3306, 56
      %v3510 = vpop.permute.xlu0 %3509
      %3511 = vrot.lane.b32.xlu0 %v3320, 56
      %v3512 = vpop.permute.xlu0 %3511
      %3513 = vrot.lane.b32.xlu0 %v3330, 56
      %v3514 = vpop.permute.xlu0 %3513
      %3515 = vrot.lane.b32.xlu0 %v3344, 56
      %v3516 = vpop.permute.xlu0 %3515
      %3517 = vrot.lane.b32.xlu0 %v3354, 56
      %v3518 = vpop.permute.xlu0 %3517
      %3519 = vrot.lane.b32.xlu0 %v3368, 56
      %v3520 = vpop.permute.xlu0 %3519
      %3521 = vrot.lane.b32.xlu0 %v3378, 56
      %v3522 = vpop.permute.xlu0 %3521
      %3523 = vrot.lane.b32.xlu0 %v3392, 56
      %v3524 = vpop.permute.xlu0 %3523
      %3525 = vrot.lane.b32.xlu0 %v3402, 56
      %v3526 = vpop.permute.xlu0 %3525
      %3527 = vrot.lane.b32.xlu0 %v3416, 56
      %v3528 = vpop.permute.xlu0 %3527
      %3529 = vrot.lane.b32.xlu0 %v3426, 56
      %v3530 = vpop.permute.xlu0 %3529
      %3531 = vrot.lane.b32.xlu0 %v3440, 56
      %v3532 = vpop.permute.xlu0 %3531
      %3533 = vrot.lane.b32.xlu0 %v3450, 56
      %v3534 = vpop.permute.xlu0 %3533
      %3535 = vrot.lane.b32.xlu0 %v3464, 56
      %v3536 = vpop.permute.xlu0 %3535
      %3537 = vrot.lane.b32.xlu0 %v3474, 56
      %v3538 = vpop.permute.xlu0 %3537
      %vm3571 = vcmask 519616
      %3572 = vst.msk [vmem:[#allocation3] sm:$0xf] %vm3571, %v3476
      %3573 = vst.msk [vmem:[#allocation3 + $0x4] sm:$0xf] %vm3571, %v3478
      %3574 = vst.msk [vmem:[#allocation3 + $0x8] sm:$0xf] %vm3571, %v3480
      %3575 = vst.msk [vmem:[#allocation3 + $0xc] sm:$0xf] %vm3571, %v3482
      %3576 = vst.msk [vmem:[#allocation3 + $0x10] sm:$0xf] %vm3571, %v3484
      %3577 = vst.msk [vmem:[#allocation3 + $0x14] sm:$0xf] %vm3571, %v3486
      %3578 = vst.msk [vmem:[#allocation3 + $0x18] sm:$0xf] %vm3571, %v3488
      %3579 = vst.msk [vmem:[#allocation3 + $0x1c] sm:$0xf] %vm3571, %v3490
      %3580 = vst.msk [vmem:[#allocation3 + $0x20] sm:$0xf] %vm3571, %v3492
      %3581 = vst.msk [vmem:[#allocation3 + $0x24] sm:$0xf] %vm3571, %v3494
      %3582 = vst.msk [vmem:[#allocation3 + $0x28] sm:$0xf] %vm3571, %v3496
      %3583 = vst.msk [vmem:[#allocation3 + $0x2c] sm:$0xf] %vm3571, %v3498
      %3584 = vst.msk [vmem:[#allocation3 + $0x30] sm:$0xf] %vm3571, %v3500
      %3585 = vst.msk [vmem:[#allocation3 + $0x34] sm:$0xf] %vm3571, %v3502
      %3586 = vst.msk [vmem:[#allocation3 + $0x38] sm:$0xf] %vm3571, %v3504
      %3587 = vst.msk [vmem:[#allocation3 + $0x3c] sm:$0xf] %vm3571, %v3506
      %3588 = vst.msk [vmem:[#allocation3 + $0x40] sm:$0xf] %vm3571, %v3508
      %3589 = vst.msk [vmem:[#allocation3 + $0x44] sm:$0xf] %vm3571, %v3510
      %3590 = vst.msk [vmem:[#allocation3 + $0x48] sm:$0xf] %vm3571, %v3512
      %3591 = vst.msk [vmem:[#allocation3 + $0x4c] sm:$0xf] %vm3571, %v3514
      %3592 = vst.msk [vmem:[#allocation3 + $0x50] sm:$0xf] %vm3571, %v3516
      %3593 = vst.msk [vmem:[#allocation3 + $0x54] sm:$0xf] %vm3571, %v3518
      %3594 = vst.msk [vmem:[#allocation3 + $0x58] sm:$0xf] %vm3571, %v3520
      %3595 = vst.msk [vmem:[#allocation3 + $0x5c] sm:$0xf] %vm3571, %v3522
      %3596 = vst.msk [vmem:[#allocation3 + $0x60] sm:$0xf] %vm3571, %v3524
      %3597 = vst.msk [vmem:[#allocation3 + $0x64] sm:$0xf] %vm3571, %v3526
      %3598 = vst.msk [vmem:[#allocation3 + $0x68] sm:$0xf] %vm3571, %v3528
      %3599 = vst.msk [vmem:[#allocation3 + $0x6c] sm:$0xf] %vm3571, %v3530
      %3600 = vst.msk [vmem:[#allocation3 + $0x70] sm:$0xf] %vm3571, %v3532
      %3601 = vst.msk [vmem:[#allocation3 + $0x74] sm:$0xf] %vm3571, %v3534
      %3602 = vst.msk [vmem:[#allocation3 + $0x78] sm:$0xf] %vm3571, %v3536
      %3603 = vst.msk [vmem:[#allocation3 + $0x7c] sm:$0xf] %vm3571, %v3538
      %v3604 = vld [vmem:[%s2849] sm:$0xe]
      %v3605 = vld [vmem:[%s2849 + $0x4] sm:$0xf]
      %v3606 = vld [vmem:[%s2849 + $0x8] sm:$0x1]
      %v3607 = vld [vmem:[%s2849 + $0xc] sm:$0xe]
      %v3608 = vld [vmem:[%s2849 + $0x10] sm:$0xf]
      %v3609 = vld [vmem:[%s2849 + $0x14] sm:$0x1]
      %v3610 = vld [vmem:[%s2849 + $0x18] sm:$0xe]
      %v3611 = vld [vmem:[%s2849 + $0x1c] sm:$0xf]
      %v3612 = vld [vmem:[%s2849 + $0x20] sm:$0x1]
      %v3613 = vld [vmem:[%s2849 + $0x24] sm:$0xe]
      %v3614 = vld [vmem:[%s2849 + $0x28] sm:$0xf]
      %v3615 = vld [vmem:[%s2849 + $0x2c] sm:$0x1]
      %v3616 = vld [vmem:[%s2849 + $0x30] sm:$0xe]
      %v3617 = vld [vmem:[%s2849 + $0x34] sm:$0xf]
      %v3618 = vld [vmem:[%s2849 + $0x38] sm:$0x1]
      %v3619 = vld [vmem:[%s2849 + $0x3c] sm:$0xe]
      %v3620 = vld [vmem:[%s2849 + $0x40] sm:$0xf]
      %v3621 = vld [vmem:[%s2849 + $0x44] sm:$0x1]
      %v3622 = vld [vmem:[%s2849 + $0x48] sm:$0xe]
      %v3623 = vld [vmem:[%s2849 + $0x4c] sm:$0xf]
      %v3624 = vld [vmem:[%s2849 + $0x50] sm:$0x1]
      %v3625 = vld [vmem:[%s2849 + $0x54] sm:$0xe]
      %v3626 = vld [vmem:[%s2849 + $0x58] sm:$0xf]
      %v3627 = vld [vmem:[%s2849 + $0x5c] sm:$0x1]
      %v3628 = vld [vmem:[%s2849 + $0x60] sm:$0xe]
      %v3629 = vld [vmem:[%s2849 + $0x64] sm:$0xf]
      %v3630 = vld [vmem:[%s2849 + $0x68] sm:$0x1]
      %v3631 = vld [vmem:[%s2849 + $0x6c] sm:$0xe]
      %v3632 = vld [vmem:[%s2849 + $0x70] sm:$0xf]
      %v3633 = vld [vmem:[%s2849 + $0x74] sm:$0x1]
      %v3634 = vld [vmem:[%s2849 + $0x78] sm:$0xe]
      %v3635 = vld [vmem:[%s2849 + $0x7c] sm:$0xf]
      %v3636 = vld [vmem:[%s2849 + $0x80] sm:$0x1]
      %v3637 = vld [vmem:[%s2849 + $0x84] sm:$0xe]
      %v3638 = vld [vmem:[%s2849 + $0x88] sm:$0xf]
      %v3639 = vld [vmem:[%s2849 + $0x8c] sm:$0x1]
      %v3640 = vld [vmem:[%s2849 + $0x90] sm:$0xe]
      %v3641 = vld [vmem:[%s2849 + $0x94] sm:$0xf]
      %v3642 = vld [vmem:[%s2849 + $0x98] sm:$0x1]
      %v3643 = vld [vmem:[%s2849 + $0x9c] sm:$0xe]
      %v3644 = vld [vmem:[%s2849 + $0xa0] sm:$0xf]
      %v3645 = vld [vmem:[%s2849 + $0xa4] sm:$0x1]
      %v3646 = vld [vmem:[%s2849 + $0xa8] sm:$0xe]
      %v3647 = vld [vmem:[%s2849 + $0xac] sm:$0xf]
      %v3648 = vld [vmem:[%s2849 + $0xb0] sm:$0x1]
      %v3649 = vld [vmem:[%s2849 + $0xb4] sm:$0xe]
      %v3650 = vld [vmem:[%s2849 + $0xb8] sm:$0xf]
      %v3651 = vld [vmem:[%s2849 + $0xbc] sm:$0x1]
      %v3700 = vrot.slane %v3604, 5
      %v3701 = vrot.slane %v3700, 4
      %v3702 = vrot.slane %v3605, 5
      %v3703 = vsel %vm1516, %v3701, %v3702
      %v3704 = vrot.slane %v3702, 4
      %v3705 = vrot.slane %v3606, 5
      %v3706 = vsel %vm1516, %v3704, %v3705
      %v3707 = vrot.slane %v3607, 5
      %v3708 = vrot.slane %v3707, 4
      %v3709 = vrot.slane %v3608, 5
      %v3710 = vsel %vm1516, %v3708, %v3709
      %v3711 = vrot.slane %v3709, 4
      %v3712 = vrot.slane %v3609, 5
      %v3713 = vsel %vm1516, %v3711, %v3712
      %v3714 = vrot.slane %v3610, 5
      %v3715 = vrot.slane %v3714, 4
      %v3716 = vrot.slane %v3611, 5
      %v3717 = vsel %vm1516, %v3715, %v3716
      %v3718 = vrot.slane %v3716, 4
      %v3719 = vrot.slane %v3612, 5
      %v3720 = vsel %vm1516, %v3718, %v3719
      %v3721 = vrot.slane %v3613, 5
      %v3722 = vrot.slane %v3721, 4
      %v3723 = vrot.slane %v3614, 5
      %v3724 = vsel %vm1516, %v3722, %v3723
      %v3725 = vrot.slane %v3723, 4
      %v3726 = vrot.slane %v3615, 5
      %v3727 = vsel %vm1516, %v3725, %v3726
      %v3728 = vrot.slane %v3616, 5
      %v3729 = vrot.slane %v3728, 4
      %v3730 = vrot.slane %v3617, 5
      %v3731 = vsel %vm1516, %v3729, %v3730
      %v3732 = vrot.slane %v3730, 4
      %v3733 = vrot.slane %v3618, 5
      %v3734 = vsel %vm1516, %v3732, %v3733
      %v3735 = vrot.slane %v3619, 5
      %v3736 = vrot.slane %v3735, 4
      %v3737 = vrot.slane %v3620, 5
      %v3738 = vsel %vm1516, %v3736, %v3737
      %v3739 = vrot.slane %v3737, 4
      %v3740 = vrot.slane %v3621, 5
      %v3741 = vsel %vm1516, %v3739, %v3740
      %v3742 = vrot.slane %v3622, 5
      %v3743 = vrot.slane %v3742, 4
      %v3744 = vrot.slane %v3623, 5
      %v3745 = vsel %vm1516, %v3743, %v3744
      %v3746 = vrot.slane %v3744, 4
      %v3747 = vrot.slane %v3624, 5
      %v3748 = vsel %vm1516, %v3746, %v3747
      %v3749 = vrot.slane %v3625, 5
      %v3750 = vrot.slane %v3749, 4
      %v3751 = vrot.slane %v3626, 5
      %v3752 = vsel %vm1516, %v3750, %v3751
      %v3753 = vrot.slane %v3751, 4
      %v3754 = vrot.slane %v3627, 5
      %v3755 = vsel %vm1516, %v3753, %v3754
      %v3756 = vrot.slane %v3628, 5
      %v3757 = vrot.slane %v3756, 4
      %v3758 = vrot.slane %v3629, 5
      %v3759 = vsel %vm1516, %v3757, %v3758
      %v3760 = vrot.slane %v3758, 4
      %v3761 = vrot.slane %v3630, 5
      %v3762 = vsel %vm1516, %v3760, %v3761
      %v3763 = vrot.slane %v3631, 5
      %v3764 = vrot.slane %v3763, 4
      %v3765 = vrot.slane %v3632, 5
      %v3766 = vsel %vm1516, %v3764, %v3765
      %v3767 = vrot.slane %v3765, 4
      %v3768 = vrot.slane %v3633, 5
      %v3769 = vsel %vm1516, %v3767, %v3768
      %v3770 = vrot.slane %v3634, 5
      %v3771 = vrot.slane %v3770, 4
      %v3772 = vrot.slane %v3635, 5
      %v3773 = vsel %vm1516, %v3771, %v3772
      %v3774 = vrot.slane %v3772, 4
      %v3775 = vrot.slane %v3636, 5
      %v3776 = vsel %vm1516, %v3774, %v3775
      %v3777 = vrot.slane %v3637, 5
      %v3778 = vrot.slane %v3777, 4
      %v3779 = vrot.slane %v3638, 5
      %v3780 = vsel %vm1516, %v3778, %v3779
      %v3781 = vrot.slane %v3779, 4
      %v3782 = vrot.slane %v3639, 5
      %v3783 = vsel %vm1516, %v3781, %v3782
      %v3784 = vrot.slane %v3640, 5
      %v3785 = vrot.slane %v3784, 4
      %v3786 = vrot.slane %v3641, 5
      %v3787 = vsel %vm1516, %v3785, %v3786
      %v3788 = vrot.slane %v3786, 4
      %v3789 = vrot.slane %v3642, 5
      %v3790 = vsel %vm1516, %v3788, %v3789
      %v3791 = vrot.slane %v3643, 5
      %v3792 = vrot.slane %v3791, 4
      %v3793 = vrot.slane %v3644, 5
      %v3794 = vsel %vm1516, %v3792, %v3793
      %v3795 = vrot.slane %v3793, 4
      %v3796 = vrot.slane %v3645, 5
      %v3797 = vsel %vm1516, %v3795, %v3796
      %v3798 = vrot.slane %v3646, 5
      %v3799 = vrot.slane %v3798, 4
      %v3800 = vrot.slane %v3647, 5
      %v3801 = vsel %vm1516, %v3799, %v3800
      %v3802 = vrot.slane %v3800, 4
      %v3803 = vrot.slane %v3648, 5
      %v3804 = vsel %vm1516, %v3802, %v3803
      %v3805 = vrot.slane %v3649, 5
      %v3806 = vrot.slane %v3805, 4
      %v3807 = vrot.slane %v3650, 5
      %v3808 = vsel %vm1516, %v3806, %v3807
      %v3809 = vrot.slane %v3807, 4
      %v3810 = vrot.slane %v3651, 5
      %v3811 = vsel %vm1516, %v3809, %v3810
      %3812 = vrot.lane.b32.xlu0 %v3703, 64
      %v3813 = vpop.permute.xlu0 %3812
      %3814 = vrot.lane.b32.xlu0 %v3706, 64
      %v3815 = vpop.permute.xlu0 %3814
      %3816 = vrot.lane.b32.xlu0 %v3710, 64
      %v3817 = vpop.permute.xlu0 %3816
      %3818 = vrot.lane.b32.xlu0 %v3713, 64
      %v3819 = vpop.permute.xlu0 %3818
      %3820 = vrot.lane.b32.xlu0 %v3717, 64
      %v3821 = vpop.permute.xlu0 %3820
      %3822 = vrot.lane.b32.xlu0 %v3720, 64
      %v3823 = vpop.permute.xlu0 %3822
      %3824 = vrot.lane.b32.xlu0 %v3724, 64
      %v3825 = vpop.permute.xlu0 %3824
      %3826 = vrot.lane.b32.xlu0 %v3727, 64
      %v3827 = vpop.permute.xlu0 %3826
      %3828 = vrot.lane.b32.xlu0 %v3731, 64
      %v3829 = vpop.permute.xlu0 %3828
      %3830 = vrot.lane.b32.xlu0 %v3734, 64
      %v3831 = vpop.permute.xlu0 %3830
      %3832 = vrot.lane.b32.xlu0 %v3738, 64
      %v3833 = vpop.permute.xlu0 %3832
      %3834 = vrot.lane.b32.xlu0 %v3741, 64
      %v3835 = vpop.permute.xlu0 %3834
      %3836 = vrot.lane.b32.xlu0 %v3745, 64
      %v3837 = vpop.permute.xlu0 %3836
      %3838 = vrot.lane.b32.xlu0 %v3748, 64
      %v3839 = vpop.permute.xlu0 %3838
      %3840 = vrot.lane.b32.xlu0 %v3752, 64
      %v3841 = vpop.permute.xlu0 %3840
      %3842 = vrot.lane.b32.xlu0 %v3755, 64
      %v3843 = vpop.permute.xlu0 %3842
      %3844 = vrot.lane.b32.xlu0 %v3759, 64
      %v3845 = vpop.permute.xlu0 %3844
      %3846 = vrot.lane.b32.xlu0 %v3762, 64
      %v3847 = vpop.permute.xlu0 %3846
      %3848 = vrot.lane.b32.xlu0 %v3766, 64
      %v3849 = vpop.permute.xlu0 %3848
      %3850 = vrot.lane.b32.xlu0 %v3769, 64
      %v3851 = vpop.permute.xlu0 %3850
      %3852 = vrot.lane.b32.xlu0 %v3773, 64
      %v3853 = vpop.permute.xlu0 %3852
      %3854 = vrot.lane.b32.xlu0 %v3776, 64
      %v3855 = vpop.permute.xlu0 %3854
      %3856 = vrot.lane.b32.xlu0 %v3780, 64
      %v3857 = vpop.permute.xlu0 %3856
      %3858 = vrot.lane.b32.xlu0 %v3783, 64
      %v3859 = vpop.permute.xlu0 %3858
      %3860 = vrot.lane.b32.xlu0 %v3787, 64
      %v3861 = vpop.permute.xlu0 %3860
      %3862 = vrot.lane.b32.xlu0 %v3790, 64
      %v3863 = vpop.permute.xlu0 %3862
      %3864 = vrot.lane.b32.xlu0 %v3794, 64
      %v3865 = vpop.permute.xlu0 %3864
      %3866 = vrot.lane.b32.xlu0 %v3797, 64
      %v3867 = vpop.permute.xlu0 %3866
      %3868 = vrot.lane.b32.xlu0 %v3801, 64
      %v3869 = vpop.permute.xlu0 %3868
      %3870 = vrot.lane.b32.xlu0 %v3804, 64
      %v3871 = vpop.permute.xlu0 %3870
      %3872 = vrot.lane.b32.xlu0 %v3808, 64
      %v3873 = vpop.permute.xlu0 %3872
      %3874 = vrot.lane.b32.xlu0 %v3811, 64
      %v3875 = vpop.permute.xlu0 %3874
      %vm3908 = vcmask 585216
      %3909 = vst.msk [vmem:[#allocation3] sm:$0xf] %vm3908, %v3813
      %3910 = vst.msk [vmem:[#allocation3 + $0x4] sm:$0xf] %vm3908, %v3815
      %3911 = vst.msk [vmem:[#allocation3 + $0x8] sm:$0xf] %vm3908, %v3817
      %3912 = vst.msk [vmem:[#allocation3 + $0xc] sm:$0xf] %vm3908, %v3819
      %3913 = vst.msk [vmem:[#allocation3 + $0x10] sm:$0xf] %vm3908, %v3821
      %3914 = vst.msk [vmem:[#allocation3 + $0x14] sm:$0xf] %vm3908, %v3823
      %3915 = vst.msk [vmem:[#allocation3 + $0x18] sm:$0xf] %vm3908, %v3825
      %3916 = vst.msk [vmem:[#allocation3 + $0x1c] sm:$0xf] %vm3908, %v3827
      %3917 = vst.msk [vmem:[#allocation3 + $0x20] sm:$0xf] %vm3908, %v3829
      %3918 = vst.msk [vmem:[#allocation3 + $0x24] sm:$0xf] %vm3908, %v3831
      %3919 = vst.msk [vmem:[#allocation3 + $0x28] sm:$0xf] %vm3908, %v3833
      %3920 = vst.msk [vmem:[#allocation3 + $0x2c] sm:$0xf] %vm3908, %v3835
      %3921 = vst.msk [vmem:[#allocation3 + $0x30] sm:$0xf] %vm3908, %v3837
      %3922 = vst.msk [vmem:[#allocation3 + $0x34] sm:$0xf] %vm3908, %v3839
      %3923 = vst.msk [vmem:[#allocation3 + $0x38] sm:$0xf] %vm3908, %v3841
      %3924 = vst.msk [vmem:[#allocation3 + $0x3c] sm:$0xf] %vm3908, %v3843
      %3925 = vst.msk [vmem:[#allocation3 + $0x40] sm:$0xf] %vm3908, %v3845
      %3926 = vst.msk [vmem:[#allocation3 + $0x44] sm:$0xf] %vm3908, %v3847
      %3927 = vst.msk [vmem:[#allocation3 + $0x48] sm:$0xf] %vm3908, %v3849
      %3928 = vst.msk [vmem:[#allocation3 + $0x4c] sm:$0xf] %vm3908, %v3851
      %3929 = vst.msk [vmem:[#allocation3 + $0x50] sm:$0xf] %vm3908, %v3853
      %3930 = vst.msk [vmem:[#allocation3 + $0x54] sm:$0xf] %vm3908, %v3855
      %3931 = vst.msk [vmem:[#allocation3 + $0x58] sm:$0xf] %vm3908, %v3857
      %3932 = vst.msk [vmem:[#allocation3 + $0x5c] sm:$0xf] %vm3908, %v3859
      %3933 = vst.msk [vmem:[#allocation3 + $0x60] sm:$0xf] %vm3908, %v3861
      %3934 = vst.msk [vmem:[#allocation3 + $0x64] sm:$0xf] %vm3908, %v3863
      %3935 = vst.msk [vmem:[#allocation3 + $0x68] sm:$0xf] %vm3908, %v3865
      %3936 = vst.msk [vmem:[#allocation3 + $0x6c] sm:$0xf] %vm3908, %v3867
      %3937 = vst.msk [vmem:[#allocation3 + $0x70] sm:$0xf] %vm3908, %v3869
      %3938 = vst.msk [vmem:[#allocation3 + $0x74] sm:$0xf] %vm3908, %v3871
      %3939 = vst.msk [vmem:[#allocation3 + $0x78] sm:$0xf] %vm3908, %v3873
      %3940 = vst.msk [vmem:[#allocation3 + $0x7c] sm:$0xf] %vm3908, %v3875
      %v3941 = vld [vmem:[#allocation3] sm:$0xf]
      %v3942 = vld [vmem:[#allocation3 + $0x4] sm:$0xf]
      %v3943 = vld [vmem:[#allocation3 + $0x8] sm:$0xf]
      %v3944 = vld [vmem:[#allocation3 + $0xc] sm:$0xf]
      %v3945 = vld [vmem:[#allocation3 + $0x10] sm:$0xf]
      %v3946 = vld [vmem:[#allocation3 + $0x14] sm:$0xf]
      %v3947 = vld [vmem:[#allocation3 + $0x18] sm:$0xf]
      %v3948 = vld [vmem:[#allocation3 + $0x1c] sm:$0xf]
      %v3949 = vld [vmem:[#allocation3 + $0x20] sm:$0xf]
      %v3950 = vld [vmem:[#allocation3 + $0x24] sm:$0xf]
      %v3951 = vld [vmem:[#allocation3 + $0x28] sm:$0xf]
      %v3952 = vld [vmem:[#allocation3 + $0x2c] sm:$0xf]
      %v3953 = vld [vmem:[#allocation3 + $0x30] sm:$0xf]
      %v3954 = vld [vmem:[#allocation3 + $0x34] sm:$0xf]
      %v3955 = vld [vmem:[#allocation3 + $0x38] sm:$0xf]
      %v3956 = vld [vmem:[#allocation3 + $0x3c] sm:$0xf]
      %v3957 = vld [vmem:[#allocation3 + $0x40] sm:$0xf]
      %v3958 = vld [vmem:[#allocation3 + $0x44] sm:$0xf]
      %v3959 = vld [vmem:[#allocation3 + $0x48] sm:$0xf]
      %v3960 = vld [vmem:[#allocation3 + $0x4c] sm:$0xf]
      %v3961 = vld [vmem:[#allocation3 + $0x50] sm:$0xf]
      %v3962 = vld [vmem:[#allocation3 + $0x54] sm:$0xf]
      %v3963 = vld [vmem:[#allocation3 + $0x58] sm:$0xf]
      %v3964 = vld [vmem:[#allocation3 + $0x5c] sm:$0xf]
      %v3965 = vld [vmem:[#allocation3 + $0x60] sm:$0xf]
      %v3966 = vld [vmem:[#allocation3 + $0x64] sm:$0xf]
      %v3967 = vld [vmem:[#allocation3 + $0x68] sm:$0xf]
      %v3968 = vld [vmem:[#allocation3 + $0x6c] sm:$0xf]
      %v3969 = vld [vmem:[#allocation3 + $0x70] sm:$0xf]
      %v3970 = vld [vmem:[#allocation3 + $0x74] sm:$0xf]
      %v3971 = vld [vmem:[#allocation3 + $0x78] sm:$0xf]
      %v3972 = vld [vmem:[#allocation3 + $0x7c] sm:$0xf]
      %v3973 = vld [vmem:[%s1] sm:$0xf]
      %v3974 = vld [vmem:[%s1 + $0x4] sm:$0xf]
      %v3975 = vld [vmem:[%s1 + $0x8] sm:$0xf]
      %v3976 = vld [vmem:[%s1 + $0xc] sm:$0xf]
      %v3977 = vld [vmem:[%s1 + $0x10] sm:$0xf]
      %v3978 = vld [vmem:[%s1 + $0x14] sm:$0xf]
      %v3979 = vld [vmem:[%s1 + $0x18] sm:$0xf]
      %v3980 = vld [vmem:[%s1 + $0x1c] sm:$0xf]
      %v3981 = vld [vmem:[%s1 + $0x20] sm:$0xf]
      %v4014 = vunpack.c.l.b16 %v3941
      %v4015 = vunpack.c.l.b16 %v3942
      %v4016 = vunpack.c.l.b16 %v3943
      %v4017 = vunpack.c.l.b16 %v3944
      %v4018 = vunpack.c.l.b16 %v3945
      %v4019 = vunpack.c.l.b16 %v3946
      %v4020 = vunpack.c.l.b16 %v3947
      %v4021 = vunpack.c.l.b16 %v3948
      %v4022 = vunpack.c.l.b16 %v3949
      %v4023 = vunpack.c.l.b16 %v3950
      %v4024 = vunpack.c.l.b16 %v3951
      %v4025 = vunpack.c.l.b16 %v3952
      %v4026 = vunpack.c.l.b16 %v3953
      %v4027 = vunpack.c.l.b16 %v3954
      %v4028 = vunpack.c.l.b16 %v3955
      %v4029 = vunpack.c.l.b16 %v3956
      %v4030 = vunpack.c.l.b16 %v3957
      %v4031 = vunpack.c.l.b16 %v3958
      %v4032 = vunpack.c.l.b16 %v3959
      %v4033 = vunpack.c.l.b16 %v3960
      %v4034 = vunpack.c.l.b16 %v3961
      %v4035 = vunpack.c.l.b16 %v3962
      %v4036 = vunpack.c.l.b16 %v3963
      %v4037 = vunpack.c.l.b16 %v3964
      %v4038 = vunpack.c.l.b16 %v3965
      %v4039 = vunpack.c.l.b16 %v3966
      %v4040 = vunpack.c.l.b16 %v3967
      %v4041 = vunpack.c.l.b16 %v3968
      %v4042 = vunpack.c.l.b16 %v3969
      %v4043 = vunpack.c.l.b16 %v3970
      %v4044 = vunpack.c.l.b16 %v3971
      %v4045 = vunpack.c.l.b16 %v3972
      %v4046 = vpack.c.b16 %v4015, %v4014
      %v4047 = vpack.c.b16 %v4017, %v4016
      %v4048 = vpack.c.b16 %v4019, %v4018
      %v4049 = vpack.c.b16 %v4021, %v4020
      %v4050 = vpack.c.b16 %v4023, %v4022
      %v4051 = vpack.c.b16 %v4025, %v4024
      %v4052 = vpack.c.b16 %v4027, %v4026
      %v4053 = vpack.c.b16 %v4029, %v4028
      %v4054 = vpack.c.b16 %v4031, %v4030
      %v4055 = vpack.c.b16 %v4033, %v4032
      %v4056 = vpack.c.b16 %v4035, %v4034
      %v4057 = vpack.c.b16 %v4037, %v4036
      %v4058 = vpack.c.b16 %v4039, %v4038
      %v4059 = vpack.c.b16 %v4041, %v4040
      %v4060 = vpack.c.b16 %v4043, %v4042
      %v4061 = vpack.c.b16 %v4045, %v4044
      %v4071 = vunpack.c.l.b16 %v3973
      %v4072 = vunpack.c.l.b16 %v3974
      %v4073 = vunpack.c.l.b16 %v3975
      %v4074 = vunpack.c.l.b16 %v3976
      %v4075 = vunpack.c.l.b16 %v3977
      %v4076 = vunpack.c.l.b16 %v3978
      %v4077 = vunpack.c.l.b16 %v3979
      %v4078 = vunpack.c.l.b16 %v3980
      %v4079 = vunpack.c.l.b16 %v3981
      %v4080 = vpack.c.b16 %v4072, %v4071
      %v4081 = vpack.c.b16 %v4074, %v4073
      %v4082 = vpack.c.b16 %v4076, %v4075
      %v4083 = vpack.c.b16 %v4078, %v4077
      %v4084 = vpack.c.b16 %v4079, %v4079
      %vm4089 = vcmask 588800
      %v4091 = vsel %vm4089, %v4046, 0
      %v4094 = vsel %vm4089, %v4047, 0
      %v4097 = vsel %vm4089, %v4048, 0
      %v4100 = vsel %vm4089, %v4049, 0
      %v4103 = vsel %vm4089, %v4050, 0
      %v4106 = vsel %vm4089, %v4051, 0
      %v4109 = vsel %vm4089, %v4052, 0
      %v4112 = vsel %vm4089, %v4053, 0
      %v4115 = vsel %vm4089, %v4054, 0
      %v4118 = vsel %vm4089, %v4055, 0
      %v4121 = vsel %vm4089, %v4056, 0
      %v4124 = vsel %vm4089, %v4057, 0
      %v4127 = vsel %vm4089, %v4058, 0
      %v4130 = vsel %vm4089, %v4059, 0
      %v4133 = vsel %vm4089, %v4060, 0
      %v4136 = vsel %vm4089, %v4061, 0
      %vm4138 = vcmask 1043456
      %v4140 = vsel %vm4138, %v4084, 0
      %4142 = vmatprep.subr.bf16.mxu0 0
      %4143 = vmatpush1.bf16.msra.mxu0 0
      %4144 = vmatprep.subr.bf16.mxu0 0
      %4145 = vmatpush1.bf16.msra.mxu0 0
      %4146 = vmatprep.subr.bf16.mxu0 0
      %4147 = vmatpush1.bf16.msra.mxu0 0
      %4148 = vmatprep.subr.bf16.mxu0 0
      %4149 = vmatpush1.bf16.msra.mxu0 %v4140
      %4150 = vmatprep.subr.bf16.mxu0 0
      %4151 = vmatpush1.bf16.msra.mxu0 %v4083
      %4152 = vmatprep.subr.bf16.mxu0 0
      %4153 = vmatpush1.bf16.msra.mxu0 %v4082
      %4154 = vmatprep.subr.bf16.mxu0 0
      %4155 = vmatpush1.bf16.msra.mxu0 %v4081
      %4156 = vmatprep.subr.bf16.mxu0 0
      %4157 = vmatpush1.bf16.msra.mxu0 %v4080
      %4158 = vmatprep.subr.bf16.mxu0 0
      %4159 = vmatpush2.bf16.msra.mxu0 0
      %4160 = vmatprep.subr.bf16.mxu0 0
      %4161 = vmatpush2.bf16.msra.mxu0 0
      %4162 = vmatprep.subr.bf16.mxu0 0
      %4163 = vmatpush2.bf16.msra.mxu0 0
      %4164 = vmatprep.subr.bf16.mxu0 0
      %4165 = vmatpush2.bf16.msra.mxu0 0
      %4166 = vmatprep.subr.bf16.mxu0 0
      %4167 = vmatpush2.bf16.msra.mxu0 0
      %4168 = vmatprep.subr.bf16.mxu0 0
      %4169 = vmatpush2.bf16.msra.mxu0 0
      %4170 = vmatprep.subr.bf16.mxu0 0
      %4171 = vmatpush2.bf16.msra.mxu0 0
      %4172 = vmatprep.subr.bf16.mxu0 0
      %4173 = vmatpush2.bf16.msra.mxu0 0
      %4174 = vmatprep.mubr.bf16.mxu0 0
      %4175 = vmatmul.mubr.bf16.gmra.mxu0 %v4091
      %v4176 = vpop.f32.mrf.mxu0
      %v4177 = vadd.f32 0.0, %v4176
      %v4178 = vpop.f32.mrf.mxu0
      %v4179 = vpop.f32.mrf.mxu0
      %v4180 = vadd.f32 0.0, %v4179
      %v4181 = vpop.f32.mrf.mxu0
      %4182 = vmatprep.mubr.bf16.mxu0 0
      %4183 = vmatmul.mubr.bf16.gmra.mxu0 %v4094
      %v4184 = vpop.f32.mrf.mxu0
      %v4185 = vadd.f32 0.0, %v4184
      %v4186 = vpop.f32.mrf.mxu0
      %v4187 = vpop.f32.mrf.mxu0
      %v4188 = vadd.f32 0.0, %v4187
      %v4189 = vpop.f32.mrf.mxu0
      %4190 = vmatprep.mubr.bf16.mxu0 0
      %4191 = vmatmul.mubr.bf16.gmra.mxu0 %v4097
      %v4192 = vpop.f32.mrf.mxu0
      %v4193 = vadd.f32 0.0, %v4192
      %v4194 = vpop.f32.mrf.mxu0
      %v4195 = vpop.f32.mrf.mxu0
      %v4196 = vadd.f32 0.0, %v4195
      %v4197 = vpop.f32.mrf.mxu0
      %4198 = vmatprep.mubr.bf16.mxu0 0
      %4199 = vmatmul.mubr.bf16.gmra.mxu0 %v4100
      %v4200 = vpop.f32.mrf.mxu0
      %v4201 = vadd.f32 0.0, %v4200
      %v4202 = vpop.f32.mrf.mxu0
      %v4203 = vpop.f32.mrf.mxu0
      %v4204 = vadd.f32 0.0, %v4203
      %v4205 = vpop.f32.mrf.mxu0
      %4206 = vmatprep.mubr.bf16.mxu0 0
      %4207 = vmatmul.mubr.bf16.gmra.mxu0 %v4103
      %v4208 = vpop.f32.mrf.mxu0
      %v4209 = vadd.f32 0.0, %v4208
      %v4210 = vpop.f32.mrf.mxu0
      %v4211 = vpop.f32.mrf.mxu0
      %v4212 = vadd.f32 0.0, %v4211
      %v4213 = vpop.f32.mrf.mxu0
      %4214 = vmatprep.mubr.bf16.mxu0 0
      %4215 = vmatmul.mubr.bf16.gmra.mxu0 %v4106
      %v4216 = vpop.f32.mrf.mxu0
      %v4217 = vadd.f32 0.0, %v4216
      %v4218 = vpop.f32.mrf.mxu0
      %v4219 = vpop.f32.mrf.mxu0
      %v4220 = vadd.f32 0.0, %v4219
      %v4221 = vpop.f32.mrf.mxu0
      %4222 = vmatprep.mubr.bf16.mxu0 0
      %4223 = vmatmul.mubr.bf16.gmra.mxu0 %v4109
      %v4224 = vpop.f32.mrf.mxu0
      %v4225 = vadd.f32 0.0, %v4224
      %v4226 = vpop.f32.mrf.mxu0
      %v4227 = vpop.f32.mrf.mxu0
      %v4228 = vadd.f32 0.0, %v4227
      %v4229 = vpop.f32.mrf.mxu0
      %4230 = vmatprep.mubr.bf16.mxu0 0
      %4231 = vmatmul.mubr.bf16.gmra.mxu0 %v4112
      %v4232 = vpop.f32.mrf.mxu0
      %v4233 = vadd.f32 0.0, %v4232
      %v4234 = vpop.f32.mrf.mxu0
      %v4235 = vpop.f32.mrf.mxu0
      %v4236 = vadd.f32 0.0, %v4235
      %v4237 = vpop.f32.mrf.mxu0
      %4238 = vmatprep.mubr.bf16.mxu0 0
      %4239 = vmatmul.mubr.bf16.gmra.mxu0 %v4115
      %v4240 = vpop.f32.mrf.mxu0
      %v4241 = vadd.f32 0.0, %v4240
      %v4242 = vpop.f32.mrf.mxu0
      %v4243 = vpop.f32.mrf.mxu0
      %v4244 = vadd.f32 0.0, %v4243
      %v4245 = vpop.f32.mrf.mxu0
      %4246 = vmatprep.mubr.bf16.mxu0 0
      %4247 = vmatmul.mubr.bf16.gmra.mxu0 %v4118
      %v4248 = vpop.f32.mrf.mxu0
      %v4249 = vadd.f32 0.0, %v4248
      %v4250 = vpop.f32.mrf.mxu0
      %v4251 = vpop.f32.mrf.mxu0
      %v4252 = vadd.f32 0.0, %v4251
      %v4253 = vpop.f32.mrf.mxu0
      %4254 = vmatprep.mubr.bf16.mxu0 0
      %4255 = vmatmul.mubr.bf16.gmra.mxu0 %v4121
      %v4256 = vpop.f32.mrf.mxu0
      %v4257 = vadd.f32 0.0, %v4256
      %v4258 = vpop.f32.mrf.mxu0
      %v4259 = vpop.f32.mrf.mxu0
      %v4260 = vadd.f32 0.0, %v4259
      %v4261 = vpop.f32.mrf.mxu0
      %4262 = vmatprep.mubr.bf16.mxu0 0
      %4263 = vmatmul.mubr.bf16.gmra.mxu0 %v4124
      %v4264 = vpop.f32.mrf.mxu0
      %v4265 = vadd.f32 0.0, %v4264
      %v4266 = vpop.f32.mrf.mxu0
      %v4267 = vpop.f32.mrf.mxu0
      %v4268 = vadd.f32 0.0, %v4267
      %v4269 = vpop.f32.mrf.mxu0
      %4270 = vmatprep.mubr.bf16.mxu0 0
      %4271 = vmatmul.mubr.bf16.gmra.mxu0 %v4127
      %v4272 = vpop.f32.mrf.mxu0
      %v4273 = vadd.f32 0.0, %v4272
      %v4274 = vpop.f32.mrf.mxu0
      %v4275 = vpop.f32.mrf.mxu0
      %v4276 = vadd.f32 0.0, %v4275
      %v4277 = vpop.f32.mrf.mxu0
      %4278 = vmatprep.mubr.bf16.mxu0 0
      %4279 = vmatmul.mubr.bf16.gmra.mxu0 %v4130
      %v4280 = vpop.f32.mrf.mxu0
      %v4281 = vadd.f32 0.0, %v4280
      %v4282 = vpop.f32.mrf.mxu0
      %v4283 = vpop.f32.mrf.mxu0
      %v4284 = vadd.f32 0.0, %v4283
      %v4285 = vpop.f32.mrf.mxu0
      %4286 = vmatprep.mubr.bf16.mxu0 0
      %4287 = vmatmul.mubr.bf16.gmra.mxu0 %v4133
      %v4288 = vpop.f32.mrf.mxu0
      %v4289 = vadd.f32 0.0, %v4288
      %v4290 = vpop.f32.mrf.mxu0
      %v4291 = vpop.f32.mrf.mxu0
      %v4292 = vadd.f32 0.0, %v4291
      %v4293 = vpop.f32.mrf.mxu0
      %4294 = vmatprep.mubr.bf16.mxu0 0
      %4295 = vmatmul.mubr.bf16.gmra.mxu0 %v4136
      %v4296 = vpop.f32.mrf.mxu0
      %v4297 = vadd.f32 0.0, %v4296
      %v4298 = vpop.f32.mrf.mxu0
      %v4299 = vpop.f32.mrf.mxu0
      %v4300 = vadd.f32 0.0, %v4299
      %v4301 = vpop.f32.mrf.mxu0
      %4302 = vdwg.mxu0
      %v4303 = vld [vmem:[%s2] sm:$0x1]
      %v4305 = vlaneseq
      %v4306 = vshrl.u32 %v4305, 7
      %v4307 = vsub.s32 0, %v4306
      %v4308 = vrot.slane %v4303, %v4307
      %v4310 = vmul.f32 %v4177, %v4308
      %v4311 = vmul.f32 %v4180, %v4308
      %v4312 = vmul.f32 %v4185, %v4308
      %v4313 = vmul.f32 %v4188, %v4308
      %v4314 = vmul.f32 %v4193, %v4308
      %v4315 = vmul.f32 %v4196, %v4308
      %v4316 = vmul.f32 %v4201, %v4308
      %v4317 = vmul.f32 %v4204, %v4308
      %v4318 = vmul.f32 %v4209, %v4308
      %v4319 = vmul.f32 %v4212, %v4308
      %v4320 = vmul.f32 %v4217, %v4308
      %v4321 = vmul.f32 %v4220, %v4308
      %v4322 = vmul.f32 %v4225, %v4308
      %v4323 = vmul.f32 %v4228, %v4308
      %v4324 = vmul.f32 %v4233, %v4308
      %v4325 = vmul.f32 %v4236, %v4308
      %v4326 = vmul.f32 %v4241, %v4308
      %v4327 = vmul.f32 %v4244, %v4308
      %v4328 = vmul.f32 %v4249, %v4308
      %v4329 = vmul.f32 %v4252, %v4308
      %v4330 = vmul.f32 %v4257, %v4308
      %v4331 = vmul.f32 %v4260, %v4308
      %v4332 = vmul.f32 %v4265, %v4308
      %v4333 = vmul.f32 %v4268, %v4308
      %v4334 = vmul.f32 %v4273, %v4308
      %v4335 = vmul.f32 %v4276, %v4308
      %v4336 = vmul.f32 %v4281, %v4308
      %v4337 = vmul.f32 %v4284, %v4308
      %v4338 = vmul.f32 %v4289, %v4308
      %v4339 = vmul.f32 %v4292, %v4308
      %v4340 = vmul.f32 %v4297, %v4308
      %v4341 = vmul.f32 %v4300, %v4308
      %v4342 = vld [vmem:[%s3] sm:$0x1]
      %v4344 = vlaneseq
      %v4345 = vshrl.u32 %v4344, 7
      %v4346 = vsub.s32 0, %v4345
      %v4347 = vrot.slane %v4342, %v4346
      %v4349 = vadd.f32 %v4310, %v4347
      %v4350 = vadd.f32 %v4311, %v4347
      %v4351 = vadd.f32 %v4312, %v4347
      %v4352 = vadd.f32 %v4313, %v4347
      %v4353 = vadd.f32 %v4314, %v4347
      %v4354 = vadd.f32 %v4315, %v4347
      %v4355 = vadd.f32 %v4316, %v4347
      %v4356 = vadd.f32 %v4317, %v4347
      %v4357 = vadd.f32 %v4318, %v4347
      %v4358 = vadd.f32 %v4319, %v4347
      %v4359 = vadd.f32 %v4320, %v4347
      %v4360 = vadd.f32 %v4321, %v4347
      %v4361 = vadd.f32 %v4322, %v4347
      %v4362 = vadd.f32 %v4323, %v4347
      %v4363 = vadd.f32 %v4324, %v4347
      %v4364 = vadd.f32 %v4325, %v4347
      %v4365 = vadd.f32 %v4326, %v4347
      %v4366 = vadd.f32 %v4327, %v4347
      %v4367 = vadd.f32 %v4328, %v4347
      %v4368 = vadd.f32 %v4329, %v4347
      %v4369 = vadd.f32 %v4330, %v4347
      %v4370 = vadd.f32 %v4331, %v4347
      %v4371 = vadd.f32 %v4332, %v4347
      %v4372 = vadd.f32 %v4333, %v4347
      %v4373 = vadd.f32 %v4334, %v4347
      %v4374 = vadd.f32 %v4335, %v4347
      %v4375 = vadd.f32 %v4336, %v4347
      %v4376 = vadd.f32 %v4337, %v4347
      %v4377 = vadd.f32 %v4338, %v4347
      %v4378 = vadd.f32 %v4339, %v4347
      %v4379 = vadd.f32 %v4340, %v4347
      %v4380 = vadd.f32 %v4341, %v4347
      %v4381 = vmax.f32 %v4349, 0.0
      %v4382 = vmax.f32 %v4350, 0.0
      %v4383 = vmax.f32 %v4351, 0.0
      %v4384 = vmax.f32 %v4352, 0.0
      %v4385 = vmax.f32 %v4353, 0.0
      %v4386 = vmax.f32 %v4354, 0.0
      %v4387 = vmax.f32 %v4355, 0.0
      %v4388 = vmax.f32 %v4356, 0.0
      %v4389 = vmax.f32 %v4357, 0.0
      %v4390 = vmax.f32 %v4358, 0.0
      %v4391 = vmax.f32 %v4359, 0.0
      %v4392 = vmax.f32 %v4360, 0.0
      %v4393 = vmax.f32 %v4361, 0.0
      %v4394 = vmax.f32 %v4362, 0.0
      %v4395 = vmax.f32 %v4363, 0.0
      %v4396 = vmax.f32 %v4364, 0.0
      %v4397 = vmax.f32 %v4365, 0.0
      %v4398 = vmax.f32 %v4366, 0.0
      %v4399 = vmax.f32 %v4367, 0.0
      %v4400 = vmax.f32 %v4368, 0.0
      %v4401 = vmax.f32 %v4369, 0.0
      %v4402 = vmax.f32 %v4370, 0.0
      %v4403 = vmax.f32 %v4371, 0.0
      %v4404 = vmax.f32 %v4372, 0.0
      %v4405 = vmax.f32 %v4373, 0.0
      %v4406 = vmax.f32 %v4374, 0.0
      %v4407 = vmax.f32 %v4375, 0.0
      %v4408 = vmax.f32 %v4376, 0.0
      %v4409 = vmax.f32 %v4377, 0.0
      %v4410 = vmax.f32 %v4378, 0.0
      %v4411 = vmax.f32 %v4379, 0.0
      %v4412 = vmax.f32 %v4380, 0.0
      %v4413 = vunpack.c.l.bf16 %v199
      %v4414 = vunpack.c.l.bf16 %v200
      %v4415 = vunpack.c.l.bf16 %v201
      %v4416 = vunpack.c.l.bf16 %v202
      %v4417 = vunpack.c.l.bf16 %v203
      %v4418 = vunpack.c.l.bf16 %v204
      %v4419 = vunpack.c.l.bf16 %v205
      %v4420 = vunpack.c.l.bf16 %v206
      %v4421 = vunpack.c.l.bf16 %v207
      %v4422 = vunpack.c.l.bf16 %v208
      %v4423 = vunpack.c.l.bf16 %v209
      %v4424 = vunpack.c.l.bf16 %v210
      %v4425 = vunpack.c.l.bf16 %v211
      %v4426 = vunpack.c.l.bf16 %v212
      %v4427 = vunpack.c.l.bf16 %v213
      %v4428 = vunpack.c.l.bf16 %v214
      %v4429 = vunpack.c.l.bf16 %v215
      %v4430 = vunpack.c.l.bf16 %v216
      %v4431 = vunpack.c.l.bf16 %v217
      %v4432 = vunpack.c.l.bf16 %v218
      %v4433 = vunpack.c.l.bf16 %v219
      %v4434 = vunpack.c.l.bf16 %v220
      %v4435 = vunpack.c.l.bf16 %v221
      %v4436 = vunpack.c.l.bf16 %v222
      %v4437 = vunpack.c.l.bf16 %v223
      %v4438 = vunpack.c.l.bf16 %v224
      %v4439 = vunpack.c.l.bf16 %v225
      %v4440 = vunpack.c.l.bf16 %v226
      %v4441 = vunpack.c.l.bf16 %v227
      %v4442 = vunpack.c.l.bf16 %v228
      %v4443 = vunpack.c.l.bf16 %v229
      %v4444 = vunpack.c.l.bf16 %v230
      %4477 = vrot.lane.b32.xlu0 %v4413, 120
      %v4478 = vpop.permute.xlu0 %4477
      %4479 = vrot.lane.b32.xlu0 %v4414, 120
      %v4480 = vpop.permute.xlu0 %4479
      %4481 = vrot.lane.b32.xlu0 %v4415, 120
      %v4482 = vpop.permute.xlu0 %4481
      %4483 = vrot.lane.b32.xlu0 %v4416, 120
      %v4484 = vpop.permute.xlu0 %4483
      %4485 = vrot.lane.b32.xlu0 %v4417, 120
      %v4486 = vpop.permute.xlu0 %4485
      %4487 = vrot.lane.b32.xlu0 %v4418, 120
      %v4488 = vpop.permute.xlu0 %4487
      %4489 = vrot.lane.b32.xlu0 %v4419, 120
      %v4490 = vpop.permute.xlu0 %4489
      %4491 = vrot.lane.b32.xlu0 %v4420, 120
      %v4492 = vpop.permute.xlu0 %4491
      %4493 = vrot.lane.b32.xlu0 %v4421, 120
      %v4494 = vpop.permute.xlu0 %4493
      %4495 = vrot.lane.b32.xlu0 %v4422, 120
      %v4496 = vpop.permute.xlu0 %4495
      %4497 = vrot.lane.b32.xlu0 %v4423, 120
      %v4498 = vpop.permute.xlu0 %4497
      %4499 = vrot.lane.b32.xlu0 %v4424, 120
      %v4500 = vpop.permute.xlu0 %4499
      %4501 = vrot.lane.b32.xlu0 %v4425, 120
      %v4502 = vpop.permute.xlu0 %4501
      %4503 = vrot.lane.b32.xlu0 %v4426, 120
      %v4504 = vpop.permute.xlu0 %4503
      %4505 = vrot.lane.b32.xlu0 %v4427, 120
      %v4506 = vpop.permute.xlu0 %4505
      %4507 = vrot.lane.b32.xlu0 %v4428, 120
      %v4508 = vpop.permute.xlu0 %4507
      %4509 = vrot.lane.b32.xlu0 %v4429, 120
      %v4510 = vpop.permute.xlu0 %4509
      %4511 = vrot.lane.b32.xlu0 %v4430, 120
      %v4512 = vpop.permute.xlu0 %4511
      %4513 = vrot.lane.b32.xlu0 %v4431, 120
      %v4514 = vpop.permute.xlu0 %4513
      %4515 = vrot.lane.b32.xlu0 %v4432, 120
      %v4516 = vpop.permute.xlu0 %4515
      %4517 = vrot.lane.b32.xlu0 %v4433, 120
      %v4518 = vpop.permute.xlu0 %4517
      %4519 = vrot.lane.b32.xlu0 %v4434, 120
      %v4520 = vpop.permute.xlu0 %4519
      %4521 = vrot.lane.b32.xlu0 %v4435, 120
      %v4522 = vpop.permute.xlu0 %4521
      %4523 = vrot.lane.b32.xlu0 %v4436, 120
      %v4524 = vpop.permute.xlu0 %4523
      %4525 = vrot.lane.b32.xlu0 %v4437, 120
      %v4526 = vpop.permute.xlu0 %4525
      %4527 = vrot.lane.b32.xlu0 %v4438, 120
      %v4528 = vpop.permute.xlu0 %4527
      %4529 = vrot.lane.b32.xlu0 %v4439, 120
      %v4530 = vpop.permute.xlu0 %4529
      %4531 = vrot.lane.b32.xlu0 %v4440, 120
      %v4532 = vpop.permute.xlu0 %4531
      %4533 = vrot.lane.b32.xlu0 %v4441, 120
      %v4534 = vpop.permute.xlu0 %4533
      %4535 = vrot.lane.b32.xlu0 %v4442, 120
      %v4536 = vpop.permute.xlu0 %4535
      %4537 = vrot.lane.b32.xlu0 %v4443, 120
      %v4538 = vpop.permute.xlu0 %4537
      %4539 = vrot.lane.b32.xlu0 %v4444, 120
      %v4540 = vpop.permute.xlu0 %4539
      %v4573 = vadd.f32 %v4381, %v4478
      %v4574 = vadd.f32 %v4382, %v4480
      %v4575 = vadd.f32 %v4383, %v4482
      %v4576 = vadd.f32 %v4384, %v4484
      %v4577 = vadd.f32 %v4385, %v4486
      %v4578 = vadd.f32 %v4386, %v4488
      %v4579 = vadd.f32 %v4387, %v4490
      %v4580 = vadd.f32 %v4388, %v4492
      %v4581 = vadd.f32 %v4389, %v4494
      %v4582 = vadd.f32 %v4390, %v4496
      %v4583 = vadd.f32 %v4391, %v4498
      %v4584 = vadd.f32 %v4392, %v4500
      %v4585 = vadd.f32 %v4393, %v4502
      %v4586 = vadd.f32 %v4394, %v4504
      %v4587 = vadd.f32 %v4395, %v4506
      %v4588 = vadd.f32 %v4396, %v4508
      %v4589 = vadd.f32 %v4397, %v4510
      %v4590 = vadd.f32 %v4398, %v4512
      %v4591 = vadd.f32 %v4399, %v4514
      %v4592 = vadd.f32 %v4400, %v4516
      %v4593 = vadd.f32 %v4401, %v4518
      %v4594 = vadd.f32 %v4402, %v4520
      %v4595 = vadd.f32 %v4403, %v4522
      %v4596 = vadd.f32 %v4404, %v4524
      %v4597 = vadd.f32 %v4405, %v4526
      %v4598 = vadd.f32 %v4406, %v4528
      %v4599 = vadd.f32 %v4407, %v4530
      %v4600 = vadd.f32 %v4408, %v4532
      %v4601 = vadd.f32 %v4409, %v4534
      %v4602 = vadd.f32 %v4410, %v4536
      %v4603 = vadd.f32 %v4411, %v4538
      %v4604 = vadd.f32 %v4412, %v4540
      %v4605 = vmax.f32 %v4573, 0.0
      %v4606 = vmax.f32 %v4574, 0.0
      %v4607 = vmax.f32 %v4575, 0.0
      %v4608 = vmax.f32 %v4576, 0.0
      %v4609 = vmax.f32 %v4577, 0.0
      %v4610 = vmax.f32 %v4578, 0.0
      %v4611 = vmax.f32 %v4579, 0.0
      %v4612 = vmax.f32 %v4580, 0.0
      %v4613 = vmax.f32 %v4581, 0.0
      %v4614 = vmax.f32 %v4582, 0.0
      %v4615 = vmax.f32 %v4583, 0.0
      %v4616 = vmax.f32 %v4584, 0.0
      %v4617 = vmax.f32 %v4585, 0.0
      %v4618 = vmax.f32 %v4586, 0.0
      %v4619 = vmax.f32 %v4587, 0.0
      %v4620 = vmax.f32 %v4588, 0.0
      %v4621 = vmax.f32 %v4589, 0.0
      %v4622 = vmax.f32 %v4590, 0.0
      %v4623 = vmax.f32 %v4591, 0.0
      %v4624 = vmax.f32 %v4592, 0.0
      %v4625 = vmax.f32 %v4593, 0.0
      %v4626 = vmax.f32 %v4594, 0.0
      %v4627 = vmax.f32 %v4595, 0.0
      %v4628 = vmax.f32 %v4596, 0.0
      %v4629 = vmax.f32 %v4597, 0.0
      %v4630 = vmax.f32 %v4598, 0.0
      %v4631 = vmax.f32 %v4599, 0.0
      %v4632 = vmax.f32 %v4600, 0.0
      %v4633 = vmax.f32 %v4601, 0.0
      %v4634 = vmax.f32 %v4602, 0.0
      %v4635 = vmax.f32 %v4603, 0.0
      %v4636 = vmax.f32 %v4604, 0.0
      %vm4637 = vcmask 64512
      %4638 = vst.msk [vmem:[%s197] sm:$0xff] %vm4637, %v4605
      %4639 = vst.msk [vmem:[%s197 + $0x8] sm:$0xff] %vm4637, %v4606
      %4640 = vst.msk [vmem:[%s197 + $0x10] sm:$0xff] %vm4637, %v4607
      %4641 = vst.msk [vmem:[%s197 + $0x18] sm:$0xff] %vm4637, %v4608
      %4642 = vst.msk [vmem:[%s197 + $0x20] sm:$0xff] %vm4637, %v4609
      %4643 = vst.msk [vmem:[%s197 + $0x28] sm:$0xff] %vm4637, %v4610
      %4644 = vst.msk [vmem:[%s197 + $0x30] sm:$0xff] %vm4637, %v4611
      %4645 = vst.msk [vmem:[%s197 + $0x38] sm:$0xff] %vm4637, %v4612
      %4646 = vst.msk [vmem:[%s197 + $0x40] sm:$0xff] %vm4637, %v4613
      %4647 = vst.msk [vmem:[%s197 + $0x48] sm:$0xff] %vm4637, %v4614
      %4648 = vst.msk [vmem:[%s197 + $0x50] sm:$0xff] %vm4637, %v4615
      %4649 = vst.msk [vmem:[%s197 + $0x58] sm:$0xff] %vm4637, %v4616
      %4650 = vst.msk [vmem:[%s197 + $0x60] sm:$0xff] %vm4637, %v4617
      %4651 = vst.msk [vmem:[%s197 + $0x68] sm:$0xff] %vm4637, %v4618
      %4652 = vst.msk [vmem:[%s197 + $0x70] sm:$0xff] %vm4637, %v4619
      %4653 = vst.msk [vmem:[%s197 + $0x78] sm:$0xff] %vm4637, %v4620
      %4654 = vst.msk [vmem:[%s197 + $0x80] sm:$0xff] %vm4637, %v4621
      %4655 = vst.msk [vmem:[%s197 + $0x88] sm:$0xff] %vm4637, %v4622
      %4656 = vst.msk [vmem:[%s197 + $0x90] sm:$0xff] %vm4637, %v4623
      %4657 = vst.msk [vmem:[%s197 + $0x98] sm:$0xff] %vm4637, %v4624
      %4658 = vst.msk [vmem:[%s197 + $0xa0] sm:$0xff] %vm4637, %v4625
      %4659 = vst.msk [vmem:[%s197 + $0xa8] sm:$0xff] %vm4637, %v4626
      %4660 = vst.msk [vmem:[%s197 + $0xb0] sm:$0xff] %vm4637, %v4627
      %4661 = vst.msk [vmem:[%s197 + $0xb8] sm:$0xff] %vm4637, %v4628
      %4662 = vst.msk [vmem:[%s197 + $0xc0] sm:$0xff] %vm4637, %v4629
      %4663 = vst.msk [vmem:[%s197 + $0xc8] sm:$0xff] %vm4637, %v4630
      %4664 = vst.msk [vmem:[%s197 + $0xd0] sm:$0xff] %vm4637, %v4631
      %4665 = vst.msk [vmem:[%s197 + $0xd8] sm:$0xff] %vm4637, %v4632
      %4666 = vst.msk [vmem:[%s197 + $0xe0] sm:$0xff] %vm4637, %v4633
      %4667 = vst.msk [vmem:[%s197 + $0xe8] sm:$0xff] %vm4637, %v4634
      %4668 = vst.msk [vmem:[%s197 + $0xf0] sm:$0xff] %vm4637, %v4635
      %4669 = vst.msk [vmem:[%s197 + $0xf8] sm:$0xff] %vm4637, %v4636
      %p4670 = scmp.lt.s32.totalorder %s15, 1
      %s4671 = scalar_select %p4670, %s15, 1
      %s4672 = smul.addr %s4671, 32
      %s4673 = smul.addr %s4672, 8
      %s4674 = scalar_lea.vmem %s4, %s4673
      // Predicated region
      $region37: #{residual_basic_forward.3} parent=35 // pred_check
        %p4675 = pneg %p122
      $region38: #{residual_basic_forward.3} parent=35 // pred_check_branch
        %4677 = sbr.rel (%p4675) target = $region40
      $region39: #{residual_basic_forward.3} parent=35 // pred_region
        _
      $region40: #{residual_basic_forward.3} parent=35 // pred_fallthru
        _
    $region36: #{residual_basic_forward.3} parent=5 // pred_fallthru
      _
    %p4678 = scmp.le.s32.totalorder 2, %s10
    // Predicated region
    $region41: #{residual_basic_forward.3} parent=5 // pred_check
      %p4679 = pneg %p4678
    $region42: #{residual_basic_forward.3} parent=5 // pred_check_branch
      %4681 = sbr.rel (%p4679) target = $region44
    $region43: #{residual_basic_forward.3} parent=5 // pred_region
      %s4682 = ssub.s32 %s10, 2
      // Predicated region
      $region45: #{residual_basic_forward.3} parent=43 // pred_check
        %p4683 = pneg %p128
      $region46: #{residual_basic_forward.3} parent=43 // pred_check_branch
        %4685 = sbr.rel (%p4683) target = $region48
      $region47: #{residual_basic_forward.3} parent=43 // pred_region
        %p4686 = scmp.lt.s32.totalorder %s16, 1
        %s4687 = scalar_select %p4686, %s16, 1
        %s4688 = smul.addr %s4687, 32
        %s4689 = smul.addr %s4688, 8
        %s4690 = scalar_lea.vmem %s4, %s4689
      $region48: #{residual_basic_forward.3} parent=43 // pred_fallthru
        _
    $region44: #{residual_basic_forward.3} parent=5 // pred_fallthru
      _
  $region6: #{residual_basic_forward.3} parent=0 // loop_footer
    %s14 = sadd.s32 1, %s10
  $region7: #{residual_basic_forward.3} parent=0 // loop_footer_branch
    %9 = sbr.rel target = $region3
  $region8: #{residual_basic_forward.3} parent=0 // loop_exit
    _

// kernel: residual_basic_forward.2
$region0: #{residual_basic_forward.2}
  #allocation0 [shape = 'u32[]', space=smem, size = 0x4, offset = 0x4, fixed_abs, tag = 'smem constant byte address 0x4 - core index']
  #allocation1 [shape = 'u32[144,128]{1,0:T(1,128)}', space=vmem, size = 0x12000, scoped, tag = 'internal scratch']
  #allocation2 [shape = 'bf16[1,18,18,4]{3,2,1,0:T(8,128)(2,1)}', space=vmem, size = 0x1b000, scoped, tag = 'scratch operand']
  #allocation3 [shape = 'bf16[256,36]{1,0:T(8,128)(2,1)}', space=vmem, size = 0x10000, scoped, tag = 'scratch operand']
  %s0 = inlined_call_operand.vmem [shape: bf16[2,16,16,4], index: 0, kind: input, shape index: {}]
  %s1 = inlined_call_operand.vmem [shape: bf16[36,16], index: 1, kind: input, shape index: {}]
  %s2 = inlined_call_operand.vmem [shape: f32[1,16], index: 2, kind: input, shape index: {}]
  %s3 = inlined_call_operand.vmem [shape: f32[1,16], index: 3, kind: input, shape index: {}]
  %s4 = inlined_call_operand.vmem [shape: bf16[2,16,16,16], index: 4, kind: output, shape index: {}]
  %s5 = sld [smem:[#allocation0]]
  $region49: #{residual_basic_forward.2} parent=0
    _
  %s7 = ssub.s32 1, %s5
  %s8 = scalar_select 0, %s7, %s5
  loop: start=0, step=1, limit=4
  $region2: #{residual_basic_forward.2} parent=0 // loop_pre_header
    _
  $region3: #{residual_basic_forward.2} parent=0 // loop_header
    %s10 = sphi 0, %s14
    %p11 = scmp.ge.s32.totalorder %s10, 4
    %s20 = sphi 0, %s22
    %s23 = sphi 0, %s20
    %s24 = sphi 0, %s23
    %s40 = sphi 0, %s24
    %s44 = sphi 0, %s44
    %s46 = sphi 0, %s44
    %s47 = sphi 0, %s46
    %s61 = sphi 0, %s47
    %s65 = sphi 0, %s65
    %s67 = sphi 0, %s65
    %s68 = sphi 0, %s67
    %s82 = sphi 0, %s68
    %s86 = sphi 0, %s86
    %s88 = sphi 0, %s86
    %s89 = sphi 0, %s88
    %s103 = sphi 0, %s89
    %s109 = sphi 0, %s111
    %s112 = sphi 0, %s109
    %s113 = sphi 0, %s112
    %s129 = sphi 0, %s113
  $region4: #{residual_basic_forward.2} parent=0 // loop_header_branch
    %13 = sbr.rel (%p11) target = $region8
  $region5: #{residual_basic_forward.2} parent=0 // loop_body
    %s15 = ssub.s32 %s10, 1
    %s16 = ssub.s32 %s10, 2
    %s17 = sadd.s32 %s10, 1
    %s18 = ssub.s32 %s10, %s17
    %p19 = scmp.eq.s32.totalorder %s18, 0
    %s21 = sadd.s32 %s20, 1
    %s22 = scalar_select %p19, %s20, %s21
    %p25 = pneg %p19
    %p26 = scmp.eq.s32.totalorder %s10, 1
    %p27 = por %p25, %p26
    %p28 = scmp.ne.s32.totalorder %s20, %s23
    %p29 = scmp.eq.s32.totalorder %s10, 0
    %p30 = por %p28, %p29
    %p31 = scmp.ne.s32.totalorder %s20, %s23
    %p32 = scmp.eq.s32.totalorder %s15, 1
    %p33 = por %p31, %p32
    %p34 = scmp.ne.s32.totalorder %s23, %s24
    %p35 = scmp.eq.s32.totalorder %s15, 0
    %p36 = por %p34, %p35
    %p37 = scmp.ne.s32.totalorder %s23, %s24
    %p38 = scmp.eq.s32.totalorder %s16, 1
    %p39 = por %p37, %p38
    %p41 = scmp.ne.s32.totalorder %s24, %s40
    %p42 = scmp.eq.s32.totalorder %s16, 0
    %p43 = por %p41, %p42
    %s45 = sadd.s32 %s44, 1
    %p48 = scmp.eq.s32.totalorder %s10, 1
    %p49 = scmp.ne.s32.totalorder %s44, %s46
    %p50 = scmp.eq.s32.totalorder %s10, 0
    %p51 = por %p49, %p50
    %p52 = scmp.ne.s32.totalorder %s44, %s46
    %p53 = scmp.eq.s32.totalorder %s15, 1
    %p54 = por %p52, %p53
    %p55 = scmp.ne.s32.totalorder %s46, %s47
    %p56 = scmp.eq.s32.totalorder %s15, 0
    %p57 = por %p55, %p56
    %p58 = scmp.ne.s32.totalorder %s46, %s47
    %p59 = scmp.eq.s32.totalorder %s16, 1
    %p60 = por %p58, %p59
    %p62 = scmp.ne.s32.totalorder %s47, %s61
    %p63 = scmp.eq.s32.totalorder %s16, 0
    %p64 = por %p62, %p63
    %s66 = sadd.s32 %s65, 1
    %p69 = scmp.eq.s32.totalorder %s10, 1
    %p70 = scmp.ne.s32.totalorder %s65, %s67
    %p71 = scmp.eq.s32.totalorder %s10, 0
    %p72 = por %p70, %p71
    %p73 = scmp.ne.s32.totalorder %s65, %s67
    %p74 = scmp.eq.s32.totalorder %s15, 1
    %p75 = por %p73, %p74
    %p76 = scmp.ne.s32.totalorder %s67, %s68
    %p77 = scmp.eq.s32.totalorder %s15, 0
    %p78 = por %p76, %p77
    %p79 = scmp.ne.s32.totalorder %s67, %s68
    %p80 = scmp.eq.s32.totalorder %s16, 1
    %p81 = por %p79, %p80
    %p83 = scmp.ne.s32.totalorder %s68, %s82
    %p84 = scmp.eq.s32.totalorder %s16, 0
    %p85 = por %p83, %p84
    %s87 = sadd.s32 %s86, 1
    %p90 = scmp.eq.s32.totalorder %s10, 1
    %p91 = scmp.ne.s32.totalorder %s86, %s88
    %p92 = scmp.eq.s32.totalorder %s10, 0
    %p93 = por %p91, %p92
    %p94 = scmp.ne.s32.totalorder %s86, %s88
    %p95 = scmp.eq.s32.totalorder %s15, 1
    %p96 = por %p94, %p95
    %p97 = scmp.ne.s32.totalorder %s88, %s89
    %p98 = scmp.eq.s32.totalorder %s15, 0
    %p99 = por %p97, %p98
    %p100 = scmp.ne.s32.totalorder %s88, %s89
    %p101 = scmp.eq.s32.totalorder %s16, 1
    %p102 = por %p100, %p101
    %p104 = scmp.ne.s32.totalorder %s89, %s103
    %p105 = scmp.eq.s32.totalorder %s16, 0
    %p106 = por %p104, %p105
    %s107 = ssub.s32 %s10, %s17
    %p108 = scmp.eq.s32.totalorder %s107, 0
    %s110 = sadd.s32 %s109, 1
    %s111 = scalar_select %p108, %s109, %s110
    %p114 = pneg %p108
    %p115 = scmp.eq.s32.totalorder %s10, 1
    %p116 = por %p114, %p115
    %p117 = scmp.ne.s32.totalorder %s109, %s112
    %p118 = scmp.eq.s32.totalorder %s10, 0
    %p119 = por %p117, %p118
    %p120 = scmp.ne.s32.totalorder %s109, %s112
    %p121 = scmp.eq.s32.totalorder %s15, 1
    %p122 = por %p120, %p121
    %p123 = scmp.ne.s32.totalorder %s112, %s113
    %p124 = scmp.eq.s32.totalorder %s15, 0
    %p125 = por %p123, %p124
    %p126 = scmp.ne.s32.totalorder %s112, %s113
    %p127 = scmp.eq.s32.totalorder %s16, 1
    %p128 = por %p126, %p127
    %p130 = scmp.ne.s32.totalorder %s113, %s129
    %p131 = scmp.eq.s32.totalorder %s16, 0
    %p132 = por %p130, %p131
    %p133 = scmp.le.s32.totalorder 1, %s10
    %p134 = scmp.lt.s32.totalorder %s10, 3
    %p135 = pnand %p133, %p134
    %p136 = pneg %p135
    // Predicated region
    $region9: #{residual_basic_forward.2} parent=5 // pred_check
      _
    $region10: #{residual_basic_forward.2} parent=5 // pred_check_branch
      %138 = sbr.rel (%p135) target = $region12
    $region11: #{residual_basic_forward.2} parent=5 // pred_region
      %s139 = ssub.s32 %s10, 1
      // Predicated region
      $region13: #{residual_basic_forward.2} parent=11 // pred_check
        %p140 = pneg %p57
      $region14: #{residual_basic_forward.2} parent=11 // pred_check_branch
        %142 = sbr.rel (%p140) target = $region16
      $region15: #{residual_basic_forward.2} parent=11 // pred_region
        _
      $region16: #{residual_basic_forward.2} parent=11 // pred_fallthru
        _
      // Predicated region
      $region17: #{residual_basic_forward.2} parent=11 // pred_check
        %p143 = pneg %p78
      $region18: #{residual_basic_forward.2} parent=11 // pred_check_branch
        %145 = sbr.rel (%p143) target = $region20
      $region19: #{residual_basic_forward.2} parent=11 // pred_region
        _
      $region20: #{residual_basic_forward.2} parent=11 // pred_fallthru
        _
      // Predicated region
      $region21: #{residual_basic_forward.2} parent=11 // pred_check
        %p146 = pneg %p99
      $region22: #{residual_basic_forward.2} parent=11 // pred_check_branch
        %148 = sbr.rel (%p146) target = $region24
      $region23: #{residual_basic_forward.2} parent=11 // pred_region
        _
      $region24: #{residual_basic_forward.2} parent=11 // pred_fallthru
        _
    $region12: #{residual_basic_forward.2} parent=5 // pred_fallthru
      _
    %p149 = scmp.lt.s32.totalorder %s10, 2
    // Predicated region
    $region25: #{residual_basic_forward.2} parent=5 // pred_check
      %p150 = pneg %p149
    $region26: #{residual_basic_forward.2} parent=5 // pred_check_branch
      %152 = sbr.rel (%p150) target = $region28
    $region27: #{residual_basic_forward.2} parent=5 // pred_region
      // Predicated region
      $region29: #{residual_basic_forward.2} parent=27 // pred_check
        %p153 = pneg %p30
      $region30: #{residual_basic_forward.2} parent=27 // pred_check_branch
        %155 = sbr.rel (%p153) target = $region32
      $region31: #{residual_basic_forward.2} parent=27 // pred_region
        %p156 = scmp.lt.s32.totalorder %s10, 1
        %s157 = scalar_select %p156, %s10, 1
        %s158 = smul.addr %s157, 32
        %s159 = smul.addr %s158, 4
        %s160 = scalar_lea.vmem %s0, %s159
      $region32: #{residual_basic_forward.2} parent=27 // pred_fallthru
        _
    $region28: #{residual_basic_forward.2} parent=5 // pred_fallthru
      _
    %p161 = scmp.le.s32.totalorder 1, %s10
    %p162 = scmp.lt.s32.totalorder %s10, 3
    %p163 = pnand %p161, %p162
    %p164 = pneg %p163
    // Predicated region
    $region33: #{residual_basic_forward.2} parent=5 // pred_check
      _
    $region34: #{residual_basic_forward.2} parent=5 // pred_check_branch
      %166 = sbr.rel (%p163) target = $region36
    $region35: #{residual_basic_forward.2} parent=5 // pred_region
      %s167 = ssub.s32 %s10, 1
      %p168 = scmp.lt.s32.totalorder %s15, 1
      %s169 = scalar_select %p168, %s15, 1
      %s170 = smul.addr %s169, 32
      %s171 = smul.addr %s170, 4
      %s172 = scalar_lea.vmem %s0, %s171
      %p173 = pneg %p36
      %p174 = pneg %p33
      %p175 = pneg %p57
      %p176 = pneg %p54
      %p177 = pneg %p78
      %p178 = pneg %p75
      %p179 = pneg %p99
      %p180 = pneg %p96
      %p181 = pneg %p125
      %p182 = pneg %p122
      %p183 = scmp.lt.s32.totalorder %s15, 1
      %s184 = scalar_select %p183, %s15, 1
      %s185 = smul.addr %s184, 32
      %s186 = smul.addr %s185, 4
      %s187 = scalar_lea.vmem %s4, %s186
      %p188 = scmp.lt.s32.totalorder %s15, 1
      %s189 = scalar_select %p188, %s15, 1
      %s190 = smul.addr %s189, 32
      %s191 = smul.addr %s190, 4
      %s192 = scalar_lea.vmem %s0, %s191
      %p193 = scmp.lt.s32.totalorder %s15, 1
      %s194 = scalar_select %p193, %s15, 1
      %s195 = smul.addr %s194, 32
      %s196 = smul.addr %s195, 4
      %s197 = scalar_lea.vmem %s4, %s196
      %v199 = vld [vmem:[%s192] sm:$0xf]
      %v200 = vld [vmem:[%s192 + $0x4] sm:$0xf]
      %v201 = vld [vmem:[%s192 + $0x8] sm:$0xf]
      %v202 = vld [vmem:[%s192 + $0xc] sm:$0xf]
      %v203 = vld [vmem:[%s192 + $0x10] sm:$0xf]
      %v204 = vld [vmem:[%s192 + $0x14] sm:$0xf]
      %v205 = vld [vmem:[%s192 + $0x18] sm:$0xf]
      %v206 = vld [vmem:[%s192 + $0x1c] sm:$0xf]
      %v207 = vld [vmem:[%s192 + $0x20] sm:$0xf]
      %v208 = vld [vmem:[%s192 + $0x24] sm:$0xf]
      %v209 = vld [vmem:[%s192 + $0x28] sm:$0xf]
      %v210 = vld [vmem:[%s192 + $0x2c] sm:$0xf]
      %v211 = vld [vmem:[%s192 + $0x30] sm:$0xf]
      %v212 = vld [vmem:[%s192 + $0x34] sm:$0xf]
      %v213 = vld [vmem:[%s192 + $0x38] sm:$0xf]
      %v214 = vld [vmem:[%s192 + $0x3c] sm:$0xf]
      %v215 = vld [vmem:[%s192 + $0x40] sm:$0xf]
      %v216 = vld [vmem:[%s192 + $0x44] sm:$0xf]
      %v217 = vld [vmem:[%s192 + $0x48] sm:$0xf]
      %v218 = vld [vmem:[%s192 + $0x4c] sm:$0xf]
      %v219 = vld [vmem:[%s192 + $0x50] sm:$0xf]
      %v220 = vld [vmem:[%s192 + $0x54] sm:$0xf]
      %v221 = vld [vmem:[%s192 + $0x58] sm:$0xf]
      %v222 = vld [vmem:[%s192 + $0x5c] sm:$0xf]
      %v223 = vld [vmem:[%s192 + $0x60] sm:$0xf]
      %v224 = vld [vmem:[%s192 + $0x64] sm:$0xf]
      %v225 = vld [vmem:[%s192 + $0x68] sm:$0xf]
      %v226 = vld [vmem:[%s192 + $0x6c] sm:$0xf]
      %v227 = vld [vmem:[%s192 + $0x70] sm:$0xf]
      %v228 = vld [vmem:[%s192 + $0x74] sm:$0xf]
      %v229 = vld [vmem:[%s192 + $0x78] sm:$0xf]
      %v230 = vld [vmem:[%s192 + $0x7c] sm:$0xf]
      %vm231 = vcmask 27648
      %232 = vst.msk [vmem:[#allocation2] sm:$0xf] %vm231, 0
      %233 = vst.msk [vmem:[#allocation2 + $0x4] sm:$0xf] %vm231, 0
      %vm234 = vcmask 24576
      %235 = vst.msk [vmem:[#allocation2 + $0x8] sm:$0x1] %vm234, 0
      %s236 = scalar_lea.vmem [#allocation2], 204
      %237 = vst.msk [vmem:[%s236] sm:$0xf] %vm231, 0
      %238 = vst.msk [vmem:[%s236 + $0x4] sm:$0xf] %vm231, 0
      %239 = vst.msk [vmem:[%s236 + $0x8] sm:$0x1] %vm234, 0
      %vm240 = vcmask 24576
      %vm241 = vsmask.f32 256
      %vm242 = vmand %vm240, %vm241
      %v243 = vld [vmem:[#allocation2] sm:$0x1]
      %v244 = vsel %vm242, 0, %v243
      %245 = vst [vmem:[#allocation2] sm:$0x1] %v244
      %v246 = vld [vmem:[#allocation2 + $0xc] sm:$0x1]
      %v247 = vsel %vm242, 0, %v246
      %248 = vst [vmem:[#allocation2 + $0xc] sm:$0x1] %v247
      %v249 = vld [vmem:[#allocation2 + $0x18] sm:$0x1]
      %v250 = vsel %vm242, 0, %v249
      %251 = vst [vmem:[#allocation2 + $0x18] sm:$0x1] %v250
      %v252 = vld [vmem:[#allocation2 + $0x24] sm:$0x1]
      %v253 = vsel %vm242, 0, %v252
      %254 = vst [vmem:[#allocation2 + $0x24] sm:$0x1] %v253
      %v255 = vld [vmem:[#allocation2 + $0x30] sm:$0x1]
      %v256 = vsel %vm242, 0, %v255
      %257 = vst [vmem:[#allocation2 + $0x30] sm:$0x1] %v256
      %v258 = vld [vmem:[#allocation2 + $0x3c] sm:$0x1]
      %v259 = vsel %vm242, 0, %v258
      %260 = vst [vmem:[#allocation2 + $0x3c] sm:$0x1] %v259
      %v261 = vld [vmem:[#allocation2 + $0x48] sm:$0x1]
      %v262 = vsel %vm242, 0, %v261
      %263 = vst [vmem:[#allocation2 + $0x48] sm:$0x1] %v262
      %v264 = vld [vmem:[#allocation2 + $0x54] sm:$0x1]
      %v265 = vsel %vm242, 0, %v264
      %266 = vst [vmem:[#allocation2 + $0x54] sm:$0x1] %v265
      %v267 = vld [vmem:[#allocation2 + $0x60] sm:$0x1]
      %v268 = vsel %vm242, 0, %v267
      %269 = vst [vmem:[#allocation2 + $0x60] sm:$0x1] %v268
      %v270 = vld [vmem:[#allocation2 + $0x6c] sm:$0x1]
      %v271 = vsel %vm242, 0, %v270
      %272 = vst [vmem:[#allocation2 + $0x6c] sm:$0x1] %v271
      %v273 = vld [vmem:[#allocation2 + $0x78] sm:$0x1]
      %v274 = vsel %vm242, 0, %v273
      %275 = vst [vmem:[#allocation2 + $0x78] sm:$0x1] %v274
      %v276 = vld [vmem:[#allocation2 + $0x84] sm:$0x1]
      %v277 = vsel %vm242, 0, %v276
      %278 = vst [vmem:[#allocation2 + $0x84] sm:$0x1] %v277
      %v279 = vld [vmem:[#allocation2 + $0x90] sm:$0x1]
      %v280 = vsel %vm242, 0, %v279
      %281 = vst [vmem:[#allocation2 + $0x90] sm:$0x1] %v280
      %v282 = vld [vmem:[#allocation2 + $0x9c] sm:$0x1]
      %v283 = vsel %vm242, 0, %v282
      %284 = vst [vmem:[#allocation2 + $0x9c] sm:$0x1] %v283
      %v285 = vld [vmem:[#allocation2 + $0xa8] sm:$0x1]
      %v286 = vsel %vm242, 0, %v285
      %287 = vst [vmem:[#allocation2 + $0xa8] sm:$0x1] %v286
      %v288 = vld [vmem:[#allocation2 + $0xb4] sm:$0x1]
      %v289 = vsel %vm242, 0, %v288
      %290 = vst [vmem:[#allocation2 + $0xb4] sm:$0x1] %v289
      %v291 = vld [vmem:[#allocation2 + $0xc0] sm:$0x1]
      %v292 = vsel %vm242, 0, %v291
      %293 = vst [vmem:[#allocation2 + $0xc0] sm:$0x1] %v292
      %v294 = vld [vmem:[#allocation2 + $0xcc] sm:$0x1]
      %v295 = vsel %vm242, 0, %v294
      %296 = vst [vmem:[#allocation2 + $0xcc] sm:$0x1] %v295
      %vm297 = vsmask.f32 7938
      %vm298 = vmand %vm240, %vm297
      %v299 = vld [vmem:[#allocation2 + $0x8] sm:$0x1]
      %v300 = vsel %vm298, 0, %v299
      %301 = vst [vmem:[#allocation2 + $0x8] sm:$0x1] %v300
      %v302 = vld [vmem:[#allocation2 + $0x14] sm:$0x1]
      %v303 = vsel %vm298, 0, %v302
      %304 = vst [vmem:[#allocation2 + $0x14] sm:$0x1] %v303
      %v305 = vld [vmem:[#allocation2 + $0x20] sm:$0x1]
      %v306 = vsel %vm298, 0, %v305
      %307 = vst [vmem:[#allocation2 + $0x20] sm:$0x1] %v306
      %v308 = vld [vmem:[#allocation2 + $0x2c] sm:$0x1]
      %v309 = vsel %vm298, 0, %v308
      %310 = vst [vmem:[#allocation2 + $0x2c] sm:$0x1] %v309
      %v311 = vld [vmem:[#allocation2 + $0x38] sm:$0x1]
      %v312 = vsel %vm298, 0, %v311
      %313 = vst [vmem:[#allocation2 + $0x38] sm:$0x1] %v312
      %v314 = vld [vmem:[#allocation2 + $0x44] sm:$0x1]
      %v315 = vsel %vm298, 0, %v314
      %316 = vst [vmem:[#allocation2 + $0x44] sm:$0x1] %v315
      %v317 = vld [vmem:[#allocation2 + $0x50] sm:$0x1]
      %v318 = vsel %vm298, 0, %v317
      %319 = vst [vmem:[#allocation2 + $0x50] sm:$0x1] %v318
      %v320 = vld [vmem:[#allocation2 + $0x5c] sm:$0x1]
      %v321 = vsel %vm298, 0, %v320
      %322 = vst [vmem:[#allocation2 + $0x5c] sm:$0x1] %v321
      %v323 = vld [vmem:[#allocation2 + $0x68] sm:$0x1]
      %v324 = vsel %vm298, 0, %v323
      %325 = vst [vmem:[#allocation2 + $0x68] sm:$0x1] %v324
      %v326 = vld [vmem:[#allocation2 + $0x74] sm:$0x1]
      %v327 = vsel %vm298, 0, %v326
      %328 = vst [vmem:[#allocation2 + $0x74] sm:$0x1] %v327
      %v329 = vld [vmem:[#allocation2 + $0x80] sm:$0x1]
      %v330 = vsel %vm298, 0, %v329
      %331 = vst [vmem:[#allocation2 + $0x80] sm:$0x1] %v330
      %v332 = vld [vmem:[#allocation2 + $0x8c] sm:$0x1]
      %v333 = vsel %vm298, 0, %v332
      %334 = vst [vmem:[#allocation2 + $0x8c] sm:$0x1] %v333
      %v335 = vld [vmem:[#allocation2 + $0x98] sm:$0x1]
      %v336 = vsel %vm298, 0, %v335
      %337 = vst [vmem:[#allocation2 + $0x98] sm:$0x1] %v336
      %v338 = vld [vmem:[#allocation2 + $0xa4] sm:$0x1]
      %v339 = vsel %vm298, 0, %v338
      %340 = vst [vmem:[#allocation2 + $0xa4] sm:$0x1] %v339
      %v341 = vld [vmem:[#allocation2 + $0xb0] sm:$0x1]
      %v342 = vsel %vm298, 0, %v341
      %343 = vst [vmem:[#allocation2 + $0xb0] sm:$0x1] %v342
      %v344 = vld [vmem:[#allocation2 + $0xbc] sm:$0x1]
      %v345 = vsel %vm298, 0, %v344
      %346 = vst [vmem:[#allocation2 + $0xbc] sm:$0x1] %v345
      %v347 = vld [vmem:[#allocation2 + $0xc8] sm:$0x1]
      %v348 = vsel %vm298, 0, %v347
      %349 = vst [vmem:[#allocation2 + $0xc8] sm:$0x1] %v348
      %v350 = vld [vmem:[#allocation2 + $0xd4] sm:$0x1]
      %v351 = vsel %vm298, 0, %v350
      %352 = vst [vmem:[#allocation2 + $0xd4] sm:$0x1] %v351
      %vm353 = vsmask.f32 4368
      %vm354 = vmor %vm241, %vm353
      %v356 = vshrl.u32 %v199, 16
      %v358 = vrot.slane %v356, 7
      %v359 = vshll.u32 %v199, 16
      %v361 = vor.u32 %v358, %v359
      %v362 = vrot.slane %v358, 4
      %v364 = vshrl.u32 %v200, 16
      %v366 = vrot.slane %v364, 7
      %v367 = vshll.u32 %v200, 16
      %v369 = vor.u32 %v366, %v367
      %v370 = vsel %vm354, %v362, %v369
      %v371 = vrot.slane %v366, 4
      %v373 = vshrl.u32 %v201, 16
      %v375 = vrot.slane %v373, 7
      %v376 = vshll.u32 %v201, 16
      %v378 = vor.u32 %v375, %v376
      %v379 = vrot.slane %v375, 4
      %v381 = vshrl.u32 %v202, 16
      %v383 = vrot.slane %v381, 7
      %v384 = vshll.u32 %v202, 16
      %v386 = vor.u32 %v383, %v384
      %v387 = vsel %vm354, %v379, %v386
      %v388 = vrot.slane %v383, 4
      %v390 = vshrl.u32 %v203, 16
      %v392 = vrot.slane %v390, 7
      %v393 = vshll.u32 %v203, 16
      %v395 = vor.u32 %v392, %v393
      %v396 = vrot.slane %v392, 4
      %v398 = vshrl.u32 %v204, 16
      %v400 = vrot.slane %v398, 7
      %v401 = vshll.u32 %v204, 16
      %v403 = vor.u32 %v400, %v401
      %v404 = vsel %vm354, %v396, %v403
      %v405 = vrot.slane %v400, 4
      %v407 = vshrl.u32 %v205, 16
      %v409 = vrot.slane %v407, 7
      %v410 = vshll.u32 %v205, 16
      %v412 = vor.u32 %v409, %v410
      %v413 = vrot.slane %v409, 4
      %v415 = vshrl.u32 %v206, 16
      %v417 = vrot.slane %v415, 7
      %v418 = vshll.u32 %v206, 16
      %v420 = vor.u32 %v417, %v418
      %v421 = vsel %vm354, %v413, %v420
      %v422 = vrot.slane %v417, 4
      %v424 = vshrl.u32 %v207, 16
      %v426 = vrot.slane %v424, 7
      %v427 = vshll.u32 %v207, 16
      %v429 = vor.u32 %v426, %v427
      %v430 = vrot.slane %v426, 4
      %v432 = vshrl.u32 %v208, 16
      %v434 = vrot.slane %v432, 7
      %v435 = vshll.u32 %v208, 16
      %v437 = vor.u32 %v434, %v435
      %v438 = vsel %vm354, %v430, %v437
      %v439 = vrot.slane %v434, 4
      %v441 = vshrl.u32 %v209, 16
      %v443 = vrot.slane %v441, 7
      %v444 = vshll.u32 %v209, 16
      %v446 = vor.u32 %v443, %v444
      %v447 = vrot.slane %v443, 4
      %v449 = vshrl.u32 %v210, 16
      %v451 = vrot.slane %v449, 7
      %v452 = vshll.u32 %v210, 16
      %v454 = vor.u32 %v451, %v452
      %v455 = vsel %vm354, %v447, %v454
      %v456 = vrot.slane %v451, 4
      %v458 = vshrl.u32 %v211, 16
      %v460 = vrot.slane %v458, 7
      %v461 = vshll.u32 %v211, 16
      %v463 = vor.u32 %v460, %v461
      %v464 = vrot.slane %v460, 4
      %v466 = vshrl.u32 %v212, 16
      %v468 = vrot.slane %v466, 7
      %v469 = vshll.u32 %v212, 16
      %v471 = vor.u32 %v468, %v469
      %v472 = vsel %vm354, %v464, %v471
      %v473 = vrot.slane %v468, 4
      %v475 = vshrl.u32 %v213, 16
      %v477 = vrot.slane %v475, 7
      %v478 = vshll.u32 %v213, 16
      %v480 = vor.u32 %v477, %v478
      %v481 = vrot.slane %v477, 4
      %v483 = vshrl.u32 %v214, 16
      %v485 = vrot.slane %v483, 7
      %v486 = vshll.u32 %v214, 16
      %v488 = vor.u32 %v485, %v486
      %v489 = vsel %vm354, %v481, %v488
      %v490 = vrot.slane %v485, 4
      %v492 = vshrl.u32 %v215, 16
      %v494 = vrot.slane %v492, 7
      %v495 = vshll.u32 %v215, 16
      %v497 = vor.u32 %v494, %v495
      %v498 = vrot.slane %v494, 4
      %v500 = vshrl.u32 %v216, 16
      %v502 = vrot.slane %v500, 7
      %v503 = vshll.u32 %v216, 16
      %v505 = vor.u32 %v502, %v503
      %v506 = vsel %vm354, %v498, %v505
      %v507 = vrot.slane %v502, 4
      %v509 = vshrl.u32 %v217, 16
      %v511 = vrot.slane %v509, 7
      %v512 = vshll.u32 %v217, 16
      %v514 = vor.u32 %v511, %v512
      %v515 = vrot.slane %v511, 4
      %v517 = vshrl.u32 %v218, 16
      %v519 = vrot.slane %v517, 7
      %v520 = vshll.u32 %v218, 16
      %v522 = vor.u32 %v519, %v520
      %v523 = vsel %vm354, %v515, %v522
      %v524 = vrot.slane %v519, 4
      %v526 = vshrl.u32 %v219, 16
      %v528 = vrot.slane %v526, 7
      %v529 = vshll.u32 %v219, 16
      %v531 = vor.u32 %v528, %v529
      %v532 = vrot.slane %v528, 4
      %v534 = vshrl.u32 %v220, 16
      %v536 = vrot.slane %v534, 7
      %v537 = vshll.u32 %v220, 16
      %v539 = vor.u32 %v536, %v537
      %v540 = vsel %vm354, %v532, %v539
      %v541 = vrot.slane %v536, 4
      %v543 = vshrl.u32 %v221, 16
      %v545 = vrot.slane %v543, 7
      %v546 = vshll.u32 %v221, 16
      %v548 = vor.u32 %v545, %v546
      %v549 = vrot.slane %v545, 4
      %v551 = vshrl.u32 %v222, 16
      %v553 = vrot.slane %v551, 7
      %v554 = vshll.u32 %v222, 16
      %v556 = vor.u32 %v553, %v554
      %v557 = vsel %vm354, %v549, %v556
      %v558 = vrot.slane %v553, 4
      %v560 = vshrl.u32 %v223, 16
      %v562 = vrot.slane %v560, 7
      %v563 = vshll.u32 %v223, 16
      %v565 = vor.u32 %v562, %v563
      %v566 = vrot.slane %v562, 4
      %v568 = vshrl.u32 %v224, 16
      %v570 = vrot.slane %v568, 7
      %v571 = vshll.u32 %v224, 16
      %v573 = vor.u32 %v570, %v571
      %v574 = vsel %vm354, %v566, %v573
      %v575 = vrot.slane %v570, 4
      %v577 = vshrl.u32 %v225, 16
      %v579 = vrot.slane %v577, 7
      %v580 = vshll.u32 %v225, 16
      %v582 = vor.u32 %v579, %v580
      %v583 = vrot.slane %v579, 4
      %v585 = vshrl.u32 %v226, 16
      %v587 = vrot.slane %v585, 7
      %v588 = vshll.u32 %v226, 16
      %v590 = vor.u32 %v587, %v588
      %v591 = vsel %vm354, %v583, %v590
      %v592 = vrot.slane %v587, 4
      %v594 = vshrl.u32 %v227, 16
      %v596 = vrot.slane %v594, 7
      %v597 = vshll.u32 %v227, 16
      %v599 = vor.u32 %v596, %v597
      %v600 = vrot.slane %v596, 4
      %v602 = vshrl.u32 %v228, 16
      %v604 = vrot.slane %v602, 7
      %v605 = vshll.u32 %v228, 16
      %v607 = vor.u32 %v604, %v605
      %v608 = vsel %vm354, %v600, %v607
      %v609 = vrot.slane %v604, 4
      %v611 = vshrl.u32 %v229, 16
      %v613 = vrot.slane %v611, 7
      %v614 = vshll.u32 %v229, 16
      %v616 = vor.u32 %v613, %v614
      %v617 = vrot.slane %v613, 4
      %v619 = vshrl.u32 %v230, 16
      %v621 = vrot.slane %v619, 7
      %v622 = vshll.u32 %v230, 16
      %v624 = vor.u32 %v621, %v622
      %v625 = vsel %vm354, %v617, %v624
      %v626 = vrot.slane %v621, 4
      %s675 = scalar_lea.vmem [#allocation2], 12
      %vm676 = vcmask 27648
      %vm677 = vmand %vm676, %vm297
      %v678 = vld [vmem:[%s675] sm:$0xf]
      %v679 = vsel %vm677, %v361, %v678
      %680 = vst [vmem:[%s675] sm:$0xf] %v679
      %681 = vst.msk [vmem:[%s675 + $0x4] sm:$0xf] %vm231, %v370
      %v682 = vld [vmem:[%s675 + $0x8] sm:$0x1]
      %v683 = vsel %vm242, %v371, %v682
      %684 = vst [vmem:[%s675 + $0x8] sm:$0x1] %v683
      %v685 = vld [vmem:[%s675 + $0xc] sm:$0xf]
      %v686 = vsel %vm677, %v378, %v685
      %687 = vst [vmem:[%s675 + $0xc] sm:$0xf] %v686
      %688 = vst.msk [vmem:[%s675 + $0x10] sm:$0xf] %vm231, %v387
      %v689 = vld [vmem:[%s675 + $0x14] sm:$0x1]
      %v690 = vsel %vm242, %v388, %v689
      %691 = vst [vmem:[%s675 + $0x14] sm:$0x1] %v690
      %v692 = vld [vmem:[%s675 + $0x18] sm:$0xf]
      %v693 = vsel %vm677, %v395, %v692
      %694 = vst [vmem:[%s675 + $0x18] sm:$0xf] %v693
      %695 = vst.msk [vmem:[%s675 + $0x1c] sm:$0xf] %vm231, %v404
      %v696 = vld [vmem:[%s675 + $0x20] sm:$0x1]
      %v697 = vsel %vm242, %v405, %v696
      %698 = vst [vmem:[%s675 + $0x20] sm:$0x1] %v697
      %v699 = vld [vmem:[%s675 + $0x24] sm:$0xf]
      %v700 = vsel %vm677, %v412, %v699
      %701 = vst [vmem:[%s675 + $0x24] sm:$0xf] %v700
      %702 = vst.msk [vmem:[%s675 + $0x28] sm:$0xf] %vm231, %v421
      %v703 = vld [vmem:[%s675 + $0x2c] sm:$0x1]
      %v704 = vsel %vm242, %v422, %v703
      %705 = vst [vmem:[%s675 + $0x2c] sm:$0x1] %v704
      %v706 = vld [vmem:[%s675 + $0x30] sm:$0xf]
      %v707 = vsel %vm677, %v429, %v706
      %708 = vst [vmem:[%s675 + $0x30] sm:$0xf] %v707
      %709 = vst.msk [vmem:[%s675 + $0x34] sm:$0xf] %vm231, %v438
      %v710 = vld [vmem:[%s675 + $0x38] sm:$0x1]
      %v711 = vsel %vm242, %v439, %v710
      %712 = vst [vmem:[%s675 + $0x38] sm:$0x1] %v711
      %v713 = vld [vmem:[%s675 + $0x3c] sm:$0xf]
      %v714 = vsel %vm677, %v446, %v713
      %715 = vst [vmem:[%s675 + $0x3c] sm:$0xf] %v714
      %716 = vst.msk [vmem:[%s675 + $0x40] sm:$0xf] %vm231, %v455
      %v717 = vld [vmem:[%s675 + $0x44] sm:$0x1]
      %v718 = vsel %vm242, %v456, %v717
      %719 = vst [vmem:[%s675 + $0x44] sm:$0x1] %v718
      %v720 = vld [vmem:[%s675 + $0x48] sm:$0xf]
      %v721 = vsel %vm677, %v463, %v720
      %722 = vst [vmem:[%s675 + $0x48] sm:$0xf] %v721
      %723 = vst.msk [vmem:[%s675 + $0x4c] sm:$0xf] %vm231, %v472
      %v724 = vld [vmem:[%s675 + $0x50] sm:$0x1]
      %v725 = vsel %vm242, %v473, %v724
      %726 = vst [vmem:[%s675 + $0x50] sm:$0x1] %v725
      %v727 = vld [vmem:[%s675 + $0x54] sm:$0xf]
      %v728 = vsel %vm677, %v480, %v727
      %729 = vst [vmem:[%s675 + $0x54] sm:$0xf] %v728
      %730 = vst.msk [vmem:[%s675 + $0x58] sm:$0xf] %vm231, %v489
      %v731 = vld [vmem:[%s675 + $0x5c] sm:$0x1]
      %v732 = vsel %vm242, %v490, %v731
      %733 = vst [vmem:[%s675 + $0x5c] sm:$0x1] %v732
      %v734 = vld [vmem:[%s675 + $0x60] sm:$0xf]
      %v735 = vsel %vm677, %v497, %v734
      %736 = vst [vmem:[%s675 + $0x60] sm:$0xf] %v735
      %737 = vst.msk [vmem:[%s675 + $0x64] sm:$0xf] %vm231, %v506
      %v738 = vld [vmem:[%s675 + $0x68] sm:$0x1]
      %v739 = vsel %vm242, %v507, %v738
      %740 = vst [vmem:[%s675 + $0x68] sm:$0x1] %v739
      %v741 = vld [vmem:[%s675 + $0x6c] sm:$0xf]
      %v742 = vsel %vm677, %v514, %v741
      %743 = vst [vmem:[%s675 + $0x6c] sm:$0xf] %v742
      %744 = vst.msk [vmem:[%s675 + $0x70] sm:$0xf] %vm231, %v523
      %v745 = vld [vmem:[%s675 + $0x74] sm:$0x1]
      %v746 = vsel %vm242, %v524, %v745
      %747 = vst [vmem:[%s675 + $0x74] sm:$0x1] %v746
      %v748 = vld [vmem:[%s675 + $0x78] sm:$0xf]
      %v749 = vsel %vm677, %v531, %v748
      %750 = vst [vmem:[%s675 + $0x78] sm:$0xf] %v749
      %751 = vst.msk [vmem:[%s675 + $0x7c] sm:$0xf] %vm231, %v540
      %v752 = vld [vmem:[%s675 + $0x80] sm:$0x1]
      %v753 = vsel %vm242, %v541, %v752
      %754 = vst [vmem:[%s675 + $0x80] sm:$0x1] %v753
      %v755 = vld [vmem:[%s675 + $0x84] sm:$0xf]
      %v756 = vsel %vm677, %v548, %v755
      %757 = vst [vmem:[%s675 + $0x84] sm:$0xf] %v756
      %758 = vst.msk [vmem:[%s675 + $0x88] sm:$0xf] %vm231, %v557
      %v759 = vld [vmem:[%s675 + $0x8c] sm:$0x1]
      %v760 = vsel %vm242, %v558, %v759
      %761 = vst [vmem:[%s675 + $0x8c] sm:$0x1] %v760
      %v762 = vld [vmem:[%s675 + $0x90] sm:$0xf]
      %v763 = vsel %vm677, %v565, %v762
      %764 = vst [vmem:[%s675 + $0x90] sm:$0xf] %v763
      %765 = vst.msk [vmem:[%s675 + $0x94] sm:$0xf] %vm231, %v574
      %v766 = vld [vmem:[%s675 + $0x98] sm:$0x1]
      %v767 = vsel %vm242, %v575, %v766
      %768 = vst [vmem:[%s675 + $0x98] sm:$0x1] %v767
      %v769 = vld [vmem:[%s675 + $0x9c] sm:$0xf]
      %v770 = vsel %vm677, %v582, %v769
      %771 = vst [vmem:[%s675 + $0x9c] sm:$0xf] %v770
      %772 = vst.msk [vmem:[%s675 + $0xa0] sm:$0xf] %vm231, %v591
      %v773 = vld [vmem:[%s675 + $0xa4] sm:$0x1]
      %v774 = vsel %vm242, %v592, %v773
      %775 = vst [vmem:[%s675 + $0xa4] sm:$0x1] %v774
      %v776 = vld [vmem:[%s675 + $0xa8] sm:$0xf]
      %v777 = vsel %vm677, %v599, %v776
      %778 = vst [vmem:[%s675 + $0xa8] sm:$0xf] %v777
      %779 = vst.msk [vmem:[%s675 + $0xac] sm:$0xf] %vm231, %v608
      %v780 = vld [vmem:[%s675 + $0xb0] sm:$0x1]
      %v781 = vsel %vm242, %v609, %v780
      %782 = vst [vmem:[%s675 + $0xb0] sm:$0x1] %v781
      %v783 = vld [vmem:[%s675 + $0xb4] sm:$0xf]
      %v784 = vsel %vm677, %v616, %v783
      %785 = vst [vmem:[%s675 + $0xb4] sm:$0xf] %v784
      %786 = vst.msk [vmem:[%s675 + $0xb8] sm:$0xf] %vm231, %v625
      %v787 = vld [vmem:[%s675 + $0xbc] sm:$0x1]
      %v788 = vsel %vm242, %v626, %v787
      %789 = vst [vmem:[%s675 + $0xbc] sm:$0x1] %v788
      %v790 = vld [vmem:[#allocation2] sm:$0xf]
      %v791 = vld [vmem:[#allocation2 + $0x4] sm:$0xf]
      %v792 = vld [vmem:[#allocation2 + $0xc] sm:$0xf]
      %v793 = vld [vmem:[#allocation2 + $0x10] sm:$0xf]
      %v794 = vld [vmem:[#allocation2 + $0x18] sm:$0xf]
      %v795 = vld [vmem:[#allocation2 + $0x1c] sm:$0xf]
      %v796 = vld [vmem:[#allocation2 + $0x24] sm:$0xf]
      %v797 = vld [vmem:[#allocation2 + $0x28] sm:$0xf]
      %v798 = vld [vmem:[#allocation2 + $0x30] sm:$0xf]
      %v799 = vld [vmem:[#allocation2 + $0x34] sm:$0xf]
      %v800 = vld [vmem:[#allocation2 + $0x3c] sm:$0xf]
      %v801 = vld [vmem:[#allocation2 + $0x40] sm:$0xf]
      %v802 = vld [vmem:[#allocation2 + $0x48] sm:$0xf]
      %v803 = vld [vmem:[#allocation2 + $0x4c] sm:$0xf]
      %v804 = vld [vmem:[#allocation2 + $0x54] sm:$0xf]
      %v805 = vld [vmem:[#allocation2 + $0x58] sm:$0xf]
      %v806 = vld [vmem:[#allocation2 + $0x60] sm:$0xf]
      %v807 = vld [vmem:[#allocation2 + $0x64] sm:$0xf]
      %v808 = vld [vmem:[#allocation2 + $0x6c] sm:$0xf]
      %v809 = vld [vmem:[#allocation2 + $0x70] sm:$0xf]
      %v810 = vld [vmem:[#allocation2 + $0x78] sm:$0xf]
      %v811 = vld [vmem:[#allocation2 + $0x7c] sm:$0xf]
      %v812 = vld [vmem:[#allocation2 + $0x84] sm:$0xf]
      %v813 = vld [vmem:[#allocation2 + $0x88] sm:$0xf]
      %v814 = vld [vmem:[#allocation2 + $0x90] sm:$0xf]
      %v815 = vld [vmem:[#allocation2 + $0x94] sm:$0xf]
      %v816 = vld [vmem:[#allocation2 + $0x9c] sm:$0xf]
      %v817 = vld [vmem:[#allocation2 + $0xa0] sm:$0xf]
      %v818 = vld [vmem:[#allocation2 + $0xa8] sm:$0xf]
      %v819 = vld [vmem:[#allocation2 + $0xac] sm:$0xf]
      %v820 = vld [vmem:[#allocation2 + $0xb4] sm:$0xf]
      %v821 = vld [vmem:[#allocation2 + $0xb8] sm:$0xf]
      %822 = vst.msk [vmem:[#allocation3] sm:$0xf] %vm231, %v790
      %823 = vst.msk [vmem:[#allocation3 + $0x4] sm:$0xf] %vm231, %v791
      %824 = vst.msk [vmem:[#allocation3 + $0x8] sm:$0xf] %vm231, %v792
      %825 = vst.msk [vmem:[#allocation3 + $0xc] sm:$0xf] %vm231, %v793
      %826 = vst.msk [vmem:[#allocation3 + $0x10] sm:$0xf] %vm231, %v794
      %827 = vst.msk [vmem:[#allocation3 + $0x14] sm:$0xf] %vm231, %v795
      %828 = vst.msk [vmem:[#allocation3 + $0x18] sm:$0xf] %vm231, %v796
      %829 = vst.msk [vmem:[#allocation3 + $0x1c] sm:$0xf] %vm231, %v797
      %830 = vst.msk [vmem:[#allocation3 + $0x20] sm:$0xf] %vm231, %v798
      %831 = vst.msk [vmem:[#allocation3 + $0x24] sm:$0xf] %vm231, %v799
      %832 = vst.msk [vmem:[#allocation3 + $0x28] sm:$0xf] %vm231, %v800
      %833 = vst.msk [vmem:[#allocation3 + $0x2c] sm:$0xf] %vm231, %v801
      %834 = vst.msk [vmem:[#allocation3 + $0x30] sm:$0xf] %vm231, %v802
      %835 = vst.msk [vmem:[#allocation3 + $0x34] sm:$0xf] %vm231, %v803
      %836 = vst.msk [vmem:[#allocation3 + $0x38] sm:$0xf] %vm231, %v804
      %837 = vst.msk [vmem:[#allocation3 + $0x3c] sm:$0xf] %vm231, %v805
      %838 = vst.msk [vmem:[#allocation3 + $0x40] sm:$0xf] %vm231, %v806
      %839 = vst.msk [vmem:[#allocation3 + $0x44] sm:$0xf] %vm231, %v807
      %840 = vst.msk [vmem:[#allocation3 + $0x48] sm:$0xf] %vm231, %v808
      %841 = vst.msk [vmem:[#allocation3 + $0x4c] sm:$0xf] %vm231, %v809
      %842 = vst.msk [vmem:[#allocation3 + $0x50] sm:$0xf] %vm231, %v810
      %843 = vst.msk [vmem:[#allocation3 + $0x54] sm:$0xf] %vm231, %v811
      %844 = vst.msk [vmem:[#allocation3 + $0x58] sm:$0xf] %vm231, %v812
      %845 = vst.msk [vmem:[#allocation3 + $0x5c] sm:$0xf] %vm231, %v813
      %846 = vst.msk [vmem:[#allocation3 + $0x60] sm:$0xf] %vm231, %v814
      %847 = vst.msk [vmem:[#allocation3 + $0x64] sm:$0xf] %vm231, %v815
      %848 = vst.msk [vmem:[#allocation3 + $0x68] sm:$0xf] %vm231, %v816
      %849 = vst.msk [vmem:[#allocation3 + $0x6c] sm:$0xf] %vm231, %v817
      %850 = vst.msk [vmem:[#allocation3 + $0x70] sm:$0xf] %vm231, %v818
      %851 = vst.msk [vmem:[#allocation3 + $0x74] sm:$0xf] %vm231, %v819
      %852 = vst.msk [vmem:[#allocation3 + $0x78] sm:$0xf] %vm231, %v820
      %853 = vst.msk [vmem:[#allocation3 + $0x7c] sm:$0xf] %vm231, %v821
      %v854 = vld [vmem:[#allocation2] sm:$0xf]
      %v855 = vld [vmem:[#allocation2 + $0x4] sm:$0xf]
      %v856 = vld [vmem:[#allocation2 + $0x8] sm:$0x1]
      %v857 = vld [vmem:[#allocation2 + $0xc] sm:$0xf]
      %v858 = vld [vmem:[#allocation2 + $0x10] sm:$0xf]
      %v859 = vld [vmem:[#allocation2 + $0x14] sm:$0x1]
      %v860 = vld [vmem:[#allocation2 + $0x18] sm:$0xf]
      %v861 = vld [vmem:[#allocation2 + $0x1c] sm:$0xf]
      %v862 = vld [vmem:[#allocation2 + $0x20] sm:$0x1]
      %v863 = vld [vmem:[#allocation2 + $0x24] sm:$0xf]
      %v864 = vld [vmem:[#allocation2 + $0x28] sm:$0xf]
      %v865 = vld [vmem:[#allocation2 + $0x2c] sm:$0x1]
      %v866 = vld [vmem:[#allocation2 + $0x30] sm:$0xf]
      %v867 = vld [vmem:[#allocation2 + $0x34] sm:$0xf]
      %v868 = vld [vmem:[#allocation2 + $0x38] sm:$0x1]
      %v869 = vld [vmem:[#allocation2 + $0x3c] sm:$0xf]
      %v870 = vld [vmem:[#allocation2 + $0x40] sm:$0xf]
      %v871 = vld [vmem:[#allocation2 + $0x44] sm:$0x1]
      %v872 = vld [vmem:[#allocation2 + $0x48] sm:$0xf]
      %v873 = vld [vmem:[#allocation2 + $0x4c] sm:$0xf]
      %v874 = vld [vmem:[#allocation2 + $0x50] sm:$0x1]
      %v875 = vld [vmem:[#allocation2 + $0x54] sm:$0xf]
      %v876 = vld [vmem:[#allocation2 + $0x58] sm:$0xf]
      %v877 = vld [vmem:[#allocation2 + $0x5c] sm:$0x1]
      %v878 = vld [vmem:[#allocation2 + $0x60] sm:$0xf]
      %v879 = vld [vmem:[#allocation2 + $0x64] sm:$0xf]
      %v880 = vld [vmem:[#allocation2 + $0x68] sm:$0x1]
      %v881 = vld [vmem:[#allocation2 + $0x6c] sm:$0xf]
      %v882 = vld [vmem:[#allocation2 + $0x70] sm:$0xf]
      %v883 = vld [vmem:[#allocation2 + $0x74] sm:$0x1]
      %v884 = vld [vmem:[#allocation2 + $0x78] sm:$0xf]
      %v885 = vld [vmem:[#allocation2 + $0x7c] sm:$0xf]
      %v886 = vld [vmem:[#allocation2 + $0x80] sm:$0x1]
      %v887 = vld [vmem:[#allocation2 + $0x84] sm:$0xf]
      %v888 = vld [vmem:[#allocation2 + $0x88] sm:$0xf]
      %v889 = vld [vmem:[#allocation2 + $0x8c] sm:$0x1]
      %v890 = vld [vmem:[#allocation2 + $0x90] sm:$0xf]
      %v891 = vld [vmem:[#allocation2 + $0x94] sm:$0xf]
      %v892 = vld [vmem:[#allocation2 + $0x98] sm:$0x1]
      %v893 = vld [vmem:[#allocation2 + $0x9c] sm:$0xf]
      %v894 = vld [vmem:[#allocation2 + $0xa0] sm:$0xf]
      %v895 = vld [vmem:[#allocation2 + $0xa4] sm:$0x1]
      %v896 = vld [vmem:[#allocation2 + $0xa8] sm:$0xf]
      %v897 = vld [vmem:[#allocation2 + $0xac] sm:$0xf]
      %v898 = vld [vmem:[#allocation2 + $0xb0] sm:$0x1]
      %v899 = vld [vmem:[#allocation2 + $0xb4] sm:$0xf]
      %v900 = vld [vmem:[#allocation2 + $0xb8] sm:$0xf]
      %v901 = vld [vmem:[#allocation2 + $0xbc] sm:$0x1]
      %vm902 = vsmask.f32 3328
      %vm903 = vsmask.f32 7440
      %vm904 = vmor %vm902, %vm903
      %v906 = vshrl.u32 %v854, 16
      %v908 = vrot.slane %v906, 4
      %v909 = vshll.u32 %v854, 16
      %v911 = vrot.slane %v909, 5
      %v912 = vor.u32 %v908, %v911
      %v913 = vrot.slane %v912, 4
      %v915 = vshll.u32 %v855, 16
      %v917 = vrot.slane %v915, 5
      %v918 = vsel %vm904, %v913, %v917
      %v919 = vshrl.u32 %v855, 16
      %v921 = vrot.slane %v919, 4
      %v922 = vor.u32 %v921, %v917
      %v923 = vrot.slane %v922, 4
      %v925 = vshll.u32 %v856, 16
      %v927 = vrot.slane %v925, 5
      %v928 = vsel %vm904, %v923, %v927
      %v930 = vshrl.u32 %v857, 16
      %v932 = vrot.slane %v930, 4
      %v933 = vshll.u32 %v857, 16
      %v935 = vrot.slane %v933, 5
      %v936 = vor.u32 %v932, %v935
      %v937 = vrot.slane %v936, 4
      %v939 = vshll.u32 %v858, 16
      %v941 = vrot.slane %v939, 5
      %v942 = vsel %vm904, %v937, %v941
      %v943 = vshrl.u32 %v858, 16
      %v945 = vrot.slane %v943, 4
      %v946 = vor.u32 %v945, %v941
      %v947 = vrot.slane %v946, 4
      %v949 = vshll.u32 %v859, 16
      %v951 = vrot.slane %v949, 5
      %v952 = vsel %vm904, %v947, %v951
      %v954 = vshrl.u32 %v860, 16
      %v956 = vrot.slane %v954, 4
      %v957 = vshll.u32 %v860, 16
      %v959 = vrot.slane %v957, 5
      %v960 = vor.u32 %v956, %v959
      %v961 = vrot.slane %v960, 4
      %v963 = vshll.u32 %v861, 16
      %v965 = vrot.slane %v963, 5
      %v966 = vsel %vm904, %v961, %v965
      %v967 = vshrl.u32 %v861, 16
      %v969 = vrot.slane %v967, 4
      %v970 = vor.u32 %v969, %v965
      %v971 = vrot.slane %v970, 4
      %v973 = vshll.u32 %v862, 16
      %v975 = vrot.slane %v973, 5
      %v976 = vsel %vm904, %v971, %v975
      %v978 = vshrl.u32 %v863, 16
      %v980 = vrot.slane %v978, 4
      %v981 = vshll.u32 %v863, 16
      %v983 = vrot.slane %v981, 5
      %v984 = vor.u32 %v980, %v983
      %v985 = vrot.slane %v984, 4
      %v987 = vshll.u32 %v864, 16
      %v989 = vrot.slane %v987, 5
      %v990 = vsel %vm904, %v985, %v989
      %v991 = vshrl.u32 %v864, 16
      %v993 = vrot.slane %v991, 4
      %v994 = vor.u32 %v993, %v989
      %v995 = vrot.slane %v994, 4
      %v997 = vshll.u32 %v865, 16
      %v999 = vrot.slane %v997, 5
      %v1000 = vsel %vm904, %v995, %v999
      %v1002 = vshrl.u32 %v866, 16
      %v1004 = vrot.slane %v1002, 4
      %v1005 = vshll.u32 %v866, 16
      %v1007 = vrot.slane %v1005, 5
      %v1008 = vor.u32 %v1004, %v1007
      %v1009 = vrot.slane %v1008, 4
      %v1011 = vshll.u32 %v867, 16
      %v1013 = vrot.slane %v1011, 5
      %v1014 = vsel %vm904, %v1009, %v1013
      %v1015 = vshrl.u32 %v867, 16
      %v1017 = vrot.slane %v1015, 4
      %v1018 = vor.u32 %v1017, %v1013
      %v1019 = vrot.slane %v1018, 4
      %v1021 = vshll.u32 %v868, 16
      %v1023 = vrot.slane %v1021, 5
      %v1024 = vsel %vm904, %v1019, %v1023
      %v1026 = vshrl.u32 %v869, 16
      %v1028 = vrot.slane %v1026, 4
      %v1029 = vshll.u32 %v869, 16
      %v1031 = vrot.slane %v1029, 5
      %v1032 = vor.u32 %v1028, %v1031
      %v1033 = vrot.slane %v1032, 4
      %v1035 = vshll.u32 %v870, 16
      %v1037 = vrot.slane %v1035, 5
      %v1038 = vsel %vm904, %v1033, %v1037
      %v1039 = vshrl.u32 %v870, 16
      %v1041 = vrot.slane %v1039, 4
      %v1042 = vor.u32 %v1041, %v1037
      %v1043 = vrot.slane %v1042, 4
      %v1045 = vshll.u32 %v871, 16
      %v1047 = vrot.slane %v1045, 5
      %v1048 = vsel %vm904, %v1043, %v1047
      %v1050 = vshrl.u32 %v872, 16
      %v1052 = vrot.slane %v1050, 4
      %v1053 = vshll.u32 %v872, 16
      %v1055 = vrot.slane %v1053, 5
      %v1056 = vor.u32 %v1052, %v1055
      %v1057 = vrot.slane %v1056, 4
      %v1059 = vshll.u32 %v873, 16
      %v1061 = vrot.slane %v1059, 5
      %v1062 = vsel %vm904, %v1057, %v1061
      %v1063 = vshrl.u32 %v873, 16
      %v1065 = vrot.slane %v1063, 4
      %v1066 = vor.u32 %v1065, %v1061
      %v1067 = vrot.slane %v1066, 4
      %v1069 = vshll.u32 %v874, 16
      %v1071 = vrot.slane %v1069, 5
      %v1072 = vsel %vm904, %v1067, %v1071
      %v1074 = vshrl.u32 %v875, 16
      %v1076 = vrot.slane %v1074, 4
      %v1077 = vshll.u32 %v875, 16
      %v1079 = vrot.slane %v1077, 5
      %v1080 = vor.u32 %v1076, %v1079
      %v1081 = vrot.slane %v1080, 4
      %v1083 = vshll.u32 %v876, 16
      %v1085 = vrot.slane %v1083, 5
      %v1086 = vsel %vm904, %v1081, %v1085
      %v1087 = vshrl.u32 %v876, 16
      %v1089 = vrot.slane %v1087, 4
      %v1090 = vor.u32 %v1089, %v1085
      %v1091 = vrot.slane %v1090, 4
      %v1093 = vshll.u32 %v877, 16
      %v1095 = vrot.slane %v1093, 5
      %v1096 = vsel %vm904, %v1091, %v1095
      %v1098 = vshrl.u32 %v878, 16
      %v1100 = vrot.slane %v1098, 4
      %v1101 = vshll.u32 %v878, 16
      %v1103 = vrot.slane %v1101, 5
      %v1104 = vor.u32 %v1100, %v1103
      %v1105 = vrot.slane %v1104, 4
      %v1107 = vshll.u32 %v879, 16
      %v1109 = vrot.slane %v1107, 5
      %v1110 = vsel %vm904, %v1105, %v1109
      %v1111 = vshrl.u32 %v879, 16
      %v1113 = vrot.slane %v1111, 4
      %v1114 = vor.u32 %v1113, %v1109
      %v1115 = vrot.slane %v1114, 4
      %v1117 = vshll.u32 %v880, 16
      %v1119 = vrot.slane %v1117, 5
      %v1120 = vsel %vm904, %v1115, %v1119
      %v1122 = vshrl.u32 %v881, 16
      %v1124 = vrot.slane %v1122, 4
      %v1125 = vshll.u32 %v881, 16
      %v1127 = vrot.slane %v1125, 5
      %v1128 = vor.u32 %v1124, %v1127
      %v1129 = vrot.slane %v1128, 4
      %v1131 = vshll.u32 %v882, 16
      %v1133 = vrot.slane %v1131, 5
      %v1134 = vsel %vm904, %v1129, %v1133
      %v1135 = vshrl.u32 %v882, 16
      %v1137 = vrot.slane %v1135, 4
      %v1138 = vor.u32 %v1137, %v1133
      %v1139 = vrot.slane %v1138, 4
      %v1141 = vshll.u32 %v883, 16
      %v1143 = vrot.slane %v1141, 5
      %v1144 = vsel %vm904, %v1139, %v1143
      %v1146 = vshrl.u32 %v884, 16
      %v1148 = vrot.slane %v1146, 4
      %v1149 = vshll.u32 %v884, 16
      %v1151 = vrot.slane %v1149, 5
      %v1152 = vor.u32 %v1148, %v1151
      %v1153 = vrot.slane %v1152, 4
      %v1155 = vshll.u32 %v885, 16
      %v1157 = vrot.slane %v1155, 5
      %v1158 = vsel %vm904, %v1153, %v1157
      %v1159 = vshrl.u32 %v885, 16
      %v1161 = vrot.slane %v1159, 4
      %v1162 = vor.u32 %v1161, %v1157
      %v1163 = vrot.slane %v1162, 4
      %v1165 = vshll.u32 %v886, 16
      %v1167 = vrot.slane %v1165, 5
      %v1168 = vsel %vm904, %v1163, %v1167
      %v1170 = vshrl.u32 %v887, 16
      %v1172 = vrot.slane %v1170, 4
      %v1173 = vshll.u32 %v887, 16
      %v1175 = vrot.slane %v1173, 5
      %v1176 = vor.u32 %v1172, %v1175
      %v1177 = vrot.slane %v1176, 4
      %v1179 = vshll.u32 %v888, 16
      %v1181 = vrot.slane %v1179, 5
      %v1182 = vsel %vm904, %v1177, %v1181
      %v1183 = vshrl.u32 %v888, 16
      %v1185 = vrot.slane %v1183, 4
      %v1186 = vor.u32 %v1185, %v1181
      %v1187 = vrot.slane %v1186, 4
      %v1189 = vshll.u32 %v889, 16
      %v1191 = vrot.slane %v1189, 5
      %v1192 = vsel %vm904, %v1187, %v1191
      %v1194 = vshrl.u32 %v890, 16
      %v1196 = vrot.slane %v1194, 4
      %v1197 = vshll.u32 %v890, 16
      %v1199 = vrot.slane %v1197, 5
      %v1200 = vor.u32 %v1196, %v1199
      %v1201 = vrot.slane %v1200, 4
      %v1203 = vshll.u32 %v891, 16
      %v1205 = vrot.slane %v1203, 5
      %v1206 = vsel %vm904, %v1201, %v1205
      %v1207 = vshrl.u32 %v891, 16
      %v1209 = vrot.slane %v1207, 4
      %v1210 = vor.u32 %v1209, %v1205
      %v1211 = vrot.slane %v1210, 4
      %v1213 = vshll.u32 %v892, 16
      %v1215 = vrot.slane %v1213, 5
      %v1216 = vsel %vm904, %v1211, %v1215
      %v1218 = vshrl.u32 %v893, 16
      %v1220 = vrot.slane %v1218, 4
      %v1221 = vshll.u32 %v893, 16
      %v1223 = vrot.slane %v1221, 5
      %v1224 = vor.u32 %v1220, %v1223
      %v1225 = vrot.slane %v1224, 4
      %v1227 = vshll.u32 %v894, 16
      %v1229 = vrot.slane %v1227, 5
      %v1230 = vsel %vm904, %v1225, %v1229
      %v1231 = vshrl.u32 %v894, 16
      %v1233 = vrot.slane %v1231, 4
      %v1234 = vor.u32 %v1233, %v1229
      %v1235 = vrot.slane %v1234, 4
      %v1237 = vshll.u32 %v895, 16
      %v1239 = vrot.slane %v1237, 5
      %v1240 = vsel %vm904, %v1235, %v1239
      %v1242 = vshrl.u32 %v896, 16
      %v1244 = vrot.slane %v1242, 4
      %v1245 = vshll.u32 %v896, 16
      %v1247 = vrot.slane %v1245, 5
      %v1248 = vor.u32 %v1244, %v1247
      %v1249 = vrot.slane %v1248, 4
      %v1251 = vshll.u32 %v897, 16
      %v1253 = vrot.slane %v1251, 5
      %v1254 = vsel %vm904, %v1249, %v1253
      %v1255 = vshrl.u32 %v897, 16
      %v1257 = vrot.slane %v1255, 4
      %v1258 = vor.u32 %v1257, %v1253
      %v1259 = vrot.slane %v1258, 4
      %v1261 = vshll.u32 %v898, 16
      %v1263 = vrot.slane %v1261, 5
      %v1264 = vsel %vm904, %v1259, %v1263
      %v1266 = vshrl.u32 %v899, 16
      %v1268 = vrot.slane %v1266, 4
      %v1269 = vshll.u32 %v899, 16
      %v1271 = vrot.slane %v1269, 5
      %v1272 = vor.u32 %v1268, %v1271
      %v1273 = vrot.slane %v1272, 4
      %v1275 = vshll.u32 %v900, 16
      %v1277 = vrot.slane %v1275, 5
      %v1278 = vsel %vm904, %v1273, %v1277
      %v1279 = vshrl.u32 %v900, 16
      %v1281 = vrot.slane %v1279, 4
      %v1282 = vor.u32 %v1281, %v1277
      %v1283 = vrot.slane %v1282, 4
      %v1285 = vshll.u32 %v901, 16
      %v1287 = vrot.slane %v1285, 5
      %v1288 = vsel %vm904, %v1283, %v1287
      %1289 = vrot.lane.b32.xlu0 %v918, 4
      %v1290 = vpop.permute.xlu0 %1289
      %1291 = vrot.lane.b32.xlu0 %v928, 4
      %v1292 = vpop.permute.xlu0 %1291
      %1293 = vrot.lane.b32.xlu0 %v942, 4
      %v1294 = vpop.permute.xlu0 %1293
      %1295 = vrot.lane.b32.xlu0 %v952, 4
      %v1296 = vpop.permute.xlu0 %1295
      %1297 = vrot.lane.b32.xlu0 %v966, 4
      %v1298 = vpop.permute.xlu0 %1297
      %1299 = vrot.lane.b32.xlu0 %v976, 4
      %v1300 = vpop.permute.xlu0 %1299
      %1301 = vrot.lane.b32.xlu0 %v990, 4
      %v1302 = vpop.permute.xlu0 %1301
      %1303 = vrot.lane.b32.xlu0 %v1000, 4
      %v1304 = vpop.permute.xlu0 %1303
      %1305 = vrot.lane.b32.xlu0 %v1014, 4
      %v1306 = vpop.permute.xlu0 %1305
      %1307 = vrot.lane.b32.xlu0 %v1024, 4
      %v1308 = vpop.permute.xlu0 %1307
      %1309 = vrot.lane.b32.xlu0 %v1038, 4
      %v1310 = vpop.permute.xlu0 %1309
      %1311 = vrot.lane.b32.xlu0 %v1048, 4
      %v1312 = vpop.permute.xlu0 %1311
      %1313 = vrot.lane.b32.xlu0 %v1062, 4
      %v1314 = vpop.permute.xlu0 %1313
      %1315 = vrot.lane.b32.xlu0 %v1072, 4
      %v1316 = vpop.permute.xlu0 %1315
      %1317 = vrot.lane.b32.xlu0 %v1086, 4
      %v1318 = vpop.permute.xlu0 %1317
      %1319 = vrot.lane.b32.xlu0 %v1096, 4
      %v1320 = vpop.permute.xlu0 %1319
      %1321 = vrot.lane.b32.xlu0 %v1110, 4
      %v1322 = vpop.permute.xlu0 %1321
      %1323 = vrot.lane.b32.xlu0 %v1120, 4
      %v1324 = vpop.permute.xlu0 %1323
      %1325 = vrot.lane.b32.xlu0 %v1134, 4
      %v1326 = vpop.permute.xlu0 %1325
      %1327 = vrot.lane.b32.xlu0 %v1144, 4
      %v1328 = vpop.permute.xlu0 %1327
      %1329 = vrot.lane.b32.xlu0 %v1158, 4
      %v1330 = vpop.permute.xlu0 %1329
      %1331 = vrot.lane.b32.xlu0 %v1168, 4
      %v1332 = vpop.permute.xlu0 %1331
      %1333 = vrot.lane.b32.xlu0 %v1182, 4
      %v1334 = vpop.permute.xlu0 %1333
      %1335 = vrot.lane.b32.xlu0 %v1192, 4
      %v1336 = vpop.permute.xlu0 %1335
      %1337 = vrot.lane.b32.xlu0 %v1206, 4
      %v1338 = vpop.permute.xlu0 %1337
      %1339 = vrot.lane.b32.xlu0 %v1216, 4
      %v1340 = vpop.permute.xlu0 %1339
      %1341 = vrot.lane.b32.xlu0 %v1230, 4
      %v1342 = vpop.permute.xlu0 %1341
      %1343 = vrot.lane.b32.xlu0 %v1240, 4
      %v1344 = vpop.permute.xlu0 %1343
      %1345 = vrot.lane.b32.xlu0 %v1254, 4
      %v1346 = vpop.permute.xlu0 %1345
      %1347 = vrot.lane.b32.xlu0 %v1264, 4
      %v1348 = vpop.permute.xlu0 %1347
      %1349 = vrot.lane.b32.xlu0 %v1278, 4
      %v1350 = vpop.permute.xlu0 %1349
      %1351 = vrot.lane.b32.xlu0 %v1288, 4
      %v1352 = vpop.permute.xlu0 %1351
      %vm1385 = vcmask 60448
      %1386 = vst.msk [vmem:[#allocation3] sm:$0xf] %vm1385, %v1290
      %1387 = vst.msk [vmem:[#allocation3 + $0x4] sm:$0xf] %vm1385, %v1292
      %1388 = vst.msk [vmem:[#allocation3 + $0x8] sm:$0xf] %vm1385, %v1294
      %1389 = vst.msk [vmem:[#allocation3 + $0xc] sm:$0xf] %vm1385, %v1296
      %1390 = vst.msk [vmem:[#allocation3 + $0x10] sm:$0xf] %vm1385, %v1298
      %1391 = vst.msk [vmem:[#allocation3 + $0x14] sm:$0xf] %vm1385, %v1300
      %1392 = vst.msk [vmem:[#allocation3 + $0x18] sm:$0xf] %vm1385, %v1302
      %1393 = vst.msk [vmem:[#allocation3 + $0x1c] sm:$0xf] %vm1385, %v1304
      %1394 = vst.msk [vmem:[#allocation3 + $0x20] sm:$0xf] %vm1385, %v1306
      %1395 = vst.msk [vmem:[#allocation3 + $0x24] sm:$0xf] %vm1385, %v1308
      %1396 = vst.msk [vmem:[#allocation3 + $0x28] sm:$0xf] %vm1385, %v1310
      %1397 = vst.msk [vmem:[#allocation3 + $0x2c] sm:$0xf] %vm1385, %v1312
      %1398 = vst.msk [vmem:[#allocation3 + $0x30] sm:$0xf] %vm1385, %v1314
      %1399 = vst.msk [vmem:[#allocation3 + $0x34] sm:$0xf] %vm1385, %v1316
      %1400 = vst.msk [vmem:[#allocation3 + $0x38] sm:$0xf] %vm1385, %v1318
      %1401 = vst.msk [vmem:[#allocation3 + $0x3c] sm:$0xf] %vm1385, %v1320
      %1402 = vst.msk [vmem:[#allocation3 + $0x40] sm:$0xf] %vm1385, %v1322
      %1403 = vst.msk [vmem:[#allocation3 + $0x44] sm:$0xf] %vm1385, %v1324
      %1404 = vst.msk [vmem:[#allocation3 + $0x48] sm:$0xf] %vm1385, %v1326
      %1405 = vst.msk [vmem:[#allocation3 + $0x4c] sm:$0xf] %vm1385, %v1328
      %1406 = vst.msk [vmem:[#allocation3 + $0x50] sm:$0xf] %vm1385, %v1330
      %1407 = vst.msk [vmem:[#allocation3 + $0x54] sm:$0xf] %vm1385, %v1332
      %1408 = vst.msk [vmem:[#allocation3 + $0x58] sm:$0xf] %vm1385, %v1334
      %1409 = vst.msk [vmem:[#allocation3 + $0x5c] sm:$0xf] %vm1385, %v1336
      %1410 = vst.msk [vmem:[#allocation3 + $0x60] sm:$0xf] %vm1385, %v1338
      %1411 = vst.msk [vmem:[#allocation3 + $0x64] sm:$0xf] %vm1385, %v1340
      %1412 = vst.msk [vmem:[#allocation3 + $0x68] sm:$0xf] %vm1385, %v1342
      %1413 = vst.msk [vmem:[#allocation3 + $0x6c] sm:$0xf] %vm1385, %v1344
      %1414 = vst.msk [vmem:[#allocation3 + $0x70] sm:$0xf] %vm1385, %v1346
      %1415 = vst.msk [vmem:[#allocation3 + $0x74] sm:$0xf] %vm1385, %v1348
      %1416 = vst.msk [vmem:[#allocation3 + $0x78] sm:$0xf] %vm1385, %v1350
      %1417 = vst.msk [vmem:[#allocation3 + $0x7c] sm:$0xf] %vm1385, %v1352
      %v1418 = vld [vmem:[#allocation2] sm:$0xe]
      %v1419 = vld [vmem:[#allocation2 + $0x4] sm:$0xf]
      %v1420 = vld [vmem:[#allocation2 + $0x8] sm:$0x1]
      %v1421 = vld [vmem:[#allocation2 + $0xc] sm:$0xe]
      %v1422 = vld [vmem:[#allocation2 + $0x10] sm:$0xf]
      %v1423 = vld [vmem:[#allocation2 + $0x14] sm:$0x1]
      %v1424 = vld [vmem:[#allocation2 + $0x18] sm:$0xe]
      %v1425 = vld [vmem:[#allocation2 + $0x1c] sm:$0xf]
      %v1426 = vld [vmem:[#allocation2 + $0x20] sm:$0x1]
      %v1427 = vld [vmem:[#allocation2 + $0x24] sm:$0xe]
      %v1428 = vld [vmem:[#allocation2 + $0x28] sm:$0xf]
      %v1429 = vld [vmem:[#allocation2 + $0x2c] sm:$0x1]
      %v1430 = vld [vmem:[#allocation2 + $0x30] sm:$0xe]
      %v1431 = vld [vmem:[#allocation2 + $0x34] sm:$0xf]
      %v1432 = vld [vmem:[#allocation2 + $0x38] sm:$0x1]
      %v1433 = vld [vmem:[#allocation2 + $0x3c] sm:$0xe]
      %v1434 = vld [vmem:[#allocation2 + $0x40] sm:$0xf]
      %v1435 = vld [vmem:[#allocation2 + $0x44] sm:$0x1]
      %v1436 = vld [vmem:[#allocation2 + $0x48] sm:$0xe]
      %v1437 = vld [vmem:[#allocation2 + $0x4c] sm:$0xf]
      %v1438 = vld [vmem:[#allocation2 + $0x50] sm:$0x1]
      %v1439 = vld [vmem:[#allocation2 + $0x54] sm:$0xe]
      %v1440 = vld [vmem:[#allocation2 + $0x58] sm:$0xf]
      %v1441 = vld [vmem:[#allocation2 + $0x5c] sm:$0x1]
      %v1442 = vld [vmem:[#allocation2 + $0x60] sm:$0xe]
      %v1443 = vld [vmem:[#allocation2 + $0x64] sm:$0xf]
      %v1444 = vld [vmem:[#allocation2 + $0x68] sm:$0x1]
      %v1445 = vld [vmem:[#allocation2 + $0x6c] sm:$0xe]
      %v1446 = vld [vmem:[#allocation2 + $0x70] sm:$0xf]
      %v1447 = vld [vmem:[#allocation2 + $0x74] sm:$0x1]
      %v1448 = vld [vmem:[#allocation2 + $0x78] sm:$0xe]
      %v1449 = vld [vmem:[#allocation2 + $0x7c] sm:$0xf]
      %v1450 = vld [vmem:[#allocation2 + $0x80] sm:$0x1]
      %v1451 = vld [vmem:[#allocation2 + $0x84] sm:$0xe]
      %v1452 = vld [vmem:[#allocation2 + $0x88] sm:$0xf]
      %v1453 = vld [vmem:[#allocation2 + $0x8c] sm:$0x1]
      %v1454 = vld [vmem:[#allocation2 + $0x90] sm:$0xe]
      %v1455 = vld [vmem:[#allocation2 + $0x94] sm:$0xf]
      %v1456 = vld [vmem:[#allocation2 + $0x98] sm:$0x1]
      %v1457 = vld [vmem:[#allocation2 + $0x9c] sm:$0xe]
      %v1458 = vld [vmem:[#allocation2 + $0xa0] sm:$0xf]
      %v1459 = vld [vmem:[#allocation2 + $0xa4] sm:$0x1]
      %v1460 = vld [vmem:[#allocation2 + $0xa8] sm:$0xe]
      %v1461 = vld [vmem:[#allocation2 + $0xac] sm:$0xf]
      %v1462 = vld [vmem:[#allocation2 + $0xb0] sm:$0x1]
      %v1463 = vld [vmem:[#allocation2 + $0xb4] sm:$0xe]
      %v1464 = vld [vmem:[#allocation2 + $0xb8] sm:$0xf]
      %v1465 = vld [vmem:[#allocation2 + $0xbc] sm:$0x1]
      %vm1514 = vcmask 1042432
      %vm1515 = vcmask 1046532
      %vm1516 = vmor %vm1514, %vm1515
      %v1517 = vrot.slane %v1418, 5
      %v1518 = vrot.slane %v1517, 4
      %v1519 = vrot.slane %v1419, 5
      %v1520 = vsel %vm1516, %v1518, %v1519
      %v1521 = vrot.slane %v1519, 4
      %v1522 = vrot.slane %v1420, 5
      %v1523 = vsel %vm1516, %v1521, %v1522
      %v1524 = vrot.slane %v1421, 5
      %v1525 = vrot.slane %v1524, 4
      %v1526 = vrot.slane %v1422, 5
      %v1527 = vsel %vm1516, %v1525, %v1526
      %v1528 = vrot.slane %v1526, 4
      %v1529 = vrot.slane %v1423, 5
      %v1530 = vsel %vm1516, %v1528, %v1529
      %v1531 = vrot.slane %v1424, 5
      %v1532 = vrot.slane %v1531, 4
      %v1533 = vrot.slane %v1425, 5
      %v1534 = vsel %vm1516, %v1532, %v1533
      %v1535 = vrot.slane %v1533, 4
      %v1536 = vrot.slane %v1426, 5
      %v1537 = vsel %vm1516, %v1535, %v1536
      %v1538 = vrot.slane %v1427, 5
      %v1539 = vrot.slane %v1538, 4
      %v1540 = vrot.slane %v1428, 5
      %v1541 = vsel %vm1516, %v1539, %v1540
      %v1542 = vrot.slane %v1540, 4
      %v1543 = vrot.slane %v1429, 5
      %v1544 = vsel %vm1516, %v1542, %v1543
      %v1545 = vrot.slane %v1430, 5
      %v1546 = vrot.slane %v1545, 4
      %v1547 = vrot.slane %v1431, 5
      %v1548 = vsel %vm1516, %v1546, %v1547
      %v1549 = vrot.slane %v1547, 4
      %v1550 = vrot.slane %v1432, 5
      %v1551 = vsel %vm1516, %v1549, %v1550
      %v1552 = vrot.slane %v1433, 5
      %v1553 = vrot.slane %v1552, 4
      %v1554 = vrot.slane %v1434, 5
      %v1555 = vsel %vm1516, %v1553, %v1554
      %v1556 = vrot.slane %v1554, 4
      %v1557 = vrot.slane %v1435, 5
      %v1558 = vsel %vm1516, %v1556, %v1557
      %v1559 = vrot.slane %v1436, 5
      %v1560 = vrot.slane %v1559, 4
      %v1561 = vrot.slane %v1437, 5
      %v1562 = vsel %vm1516, %v1560, %v1561
      %v1563 = vrot.slane %v1561, 4
      %v1564 = vrot.slane %v1438, 5
      %v1565 = vsel %vm1516, %v1563, %v1564
      %v1566 = vrot.slane %v1439, 5
      %v1567 = vrot.slane %v1566, 4
      %v1568 = vrot.slane %v1440, 5
      %v1569 = vsel %vm1516, %v1567, %v1568
      %v1570 = vrot.slane %v1568, 4
      %v1571 = vrot.slane %v1441, 5
      %v1572 = vsel %vm1516, %v1570, %v1571
      %v1573 = vrot.slane %v1442, 5
      %v1574 = vrot.slane %v1573, 4
      %v1575 = vrot.slane %v1443, 5
      %v1576 = vsel %vm1516, %v1574, %v1575
      %v1577 = vrot.slane %v1575, 4
      %v1578 = vrot.slane %v1444, 5
      %v1579 = vsel %vm1516, %v1577, %v1578
      %v1580 = vrot.slane %v1445, 5
      %v1581 = vrot.slane %v1580, 4
      %v1582 = vrot.slane %v1446, 5
      %v1583 = vsel %vm1516, %v1581, %v1582
      %v1584 = vrot.slane %v1582, 4
      %v1585 = vrot.slane %v1447, 5
      %v1586 = vsel %vm1516, %v1584, %v1585
      %v1587 = vrot.slane %v1448, 5
      %v1588 = vrot.slane %v1587, 4
      %v1589 = vrot.slane %v1449, 5
      %v1590 = vsel %vm1516, %v1588, %v1589
      %v1591 = vrot.slane %v1589, 4
      %v1592 = vrot.slane %v1450, 5
      %v1593 = vsel %vm1516, %v1591, %v1592
      %v1594 = vrot.slane %v1451, 5
      %v1595 = vrot.slane %v1594, 4
      %v1596 = vrot.slane %v1452, 5
      %v1597 = vsel %vm1516, %v1595, %v1596
      %v1598 = vrot.slane %v1596, 4
      %v1599 = vrot.slane %v1453, 5
      %v1600 = vsel %vm1516, %v1598, %v1599
      %v1601 = vrot.slane %v1454, 5
      %v1602 = vrot.slane %v1601, 4
      %v1603 = vrot.slane %v1455, 5
      %v1604 = vsel %vm1516, %v1602, %v1603
      %v1605 = vrot.slane %v1603, 4
      %v1606 = vrot.slane %v1456, 5
      %v1607 = vsel %vm1516, %v1605, %v1606
      %v1608 = vrot.slane %v1457, 5
      %v1609 = vrot.slane %v1608, 4
      %v1610 = vrot.slane %v1458, 5
      %v1611 = vsel %vm1516, %v1609, %v1610
      %v1612 = vrot.slane %v1610, 4
      %v1613 = vrot.slane %v1459, 5
      %v1614 = vsel %vm1516, %v1612, %v1613
      %v1615 = vrot.slane %v1460, 5
      %v1616 = vrot.slane %v1615, 4
      %v1617 = vrot.slane %v1461, 5
      %v1618 = vsel %vm1516, %v1616, %v1617
      %v1619 = vrot.slane %v1617, 4
      %v1620 = vrot.slane %v1462, 5
      %v1621 = vsel %vm1516, %v1619, %v1620
      %v1622 = vrot.slane %v1463, 5
      %v1623 = vrot.slane %v1622, 4
      %v1624 = vrot.slane %v1464, 5
      %v1625 = vsel %vm1516, %v1623, %v1624
      %v1626 = vrot.slane %v1624, 4
      %v1627 = vrot.slane %v1465, 5
      %v1628 = vsel %vm1516, %v1626, %v1627
      %1629 = vrot.lane.b32.xlu0 %v1520, 8
      %v1630 = vpop.permute.xlu0 %1629
      %1631 = vrot.lane.b32.xlu0 %v1523, 8
      %v1632 = vpop.permute.xlu0 %1631
      %1633 = vrot.lane.b32.xlu0 %v1527, 8
      %v1634 = vpop.permute.xlu0 %1633
      %1635 = vrot.lane.b32.xlu0 %v1530, 8
      %v1636 = vpop.permute.xlu0 %1635
      %1637 = vrot.lane.b32.xlu0 %v1534, 8
      %v1638 = vpop.permute.xlu0 %1637
      %1639 = vrot.lane.b32.xlu0 %v1537, 8
      %v1640 = vpop.permute.xlu0 %1639
      %1641 = vrot.lane.b32.xlu0 %v1541, 8
      %v1642 = vpop.permute.xlu0 %1641
      %1643 = vrot.lane.b32.xlu0 %v1544, 8
      %v1644 = vpop.permute.xlu0 %1643
      %1645 = vrot.lane.b32.xlu0 %v1548, 8
      %v1646 = vpop.permute.xlu0 %1645
      %1647 = vrot.lane.b32.xlu0 %v1551, 8
      %v1648 = vpop.permute.xlu0 %1647
      %1649 = vrot.lane.b32.xlu0 %v1555, 8
      %v1650 = vpop.permute.xlu0 %1649
      %1651 = vrot.lane.b32.xlu0 %v1558, 8
      %v1652 = vpop.permute.xlu0 %1651
      %1653 = vrot.lane.b32.xlu0 %v1562, 8
      %v1654 = vpop.permute.xlu0 %1653
      %1655 = vrot.lane.b32.xlu0 %v1565, 8
      %v1656 = vpop.permute.xlu0 %1655
      %1657 = vrot.lane.b32.xlu0 %v1569, 8
      %v1658 = vpop.permute.xlu0 %1657
      %1659 = vrot.lane.b32.xlu0 %v1572, 8
      %v1660 = vpop.permute.xlu0 %1659
      %1661 = vrot.lane.b32.xlu0 %v1576, 8
      %v1662 = vpop.permute.xlu0 %1661
      %1663 = vrot.lane.b32.xlu0 %v1579, 8
      %v1664 = vpop.permute.xlu0 %1663
      %1665 = vrot.lane.b32.xlu0 %v1583, 8
      %v1666 = vpop.permute.xlu0 %1665
      %1667 = vrot.lane.b32.xlu0 %v1586, 8
      %v1668 = vpop.permute.xlu0 %1667
      %1669 = vrot.lane.b32.xlu0 %v1590, 8
      %v1670 = vpop.permute.xlu0 %1669
      %1671 = vrot.lane.b32.xlu0 %v1593, 8
      %v1672 = vpop.permute.xlu0 %1671
      %1673 = vrot.lane.b32.xlu0 %v1597, 8
      %v1674 = vpop.permute.xlu0 %1673
      %1675 = vrot.lane.b32.xlu0 %v1600, 8
      %v1676 = vpop.permute.xlu0 %1675
      %1677 = vrot.lane.b32.xlu0 %v1604, 8
      %v1678 = vpop.permute.xlu0 %1677
      %1679 = vrot.lane.b32.xlu0 %v1607, 8
      %v1680 = vpop.permute.xlu0 %1679
      %1681 = vrot.lane.b32.xlu0 %v1611, 8
      %v1682 = vpop.permute.xlu0 %1681
      %1683 = vrot.lane.b32.xlu0 %v1614, 8
      %v1684 = vpop.permute.xlu0 %1683
      %1685 = vrot.lane.b32.xlu0 %v1618, 8
      %v1686 = vpop.permute.xlu0 %1685
      %1687 = vrot.lane.b32.xlu0 %v1621, 8
      %v1688 = vpop.permute.xlu0 %1687
      %1689 = vrot.lane.b32.xlu0 %v1625, 8
      %v1690 = vpop.permute.xlu0 %1689
      %1691 = vrot.lane.b32.xlu0 %v1628, 8
      %v1692 = vpop.permute.xlu0 %1691
      %vm1725 = vcmask 93248
      %1726 = vst.msk [vmem:[#allocation3] sm:$0xf] %vm1725, %v1630
      %1727 = vst.msk [vmem:[#allocation3 + $0x4] sm:$0xf] %vm1725, %v1632
      %1728 = vst.msk [vmem:[#allocation3 + $0x8] sm:$0xf] %vm1725, %v1634
      %1729 = vst.msk [vmem:[#allocation3 + $0xc] sm:$0xf] %vm1725, %v1636
      %1730 = vst.msk [vmem:[#allocation3 + $0x10] sm:$0xf] %vm1725, %v1638
      %1731 = vst.msk [vmem:[#allocation3 + $0x14] sm:$0xf] %vm1725, %v1640
      %1732 = vst.msk [vmem:[#allocation3 + $0x18] sm:$0xf] %vm1725, %v1642
      %1733 = vst.msk [vmem:[#allocation3 + $0x1c] sm:$0xf] %vm1725, %v1644
      %1734 = vst.msk [vmem:[#allocation3 + $0x20] sm:$0xf] %vm1725, %v1646
      %1735 = vst.msk [vmem:[#allocation3 + $0x24] sm:$0xf] %vm1725, %v1648
      %1736 = vst.msk [vmem:[#allocation3 + $0x28] sm:$0xf] %vm1725, %v1650
      %1737 = vst.msk [vmem:[#allocation3 + $0x2c] sm:$0xf] %vm1725, %v1652
      %1738 = vst.msk [vmem:[#allocation3 + $0x30] sm:$0xf] %vm1725, %v1654
      %1739 = vst.msk [vmem:[#allocation3 + $0x34] sm:$0xf] %vm1725, %v1656
      %1740 = vst.msk [vmem:[#allocation3 + $0x38] sm:$0xf] %vm1725, %v1658
      %1741 = vst.msk [vmem:[#allocation3 + $0x3c] sm:$0xf] %vm1725, %v1660
      %1742 = vst.msk [vmem:[#allocation3 + $0x40] sm:$0xf] %vm1725, %v1662
      %1743 = vst.msk [vmem:[#allocation3 + $0x44] sm:$0xf] %vm1725, %v1664
      %1744 = vst.msk [vmem:[#allocation3 + $0x48] sm:$0xf] %vm1725, %v1666
      %1745 = vst.msk [vmem:[#allocation3 + $0x4c] sm:$0xf] %vm1725, %v1668
      %1746 = vst.msk [vmem:[#allocation3 + $0x50] sm:$0xf] %vm1725, %v1670
      %1747 = vst.msk [vmem:[#allocation3 + $0x54] sm:$0xf] %vm1725, %v1672
      %1748 = vst.msk [vmem:[#allocation3 + $0x58] sm:$0xf] %vm1725, %v1674
      %1749 = vst.msk [vmem:[#allocation3 + $0x5c] sm:$0xf] %vm1725, %v1676
      %1750 = vst.msk [vmem:[#allocation3 + $0x60] sm:$0xf] %vm1725, %v1678
      %1751 = vst.msk [vmem:[#allocation3 + $0x64] sm:$0xf] %vm1725, %v1680
      %1752 = vst.msk [vmem:[#allocation3 + $0x68] sm:$0xf] %vm1725, %v1682
      %1753 = vst.msk [vmem:[#allocation3 + $0x6c] sm:$0xf] %vm1725, %v1684
      %1754 = vst.msk [vmem:[#allocation3 + $0x70] sm:$0xf] %vm1725, %v1686
      %1755 = vst.msk [vmem:[#allocation3 + $0x74] sm:$0xf] %vm1725, %v1688
      %1756 = vst.msk [vmem:[#allocation3 + $0x78] sm:$0xf] %vm1725, %v1690
      %1757 = vst.msk [vmem:[#allocation3 + $0x7c] sm:$0xf] %vm1725, %v1692
      %v1758 = vld [vmem:[%s675] sm:$0xf]
      %v1759 = vld [vmem:[%s675 + $0x4] sm:$0xf]
      %v1760 = vld [vmem:[%s675 + $0xc] sm:$0xf]
      %v1761 = vld [vmem:[%s675 + $0x10] sm:$0xf]
      %v1762 = vld [vmem:[%s675 + $0x18] sm:$0xf]
      %v1763 = vld [vmem:[%s675 + $0x1c] sm:$0xf]
      %v1764 = vld [vmem:[%s675 + $0x24] sm:$0xf]
      %v1765 = vld [vmem:[%s675 + $0x28] sm:$0xf]
      %v1766 = vld [vmem:[%s675 + $0x30] sm:$0xf]
      %v1767 = vld [vmem:[%s675 + $0x34] sm:$0xf]
      %v1768 = vld [vmem:[%s675 + $0x3c] sm:$0xf]
      %v1769 = vld [vmem:[%s675 + $0x40] sm:$0xf]
      %v1770 = vld [vmem:[%s675 + $0x48] sm:$0xf]
      %v1771 = vld [vmem:[%s675 + $0x4c] sm:$0xf]
      %v1772 = vld [vmem:[%s675 + $0x54] sm:$0xf]
      %v1773 = vld [vmem:[%s675 + $0x58] sm:$0xf]
      %v1774 = vld [vmem:[%s675 + $0x60] sm:$0xf]
      %v1775 = vld [vmem:[%s675 + $0x64] sm:$0xf]
      %v1776 = vld [vmem:[%s675 + $0x6c] sm:$0xf]
      %v1777 = vld [vmem:[%s675 + $0x70] sm:$0xf]
      %v1778 = vld [vmem:[%s675 + $0x78] sm:$0xf]
      %v1779 = vld [vmem:[%s675 + $0x7c] sm:$0xf]
      %v1780 = vld [vmem:[%s675 + $0x84] sm:$0xf]
      %v1781 = vld [vmem:[%s675 + $0x88] sm:$0xf]
      %v1782 = vld [vmem:[%s675 + $0x90] sm:$0xf]
      %v1783 = vld [vmem:[%s675 + $0x94] sm:$0xf]
      %v1784 = vld [vmem:[%s675 + $0x9c] sm:$0xf]
      %v1785 = vld [vmem:[%s675 + $0xa0] sm:$0xf]
      %v1786 = vld [vmem:[%s675 + $0xa8] sm:$0xf]
      %v1787 = vld [vmem:[%s675 + $0xac] sm:$0xf]
      %v1788 = vld [vmem:[%s675 + $0xb4] sm:$0xf]
      %v1789 = vld [vmem:[%s675 + $0xb8] sm:$0xf]
      %1822 = vrot.lane.b32.xlu0 %v1758, 12
      %v1823 = vpop.permute.xlu0 %1822
      %1824 = vrot.lane.b32.xlu0 %v1759, 12
      %v1825 = vpop.permute.xlu0 %1824
      %1826 = vrot.lane.b32.xlu0 %v1760, 12
      %v1827 = vpop.permute.xlu0 %1826
      %1828 = vrot.lane.b32.xlu0 %v1761, 12
      %v1829 = vpop.permute.xlu0 %1828
      %1830 = vrot.lane.b32.xlu0 %v1762, 12
      %v1831 = vpop.permute.xlu0 %1830
      %1832 = vrot.lane.b32.xlu0 %v1763, 12
      %v1833 = vpop.permute.xlu0 %1832
      %1834 = vrot.lane.b32.xlu0 %v1764, 12
      %v1835 = vpop.permute.xlu0 %1834
      %1836 = vrot.lane.b32.xlu0 %v1765, 12
      %v1837 = vpop.permute.xlu0 %1836
      %1838 = vrot.lane.b32.xlu0 %v1766, 12
      %v1839 = vpop.permute.xlu0 %1838
      %1840 = vrot.lane.b32.xlu0 %v1767, 12
      %v1841 = vpop.permute.xlu0 %1840
      %1842 = vrot.lane.b32.xlu0 %v1768, 12
      %v1843 = vpop.permute.xlu0 %1842
      %1844 = vrot.lane.b32.xlu0 %v1769, 12
      %v1845 = vpop.permute.xlu0 %1844
      %1846 = vrot.lane.b32.xlu0 %v1770, 12
      %v1847 = vpop.permute.xlu0 %1846
      %1848 = vrot.lane.b32.xlu0 %v1771, 12
      %v1849 = vpop.permute.xlu0 %1848
      %1850 = vrot.lane.b32.xlu0 %v1772, 12
      %v1851 = vpop.permute.xlu0 %1850
      %1852 = vrot.lane.b32.xlu0 %v1773, 12
      %v1853 = vpop.permute.xlu0 %1852
      %1854 = vrot.lane.b32.xlu0 %v1774, 12
      %v1855 = vpop.permute.xlu0 %1854
      %1856 = vrot.lane.b32.xlu0 %v1775, 12
      %v1857 = vpop.permute.xlu0 %1856
      %1858 = vrot.lane.b32.xlu0 %v1776, 12
      %v1859 = vpop.permute.xlu0 %1858
      %1860 = vrot.lane.b32.xlu0 %v1777, 12
      %v1861 = vpop.permute.xlu0 %1860
      %1862 = vrot.lane.b32.xlu0 %v1778, 12
      %v1863 = vpop.permute.xlu0 %1862
      %1864 = vrot.lane.b32.xlu0 %v1779, 12
      %v1865 = vpop.permute.xlu0 %1864
      %1866 = vrot.lane.b32.xlu0 %v1780, 12
      %v1867 = vpop.permute.xlu0 %1866
      %1868 = vrot.lane.b32.xlu0 %v1781, 12
      %v1869 = vpop.permute.xlu0 %1868
      %1870 = vrot.lane.b32.xlu0 %v1782, 12
      %v1871 = vpop.permute.xlu0 %1870
      %1872 = vrot.lane.b32.xlu0 %v1783, 12
      %v1873 = vpop.permute.xlu0 %1872
      %1874 = vrot.lane.b32.xlu0 %v1784, 12
      %v1875 = vpop.permute.xlu0 %1874
      %1876 = vrot.lane.b32.xlu0 %v1785, 12
      %v1877 = vpop.permute.xlu0 %1876
      %1878 = vrot.lane.b32.xlu0 %v1786, 12
      %v1879 = vpop.permute.xlu0 %1878
      %1880 = vrot.lane.b32.xlu0 %v1787, 12
      %v1881 = vpop.permute.xlu0 %1880
      %1882 = vrot.lane.b32.xlu0 %v1788, 12
      %v1883 = vpop.permute.xlu0 %1882
      %1884 = vrot.lane.b32.xlu0 %v1789, 12
      %v1885 = vpop.permute.xlu0 %1884
      %vm1918 = vcmask 126048
      %1919 = vst.msk [vmem:[#allocation3] sm:$0xf] %vm1918, %v1823
      %1920 = vst.msk [vmem:[#allocation3 + $0x4] sm:$0xf] %vm1918, %v1825
      %1921 = vst.msk [vmem:[#allocation3 + $0x8] sm:$0xf] %vm1918, %v1827
      %1922 = vst.msk [vmem:[#allocation3 + $0xc] sm:$0xf] %vm1918, %v1829
      %1923 = vst.msk [vmem:[#allocation3 + $0x10] sm:$0xf] %vm1918, %v1831
      %1924 = vst.msk [vmem:[#allocation3 + $0x14] sm:$0xf] %vm1918, %v1833
      %1925 = vst.msk [vmem:[#allocation3 + $0x18] sm:$0xf] %vm1918, %v1835
      %1926 = vst.msk [vmem:[#allocation3 + $0x1c] sm:$0xf] %vm1918, %v1837
      %1927 = vst.msk [vmem:[#allocation3 + $0x20] sm:$0xf] %vm1918, %v1839
      %1928 = vst.msk [vmem:[#allocation3 + $0x24] sm:$0xf] %vm1918, %v1841
      %1929 = vst.msk [vmem:[#allocation3 + $0x28] sm:$0xf] %vm1918, %v1843
      %1930 = vst.msk [vmem:[#allocation3 + $0x2c] sm:$0xf] %vm1918, %v1845
      %1931 = vst.msk [vmem:[#allocation3 + $0x30] sm:$0xf] %vm1918, %v1847
      %1932 = vst.msk [vmem:[#allocation3 + $0x34] sm:$0xf] %vm1918, %v1849
      %1933 = vst.msk [vmem:[#allocation3 + $0x38] sm:$0xf] %vm1918, %v1851
      %1934 = vst.msk [vmem:[#allocation3 + $0x3c] sm:$0xf] %vm1918, %v1853
      %1935 = vst.msk [vmem:[#allocation3 + $0x40] sm:$0xf] %vm1918, %v1855
      %1936 = vst.msk [vmem:[#allocation3 + $0x44] sm:$0xf] %vm1918, %v1857
      %1937 = vst.msk [vmem:[#allocation3 + $0x48] sm:$0xf] %vm1918, %v1859
      %1938 = vst.msk [vmem:[#allocation3 + $0x4c] sm:$0xf] %vm1918, %v1861
      %1939 = vst.msk [vmem:[#allocation3 + $0x50] sm:$0xf] %vm1918, %v1863
      %1940 = vst.msk [vmem:[#allocation3 + $0x54] sm:$0xf] %vm1918, %v1865
      %1941 = vst.msk [vmem:[#allocation3 + $0x58] sm:$0xf] %vm1918, %v1867
      %1942 = vst.msk [vmem:[#allocation3 + $0x5c] sm:$0xf] %vm1918, %v1869
      %1943 = vst.msk [vmem:[#allocation3 + $0x60] sm:$0xf] %vm1918, %v1871
      %1944 = vst.msk [vmem:[#allocation3 + $0x64] sm:$0xf] %vm1918, %v1873
      %1945 = vst.msk [vmem:[#allocation3 + $0x68] sm:$0xf] %vm1918, %v1875
      %1946 = vst.msk [vmem:[#allocation3 + $0x6c] sm:$0xf] %vm1918, %v1877
      %1947 = vst.msk [vmem:[#allocation3 + $0x70] sm:$0xf] %vm1918, %v1879
      %1948 = vst.msk [vmem:[#allocation3 + $0x74] sm:$0xf] %vm1918, %v1881
      %1949 = vst.msk [vmem:[#allocation3 + $0x78] sm:$0xf] %vm1918, %v1883
      %1950 = vst.msk [vmem:[#allocation3 + $0x7c] sm:$0xf] %vm1918, %v1885
      %v1951 = vld [vmem:[%s675] sm:$0xf]
      %v1952 = vld [vmem:[%s675 + $0x4] sm:$0xf]
      %v1953 = vld [vmem:[%s675 + $0x8] sm:$0x1]
      %v1954 = vld [vmem:[%s675 + $0xc] sm:$0xf]
      %v1955 = vld [vmem:[%s675 + $0x10] sm:$0xf]
      %v1956 = vld [vmem:[%s675 + $0x14] sm:$0x1]
      %v1957 = vld [vmem:[%s675 + $0x18] sm:$0xf]
      %v1958 = vld [vmem:[%s675 + $0x1c] sm:$0xf]
      %v1959 = vld [vmem:[%s675 + $0x20] sm:$0x1]
      %v1960 = vld [vmem:[%s675 + $0x24] sm:$0xf]
      %v1961 = vld [vmem:[%s675 + $0x28] sm:$0xf]
      %v1962 = vld [vmem:[%s675 + $0x2c] sm:$0x1]
      %v1963 = vld [vmem:[%s675 + $0x30] sm:$0xf]
      %v1964 = vld [vmem:[%s675 + $0x34] sm:$0xf]
      %v1965 = vld [vmem:[%s675 + $0x38] sm:$0x1]
      %v1966 = vld [vmem:[%s675 + $0x3c] sm:$0xf]
      %v1967 = vld [vmem:[%s675 + $0x40] sm:$0xf]
      %v1968 = vld [vmem:[%s675 + $0x44] sm:$0x1]
      %v1969 = vld [vmem:[%s675 + $0x48] sm:$0xf]
      %v1970 = vld [vmem:[%s675 + $0x4c] sm:$0xf]
      %v1971 = vld [vmem:[%s675 + $0x50] sm:$0x1]
      %v1972 = vld [vmem:[%s675 + $0x54] sm:$0xf]
      %v1973 = vld [vmem:[%s675 + $0x58] sm:$0xf]
      %v1974 = vld [vmem:[%s675 + $0x5c] sm:$0x1]
      %v1975 = vld [vmem:[%s675 + $0x60] sm:$0xf]
      %v1976 = vld [vmem:[%s675 + $0x64] sm:$0xf]
      %v1977 = vld [vmem:[%s675 + $0x68] sm:$0x1]
      %v1978 = vld [vmem:[%s675 + $0x6c] sm:$0xf]
      %v1979 = vld [vmem:[%s675 + $0x70] sm:$0xf]
      %v1980 = vld [vmem:[%s675 + $0x74] sm:$0x1]
      %v1981 = vld [vmem:[%s675 + $0x78] sm:$0xf]
      %v1982 = vld [vmem:[%s675 + $0x7c] sm:$0xf]
      %v1983 = vld [vmem:[%s675 + $0x80] sm:$0x1]
      %v1984 = vld [vmem:[%s675 + $0x84] sm:$0xf]
      %v1985 = vld [vmem:[%s675 + $0x88] sm:$0xf]
      %v1986 = vld [vmem:[%s675 + $0x8c] sm:$0x1]
      %v1987 = vld [vmem:[%s675 + $0x90] sm:$0xf]
      %v1988 = vld [vmem:[%s675 + $0x94] sm:$0xf]
      %v1989 = vld [vmem:[%s675 + $0x98] sm:$0x1]
      %v1990 = vld [vmem:[%s675 + $0x9c] sm:$0xf]
      %v1991 = vld [vmem:[%s675 + $0xa0] sm:$0xf]
      %v1992 = vld [vmem:[%s675 + $0xa4] sm:$0x1]
      %v1993 = vld [vmem:[%s675 + $0xa8] sm:$0xf]
      %v1994 = vld [vmem:[%s675 + $0xac] sm:$0xf]
      %v1995 = vld [vmem:[%s675 + $0xb0] sm:$0x1]
      %v1996 = vld [vmem:[%s675 + $0xb4] sm:$0xf]
      %v1997 = vld [vmem:[%s675 + $0xb8] sm:$0xf]
      %v1998 = vld [vmem:[%s675 + $0xbc] sm:$0x1]
      %v2000 = vshrl.u32 %v1951, 16
      %v2002 = vrot.slane %v2000, 4
      %v2003 = vshll.u32 %v1951, 16
      %v2005 = vrot.slane %v2003, 5
      %v2006 = vor.u32 %v2002, %v2005
      %v2007 = vrot.slane %v2006, 4
      %v2009 = vshll.u32 %v1952, 16
      %v2011 = vrot.slane %v2009, 5
      %v2012 = vsel %vm904, %v2007, %v2011
      %v2013 = vshrl.u32 %v1952, 16
      %v2015 = vrot.slane %v2013, 4
      %v2016 = vor.u32 %v2015, %v2011
      %v2017 = vrot.slane %v2016, 4
      %v2019 = vshll.u32 %v1953, 16
      %v2021 = vrot.slane %v2019, 5
      %v2022 = vsel %vm904, %v2017, %v2021
      %v2024 = vshrl.u32 %v1954, 16
      %v2026 = vrot.slane %v2024, 4
      %v2027 = vshll.u32 %v1954, 16
      %v2029 = vrot.slane %v2027, 5
      %v2030 = vor.u32 %v2026, %v2029
      %v2031 = vrot.slane %v2030, 4
      %v2033 = vshll.u32 %v1955, 16
      %v2035 = vrot.slane %v2033, 5
      %v2036 = vsel %vm904, %v2031, %v2035
      %v2037 = vshrl.u32 %v1955, 16
      %v2039 = vrot.slane %v2037, 4
      %v2040 = vor.u32 %v2039, %v2035
      %v2041 = vrot.slane %v2040, 4
      %v2043 = vshll.u32 %v1956, 16
      %v2045 = vrot.slane %v2043, 5
      %v2046 = vsel %vm904, %v2041, %v2045
      %v2048 = vshrl.u32 %v1957, 16
      %v2050 = vrot.slane %v2048, 4
      %v2051 = vshll.u32 %v1957, 16
      %v2053 = vrot.slane %v2051, 5
      %v2054 = vor.u32 %v2050, %v2053
      %v2055 = vrot.slane %v2054, 4
      %v2057 = vshll.u32 %v1958, 16
      %v2059 = vrot.slane %v2057, 5
      %v2060 = vsel %vm904, %v2055, %v2059
      %v2061 = vshrl.u32 %v1958, 16
      %v2063 = vrot.slane %v2061, 4
      %v2064 = vor.u32 %v2063, %v2059
      %v2065 = vrot.slane %v2064, 4
      %v2067 = vshll.u32 %v1959, 16
      %v2069 = vrot.slane %v2067, 5
      %v2070 = vsel %vm904, %v2065, %v2069
      %v2072 = vshrl.u32 %v1960, 16
      %v2074 = vrot.slane %v2072, 4
      %v2075 = vshll.u32 %v1960, 16
      %v2077 = vrot.slane %v2075, 5
      %v2078 = vor.u32 %v2074, %v2077
      %v2079 = vrot.slane %v2078, 4
      %v2081 = vshll.u32 %v1961, 16
      %v2083 = vrot.slane %v2081, 5
      %v2084 = vsel %vm904, %v2079, %v2083
      %v2085 = vshrl.u32 %v1961, 16
      %v2087 = vrot.slane %v2085, 4
      %v2088 = vor.u32 %v2087, %v2083
      %v2089 = vrot.slane %v2088, 4
      %v2091 = vshll.u32 %v1962, 16
      %v2093 = vrot.slane %v2091, 5
      %v2094 = vsel %vm904, %v2089, %v2093
      %v2096 = vshrl.u32 %v1963, 16
      %v2098 = vrot.slane %v2096, 4
      %v2099 = vshll.u32 %v1963, 16
      %v2101 = vrot.slane %v2099, 5
      %v2102 = vor.u32 %v2098, %v2101
      %v2103 = vrot.slane %v2102, 4
      %v2105 = vshll.u32 %v1964, 16
      %v2107 = vrot.slane %v2105, 5
      %v2108 = vsel %vm904, %v2103, %v2107
      %v2109 = vshrl.u32 %v1964, 16
      %v2111 = vrot.slane %v2109, 4
      %v2112 = vor.u32 %v2111, %v2107
      %v2113 = vrot.slane %v2112, 4
      %v2115 = vshll.u32 %v1965, 16
      %v2117 = vrot.slane %v2115, 5
      %v2118 = vsel %vm904, %v2113, %v2117
      %v2120 = vshrl.u32 %v1966, 16
      %v2122 = vrot.slane %v2120, 4
      %v2123 = vshll.u32 %v1966, 16
      %v2125 = vrot.slane %v2123, 5
      %v2126 = vor.u32 %v2122, %v2125
      %v2127 = vrot.slane %v2126, 4
      %v2129 = vshll.u32 %v1967, 16
      %v2131 = vrot.slane %v2129, 5
      %v2132 = vsel %vm904, %v2127, %v2131
      %v2133 = vshrl.u32 %v1967, 16
      %v2135 = vrot.slane %v2133, 4
      %v2136 = vor.u32 %v2135, %v2131
      %v2137 = vrot.slane %v2136, 4
      %v2139 = vshll.u32 %v1968, 16
      %v2141 = vrot.slane %v2139, 5
      %v2142 = vsel %vm904, %v2137, %v2141
      %v2144 = vshrl.u32 %v1969, 16
      %v2146 = vrot.slane %v2144, 4
      %v2147 = vshll.u32 %v1969, 16
      %v2149 = vrot.slane %v2147, 5
      %v2150 = vor.u32 %v2146, %v2149
      %v2151 = vrot.slane %v2150, 4
      %v2153 = vshll.u32 %v1970, 16
      %v2155 = vrot.slane %v2153, 5
      %v2156 = vsel %vm904, %v2151, %v2155
      %v2157 = vshrl.u32 %v1970, 16
      %v2159 = vrot.slane %v2157, 4
      %v2160 = vor.u32 %v2159, %v2155
      %v2161 = vrot.slane %v2160, 4
      %v2163 = vshll.u32 %v1971, 16
      %v2165 = vrot.slane %v2163, 5
      %v2166 = vsel %vm904, %v2161, %v2165
      %v2168 = vshrl.u32 %v1972, 16
      %v2170 = vrot.slane %v2168, 4
      %v2171 = vshll.u32 %v1972, 16
      %v2173 = vrot.slane %v2171, 5
      %v2174 = vor.u32 %v2170, %v2173
      %v2175 = vrot.slane %v2174, 4
      %v2177 = vshll.u32 %v1973, 16
      %v2179 = vrot.slane %v2177, 5
      %v2180 = vsel %vm904, %v2175, %v2179
      %v2181 = vshrl.u32 %v1973, 16
      %v2183 = vrot.slane %v2181, 4
      %v2184 = vor.u32 %v2183, %v2179
      %v2185 = vrot.slane %v2184, 4
      %v2187 = vshll.u32 %v1974, 16
      %v2189 = vrot.slane %v2187, 5
      %v2190 = vsel %vm904, %v2185, %v2189
      %v2192 = vshrl.u32 %v1975, 16
      %v2194 = vrot.slane %v2192, 4
      %v2195 = vshll.u32 %v1975, 16
      %v2197 = vrot.slane %v2195, 5
      %v2198 = vor.u32 %v2194, %v2197
      %v2199 = vrot.slane %v2198, 4
      %v2201 = vshll.u32 %v1976, 16
      %v2203 = vrot.slane %v2201, 5
      %v2204 = vsel %vm904, %v2199, %v2203
      %v2205 = vshrl.u32 %v1976, 16
      %v2207 = vrot.slane %v2205, 4
      %v2208 = vor.u32 %v2207, %v2203
      %v2209 = vrot.slane %v2208, 4
      %v2211 = vshll.u32 %v1977, 16
      %v2213 = vrot.slane %v2211, 5
      %v2214 = vsel %vm904, %v2209, %v2213
      %v2216 = vshrl.u32 %v1978, 16
      %v2218 = vrot.slane %v2216, 4
      %v2219 = vshll.u32 %v1978, 16
      %v2221 = vrot.slane %v2219, 5
      %v2222 = vor.u32 %v2218, %v2221
      %v2223 = vrot.slane %v2222, 4
      %v2225 = vshll.u32 %v1979, 16
      %v2227 = vrot.slane %v2225, 5
      %v2228 = vsel %vm904, %v2223, %v2227
      %v2229 = vshrl.u32 %v1979, 16
      %v2231 = vrot.slane %v2229, 4
      %v2232 = vor.u32 %v2231, %v2227
      %v2233 = vrot.slane %v2232, 4
      %v2235 = vshll.u32 %v1980, 16
      %v2237 = vrot.slane %v2235, 5
      %v2238 = vsel %vm904, %v2233, %v2237
      %v2240 = vshrl.u32 %v1981, 16
      %v2242 = vrot.slane %v2240, 4
      %v2243 = vshll.u32 %v1981, 16
      %v2245 = vrot.slane %v2243, 5
      %v2246 = vor.u32 %v2242, %v2245
      %v2247 = vrot.slane %v2246, 4
      %v2249 = vshll.u32 %v1982, 16
      %v2251 = vrot.slane %v2249, 5
      %v2252 = vsel %vm904, %v2247, %v2251
      %v2253 = vshrl.u32 %v1982, 16
      %v2255 = vrot.slane %v2253, 4
      %v2256 = vor.u32 %v2255, %v2251
      %v2257 = vrot.slane %v2256, 4
      %v2259 = vshll.u32 %v1983, 16
      %v2261 = vrot.slane %v2259, 5
      %v2262 = vsel %vm904, %v2257, %v2261
      %v2264 = vshrl.u32 %v1984, 16
      %v2266 = vrot.slane %v2264, 4
      %v2267 = vshll.u32 %v1984, 16
      %v2269 = vrot.slane %v2267, 5
      %v2270 = vor.u32 %v2266, %v2269
      %v2271 = vrot.slane %v2270, 4
      %v2273 = vshll.u32 %v1985, 16
      %v2275 = vrot.slane %v2273, 5
      %v2276 = vsel %vm904, %v2271, %v2275
      %v2277 = vshrl.u32 %v1985, 16
      %v2279 = vrot.slane %v2277, 4
      %v2280 = vor.u32 %v2279, %v2275
      %v2281 = vrot.slane %v2280, 4
      %v2283 = vshll.u32 %v1986, 16
      %v2285 = vrot.slane %v2283, 5
      %v2286 = vsel %vm904, %v2281, %v2285
      %v2288 = vshrl.u32 %v1987, 16
      %v2290 = vrot.slane %v2288, 4
      %v2291 = vshll.u32 %v1987, 16
      %v2293 = vrot.slane %v2291, 5
      %v2294 = vor.u32 %v2290, %v2293
      %v2295 = vrot.slane %v2294, 4
      %v2297 = vshll.u32 %v1988, 16
      %v2299 = vrot.slane %v2297, 5
      %v2300 = vsel %vm904, %v2295, %v2299
      %v2301 = vshrl.u32 %v1988, 16
      %v2303 = vrot.slane %v2301, 4
      %v2304 = vor.u32 %v2303, %v2299
      %v2305 = vrot.slane %v2304, 4
      %v2307 = vshll.u32 %v1989, 16
      %v2309 = vrot.slane %v2307, 5
      %v2310 = vsel %vm904, %v2305, %v2309
      %v2312 = vshrl.u32 %v1990, 16
      %v2314 = vrot.slane %v2312, 4
      %v2315 = vshll.u32 %v1990, 16
      %v2317 = vrot.slane %v2315, 5
      %v2318 = vor.u32 %v2314, %v2317
      %v2319 = vrot.slane %v2318, 4
      %v2321 = vshll.u32 %v1991, 16
      %v2323 = vrot.slane %v2321, 5
      %v2324 = vsel %vm904, %v2319, %v2323
      %v2325 = vshrl.u32 %v1991, 16
      %v2327 = vrot.slane %v2325, 4
      %v2328 = vor.u32 %v2327, %v2323
      %v2329 = vrot.slane %v2328, 4
      %v2331 = vshll.u32 %v1992, 16
      %v2333 = vrot.slane %v2331, 5
      %v2334 = vsel %vm904, %v2329, %v2333
      %v2336 = vshrl.u32 %v1993, 16
      %v2338 = vrot.slane %v2336, 4
      %v2339 = vshll.u32 %v1993, 16
      %v2341 = vrot.slane %v2339, 5
      %v2342 = vor.u32 %v2338, %v2341
      %v2343 = vrot.slane %v2342, 4
      %v2345 = vshll.u32 %v1994, 16
      %v2347 = vrot.slane %v2345, 5
      %v2348 = vsel %vm904, %v2343, %v2347
      %v2349 = vshrl.u32 %v1994, 16
      %v2351 = vrot.slane %v2349, 4
      %v2352 = vor.u32 %v2351, %v2347
      %v2353 = vrot.slane %v2352, 4
      %v2355 = vshll.u32 %v1995, 16
      %v2357 = vrot.slane %v2355, 5
      %v2358 = vsel %vm904, %v2353, %v2357
      %v2360 = vshrl.u32 %v1996, 16
      %v2362 = vrot.slane %v2360, 4
      %v2363 = vshll.u32 %v1996, 16
      %v2365 = vrot.slane %v2363, 5
      %v2366 = vor.u32 %v2362, %v2365
      %v2367 = vrot.slane %v2366, 4
      %v2369 = vshll.u32 %v1997, 16
      %v2371 = vrot.slane %v2369, 5
      %v2372 = vsel %vm904, %v2367, %v2371
      %v2373 = vshrl.u32 %v1997, 16
      %v2375 = vrot.slane %v2373, 4
      %v2376 = vor.u32 %v2375, %v2371
      %v2377 = vrot.slane %v2376, 4
      %v2379 = vshll.u32 %v1998, 16
      %v2381 = vrot.slane %v2379, 5
      %v2382 = vsel %vm904, %v2377, %v2381
      %2383 = vrot.lane.b32.xlu0 %v2012, 16
      %v2384 = vpop.permute.xlu0 %2383
      %2385 = vrot.lane.b32.xlu0 %v2022, 16
      %v2386 = vpop.permute.xlu0 %2385
      %2387 = vrot.lane.b32.xlu0 %v2036, 16
      %v2388 = vpop.permute.xlu0 %2387
      %2389 = vrot.lane.b32.xlu0 %v2046, 16
      %v2390 = vpop.permute.xlu0 %2389
      %2391 = vrot.lane.b32.xlu0 %v2060, 16
      %v2392 = vpop.permute.xlu0 %2391
      %2393 = vrot.lane.b32.xlu0 %v2070, 16
      %v2394 = vpop.permute.xlu0 %2393
      %2395 = vrot.lane.b32.xlu0 %v2084, 16
      %v2396 = vpop.permute.xlu0 %2395
      %2397 = vrot.lane.b32.xlu0 %v2094, 16
      %v2398 = vpop.permute.xlu0 %2397
      %2399 = vrot.lane.b32.xlu0 %v2108, 16
      %v2400 = vpop.permute.xlu0 %2399
      %2401 = vrot.lane.b32.xlu0 %v2118, 16
      %v2402 = vpop.permute.xlu0 %2401
      %2403 = vrot.lane.b32.xlu0 %v2132, 16
      %v2404 = vpop.permute.xlu0 %2403
      %2405 = vrot.lane.b32.xlu0 %v2142, 16
      %v2406 = vpop.permute.xlu0 %2405
      %2407 = vrot.lane.b32.xlu0 %v2156, 16
      %v2408 = vpop.permute.xlu0 %2407
      %2409 = vrot.lane.b32.xlu0 %v2166, 16
      %v2410 = vpop.permute.xlu0 %2409
      %2411 = vrot.lane.b32.xlu0 %v2180, 16
      %v2412 = vpop.permute.xlu0 %2411
      %2413 = vrot.lane.b32.xlu0 %v2190, 16
      %v2414 = vpop.permute.xlu0 %2413
      %2415 = vrot.lane.b32.xlu0 %v2204, 16
      %v2416 = vpop.permute.xlu0 %2415
      %2417 = vrot.lane.b32.xlu0 %v2214, 16
      %v2418 = vpop.permute.xlu0 %2417
      %2419 = vrot.lane.b32.xlu0 %v2228, 16
      %v2420 = vpop.permute.xlu0 %2419
      %2421 = vrot.lane.b32.xlu0 %v2238, 16
      %v2422 = vpop.permute.xlu0 %2421
      %2423 = vrot.lane.b32.xlu0 %v2252, 16
      %v2424 = vpop.permute.xlu0 %2423
      %2425 = vrot.lane.b32.xlu0 %v2262, 16
      %v2426 = vpop.permute.xlu0 %2425
      %2427 = vrot.lane.b32.xlu0 %v2276, 16
      %v2428 = vpop.permute.xlu0 %2427
      %2429 = vrot.lane.b32.xlu0 %v2286, 16
      %v2430 = vpop.permute.xlu0 %2429
      %2431 = vrot.lane.b32.xlu0 %v2300, 16
      %v2432 = vpop.permute.xlu0 %2431
      %2433 = vrot.lane.b32.xlu0 %v2310, 16
      %v2434 = vpop.permute.xlu0 %2433
      %2435 = vrot.lane.b32.xlu0 %v2324, 16
      %v2436 = vpop.permute.xlu0 %2435
      %2437 = vrot.lane.b32.xlu0 %v2334, 16
      %v2438 = vpop.permute.xlu0 %2437
      %2439 = vrot.lane.b32.xlu0 %v2348, 16
      %v2440 = vpop.permute.xlu0 %2439
      %2441 = vrot.lane.b32.xlu0 %v2358, 16
      %v2442 = vpop.permute.xlu0 %2441
      %2443 = vrot.lane.b32.xlu0 %v2372, 16
      %v2444 = vpop.permute.xlu0 %2443
      %2445 = vrot.lane.b32.xlu0 %v2382, 16
      %v2446 = vpop.permute.xlu0 %2445
      %vm2479 = vcmask 158848
      %2480 = vst.msk [vmem:[#allocation3] sm:$0xf] %vm2479, %v2384
      %2481 = vst.msk [vmem:[#allocation3 + $0x4] sm:$0xf] %vm2479, %v2386
      %2482 = vst.msk [vmem:[#allocation3 + $0x8] sm:$0xf] %vm2479, %v2388
      %2483 = vst.msk [vmem:[#allocation3 + $0xc] sm:$0xf] %vm2479, %v2390
      %2484 = vst.msk [vmem:[#allocation3 + $0x10] sm:$0xf] %vm2479, %v2392
      %2485 = vst.msk [vmem:[#allocation3 + $0x14] sm:$0xf] %vm2479, %v2394
      %2486 = vst.msk [vmem:[#allocation3 + $0x18] sm:$0xf] %vm2479, %v2396
      %2487 = vst.msk [vmem:[#allocation3 + $0x1c] sm:$0xf] %vm2479, %v2398
      %2488 = vst.msk [vmem:[#allocation3 + $0x20] sm:$0xf] %vm2479, %v2400
      %2489 = vst.msk [vmem:[#allocation3 + $0x24] sm:$0xf] %vm2479, %v2402
      %2490 = vst.msk [vmem:[#allocation3 + $0x28] sm:$0xf] %vm2479, %v2404
      %2491 = vst.msk [vmem:[#allocation3 + $0x2c] sm:$0xf] %vm2479, %v2406
      %2492 = vst.msk [vmem:[#allocation3 + $0x30] sm:$0xf] %vm2479, %v2408
      %2493 = vst.msk [vmem:[#allocation3 + $0x34] sm:$0xf] %vm2479, %v2410
      %2494 = vst.msk [vmem:[#allocation3 + $0x38] sm:$0xf] %vm2479, %v2412
      %2495 = vst.msk [vmem:[#allocation3 + $0x3c] sm:$0xf] %vm2479, %v2414
      %2496 = vst.msk [vmem:[#allocation3 + $0x40] sm:$0xf] %vm2479, %v2416
      %2497 = vst.msk [vmem:[#allocation3 + $0x44] sm:$0xf] %vm2479, %v2418
      %2498 = vst.msk [vmem:[#allocation3 + $0x48] sm:$0xf] %vm2479, %v2420
      %2499 = vst.msk [vmem:[#allocation3 + $0x4c] sm:$0xf] %vm2479, %v2422
      %2500 = vst.msk [vmem:[#allocation3 + $0x50] sm:$0xf] %vm2479, %v2424
      %2501 = vst.msk [vmem:[#allocation3 + $0x54] sm:$0xf] %vm2479, %v2426
      %2502 = vst.msk [vmem:[#allocation3 + $0x58] sm:$0xf] %vm2479, %v2428
      %2503 = vst.msk [vmem:[#allocation3 + $0x5c] sm:$0xf] %vm2479, %v2430
      %2504 = vst.msk [vmem:[#allocation3 + $0x60] sm:$0xf] %vm2479, %v2432
      %2505 = vst.msk [vmem:[#allocation3 + $0x64] sm:$0xf] %vm2479, %v2434
      %2506 = vst.msk [vmem:[#allocation3 + $0x68] sm:$0xf] %vm2479, %v2436
      %2507 = vst.msk [vmem:[#allocation3 + $0x6c] sm:$0xf] %vm2479, %v2438
      %2508 = vst.msk [vmem:[#allocation3 + $0x70] sm:$0xf] %vm2479, %v2440
      %2509 = vst.msk [vmem:[#allocation3 + $0x74] sm:$0xf] %vm2479, %v2442
      %2510 = vst.msk [vmem:[#allocation3 + $0x78] sm:$0xf] %vm2479, %v2444
      %2511 = vst.msk [vmem:[#allocation3 + $0x7c] sm:$0xf] %vm2479, %v2446
      %v2512 = vld [vmem:[%s675] sm:$0xe]
      %v2513 = vld [vmem:[%s675 + $0x4] sm:$0xf]
      %v2514 = vld [vmem:[%s675 + $0x8] sm:$0x1]
      %v2515 = vld [vmem:[%s675 + $0xc] sm:$0xe]
      %v2516 = vld [vmem:[%s675 + $0x10] sm:$0xf]
      %v2517 = vld [vmem:[%s675 + $0x14] sm:$0x1]
      %v2518 = vld [vmem:[%s675 + $0x18] sm:$0xe]
      %v2519 = vld [vmem:[%s675 + $0x1c] sm:$0xf]
      %v2520 = vld [vmem:[%s675 + $0x20] sm:$0x1]
      %v2521 = vld [vmem:[%s675 + $0x24] sm:$0xe]
      %v2522 = vld [vmem:[%s675 + $0x28] sm:$0xf]
      %v2523 = vld [vmem:[%s675 + $0x2c] sm:$0x1]
      %v2524 = vld [vmem:[%s675 + $0x30] sm:$0xe]
      %v2525 = vld [vmem:[%s675 + $0x34] sm:$0xf]
      %v2526 = vld [vmem:[%s675 + $0x38] sm:$0x1]
      %v2527 = vld [vmem:[%s675 + $0x3c] sm:$0xe]
      %v2528 = vld [vmem:[%s675 + $0x40] sm:$0xf]
      %v2529 = vld [vmem:[%s675 + $0x44] sm:$0x1]
      %v2530 = vld [vmem:[%s675 + $0x48] sm:$0xe]
      %v2531 = vld [vmem:[%s675 + $0x4c] sm:$0xf]
      %v2532 = vld [vmem:[%s675 + $0x50] sm:$0x1]
      %v2533 = vld [vmem:[%s675 + $0x54] sm:$0xe]
      %v2534 = vld [vmem:[%s675 + $0x58] sm:$0xf]
      %v2535 = vld [vmem:[%s675 + $0x5c] sm:$0x1]
      %v2536 = vld [vmem:[%s675 + $0x60] sm:$0xe]
      %v2537 = vld [vmem:[%s675 + $0x64] sm:$0xf]
      %v2538 = vld [vmem:[%s675 + $0x68] sm:$0x1]
      %v2539 = vld [vmem:[%s675 + $0x6c] sm:$0xe]
      %v2540 = vld [vmem:[%s675 + $0x70] sm:$0xf]
      %v2541 = vld [vmem:[%s675 + $0x74] sm:$0x1]
      %v2542 = vld [vmem:[%s675 + $0x78] sm:$0xe]
      %v2543 = vld [vmem:[%s675 + $0x7c] sm:$0xf]
      %v2544 = vld [vmem:[%s675 + $0x80] sm:$0x1]
      %v2545 = vld [vmem:[%s675 + $0x84] sm:$0xe]
      %v2546 = vld [vmem:[%s675 + $0x88] sm:$0xf]
      %v2547 = vld [vmem:[%s675 + $0x8c] sm:$0x1]
      %v2548 = vld [vmem:[%s675 + $0x90] sm:$0xe]
      %v2549 = vld [vmem:[%s675 + $0x94] sm:$0xf]
      %v2550 = vld [vmem:[%s675 + $0x98] sm:$0x1]
      %v2551 = vld [vmem:[%s675 + $0x9c] sm:$0xe]
      %v2552 = vld [vmem:[%s675 + $0xa0] sm:$0xf]
      %v2553 = vld [vmem:[%s675 + $0xa4] sm:$0x1]
      %v2554 = vld [vmem:[%s675 + $0xa8] sm:$0xe]
      %v2555 = vld [vmem:[%s675 + $0xac] sm:$0xf]
      %v2556 = vld [vmem:[%s675 + $0xb0] sm:$0x1]
      %v2557 = vld [vmem:[%s675 + $0xb4] sm:$0xe]
      %v2558 = vld [vmem:[%s675 + $0xb8] sm:$0xf]
      %v2559 = vld [vmem:[%s675 + $0xbc] sm:$0x1]
      %v2608 = vrot.slane %v2512, 5
      %v2609 = vrot.slane %v2608, 4
      %v2610 = vrot.slane %v2513, 5
      %v2611 = vsel %vm1516, %v2609, %v2610
      %v2612 = vrot.slane %v2610, 4
      %v2613 = vrot.slane %v2514, 5
      %v2614 = vsel %vm1516, %v2612, %v2613
      %v2615 = vrot.slane %v2515, 5
      %v2616 = vrot.slane %v2615, 4
      %v2617 = vrot.slane %v2516, 5
      %v2618 = vsel %vm1516, %v2616, %v2617
      %v2619 = vrot.slane %v2617, 4
      %v2620 = vrot.slane %v2517, 5
      %v2621 = vsel %vm1516, %v2619, %v2620
      %v2622 = vrot.slane %v2518, 5
      %v2623 = vrot.slane %v2622, 4
      %v2624 = vrot.slane %v2519, 5
      %v2625 = vsel %vm1516, %v2623, %v2624
      %v2626 = vrot.slane %v2624, 4
      %v2627 = vrot.slane %v2520, 5
      %v2628 = vsel %vm1516, %v2626, %v2627
      %v2629 = vrot.slane %v2521, 5
      %v2630 = vrot.slane %v2629, 4
      %v2631 = vrot.slane %v2522, 5
      %v2632 = vsel %vm1516, %v2630, %v2631
      %v2633 = vrot.slane %v2631, 4
      %v2634 = vrot.slane %v2523, 5
      %v2635 = vsel %vm1516, %v2633, %v2634
      %v2636 = vrot.slane %v2524, 5
      %v2637 = vrot.slane %v2636, 4
      %v2638 = vrot.slane %v2525, 5
      %v2639 = vsel %vm1516, %v2637, %v2638
      %v2640 = vrot.slane %v2638, 4
      %v2641 = vrot.slane %v2526, 5
      %v2642 = vsel %vm1516, %v2640, %v2641
      %v2643 = vrot.slane %v2527, 5
      %v2644 = vrot.slane %v2643, 4
      %v2645 = vrot.slane %v2528, 5
      %v2646 = vsel %vm1516, %v2644, %v2645
      %v2647 = vrot.slane %v2645, 4
      %v2648 = vrot.slane %v2529, 5
      %v2649 = vsel %vm1516, %v2647, %v2648
      %v2650 = vrot.slane %v2530, 5
      %v2651 = vrot.slane %v2650, 4
      %v2652 = vrot.slane %v2531, 5
      %v2653 = vsel %vm1516, %v2651, %v2652
      %v2654 = vrot.slane %v2652, 4
      %v2655 = vrot.slane %v2532, 5
      %v2656 = vsel %vm1516, %v2654, %v2655
      %v2657 = vrot.slane %v2533, 5
      %v2658 = vrot.slane %v2657, 4
      %v2659 = vrot.slane %v2534, 5
      %v2660 = vsel %vm1516, %v2658, %v2659
      %v2661 = vrot.slane %v2659, 4
      %v2662 = vrot.slane %v2535, 5
      %v2663 = vsel %vm1516, %v2661, %v2662
      %v2664 = vrot.slane %v2536, 5
      %v2665 = vrot.slane %v2664, 4
      %v2666 = vrot.slane %v2537, 5
      %v2667 = vsel %vm1516, %v2665, %v2666
      %v2668 = vrot.slane %v2666, 4
      %v2669 = vrot.slane %v2538, 5
      %v2670 = vsel %vm1516, %v2668, %v2669
      %v2671 = vrot.slane %v2539, 5
      %v2672 = vrot.slane %v2671, 4
      %v2673 = vrot.slane %v2540, 5
      %v2674 = vsel %vm1516, %v2672, %v2673
      %v2675 = vrot.slane %v2673, 4
      %v2676 = vrot.slane %v2541, 5
      %v2677 = vsel %vm1516, %v2675, %v2676
      %v2678 = vrot.slane %v2542, 5
      %v2679 = vrot.slane %v2678, 4
      %v2680 = vrot.slane %v2543, 5
      %v2681 = vsel %vm1516, %v2679, %v2680
      %v2682 = vrot.slane %v2680, 4
      %v2683 = vrot.slane %v2544, 5
      %v2684 = vsel %vm1516, %v2682, %v2683
      %v2685 = vrot.slane %v2545, 5
      %v2686 = vrot.slane %v2685, 4
      %v2687 = vrot.slane %v2546, 5
      %v2688 = vsel %vm1516, %v2686, %v2687
      %v2689 = vrot.slane %v2687, 4
      %v2690 = vrot.slane %v2547, 5
      %v2691 = vsel %vm1516, %v2689, %v2690
      %v2692 = vrot.slane %v2548, 5
      %v2693 = vrot.slane %v2692, 4
      %v2694 = vrot.slane %v2549, 5
      %v2695 = vsel %vm1516, %v2693, %v2694
      %v2696 = vrot.slane %v2694, 4
      %v2697 = vrot.slane %v2550, 5
      %v2698 = vsel %vm1516, %v2696, %v2697
      %v2699 = vrot.slane %v2551, 5
      %v2700 = vrot.slane %v2699, 4
      %v2701 = vrot.slane %v2552, 5
      %v2702 = vsel %vm1516, %v2700, %v2701
      %v2703 = vrot.slane %v2701, 4
      %v2704 = vrot.slane %v2553, 5
      %v2705 = vsel %vm1516, %v2703, %v2704
      %v2706 = vrot.slane %v2554, 5
      %v2707 = vrot.slane %v2706, 4
      %v2708 = vrot.slane %v2555, 5
      %v2709 = vsel %vm1516, %v2707, %v2708
      %v2710 = vrot.slane %v2708, 4
      %v2711 = vrot.slane %v2556, 5
      %v2712 = vsel %vm1516, %v2710, %v2711
      %v2713 = vrot.slane %v2557, 5
      %v2714 = vrot.slane %v2713, 4
      %v2715 = vrot.slane %v2558, 5
      %v2716 = vsel %vm1516, %v2714, %v2715
      %v2717 = vrot.slane %v2715, 4
      %v2718 = vrot.slane %v2559, 5
      %v2719 = vsel %vm1516, %v2717, %v2718
      %2720 = vrot.lane.b32.xlu0 %v2611, 20
      %v2721 = vpop.permute.xlu0 %2720
      %2722 = vrot.lane.b32.xlu0 %v2614, 20
      %v2723 = vpop.permute.xlu0 %2722
      %2724 = vrot.lane.b32.xlu0 %v2618, 20
      %v2725 = vpop.permute.xlu0 %2724
      %2726 = vrot.lane.b32.xlu0 %v2621, 20
      %v2727 = vpop.permute.xlu0 %2726
      %2728 = vrot.lane.b32.xlu0 %v2625, 20
      %v2729 = vpop.permute.xlu0 %2728
      %2730 = vrot.lane.b32.xlu0 %v2628, 20
      %v2731 = vpop.permute.xlu0 %2730
      %2732 = vrot.lane.b32.xlu0 %v2632, 20
      %v2733 = vpop.permute.xlu0 %2732
      %2734 = vrot.lane.b32.xlu0 %v2635, 20
      %v2735 = vpop.permute.xlu0 %2734
      %2736 = vrot.lane.b32.xlu0 %v2639, 20
      %v2737 = vpop.permute.xlu0 %2736
      %2738 = vrot.lane.b32.xlu0 %v2642, 20
      %v2739 = vpop.permute.xlu0 %2738
      %2740 = vrot.lane.b32.xlu0 %v2646, 20
      %v2741 = vpop.permute.xlu0 %2740
      %2742 = vrot.lane.b32.xlu0 %v2649, 20
      %v2743 = vpop.permute.xlu0 %2742
      %2744 = vrot.lane.b32.xlu0 %v2653, 20
      %v2745 = vpop.permute.xlu0 %2744
      %2746 = vrot.lane.b32.xlu0 %v2656, 20
      %v2747 = vpop.permute.xlu0 %2746
      %2748 = vrot.lane.b32.xlu0 %v2660, 20
      %v2749 = vpop.permute.xlu0 %2748
      %2750 = vrot.lane.b32.xlu0 %v2663, 20
      %v2751 = vpop.permute.xlu0 %2750
      %2752 = vrot.lane.b32.xlu0 %v2667, 20
      %v2753 = vpop.permute.xlu0 %2752
      %2754 = vrot.lane.b32.xlu0 %v2670, 20
      %v2755 = vpop.permute.xlu0 %2754
      %2756 = vrot.lane.b32.xlu0 %v2674, 20
      %v2757 = vpop.permute.xlu0 %2756
      %2758 = vrot.lane.b32.xlu0 %v2677, 20
      %v2759 = vpop.permute.xlu0 %2758
      %2760 = vrot.lane.b32.xlu0 %v2681, 20
      %v2761 = vpop.permute.xlu0 %2760
      %2762 = vrot.lane.b32.xlu0 %v2684, 20
      %v2763 = vpop.permute.xlu0 %2762
      %2764 = vrot.lane.b32.xlu0 %v2688, 20
      %v2765 = vpop.permute.xlu0 %2764
      %2766 = vrot.lane.b32.xlu0 %v2691, 20
      %v2767 = vpop.permute.xlu0 %2766
      %2768 = vrot.lane.b32.xlu0 %v2695, 20
      %v2769 = vpop.permute.xlu0 %2768
      %2770 = vrot.lane.b32.xlu0 %v2698, 20
      %v2771 = vpop.permute.xlu0 %2770
      %2772 = vrot.lane.b32.xlu0 %v2702, 20
      %v2773 = vpop.permute.xlu0 %2772
      %2774 = vrot.lane.b32.xlu0 %v2705, 20
      %v2775 = vpop.permute.xlu0 %2774
      %2776 = vrot.lane.b32.xlu0 %v2709, 20
      %v2777 = vpop.permute.xlu0 %2776
      %2778 = vrot.lane.b32.xlu0 %v2712, 20
      %v2779 = vpop.permute.xlu0 %2778
      %2780 = vrot.lane.b32.xlu0 %v2716, 20
      %v2781 = vpop.permute.xlu0 %2780
      %2782 = vrot.lane.b32.xlu0 %v2719, 20
      %v2783 = vpop.permute.xlu0 %2782
      %vm2816 = vcmask 191648
      %2817 = vst.msk [vmem:[#allocation3] sm:$0xf] %vm2816, %v2721
      %2818 = vst.msk [vmem:[#allocation3 + $0x4] sm:$0xf] %vm2816, %v2723
      %2819 = vst.msk [vmem:[#allocation3 + $0x8] sm:$0xf] %vm2816, %v2725
      %2820 = vst.msk [vmem:[#allocation3 + $0xc] sm:$0xf] %vm2816, %v2727
      %2821 = vst.msk [vmem:[#allocation3 + $0x10] sm:$0xf] %vm2816, %v2729
      %2822 = vst.msk [vmem:[#allocation3 + $0x14] sm:$0xf] %vm2816, %v2731
      %2823 = vst.msk [vmem:[#allocation3 + $0x18] sm:$0xf] %vm2816, %v2733
      %2824 = vst.msk [vmem:[#allocation3 + $0x1c] sm:$0xf] %vm2816, %v2735
      %2825 = vst.msk [vmem:[#allocation3 + $0x20] sm:$0xf] %vm2816, %v2737
      %2826 = vst.msk [vmem:[#allocation3 + $0x24] sm:$0xf] %vm2816, %v2739
      %2827 = vst.msk [vmem:[#allocation3 + $0x28] sm:$0xf] %vm2816, %v2741
      %2828 = vst.msk [vmem:[#allocation3 + $0x2c] sm:$0xf] %vm2816, %v2743
      %2829 = vst.msk [vmem:[#allocation3 + $0x30] sm:$0xf] %vm2816, %v2745
      %2830 = vst.msk [vmem:[#allocation3 + $0x34] sm:$0xf] %vm2816, %v2747
      %2831 = vst.msk [vmem:[#allocation3 + $0x38] sm:$0xf] %vm2816, %v2749
      %2832 = vst.msk [vmem:[#allocation3 + $0x3c] sm:$0xf] %vm2816, %v2751
      %2833 = vst.msk [vmem:[#allocation3 + $0x40] sm:$0xf] %vm2816, %v2753
      %2834 = vst.msk [vmem:[#allocation3 + $0x44] sm:$0xf] %vm2816, %v2755
      %2835 = vst.msk [vmem:[#allocation3 + $0x48] sm:$0xf] %vm2816, %v2757
      %2836 = vst.msk [vmem:[#allocation3 + $0x4c] sm:$0xf] %vm2816, %v2759
      %2837 = vst.msk [vmem:[#allocation3 + $0x50] sm:$0xf] %vm2816, %v2761
      %2838 = vst.msk [vmem:[#allocation3 + $0x54] sm:$0xf] %vm2816, %v2763
      %2839 = vst.msk [vmem:[#allocation3 + $0x58] sm:$0xf] %vm2816, %v2765
      %2840 = vst.msk [vmem:[#allocation3 + $0x5c] sm:$0xf] %vm2816, %v2767
      %2841 = vst.msk [vmem:[#allocation3 + $0x60] sm:$0xf] %vm2816, %v2769
      %2842 = vst.msk [vmem:[#allocation3 + $0x64] sm:$0xf] %vm2816, %v2771
      %2843 = vst.msk [vmem:[#allocation3 + $0x68] sm:$0xf] %vm2816, %v2773
      %2844 = vst.msk [vmem:[#allocation3 + $0x6c] sm:$0xf] %vm2816, %v2775
      %2845 = vst.msk [vmem:[#allocation3 + $0x70] sm:$0xf] %vm2816, %v2777
      %2846 = vst.msk [vmem:[#allocation3 + $0x74] sm:$0xf] %vm2816, %v2779
      %2847 = vst.msk [vmem:[#allocation3 + $0x78] sm:$0xf] %vm2816, %v2781
      %2848 = vst.msk [vmem:[#allocation3 + $0x7c] sm:$0xf] %vm2816, %v2783
      %s2849 = scalar_lea.vmem [#allocation2], 24
      %v2850 = vld [vmem:[%s2849] sm:$0xf]
      %v2851 = vld [vmem:[%s2849 + $0x4] sm:$0xf]
      %v2852 = vld [vmem:[%s2849 + $0xc] sm:$0xf]
      %v2853 = vld [vmem:[%s2849 + $0x10] sm:$0xf]
      %v2854 = vld [vmem:[%s2849 + $0x18] sm:$0xf]
      %v2855 = vld [vmem:[%s2849 + $0x1c] sm:$0xf]
      %v2856 = vld [vmem:[%s2849 + $0x24] sm:$0xf]
      %v2857 = vld [vmem:[%s2849 + $0x28] sm:$0xf]
      %v2858 = vld [vmem:[%s2849 + $0x30] sm:$0xf]
      %v2859 = vld [vmem:[%s2849 + $0x34] sm:$0xf]
      %v2860 = vld [vmem:[%s2849 + $0x3c] sm:$0xf]
      %v2861 = vld [vmem:[%s2849 + $0x40] sm:$0xf]
      %v2862 = vld [vmem:[%s2849 + $0x48] sm:$0xf]
      %v2863 = vld [vmem:[%s2849 + $0x4c] sm:$0xf]
      %v2864 = vld [vmem:[%s2849 + $0x54] sm:$0xf]
      %v2865 = vld [vmem:[%s2849 + $0x58] sm:$0xf]
      %v2866 = vld [vmem:[%s2849 + $0x60] sm:$0xf]
      %v2867 = vld [vmem:[%s2849 + $0x64] sm:$0xf]
      %v2868 = vld [vmem:[%s2849 + $0x6c] sm:$0xf]
      %v2869 = vld [vmem:[%s2849 + $0x70] sm:$0xf]
      %v2870 = vld [vmem:[%s2849 + $0x78] sm:$0xf]
      %v2871 = vld [vmem:[%s2849 + $0x7c] sm:$0xf]
      %v2872 = vld [vmem:[%s2849 + $0x84] sm:$0xf]
      %v2873 = vld [vmem:[%s2849 + $0x88] sm:$0xf]
      %v2874 = vld [vmem:[%s2849 + $0x90] sm:$0xf]
      %v2875 = vld [vmem:[%s2849 + $0x94] sm:$0xf]
      %v2876 = vld [vmem:[%s2849 + $0x9c] sm:$0xf]
      %v2877 = vld [vmem:[%s2849 + $0xa0] sm:$0xf]
      %v2878 = vld [vmem:[%s2849 + $0xa8] sm:$0xf]
      %v2879 = vld [vmem:[%s2849 + $0xac] sm:$0xf]
      %v2880 = vld [vmem:[%s2849 + $0xb4] sm:$0xf]
      %v2881 = vld [vmem:[%s2849 + $0xb8] sm:$0xf]
      %2914 = vrot.lane.b32.xlu0 %v2850, 24
      %v2915 = vpop.permute.xlu0 %2914
      %2916 = vrot.lane.b32.xlu0 %v2851, 24
      %v2917 = vpop.permute.xlu0 %2916
      %2918 = vrot.lane.b32.xlu0 %v2852, 24
      %v2919 = vpop.permute.xlu0 %2918
      %2920 = vrot.lane.b32.xlu0 %v2853, 24
      %v2921 = vpop.permute.xlu0 %2920
      %2922 = vrot.lane.b32.xlu0 %v2854, 24
      %v2923 = vpop.permute.xlu0 %2922
      %2924 = vrot.lane.b32.xlu0 %v2855, 24
      %v2925 = vpop.permute.xlu0 %2924
      %2926 = vrot.lane.b32.xlu0 %v2856, 24
      %v2927 = vpop.permute.xlu0 %2926
      %2928 = vrot.lane.b32.xlu0 %v2857, 24
      %v2929 = vpop.permute.xlu0 %2928
      %2930 = vrot.lane.b32.xlu0 %v2858, 24
      %v2931 = vpop.permute.xlu0 %2930
      %2932 = vrot.lane.b32.xlu0 %v2859, 24
      %v2933 = vpop.permute.xlu0 %2932
      %2934 = vrot.lane.b32.xlu0 %v2860, 24
      %v2935 = vpop.permute.xlu0 %2934
      %2936 = vrot.lane.b32.xlu0 %v2861, 24
      %v2937 = vpop.permute.xlu0 %2936
      %2938 = vrot.lane.b32.xlu0 %v2862, 24
      %v2939 = vpop.permute.xlu0 %2938
      %2940 = vrot.lane.b32.xlu0 %v2863, 24
      %v2941 = vpop.permute.xlu0 %2940
      %2942 = vrot.lane.b32.xlu0 %v2864, 24
      %v2943 = vpop.permute.xlu0 %2942
      %2944 = vrot.lane.b32.xlu0 %v2865, 24
      %v2945 = vpop.permute.xlu0 %2944
      %2946 = vrot.lane.b32.xlu0 %v2866, 24
      %v2947 = vpop.permute.xlu0 %2946
      %2948 = vrot.lane.b32.xlu0 %v2867, 24
      %v2949 = vpop.permute.xlu0 %2948
      %2950 = vrot.lane.b32.xlu0 %v2868, 24
      %v2951 = vpop.permute.xlu0 %2950
      %2952 = vrot.lane.b32.xlu0 %v2869, 24
      %v2953 = vpop.permute.xlu0 %2952
      %2954 = vrot.lane.b32.xlu0 %v2870, 24
      %v2955 = vpop.permute.xlu0 %2954
      %2956 = vrot.lane.b32.xlu0 %v2871, 24
      %v2957 = vpop.permute.xlu0 %2956
      %2958 = vrot.lane.b32.xlu0 %v2872, 24
      %v2959 = vpop.permute.xlu0 %2958
      %2960 = vrot.lane.b32.xlu0 %v2873, 24
      %v2961 = vpop.permute.xlu0 %2960
      %2962 = vrot.lane.b32.xlu0 %v2874, 24
      %v2963 = vpop.permute.xlu0 %2962
      %2964 = vrot.lane.b32.xlu0 %v2875, 24
      %v2965 = vpop.permute.xlu0 %2964
      %2966 = vrot.lane.b32.xlu0 %v2876, 24
      %v2967 = vpop.permute.xlu0 %2966
      %2968 = vrot.lane.b32.xlu0 %v2877, 24
      %v2969 = vpop.permute.xlu0 %2968
      %2970 = vrot.lane.b32.xlu0 %v2878, 24
      %v2971 = vpop.permute.xlu0 %2970
      %2972 = vrot.lane.b32.xlu0 %v2879, 24
      %v2973 = vpop.permute.xlu0 %2972
      %2974 = vrot.lane.b32.xlu0 %v2880, 24
      %v2975 = vpop.permute.xlu0 %2974
      %2976 = vrot.lane.b32.xlu0 %v2881, 24
      %v2977 = vpop.permute.xlu0 %2976
      %vm3010 = vcmask 224448
      %3011 = vst.msk [vmem:[#allocation3] sm:$0xf] %vm3010, %v2915
      %3012 = vst.msk [vmem:[#allocation3 + $0x4] sm:$0xf] %vm3010, %v2917
      %3013 = vst.msk [vmem:[#allocation3 + $0x8] sm:$0xf] %vm3010, %v2919
      %3014 = vst.msk [vmem:[#allocation3 + $0xc] sm:$0xf] %vm3010, %v2921
      %3015 = vst.msk [vmem:[#allocation3 + $0x10] sm:$0xf] %vm3010, %v2923
      %3016 = vst.msk [vmem:[#allocation3 + $0x14] sm:$0xf] %vm3010, %v2925
      %3017 = vst.msk [vmem:[#allocation3 + $0x18] sm:$0xf] %vm3010, %v2927
      %3018 = vst.msk [vmem:[#allocation3 + $0x1c] sm:$0xf] %vm3010, %v2929
      %3019 = vst.msk [vmem:[#allocation3 + $0x20] sm:$0xf] %vm3010, %v2931
      %3020 = vst.msk [vmem:[#allocation3 + $0x24] sm:$0xf] %vm3010, %v2933
      %3021 = vst.msk [vmem:[#allocation3 + $0x28] sm:$0xf] %vm3010, %v2935
      %3022 = vst.msk [vmem:[#allocation3 + $0x2c] sm:$0xf] %vm3010, %v2937
      %3023 = vst.msk [vmem:[#allocation3 + $0x30] sm:$0xf] %vm3010, %v2939
      %3024 = vst.msk [vmem:[#allocation3 + $0x34] sm:$0xf] %vm3010, %v2941
      %3025 = vst.msk [vmem:[#allocation3 + $0x38] sm:$0xf] %vm3010, %v2943
      %3026 = vst.msk [vmem:[#allocation3 + $0x3c] sm:$0xf] %vm3010, %v2945
      %3027 = vst.msk [vmem:[#allocation3 + $0x40] sm:$0xf] %vm3010, %v2947
      %3028 = vst.msk [vmem:[#allocation3 + $0x44] sm:$0xf] %vm3010, %v2949
      %3029 = vst.msk [vmem:[#allocation3 + $0x48] sm:$0xf] %vm3010, %v2951
      %3030 = vst.msk [vmem:[#allocation3 + $0x4c] sm:$0xf] %vm3010, %v2953
      %3031 = vst.msk [vmem:[#allocation3 + $0x50] sm:$0xf] %vm3010, %v2955
      %3032 = vst.msk [vmem:[#allocation3 + $0x54] sm:$0xf] %vm3010, %v2957
      %3033 = vst.msk [vmem:[#allocation3 + $0x58] sm:$0xf] %vm3010, %v2959
      %3034 = vst.msk [vmem:[#allocation3 + $0x5c] sm:$0xf] %vm3010, %v2961
      %3035 = vst.msk [vmem:[#allocation3 + $0x60] sm:$0xf] %vm3010, %v2963
      %3036 = vst.msk [vmem:[#allocation3 + $0x64] sm:$0xf] %vm3010, %v2965
      %3037 = vst.msk [vmem:[#allocation3 + $0x68] sm:$0xf] %vm3010, %v2967
      %3038 = vst.msk [vmem:[#allocation3 + $0x6c] sm:$0xf] %vm3010, %v2969
      %3039 = vst.msk [vmem:[#allocation3 + $0x70] sm:$0xf] %vm3010, %v2971
      %3040 = vst.msk [vmem:[#allocation3 + $0x74] sm:$0xf] %vm3010, %v2973
      %3041 = vst.msk [vmem:[#allocation3 + $0x78] sm:$0xf] %vm3010, %v2975
      %3042 = vst.msk [vmem:[#allocation3 + $0x7c] sm:$0xf] %vm3010, %v2977
      %v3043 = vld [vmem:[%s2849] sm:$0xf]
      %v3044 = vld [vmem:[%s2849 + $0x4] sm:$0xf]
      %v3045 = vld [vmem:[%s2849 + $0x8] sm:$0x1]
      %v3046 = vld [vmem:[%s2849 + $0xc] sm:$0xf]
      %v3047 = vld [vmem:[%s2849 + $0x10] sm:$0xf]
      %v3048 = vld [vmem:[%s2849 + $0x14] sm:$0x1]
      %v3049 = vld [vmem:[%s2849 + $0x18] sm:$0xf]
      %v3050 = vld [vmem:[%s2849 + $0x1c] sm:$0xf]
      %v3051 = vld [vmem:[%s2849 + $0x20] sm:$0x1]
      %v3052 = vld [vmem:[%s2849 + $0x24] sm:$0xf]
      %v3053 = vld [vmem:[%s2849 + $0x28] sm:$0xf]
      %v3054 = vld [vmem:[%s2849 + $0x2c] sm:$0x1]
      %v3055 = vld [vmem:[%s2849 + $0x30] sm:$0xf]
      %v3056 = vld [vmem:[%s2849 + $0x34] sm:$0xf]
      %v3057 = vld [vmem:[%s2849 + $0x38] sm:$0x1]
      %v3058 = vld [vmem:[%s2849 + $0x3c] sm:$0xf]
      %v3059 = vld [vmem:[%s2849 + $0x40] sm:$0xf]
      %v3060 = vld [vmem:[%s2849 + $0x44] sm:$0x1]
      %v3061 = vld [vmem:[%s2849 + $0x48] sm:$0xf]
      %v3062 = vld [vmem:[%s2849 + $0x4c] sm:$0xf]
      %v3063 = vld [vmem:[%s2849 + $0x50] sm:$0x1]
      %v3064 = vld [vmem:[%s2849 + $0x54] sm:$0xf]
      %v3065 = vld [vmem:[%s2849 + $0x58] sm:$0xf]
      %v3066 = vld [vmem:[%s2849 + $0x5c] sm:$0x1]
      %v3067 = vld [vmem:[%s2849 + $0x60] sm:$0xf]
      %v3068 = vld [vmem:[%s2849 + $0x64] sm:$0xf]
      %v3069 = vld [vmem:[%s2849 + $0x68] sm:$0x1]
      %v3070 = vld [vmem:[%s2849 + $0x6c] sm:$0xf]
      %v3071 = vld [vmem:[%s2849 + $0x70] sm:$0xf]
      %v3072 = vld [vmem:[%s2849 + $0x74] sm:$0x1]
      %v3073 = vld [vmem:[%s2849 + $0x78] sm:$0xf]
      %v3074 = vld [vmem:[%s2849 + $0x7c] sm:$0xf]
      %v3075 = vld [vmem:[%s2849 + $0x80] sm:$0x1]
      %v3076 = vld [vmem:[%s2849 + $0x84] sm:$0xf]
      %v3077 = vld [vmem:[%s2849 + $0x88] sm:$0xf]
      %v3078 = vld [vmem:[%s2849 + $0x8c] sm:$0x1]
      %v3079 = vld [vmem:[%s2849 + $0x90] sm:$0xf]
      %v3080 = vld [vmem:[%s2849 + $0x94] sm:$0xf]
      %v3081 = vld [vmem:[%s2849 + $0x98] sm:$0x1]
      %v3082 = vld [vmem:[%s2849 + $0x9c] sm:$0xf]
      %v3083 = vld [vmem:[%s2849 + $0xa0] sm:$0xf]
      %v3084 = vld [vmem:[%s2849 + $0xa4] sm:$0x1]
      %v3085 = vld [vmem:[%s2849 + $0xa8] sm:$0xf]
      %v3086 = vld [vmem:[%s2849 + $0xac] sm:$0xf]
      %v3087 = vld [vmem:[%s2849 + $0xb0] sm:$0x1]
      %v3088 = vld [vmem:[%s2849 + $0xb4] sm:$0xf]
      %v3089 = vld [vmem:[%s2849 + $0xb8] sm:$0xf]
      %v3090 = vld [vmem:[%s2849 + $0xbc] sm:$0x1]
      %v3092 = vshrl.u32 %v3043, 16
      %v3094 = vrot.slane %v3092, 4
      %v3095 = vshll.u32 %v3043, 16
      %v3097 = vrot.slane %v3095, 5
      %v3098 = vor.u32 %v3094, %v3097
      %v3099 = vrot.slane %v3098, 4
      %v3101 = vshll.u32 %v3044, 16
      %v3103 = vrot.slane %v3101, 5
      %v3104 = vsel %vm904, %v3099, %v3103
      %v3105 = vshrl.u32 %v3044, 16
      %v3107 = vrot.slane %v3105, 4
      %v3108 = vor.u32 %v3107, %v3103
      %v3109 = vrot.slane %v3108, 4
      %v3111 = vshll.u32 %v3045, 16
      %v3113 = vrot.slane %v3111, 5
      %v3114 = vsel %vm904, %v3109, %v3113
      %v3116 = vshrl.u32 %v3046, 16
      %v3118 = vrot.slane %v3116, 4
      %v3119 = vshll.u32 %v3046, 16
      %v3121 = vrot.slane %v3119, 5
      %v3122 = vor.u32 %v3118, %v3121
      %v3123 = vrot.slane %v3122, 4
      %v3125 = vshll.u32 %v3047, 16
      %v3127 = vrot.slane %v3125, 5
      %v3128 = vsel %vm904, %v3123, %v3127
      %v3129 = vshrl.u32 %v3047, 16
      %v3131 = vrot.slane %v3129, 4
      %v3132 = vor.u32 %v3131, %v3127
      %v3133 = vrot.slane %v3132, 4
      %v3135 = vshll.u32 %v3048, 16
      %v3137 = vrot.slane %v3135, 5
      %v3138 = vsel %vm904, %v3133, %v3137
      %v3140 = vshrl.u32 %v3049, 16
      %v3142 = vrot.slane %v3140, 4
      %v3143 = vshll.u32 %v3049, 16
      %v3145 = vrot.slane %v3143, 5
      %v3146 = vor.u32 %v3142, %v3145
      %v3147 = vrot.slane %v3146, 4
      %v3149 = vshll.u32 %v3050, 16
      %v3151 = vrot.slane %v3149, 5
      %v3152 = vsel %vm904, %v3147, %v3151
      %v3153 = vshrl.u32 %v3050, 16
      %v3155 = vrot.slane %v3153, 4
      %v3156 = vor.u32 %v3155, %v3151
      %v3157 = vrot.slane %v3156, 4
      %v3159 = vshll.u32 %v3051, 16
      %v3161 = vrot.slane %v3159, 5
      %v3162 = vsel %vm904, %v3157, %v3161
      %v3164 = vshrl.u32 %v3052, 16
      %v3166 = vrot.slane %v3164, 4
      %v3167 = vshll.u32 %v3052, 16
      %v3169 = vrot.slane %v3167, 5
      %v3170 = vor.u32 %v3166, %v3169
      %v3171 = vrot.slane %v3170, 4
      %v3173 = vshll.u32 %v3053, 16
      %v3175 = vrot.slane %v3173, 5
      %v3176 = vsel %vm904, %v3171, %v3175
      %v3177 = vshrl.u32 %v3053, 16
      %v3179 = vrot.slane %v3177, 4
      %v3180 = vor.u32 %v3179, %v3175
      %v3181 = vrot.slane %v3180, 4
      %v3183 = vshll.u32 %v3054, 16
      %v3185 = vrot.slane %v3183, 5
      %v3186 = vsel %vm904, %v3181, %v3185
      %v3188 = vshrl.u32 %v3055, 16
      %v3190 = vrot.slane %v3188, 4
      %v3191 = vshll.u32 %v3055, 16
      %v3193 = vrot.slane %v3191, 5
      %v3194 = vor.u32 %v3190, %v3193
      %v3195 = vrot.slane %v3194, 4
      %v3197 = vshll.u32 %v3056, 16
      %v3199 = vrot.slane %v3197, 5
      %v3200 = vsel %vm904, %v3195, %v3199
      %v3201 = vshrl.u32 %v3056, 16
      %v3203 = vrot.slane %v3201, 4
      %v3204 = vor.u32 %v3203, %v3199
      %v3205 = vrot.slane %v3204, 4
      %v3207 = vshll.u32 %v3057, 16
      %v3209 = vrot.slane %v3207, 5
      %v3210 = vsel %vm904, %v3205, %v3209
      %v3212 = vshrl.u32 %v3058, 16
      %v3214 = vrot.slane %v3212, 4
      %v3215 = vshll.u32 %v3058, 16
      %v3217 = vrot.slane %v3215, 5
      %v3218 = vor.u32 %v3214, %v3217
      %v3219 = vrot.slane %v3218, 4
      %v3221 = vshll.u32 %v3059, 16
      %v3223 = vrot.slane %v3221, 5
      %v3224 = vsel %vm904, %v3219, %v3223
      %v3225 = vshrl.u32 %v3059, 16
      %v3227 = vrot.slane %v3225, 4
      %v3228 = vor.u32 %v3227, %v3223
      %v3229 = vrot.slane %v3228, 4
      %v3231 = vshll.u32 %v3060, 16
      %v3233 = vrot.slane %v3231, 5
      %v3234 = vsel %vm904, %v3229, %v3233
      %v3236 = vshrl.u32 %v3061, 16
      %v3238 = vrot.slane %v3236, 4
      %v3239 = vshll.u32 %v3061, 16
      %v3241 = vrot.slane %v3239, 5
      %v3242 = vor.u32 %v3238, %v3241
      %v3243 = vrot.slane %v3242, 4
      %v3245 = vshll.u32 %v3062, 16
      %v3247 = vrot.slane %v3245, 5
      %v3248 = vsel %vm904, %v3243, %v3247
      %v3249 = vshrl.u32 %v3062, 16
      %v3251 = vrot.slane %v3249, 4
      %v3252 = vor.u32 %v3251, %v3247
      %v3253 = vrot.slane %v3252, 4
      %v3255 = vshll.u32 %v3063, 16
      %v3257 = vrot.slane %v3255, 5
      %v3258 = vsel %vm904, %v3253, %v3257
      %v3260 = vshrl.u32 %v3064, 16
      %v3262 = vrot.slane %v3260, 4
      %v3263 = vshll.u32 %v3064, 16
      %v3265 = vrot.slane %v3263, 5
      %v3266 = vor.u32 %v3262, %v3265
      %v3267 = vrot.slane %v3266, 4
      %v3269 = vshll.u32 %v3065, 16
      %v3271 = vrot.slane %v3269, 5
      %v3272 = vsel %vm904, %v3267, %v3271
      %v3273 = vshrl.u32 %v3065, 16
      %v3275 = vrot.slane %v3273, 4
      %v3276 = vor.u32 %v3275, %v3271
      %v3277 = vrot.slane %v3276, 4
      %v3279 = vshll.u32 %v3066, 16
      %v3281 = vrot.slane %v3279, 5
      %v3282 = vsel %vm904, %v3277, %v3281
      %v3284 = vshrl.u32 %v3067, 16
      %v3286 = vrot.slane %v3284, 4
      %v3287 = vshll.u32 %v3067, 16
      %v3289 = vrot.slane %v3287, 5
      %v3290 = vor.u32 %v3286, %v3289
      %v3291 = vrot.slane %v3290, 4
      %v3293 = vshll.u32 %v3068, 16
      %v3295 = vrot.slane %v3293, 5
      %v3296 = vsel %vm904, %v3291, %v3295
      %v3297 = vshrl.u32 %v3068, 16
      %v3299 = vrot.slane %v3297, 4
      %v3300 = vor.u32 %v3299, %v3295
      %v3301 = vrot.slane %v3300, 4
      %v3303 = vshll.u32 %v3069, 16
      %v3305 = vrot.slane %v3303, 5
      %v3306 = vsel %vm904, %v3301, %v3305
      %v3308 = vshrl.u32 %v3070, 16
      %v3310 = vrot.slane %v3308, 4
      %v3311 = vshll.u32 %v3070, 16
      %v3313 = vrot.slane %v3311, 5
      %v3314 = vor.u32 %v3310, %v3313
      %v3315 = vrot.slane %v3314, 4
      %v3317 = vshll.u32 %v3071, 16
      %v3319 = vrot.slane %v3317, 5
      %v3320 = vsel %vm904, %v3315, %v3319
      %v3321 = vshrl.u32 %v3071, 16
      %v3323 = vrot.slane %v3321, 4
      %v3324 = vor.u32 %v3323, %v3319
      %v3325 = vrot.slane %v3324, 4
      %v3327 = vshll.u32 %v3072, 16
      %v3329 = vrot.slane %v3327, 5
      %v3330 = vsel %vm904, %v3325, %v3329
      %v3332 = vshrl.u32 %v3073, 16
      %v3334 = vrot.slane %v3332, 4
      %v3335 = vshll.u32 %v3073, 16
      %v3337 = vrot.slane %v3335, 5
      %v3338 = vor.u32 %v3334, %v3337
      %v3339 = vrot.slane %v3338, 4
      %v3341 = vshll.u32 %v3074, 16
      %v3343 = vrot.slane %v3341, 5
      %v3344 = vsel %vm904, %v3339, %v3343
      %v3345 = vshrl.u32 %v3074, 16
      %v3347 = vrot.slane %v3345, 4
      %v3348 = vor.u32 %v3347, %v3343
      %v3349 = vrot.slane %v3348, 4
      %v3351 = vshll.u32 %v3075, 16
      %v3353 = vrot.slane %v3351, 5
      %v3354 = vsel %vm904, %v3349, %v3353
      %v3356 = vshrl.u32 %v3076, 16
      %v3358 = vrot.slane %v3356, 4
      %v3359 = vshll.u32 %v3076, 16
      %v3361 = vrot.slane %v3359, 5
      %v3362 = vor.u32 %v3358, %v3361
      %v3363 = vrot.slane %v3362, 4
      %v3365 = vshll.u32 %v3077, 16
      %v3367 = vrot.slane %v3365, 5
      %v3368 = vsel %vm904, %v3363, %v3367
      %v3369 = vshrl.u32 %v3077, 16
      %v3371 = vrot.slane %v3369, 4
      %v3372 = vor.u32 %v3371, %v3367
      %v3373 = vrot.slane %v3372, 4
      %v3375 = vshll.u32 %v3078, 16
      %v3377 = vrot.slane %v3375, 5
      %v3378 = vsel %vm904, %v3373, %v3377
      %v3380 = vshrl.u32 %v3079, 16
      %v3382 = vrot.slane %v3380, 4
      %v3383 = vshll.u32 %v3079, 16
      %v3385 = vrot.slane %v3383, 5
      %v3386 = vor.u32 %v3382, %v3385
      %v3387 = vrot.slane %v3386, 4
      %v3389 = vshll.u32 %v3080, 16
      %v3391 = vrot.slane %v3389, 5
      %v3392 = vsel %vm904, %v3387, %v3391
      %v3393 = vshrl.u32 %v3080, 16
      %v3395 = vrot.slane %v3393, 4
      %v3396 = vor.u32 %v3395, %v3391
      %v3397 = vrot.slane %v3396, 4
      %v3399 = vshll.u32 %v3081, 16
      %v3401 = vrot.slane %v3399, 5
      %v3402 = vsel %vm904, %v3397, %v3401
      %v3404 = vshrl.u32 %v3082, 16
      %v3406 = vrot.slane %v3404, 4
      %v3407 = vshll.u32 %v3082, 16
      %v3409 = vrot.slane %v3407, 5
      %v3410 = vor.u32 %v3406, %v3409
      %v3411 = vrot.slane %v3410, 4
      %v3413 = vshll.u32 %v3083, 16
      %v3415 = vrot.slane %v3413, 5
      %v3416 = vsel %vm904, %v3411, %v3415
      %v3417 = vshrl.u32 %v3083, 16
      %v3419 = vrot.slane %v3417, 4
      %v3420 = vor.u32 %v3419, %v3415
      %v3421 = vrot.slane %v3420, 4
      %v3423 = vshll.u32 %v3084, 16
      %v3425 = vrot.slane %v3423, 5
      %v3426 = vsel %vm904, %v3421, %v3425
      %v3428 = vshrl.u32 %v3085, 16
      %v3430 = vrot.slane %v3428, 4
      %v3431 = vshll.u32 %v3085, 16
      %v3433 = vrot.slane %v3431, 5
      %v3434 = vor.u32 %v3430, %v3433
      %v3435 = vrot.slane %v3434, 4
      %v3437 = vshll.u32 %v3086, 16
      %v3439 = vrot.slane %v3437, 5
      %v3440 = vsel %vm904, %v3435, %v3439
      %v3441 = vshrl.u32 %v3086, 16
      %v3443 = vrot.slane %v3441, 4
      %v3444 = vor.u32 %v3443, %v3439
      %v3445 = vrot.slane %v3444, 4
      %v3447 = vshll.u32 %v3087, 16
      %v3449 = vrot.slane %v3447, 5
      %v3450 = vsel %vm904, %v3445, %v3449
      %v3452 = vshrl.u32 %v3088, 16
      %v3454 = vrot.slane %v3452, 4
      %v3455 = vshll.u32 %v3088, 16
      %v3457 = vrot.slane %v3455, 5
      %v3458 = vor.u32 %v3454, %v3457
      %v3459 = vrot.slane %v3458, 4
      %v3461 = vshll.u32 %v3089, 16
      %v3463 = vrot.slane %v3461, 5
      %v3464 = vsel %vm904, %v3459, %v3463
      %v3465 = vshrl.u32 %v3089, 16
      %v3467 = vrot.slane %v3465, 4
      %v3468 = vor.u32 %v3467, %v3463
      %v3469 = vrot.slane %v3468, 4
      %v3471 = vshll.u32 %v3090, 16
      %v3473 = vrot.slane %v3471, 5
      %v3474 = vsel %vm904, %v3469, %v3473
      %3475 = vrot.lane.b32.xlu0 %v3104, 28
      %v3476 = vpop.permute.xlu0 %3475
      %3477 = vrot.lane.b32.xlu0 %v3114, 28
      %v3478 = vpop.permute.xlu0 %3477
      %3479 = vrot.lane.b32.xlu0 %v3128, 28
      %v3480 = vpop.permute.xlu0 %3479
      %3481 = vrot.lane.b32.xlu0 %v3138, 28
      %v3482 = vpop.permute.xlu0 %3481
      %3483 = vrot.lane.b32.xlu0 %v3152, 28
      %v3484 = vpop.permute.xlu0 %3483
      %3485 = vrot.lane.b32.xlu0 %v3162, 28
      %v3486 = vpop.permute.xlu0 %3485
      %3487 = vrot.lane.b32.xlu0 %v3176, 28
      %v3488 = vpop.permute.xlu0 %3487
      %3489 = vrot.lane.b32.xlu0 %v3186, 28
      %v3490 = vpop.permute.xlu0 %3489
      %3491 = vrot.lane.b32.xlu0 %v3200, 28
      %v3492 = vpop.permute.xlu0 %3491
      %3493 = vrot.lane.b32.xlu0 %v3210, 28
      %v3494 = vpop.permute.xlu0 %3493
      %3495 = vrot.lane.b32.xlu0 %v3224, 28
      %v3496 = vpop.permute.xlu0 %3495
      %3497 = vrot.lane.b32.xlu0 %v3234, 28
      %v3498 = vpop.permute.xlu0 %3497
      %3499 = vrot.lane.b32.xlu0 %v3248, 28
      %v3500 = vpop.permute.xlu0 %3499
      %3501 = vrot.lane.b32.xlu0 %v3258, 28
      %v3502 = vpop.permute.xlu0 %3501
      %3503 = vrot.lane.b32.xlu0 %v3272, 28
      %v3504 = vpop.permute.xlu0 %3503
      %3505 = vrot.lane.b32.xlu0 %v3282, 28
      %v3506 = vpop.permute.xlu0 %3505
      %3507 = vrot.lane.b32.xlu0 %v3296, 28
      %v3508 = vpop.permute.xlu0 %3507
      %3509 = vrot.lane.b32.xlu0 %v3306, 28
      %v3510 = vpop.permute.xlu0 %3509
      %3511 = vrot.lane.b32.xlu0 %v3320, 28
      %v3512 = vpop.permute.xlu0 %3511
      %3513 = vrot.lane.b32.xlu0 %v3330, 28
      %v3514 = vpop.permute.xlu0 %3513
      %3515 = vrot.lane.b32.xlu0 %v3344, 28
      %v3516 = vpop.permute.xlu0 %3515
      %3517 = vrot.lane.b32.xlu0 %v3354, 28
      %v3518 = vpop.permute.xlu0 %3517
      %3519 = vrot.lane.b32.xlu0 %v3368, 28
      %v3520 = vpop.permute.xlu0 %3519
      %3521 = vrot.lane.b32.xlu0 %v3378, 28
      %v3522 = vpop.permute.xlu0 %3521
      %3523 = vrot.lane.b32.xlu0 %v3392, 28
      %v3524 = vpop.permute.xlu0 %3523
      %3525 = vrot.lane.b32.xlu0 %v3402, 28
      %v3526 = vpop.permute.xlu0 %3525
      %3527 = vrot.lane.b32.xlu0 %v3416, 28
      %v3528 = vpop.permute.xlu0 %3527
      %3529 = vrot.lane.b32.xlu0 %v3426, 28
      %v3530 = vpop.permute.xlu0 %3529
      %3531 = vrot.lane.b32.xlu0 %v3440, 28
      %v3532 = vpop.permute.xlu0 %3531
      %3533 = vrot.lane.b32.xlu0 %v3450, 28
      %v3534 = vpop.permute.xlu0 %3533
      %3535 = vrot.lane.b32.xlu0 %v3464, 28
      %v3536 = vpop.permute.xlu0 %3535
      %3537 = vrot.lane.b32.xlu0 %v3474, 28
      %v3538 = vpop.permute.xlu0 %3537
      %vm3571 = vcmask 257248
      %3572 = vst.msk [vmem:[#allocation3] sm:$0xf] %vm3571, %v3476
      %3573 = vst.msk [vmem:[#allocation3 + $0x4] sm:$0xf] %vm3571, %v3478
      %3574 = vst.msk [vmem:[#allocation3 + $0x8] sm:$0xf] %vm3571, %v3480
      %3575 = vst.msk [vmem:[#allocation3 + $0xc] sm:$0xf] %vm3571, %v3482
      %3576 = vst.msk [vmem:[#allocation3 + $0x10] sm:$0xf] %vm3571, %v3484
      %3577 = vst.msk [vmem:[#allocation3 + $0x14] sm:$0xf] %vm3571, %v3486
      %3578 = vst.msk [vmem:[#allocation3 + $0x18] sm:$0xf] %vm3571, %v3488
      %3579 = vst.msk [vmem:[#allocation3 + $0x1c] sm:$0xf] %vm3571, %v3490
      %3580 = vst.msk [vmem:[#allocation3 + $0x20] sm:$0xf] %vm3571, %v3492
      %3581 = vst.msk [vmem:[#allocation3 + $0x24] sm:$0xf] %vm3571, %v3494
      %3582 = vst.msk [vmem:[#allocation3 + $0x28] sm:$0xf] %vm3571, %v3496
      %3583 = vst.msk [vmem:[#allocation3 + $0x2c] sm:$0xf] %vm3571, %v3498
      %3584 = vst.msk [vmem:[#allocation3 + $0x30] sm:$0xf] %vm3571, %v3500
      %3585 = vst.msk [vmem:[#allocation3 + $0x34] sm:$0xf] %vm3571, %v3502
      %3586 = vst.msk [vmem:[#allocation3 + $0x38] sm:$0xf] %vm3571, %v3504
      %3587 = vst.msk [vmem:[#allocation3 + $0x3c] sm:$0xf] %vm3571, %v3506
      %3588 = vst.msk [vmem:[#allocation3 + $0x40] sm:$0xf] %vm3571, %v3508
      %3589 = vst.msk [vmem:[#allocation3 + $0x44] sm:$0xf] %vm3571, %v3510
      %3590 = vst.msk [vmem:[#allocation3 + $0x48] sm:$0xf] %vm3571, %v3512
      %3591 = vst.msk [vmem:[#allocation3 + $0x4c] sm:$0xf] %vm3571, %v3514
      %3592 = vst.msk [vmem:[#allocation3 + $0x50] sm:$0xf] %vm3571, %v3516
      %3593 = vst.msk [vmem:[#allocation3 + $0x54] sm:$0xf] %vm3571, %v3518
      %3594 = vst.msk [vmem:[#allocation3 + $0x58] sm:$0xf] %vm3571, %v3520
      %3595 = vst.msk [vmem:[#allocation3 + $0x5c] sm:$0xf] %vm3571, %v3522
      %3596 = vst.msk [vmem:[#allocation3 + $0x60] sm:$0xf] %vm3571, %v3524
      %3597 = vst.msk [vmem:[#allocation3 + $0x64] sm:$0xf] %vm3571, %v3526
      %3598 = vst.msk [vmem:[#allocation3 + $0x68] sm:$0xf] %vm3571, %v3528
      %3599 = vst.msk [vmem:[#allocation3 + $0x6c] sm:$0xf] %vm3571, %v3530
      %3600 = vst.msk [vmem:[#allocation3 + $0x70] sm:$0xf] %vm3571, %v3532
      %3601 = vst.msk [vmem:[#allocation3 + $0x74] sm:$0xf] %vm3571, %v3534
      %3602 = vst.msk [vmem:[#allocation3 + $0x78] sm:$0xf] %vm3571, %v3536
      %3603 = vst.msk [vmem:[#allocation3 + $0x7c] sm:$0xf] %vm3571, %v3538
      %v3604 = vld [vmem:[%s2849] sm:$0xe]
      %v3605 = vld [vmem:[%s2849 + $0x4] sm:$0xf]
      %v3606 = vld [vmem:[%s2849 + $0x8] sm:$0x1]
      %v3607 = vld [vmem:[%s2849 + $0xc] sm:$0xe]
      %v3608 = vld [vmem:[%s2849 + $0x10] sm:$0xf]
      %v3609 = vld [vmem:[%s2849 + $0x14] sm:$0x1]
      %v3610 = vld [vmem:[%s2849 + $0x18] sm:$0xe]
      %v3611 = vld [vmem:[%s2849 + $0x1c] sm:$0xf]
      %v3612 = vld [vmem:[%s2849 + $0x20] sm:$0x1]
      %v3613 = vld [vmem:[%s2849 + $0x24] sm:$0xe]
      %v3614 = vld [vmem:[%s2849 + $0x28] sm:$0xf]
      %v3615 = vld [vmem:[%s2849 + $0x2c] sm:$0x1]
      %v3616 = vld [vmem:[%s2849 + $0x30] sm:$0xe]
      %v3617 = vld [vmem:[%s2849 + $0x34] sm:$0xf]
      %v3618 = vld [vmem:[%s2849 + $0x38] sm:$0x1]
      %v3619 = vld [vmem:[%s2849 + $0x3c] sm:$0xe]
      %v3620 = vld [vmem:[%s2849 + $0x40] sm:$0xf]
      %v3621 = vld [vmem:[%s2849 + $0x44] sm:$0x1]
      %v3622 = vld [vmem:[%s2849 + $0x48] sm:$0xe]
      %v3623 = vld [vmem:[%s2849 + $0x4c] sm:$0xf]
      %v3624 = vld [vmem:[%s2849 + $0x50] sm:$0x1]
      %v3625 = vld [vmem:[%s2849 + $0x54] sm:$0xe]
      %v3626 = vld [vmem:[%s2849 + $0x58] sm:$0xf]
      %v3627 = vld [vmem:[%s2849 + $0x5c] sm:$0x1]
      %v3628 = vld [vmem:[%s2849 + $0x60] sm:$0xe]
      %v3629 = vld [vmem:[%s2849 + $0x64] sm:$0xf]
      %v3630 = vld [vmem:[%s2849 + $0x68] sm:$0x1]
      %v3631 = vld [vmem:[%s2849 + $0x6c] sm:$0xe]
      %v3632 = vld [vmem:[%s2849 + $0x70] sm:$0xf]
      %v3633 = vld [vmem:[%s2849 + $0x74] sm:$0x1]
      %v3634 = vld [vmem:[%s2849 + $0x78] sm:$0xe]
      %v3635 = vld [vmem:[%s2849 + $0x7c] sm:$0xf]
      %v3636 = vld [vmem:[%s2849 + $0x80] sm:$0x1]
      %v3637 = vld [vmem:[%s2849 + $0x84] sm:$0xe]
      %v3638 = vld [vmem:[%s2849 + $0x88] sm:$0xf]
      %v3639 = vld [vmem:[%s2849 + $0x8c] sm:$0x1]
      %v3640 = vld [vmem:[%s2849 + $0x90] sm:$0xe]
      %v3641 = vld [vmem:[%s2849 + $0x94] sm:$0xf]
      %v3642 = vld [vmem:[%s2849 + $0x98] sm:$0x1]
      %v3643 = vld [vmem:[%s2849 + $0x9c] sm:$0xe]
      %v3644 = vld [vmem:[%s2849 + $0xa0] sm:$0xf]
      %v3645 = vld [vmem:[%s2849 + $0xa4] sm:$0x1]
      %v3646 = vld [vmem:[%s2849 + $0xa8] sm:$0xe]
      %v3647 = vld [vmem:[%s2849 + $0xac] sm:$0xf]
      %v3648 = vld [vmem:[%s2849 + $0xb0] sm:$0x1]
      %v3649 = vld [vmem:[%s2849 + $0xb4] sm:$0xe]
      %v3650 = vld [vmem:[%s2849 + $0xb8] sm:$0xf]
      %v3651 = vld [vmem:[%s2849 + $0xbc] sm:$0x1]
      %v3700 = vrot.slane %v3604, 5
      %v3701 = vrot.slane %v3700, 4
      %v3702 = vrot.slane %v3605, 5
      %v3703 = vsel %vm1516, %v3701, %v3702
      %v3704 = vrot.slane %v3702, 4
      %v3705 = vrot.slane %v3606, 5
      %v3706 = vsel %vm1516, %v3704, %v3705
      %v3707 = vrot.slane %v3607, 5
      %v3708 = vrot.slane %v3707, 4
      %v3709 = vrot.slane %v3608, 5
      %v3710 = vsel %vm1516, %v3708, %v3709
      %v3711 = vrot.slane %v3709, 4
      %v3712 = vrot.slane %v3609, 5
      %v3713 = vsel %vm1516, %v3711, %v3712
      %v3714 = vrot.slane %v3610, 5
      %v3715 = vrot.slane %v3714, 4
      %v3716 = vrot.slane %v3611, 5
      %v3717 = vsel %vm1516, %v3715, %v3716
      %v3718 = vrot.slane %v3716, 4
      %v3719 = vrot.slane %v3612, 5
      %v3720 = vsel %vm1516, %v3718, %v3719
      %v3721 = vrot.slane %v3613, 5
      %v3722 = vrot.slane %v3721, 4
      %v3723 = vrot.slane %v3614, 5
      %v3724 = vsel %vm1516, %v3722, %v3723
      %v3725 = vrot.slane %v3723, 4
      %v3726 = vrot.slane %v3615, 5
      %v3727 = vsel %vm1516, %v3725, %v3726
      %v3728 = vrot.slane %v3616, 5
      %v3729 = vrot.slane %v3728, 4
      %v3730 = vrot.slane %v3617, 5
      %v3731 = vsel %vm1516, %v3729, %v3730
      %v3732 = vrot.slane %v3730, 4
      %v3733 = vrot.slane %v3618, 5
      %v3734 = vsel %vm1516, %v3732, %v3733
      %v3735 = vrot.slane %v3619, 5
      %v3736 = vrot.slane %v3735, 4
      %v3737 = vrot.slane %v3620, 5
      %v3738 = vsel %vm1516, %v3736, %v3737
      %v3739 = vrot.slane %v3737, 4
      %v3740 = vrot.slane %v3621, 5
      %v3741 = vsel %vm1516, %v3739, %v3740
      %v3742 = vrot.slane %v3622, 5
      %v3743 = vrot.slane %v3742, 4
      %v3744 = vrot.slane %v3623, 5
      %v3745 = vsel %vm1516, %v3743, %v3744
      %v3746 = vrot.slane %v3744, 4
      %v3747 = vrot.slane %v3624, 5
      %v3748 = vsel %vm1516, %v3746, %v3747
      %v3749 = vrot.slane %v3625, 5
      %v3750 = vrot.slane %v3749, 4
      %v3751 = vrot.slane %v3626, 5
      %v3752 = vsel %vm1516, %v3750, %v3751
      %v3753 = vrot.slane %v3751, 4
      %v3754 = vrot.slane %v3627, 5
      %v3755 = vsel %vm1516, %v3753, %v3754
      %v3756 = vrot.slane %v3628, 5
      %v3757 = vrot.slane %v3756, 4
      %v3758 = vrot.slane %v3629, 5
      %v3759 = vsel %vm1516, %v3757, %v3758
      %v3760 = vrot.slane %v3758, 4
      %v3761 = vrot.slane %v3630, 5
      %v3762 = vsel %vm1516, %v3760, %v3761
      %v3763 = vrot.slane %v3631, 5
      %v3764 = vrot.slane %v3763, 4
      %v3765 = vrot.slane %v3632, 5
      %v3766 = vsel %vm1516, %v3764, %v3765
      %v3767 = vrot.slane %v3765, 4
      %v3768 = vrot.slane %v3633, 5
      %v3769 = vsel %vm1516, %v3767, %v3768
      %v3770 = vrot.slane %v3634, 5
      %v3771 = vrot.slane %v3770, 4
      %v3772 = vrot.slane %v3635, 5
      %v3773 = vsel %vm1516, %v3771, %v3772
      %v3774 = vrot.slane %v3772, 4
      %v3775 = vrot.slane %v3636, 5
      %v3776 = vsel %vm1516, %v3774, %v3775
      %v3777 = vrot.slane %v3637, 5
      %v3778 = vrot.slane %v3777, 4
      %v3779 = vrot.slane %v3638, 5
      %v3780 = vsel %vm1516, %v3778, %v3779
      %v3781 = vrot.slane %v3779, 4
      %v3782 = vrot.slane %v3639, 5
      %v3783 = vsel %vm1516, %v3781, %v3782
      %v3784 = vrot.slane %v3640, 5
      %v3785 = vrot.slane %v3784, 4
      %v3786 = vrot.slane %v3641, 5
      %v3787 = vsel %vm1516, %v3785, %v3786
      %v3788 = vrot.slane %v3786, 4
      %v3789 = vrot.slane %v3642, 5
      %v3790 = vsel %vm1516, %v3788, %v3789
      %v3791 = vrot.slane %v3643, 5
      %v3792 = vrot.slane %v3791, 4
      %v3793 = vrot.slane %v3644, 5
      %v3794 = vsel %vm1516, %v3792, %v3793
      %v3795 = vrot.slane %v3793, 4
      %v3796 = vrot.slane %v3645, 5
      %v3797 = vsel %vm1516, %v3795, %v3796
      %v3798 = vrot.slane %v3646, 5
      %v3799 = vrot.slane %v3798, 4
      %v3800 = vrot.slane %v3647, 5
      %v3801 = vsel %vm1516, %v3799, %v3800
      %v3802 = vrot.slane %v3800, 4
      %v3803 = vrot.slane %v3648, 5
      %v3804 = vsel %vm1516, %v3802, %v3803
      %v3805 = vrot.slane %v3649, 5
      %v3806 = vrot.slane %v3805, 4
      %v3807 = vrot.slane %v3650, 5
      %v3808 = vsel %vm1516, %v3806, %v3807
      %v3809 = vrot.slane %v3807, 4
      %v3810 = vrot.slane %v3651, 5
      %v3811 = vsel %vm1516, %v3809, %v3810
      %3812 = vrot.lane.b32.xlu0 %v3703, 32
      %v3813 = vpop.permute.xlu0 %3812
      %3814 = vrot.lane.b32.xlu0 %v3706, 32
      %v3815 = vpop.permute.xlu0 %3814
      %3816 = vrot.lane.b32.xlu0 %v3710, 32
      %v3817 = vpop.permute.xlu0 %3816
      %3818 = vrot.lane.b32.xlu0 %v3713, 32
      %v3819 = vpop.permute.xlu0 %3818
      %3820 = vrot.lane.b32.xlu0 %v3717, 32
      %v3821 = vpop.permute.xlu0 %3820
      %3822 = vrot.lane.b32.xlu0 %v3720, 32
      %v3823 = vpop.permute.xlu0 %3822
      %3824 = vrot.lane.b32.xlu0 %v3724, 32
      %v3825 = vpop.permute.xlu0 %3824
      %3826 = vrot.lane.b32.xlu0 %v3727, 32
      %v3827 = vpop.permute.xlu0 %3826
      %3828 = vrot.lane.b32.xlu0 %v3731, 32
      %v3829 = vpop.permute.xlu0 %3828
      %3830 = vrot.lane.b32.xlu0 %v3734, 32
      %v3831 = vpop.permute.xlu0 %3830
      %3832 = vrot.lane.b32.xlu0 %v3738, 32
      %v3833 = vpop.permute.xlu0 %3832
      %3834 = vrot.lane.b32.xlu0 %v3741, 32
      %v3835 = vpop.permute.xlu0 %3834
      %3836 = vrot.lane.b32.xlu0 %v3745, 32
      %v3837 = vpop.permute.xlu0 %3836
      %3838 = vrot.lane.b32.xlu0 %v3748, 32
      %v3839 = vpop.permute.xlu0 %3838
      %3840 = vrot.lane.b32.xlu0 %v3752, 32
      %v3841 = vpop.permute.xlu0 %3840
      %3842 = vrot.lane.b32.xlu0 %v3755, 32
      %v3843 = vpop.permute.xlu0 %3842
      %3844 = vrot.lane.b32.xlu0 %v3759, 32
      %v3845 = vpop.permute.xlu0 %3844
      %3846 = vrot.lane.b32.xlu0 %v3762, 32
      %v3847 = vpop.permute.xlu0 %3846
      %3848 = vrot.lane.b32.xlu0 %v3766, 32
      %v3849 = vpop.permute.xlu0 %3848
      %3850 = vrot.lane.b32.xlu0 %v3769, 32
      %v3851 = vpop.permute.xlu0 %3850
      %3852 = vrot.lane.b32.xlu0 %v3773, 32
      %v3853 = vpop.permute.xlu0 %3852
      %3854 = vrot.lane.b32.xlu0 %v3776, 32
      %v3855 = vpop.permute.xlu0 %3854
      %3856 = vrot.lane.b32.xlu0 %v3780, 32
      %v3857 = vpop.permute.xlu0 %3856
      %3858 = vrot.lane.b32.xlu0 %v3783, 32
      %v3859 = vpop.permute.xlu0 %3858
      %3860 = vrot.lane.b32.xlu0 %v3787, 32
      %v3861 = vpop.permute.xlu0 %3860
      %3862 = vrot.lane.b32.xlu0 %v3790, 32
      %v3863 = vpop.permute.xlu0 %3862
      %3864 = vrot.lane.b32.xlu0 %v3794, 32
      %v3865 = vpop.permute.xlu0 %3864
      %3866 = vrot.lane.b32.xlu0 %v3797, 32
      %v3867 = vpop.permute.xlu0 %3866
      %3868 = vrot.lane.b32.xlu0 %v3801, 32
      %v3869 = vpop.permute.xlu0 %3868
      %3870 = vrot.lane.b32.xlu0 %v3804, 32
      %v3871 = vpop.permute.xlu0 %3870
      %3872 = vrot.lane.b32.xlu0 %v3808, 32
      %v3873 = vpop.permute.xlu0 %3872
      %3874 = vrot.lane.b32.xlu0 %v3811, 32
      %v3875 = vpop.permute.xlu0 %3874
      %vm3908 = vcmask 290048
      %3909 = vst.msk [vmem:[#allocation3] sm:$0xf] %vm3908, %v3813
      %3910 = vst.msk [vmem:[#allocation3 + $0x4] sm:$0xf] %vm3908, %v3815
      %3911 = vst.msk [vmem:[#allocation3 + $0x8] sm:$0xf] %vm3908, %v3817
      %3912 = vst.msk [vmem:[#allocation3 + $0xc] sm:$0xf] %vm3908, %v3819
      %3913 = vst.msk [vmem:[#allocation3 + $0x10] sm:$0xf] %vm3908, %v3821
      %3914 = vst.msk [vmem:[#allocation3 + $0x14] sm:$0xf] %vm3908, %v3823
      %3915 = vst.msk [vmem:[#allocation3 + $0x18] sm:$0xf] %vm3908, %v3825
      %3916 = vst.msk [vmem:[#allocation3 + $0x1c] sm:$0xf] %vm3908, %v3827
      %3917 = vst.msk [vmem:[#allocation3 + $0x20] sm:$0xf] %vm3908, %v3829
      %3918 = vst.msk [vmem:[#allocation3 + $0x24] sm:$0xf] %vm3908, %v3831
      %3919 = vst.msk [vmem:[#allocation3 + $0x28] sm:$0xf] %vm3908, %v3833
      %3920 = vst.msk [vmem:[#allocation3 + $0x2c] sm:$0xf] %vm3908, %v3835
      %3921 = vst.msk [vmem:[#allocation3 + $0x30] sm:$0xf] %vm3908, %v3837
      %3922 = vst.msk [vmem:[#allocation3 + $0x34] sm:$0xf] %vm3908, %v3839
      %3923 = vst.msk [vmem:[#allocation3 + $0x38] sm:$0xf] %vm3908, %v3841
      %3924 = vst.msk [vmem:[#allocation3 + $0x3c] sm:$0xf] %vm3908, %v3843
      %3925 = vst.msk [vmem:[#allocation3 + $0x40] sm:$0xf] %vm3908, %v3845
      %3926 = vst.msk [vmem:[#allocation3 + $0x44] sm:$0xf] %vm3908, %v3847
      %3927 = vst.msk [vmem:[#allocation3 + $0x48] sm:$0xf] %vm3908, %v3849
      %3928 = vst.msk [vmem:[#allocation3 + $0x4c] sm:$0xf] %vm3908, %v3851
      %3929 = vst.msk [vmem:[#allocation3 + $0x50] sm:$0xf] %vm3908, %v3853
      %3930 = vst.msk [vmem:[#allocation3 + $0x54] sm:$0xf] %vm3908, %v3855
      %3931 = vst.msk [vmem:[#allocation3 + $0x58] sm:$0xf] %vm3908, %v3857
      %3932 = vst.msk [vmem:[#allocation3 + $0x5c] sm:$0xf] %vm3908, %v3859
      %3933 = vst.msk [vmem:[#allocation3 + $0x60] sm:$0xf] %vm3908, %v3861
      %3934 = vst.msk [vmem:[#allocation3 + $0x64] sm:$0xf] %vm3908, %v3863
      %3935 = vst.msk [vmem:[#allocation3 + $0x68] sm:$0xf] %vm3908, %v3865
      %3936 = vst.msk [vmem:[#allocation3 + $0x6c] sm:$0xf] %vm3908, %v3867
      %3937 = vst.msk [vmem:[#allocation3 + $0x70] sm:$0xf] %vm3908, %v3869
      %3938 = vst.msk [vmem:[#allocation3 + $0x74] sm:$0xf] %vm3908, %v3871
      %3939 = vst.msk [vmem:[#allocation3 + $0x78] sm:$0xf] %vm3908, %v3873
      %3940 = vst.msk [vmem:[#allocation3 + $0x7c] sm:$0xf] %vm3908, %v3875
      %v3941 = vld [vmem:[#allocation3] sm:$0xf]
      %v3942 = vld [vmem:[#allocation3 + $0x4] sm:$0xf]
      %v3943 = vld [vmem:[#allocation3 + $0x8] sm:$0xf]
      %v3944 = vld [vmem:[#allocation3 + $0xc] sm:$0xf]
      %v3945 = vld [vmem:[#allocation3 + $0x10] sm:$0xf]
      %v3946 = vld [vmem:[#allocation3 + $0x14] sm:$0xf]
      %v3947 = vld [vmem:[#allocation3 + $0x18] sm:$0xf]
      %v3948 = vld [vmem:[#allocation3 + $0x1c] sm:$0xf]
      %v3949 = vld [vmem:[#allocation3 + $0x20] sm:$0xf]
      %v3950 = vld [vmem:[#allocation3 + $0x24] sm:$0xf]
      %v3951 = vld [vmem:[#allocation3 + $0x28] sm:$0xf]
      %v3952 = vld [vmem:[#allocation3 + $0x2c] sm:$0xf]
      %v3953 = vld [vmem:[#allocation3 + $0x30] sm:$0xf]
      %v3954 = vld [vmem:[#allocation3 + $0x34] sm:$0xf]
      %v3955 = vld [vmem:[#allocation3 + $0x38] sm:$0xf]
      %v3956 = vld [vmem:[#allocation3 + $0x3c] sm:$0xf]
      %v3957 = vld [vmem:[#allocation3 + $0x40] sm:$0xf]
      %v3958 = vld [vmem:[#allocation3 + $0x44] sm:$0xf]
      %v3959 = vld [vmem:[#allocation3 + $0x48] sm:$0xf]
      %v3960 = vld [vmem:[#allocation3 + $0x4c] sm:$0xf]
      %v3961 = vld [vmem:[#allocation3 + $0x50] sm:$0xf]
      %v3962 = vld [vmem:[#allocation3 + $0x54] sm:$0xf]
      %v3963 = vld [vmem:[#allocation3 + $0x58] sm:$0xf]
      %v3964 = vld [vmem:[#allocation3 + $0x5c] sm:$0xf]
      %v3965 = vld [vmem:[#allocation3 + $0x60] sm:$0xf]
      %v3966 = vld [vmem:[#allocation3 + $0x64] sm:$0xf]
      %v3967 = vld [vmem:[#allocation3 + $0x68] sm:$0xf]
      %v3968 = vld [vmem:[#allocation3 + $0x6c] sm:$0xf]
      %v3969 = vld [vmem:[#allocation3 + $0x70] sm:$0xf]
      %v3970 = vld [vmem:[#allocation3 + $0x74] sm:$0xf]
      %v3971 = vld [vmem:[#allocation3 + $0x78] sm:$0xf]
      %v3972 = vld [vmem:[#allocation3 + $0x7c] sm:$0xf]
      %v3973 = vld [vmem:[%s1] sm:$0xf]
      %v3974 = vld [vmem:[%s1 + $0x4] sm:$0xf]
      %v3975 = vld [vmem:[%s1 + $0x8] sm:$0xf]
      %v3976 = vld [vmem:[%s1 + $0xc] sm:$0xf]
      %v3977 = vld [vmem:[%s1 + $0x10] sm:$0x3]
      %v4010 = vunpack.c.l.b16 %v3941
      %v4011 = vunpack.c.l.b16 %v3942
      %v4012 = vunpack.c.l.b16 %v3943
      %v4013 = vunpack.c.l.b16 %v3944
      %v4014 = vunpack.c.l.b16 %v3945
      %v4015 = vunpack.c.l.b16 %v3946
      %v4016 = vunpack.c.l.b16 %v3947
      %v4017 = vunpack.c.l.b16 %v3948
      %v4018 = vunpack.c.l.b16 %v3949
      %v4019 = vunpack.c.l.b16 %v3950
      %v4020 = vunpack.c.l.b16 %v3951
      %v4021 = vunpack.c.l.b16 %v3952
      %v4022 = vunpack.c.l.b16 %v3953
      %v4023 = vunpack.c.l.b16 %v3954
      %v4024 = vunpack.c.l.b16 %v3955
      %v4025 = vunpack.c.l.b16 %v3956
      %v4026 = vunpack.c.l.b16 %v3957
      %v4027 = vunpack.c.l.b16 %v3958
      %v4028 = vunpack.c.l.b16 %v3959
      %v4029 = vunpack.c.l.b16 %v3960
      %v4030 = vunpack.c.l.b16 %v3961
      %v4031 = vunpack.c.l.b16 %v3962
      %v4032 = vunpack.c.l.b16 %v3963
      %v4033 = vunpack.c.l.b16 %v3964
      %v4034 = vunpack.c.l.b16 %v3965
      %v4035 = vunpack.c.l.b16 %v3966
      %v4036 = vunpack.c.l.b16 %v3967
      %v4037 = vunpack.c.l.b16 %v3968
      %v4038 = vunpack.c.l.b16 %v3969
      %v4039 = vunpack.c.l.b16 %v3970
      %v4040 = vunpack.c.l.b16 %v3971
      %v4041 = vunpack.c.l.b16 %v3972
      %v4042 = vpack.c.b16 %v4011, %v4010
      %v4043 = vpack.c.b16 %v4013, %v4012
      %v4044 = vpack.c.b16 %v4015, %v4014
      %v4045 = vpack.c.b16 %v4017, %v4016
      %v4046 = vpack.c.b16 %v4019, %v4018
      %v4047 = vpack.c.b16 %v4021, %v4020
      %v4048 = vpack.c.b16 %v4023, %v4022
      %v4049 = vpack.c.b16 %v4025, %v4024
      %v4050 = vpack.c.b16 %v4027, %v4026
      %v4051 = vpack.c.b16 %v4029, %v4028
      %v4052 = vpack.c.b16 %v4031, %v4030
      %v4053 = vpack.c.b16 %v4033, %v4032
      %v4054 = vpack.c.b16 %v4035, %v4034
      %v4055 = vpack.c.b16 %v4037, %v4036
      %v4056 = vpack.c.b16 %v4039, %v4038
      %v4057 = vpack.c.b16 %v4041, %v4040
      %v4063 = vunpack.c.l.b16 %v3973
      %v4064 = vunpack.c.l.b16 %v3974
      %v4065 = vunpack.c.l.b16 %v3975
      %v4066 = vunpack.c.l.b16 %v3976
      %v4067 = vunpack.c.l.b16 %v3977
      %v4068 = vpack.c.b16 %v4064, %v4063
      %v4069 = vpack.c.b16 %v4066, %v4065
      %v4070 = vpack.c.b16 %v4067, %v4067
      %vm4073 = vcmask 293888
      %v4075 = vsel %vm4073, %v4042, 0
      %v4078 = vsel %vm4073, %v4043, 0
      %v4081 = vsel %vm4073, %v4044, 0
      %v4084 = vsel %vm4073, %v4045, 0
      %v4087 = vsel %vm4073, %v4046, 0
      %v4090 = vsel %vm4073, %v4047, 0
      %v4093 = vsel %vm4073, %v4048, 0
      %v4096 = vsel %vm4073, %v4049, 0
      %v4099 = vsel %vm4073, %v4050, 0
      %v4102 = vsel %vm4073, %v4051, 0
      %v4105 = vsel %vm4073, %v4052, 0
      %v4108 = vsel %vm4073, %v4053, 0
      %v4111 = vsel %vm4073, %v4054, 0
      %v4114 = vsel %vm4073, %v4055, 0
      %v4117 = vsel %vm4073, %v4056, 0
      %v4120 = vsel %vm4073, %v4057, 0
      %vm4122 = vcmask 1041408
      %v4124 = vsel %vm4122, %v4070, 0
      %4126 = vmatprep.subr.bf16.mxu0 0
      %4127 = vmatpush1.bf16.msra.mxu0 0
      %4128 = vmatprep.subr.bf16.mxu0 0
      %4129 = vmatpush1.bf16.msra.mxu0 0
      %4130 = vmatprep.subr.bf16.mxu0 0
      %4131 = vmatpush1.bf16.msra.mxu0 0
      %4132 = vmatprep.subr.bf16.mxu0 0
      %4133 = vmatpush1.bf16.msra.mxu0 0
      %4134 = vmatprep.subr.bf16.mxu0 0
      %4135 = vmatpush1.bf16.msra.mxu0 0
      %4136 = vmatprep.subr.bf16.mxu0 0
      %4137 = vmatpush1.bf16.msra.mxu0 %v4124
      %4138 = vmatprep.subr.bf16.mxu0 0
      %4139 = vmatpush1.bf16.msra.mxu0 %v4069
      %4140 = vmatprep.subr.bf16.mxu0 0
      %4141 = vmatpush1.bf16.msra.mxu0 %v4068
      %4142 = vmatprep.subr.bf16.mxu0 0
      %4143 = vmatpush2.bf16.msra.mxu0 0
      %4144 = vmatprep.subr.bf16.mxu0 0
      %4145 = vmatpush2.bf16.msra.mxu0 0
      %4146 = vmatprep.subr.bf16.mxu0 0
      %4147 = vmatpush2.bf16.msra.mxu0 0
      %4148 = vmatprep.subr.bf16.mxu0 0
      %4149 = vmatpush2.bf16.msra.mxu0 0
      %4150 = vmatprep.subr.bf16.mxu0 0
      %4151 = vmatpush2.bf16.msra.mxu0 0
      %4152 = vmatprep.subr.bf16.mxu0 0
      %4153 = vmatpush2.bf16.msra.mxu0 0
      %4154 = vmatprep.subr.bf16.mxu0 0
      %4155 = vmatpush2.bf16.msra.mxu0 0
      %4156 = vmatprep.subr.bf16.mxu0 0
      %4157 = vmatpush2.bf16.msra.mxu0 0
      %4158 = vmatprep.mubr.bf16.mxu0 0
      %4159 = vmatmul.mubr.bf16.gmra.mxu0 %v4075
      %v4160 = vpop.f32.mrf.mxu0
      %v4161 = vadd.f32 0.0, %v4160
      %v4162 = vpop.f32.mrf.mxu0
      %v4163 = vpop.f32.mrf.mxu0
      %v4164 = vadd.f32 0.0, %v4163
      %v4165 = vpop.f32.mrf.mxu0
      %4166 = vmatprep.mubr.bf16.mxu0 0
      %4167 = vmatmul.mubr.bf16.gmra.mxu0 %v4078
      %v4168 = vpop.f32.mrf.mxu0
      %v4169 = vadd.f32 0.0, %v4168
      %v4170 = vpop.f32.mrf.mxu0
      %v4171 = vpop.f32.mrf.mxu0
      %v4172 = vadd.f32 0.0, %v4171
      %v4173 = vpop.f32.mrf.mxu0
      %4174 = vmatprep.mubr.bf16.mxu0 0
      %4175 = vmatmul.mubr.bf16.gmra.mxu0 %v4081
      %v4176 = vpop.f32.mrf.mxu0
      %v4177 = vadd.f32 0.0, %v4176
      %v4178 = vpop.f32.mrf.mxu0
      %v4179 = vpop.f32.mrf.mxu0
      %v4180 = vadd.f32 0.0, %v4179
      %v4181 = vpop.f32.mrf.mxu0
      %4182 = vmatprep.mubr.bf16.mxu0 0
      %4183 = vmatmul.mubr.bf16.gmra.mxu0 %v4084
      %v4184 = vpop.f32.mrf.mxu0
      %v4185 = vadd.f32 0.0, %v4184
      %v4186 = vpop.f32.mrf.mxu0
      %v4187 = vpop.f32.mrf.mxu0
      %v4188 = vadd.f32 0.0, %v4187
      %v4189 = vpop.f32.mrf.mxu0
      %4190 = vmatprep.mubr.bf16.mxu0 0
      %4191 = vmatmul.mubr.bf16.gmra.mxu0 %v4087
      %v4192 = vpop.f32.mrf.mxu0
      %v4193 = vadd.f32 0.0, %v4192
      %v4194 = vpop.f32.mrf.mxu0
      %v4195 = vpop.f32.mrf.mxu0
      %v4196 = vadd.f32 0.0, %v4195
      %v4197 = vpop.f32.mrf.mxu0
      %4198 = vmatprep.mubr.bf16.mxu0 0
      %4199 = vmatmul.mubr.bf16.gmra.mxu0 %v4090
      %v4200 = vpop.f32.mrf.mxu0
      %v4201 = vadd.f32 0.0, %v4200
      %v4202 = vpop.f32.mrf.mxu0
      %v4203 = vpop.f32.mrf.mxu0
      %v4204 = vadd.f32 0.0, %v4203
      %v4205 = vpop.f32.mrf.mxu0
      %4206 = vmatprep.mubr.bf16.mxu0 0
      %4207 = vmatmul.mubr.bf16.gmra.mxu0 %v4093
      %v4208 = vpop.f32.mrf.mxu0
      %v4209 = vadd.f32 0.0, %v4208
      %v4210 = vpop.f32.mrf.mxu0
      %v4211 = vpop.f32.mrf.mxu0
      %v4212 = vadd.f32 0.0, %v4211
      %v4213 = vpop.f32.mrf.mxu0
      %4214 = vmatprep.mubr.bf16.mxu0 0
      %4215 = vmatmul.mubr.bf16.gmra.mxu0 %v4096
      %v4216 = vpop.f32.mrf.mxu0
      %v4217 = vadd.f32 0.0, %v4216
      %v4218 = vpop.f32.mrf.mxu0
      %v4219 = vpop.f32.mrf.mxu0
      %v4220 = vadd.f32 0.0, %v4219
      %v4221 = vpop.f32.mrf.mxu0
      %4222 = vmatprep.mubr.bf16.mxu0 0
      %4223 = vmatmul.mubr.bf16.gmra.mxu0 %v4099
      %v4224 = vpop.f32.mrf.mxu0
      %v4225 = vadd.f32 0.0, %v4224
      %v4226 = vpop.f32.mrf.mxu0
      %v4227 = vpop.f32.mrf.mxu0
      %v4228 = vadd.f32 0.0, %v4227
      %v4229 = vpop.f32.mrf.mxu0
      %4230 = vmatprep.mubr.bf16.mxu0 0
      %4231 = vmatmul.mubr.bf16.gmra.mxu0 %v4102
      %v4232 = vpop.f32.mrf.mxu0
      %v4233 = vadd.f32 0.0, %v4232
      %v4234 = vpop.f32.mrf.mxu0
      %v4235 = vpop.f32.mrf.mxu0
      %v4236 = vadd.f32 0.0, %v4235
      %v4237 = vpop.f32.mrf.mxu0
      %4238 = vmatprep.mubr.bf16.mxu0 0
      %4239 = vmatmul.mubr.bf16.gmra.mxu0 %v4105
      %v4240 = vpop.f32.mrf.mxu0
      %v4241 = vadd.f32 0.0, %v4240
      %v4242 = vpop.f32.mrf.mxu0
      %v4243 = vpop.f32.mrf.mxu0
      %v4244 = vadd.f32 0.0, %v4243
      %v4245 = vpop.f32.mrf.mxu0
      %4246 = vmatprep.mubr.bf16.mxu0 0
      %4247 = vmatmul.mubr.bf16.gmra.mxu0 %v4108
      %v4248 = vpop.f32.mrf.mxu0
      %v4249 = vadd.f32 0.0, %v4248
      %v4250 = vpop.f32.mrf.mxu0
      %v4251 = vpop.f32.mrf.mxu0
      %v4252 = vadd.f32 0.0, %v4251
      %v4253 = vpop.f32.mrf.mxu0
      %4254 = vmatprep.mubr.bf16.mxu0 0
      %4255 = vmatmul.mubr.bf16.gmra.mxu0 %v4111
      %v4256 = vpop.f32.mrf.mxu0
      %v4257 = vadd.f32 0.0, %v4256
      %v4258 = vpop.f32.mrf.mxu0
      %v4259 = vpop.f32.mrf.mxu0
      %v4260 = vadd.f32 0.0, %v4259
      %v4261 = vpop.f32.mrf.mxu0
      %4262 = vmatprep.mubr.bf16.mxu0 0
      %4263 = vmatmul.mubr.bf16.gmra.mxu0 %v4114
      %v4264 = vpop.f32.mrf.mxu0
      %v4265 = vadd.f32 0.0, %v4264
      %v4266 = vpop.f32.mrf.mxu0
      %v4267 = vpop.f32.mrf.mxu0
      %v4268 = vadd.f32 0.0, %v4267
      %v4269 = vpop.f32.mrf.mxu0
      %4270 = vmatprep.mubr.bf16.mxu0 0
      %4271 = vmatmul.mubr.bf16.gmra.mxu0 %v4117
      %v4272 = vpop.f32.mrf.mxu0
      %v4273 = vadd.f32 0.0, %v4272
      %v4274 = vpop.f32.mrf.mxu0
      %v4275 = vpop.f32.mrf.mxu0
      %v4276 = vadd.f32 0.0, %v4275
      %v4277 = vpop.f32.mrf.mxu0
      %4278 = vmatprep.mubr.bf16.mxu0 0
      %4279 = vmatmul.mubr.bf16.gmra.mxu0 %v4120
      %v4280 = vpop.f32.mrf.mxu0
      %v4281 = vadd.f32 0.0, %v4280
      %v4282 = vpop.f32.mrf.mxu0
      %v4283 = vpop.f32.mrf.mxu0
      %v4284 = vadd.f32 0.0, %v4283
      %v4285 = vpop.f32.mrf.mxu0
      %4286 = vdwg.mxu0
      %v4287 = vld [vmem:[%s2] sm:$0x1]
      %v4289 = vlaneseq
      %v4290 = vshrl.u32 %v4289, 7
      %v4291 = vsub.s32 0, %v4290
      %v4292 = vrot.slane %v4287, %v4291
      %v4294 = vmul.f32 %v4161, %v4292
      %v4295 = vmul.f32 %v4164, %v4292
      %v4296 = vmul.f32 %v4169, %v4292
      %v4297 = vmul.f32 %v4172, %v4292
      %v4298 = vmul.f32 %v4177, %v4292
      %v4299 = vmul.f32 %v4180, %v4292
      %v4300 = vmul.f32 %v4185, %v4292
      %v4301 = vmul.f32 %v4188, %v4292
      %v4302 = vmul.f32 %v4193, %v4292
      %v4303 = vmul.f32 %v4196, %v4292
      %v4304 = vmul.f32 %v4201, %v4292
      %v4305 = vmul.f32 %v4204, %v4292
      %v4306 = vmul.f32 %v4209, %v4292
      %v4307 = vmul.f32 %v4212, %v4292
      %v4308 = vmul.f32 %v4217, %v4292
      %v4309 = vmul.f32 %v4220, %v4292
      %v4310 = vmul.f32 %v4225, %v4292
      %v4311 = vmul.f32 %v4228, %v4292
      %v4312 = vmul.f32 %v4233, %v4292
      %v4313 = vmul.f32 %v4236, %v4292
      %v4314 = vmul.f32 %v4241, %v4292
      %v4315 = vmul.f32 %v4244, %v4292
      %v4316 = vmul.f32 %v4249, %v4292
      %v4317 = vmul.f32 %v4252, %v4292
      %v4318 = vmul.f32 %v4257, %v4292
      %v4319 = vmul.f32 %v4260, %v4292
      %v4320 = vmul.f32 %v4265, %v4292
      %v4321 = vmul.f32 %v4268, %v4292
      %v4322 = vmul.f32 %v4273, %v4292
      %v4323 = vmul.f32 %v4276, %v4292
      %v4324 = vmul.f32 %v4281, %v4292
      %v4325 = vmul.f32 %v4284, %v4292
      %v4326 = vld [vmem:[%s3] sm:$0x1]
      %v4328 = vlaneseq
      %v4329 = vshrl.u32 %v4328, 7
      %v4330 = vsub.s32 0, %v4329
      %v4331 = vrot.slane %v4326, %v4330
      %v4333 = vadd.f32 %v4294, %v4331
      %v4334 = vadd.f32 %v4295, %v4331
      %v4335 = vadd.f32 %v4296, %v4331
      %v4336 = vadd.f32 %v4297, %v4331
      %v4337 = vadd.f32 %v4298, %v4331
      %v4338 = vadd.f32 %v4299, %v4331
      %v4339 = vadd.f32 %v4300, %v4331
      %v4340 = vadd.f32 %v4301, %v4331
      %v4341 = vadd.f32 %v4302, %v4331
      %v4342 = vadd.f32 %v4303, %v4331
      %v4343 = vadd.f32 %v4304, %v4331
      %v4344 = vadd.f32 %v4305, %v4331
      %v4345 = vadd.f32 %v4306, %v4331
      %v4346 = vadd.f32 %v4307, %v4331
      %v4347 = vadd.f32 %v4308, %v4331
      %v4348 = vadd.f32 %v4309, %v4331
      %v4349 = vadd.f32 %v4310, %v4331
      %v4350 = vadd.f32 %v4311, %v4331
      %v4351 = vadd.f32 %v4312, %v4331
      %v4352 = vadd.f32 %v4313, %v4331
      %v4353 = vadd.f32 %v4314, %v4331
      %v4354 = vadd.f32 %v4315, %v4331
      %v4355 = vadd.f32 %v4316, %v4331
      %v4356 = vadd.f32 %v4317, %v4331
      %v4357 = vadd.f32 %v4318, %v4331
      %v4358 = vadd.f32 %v4319, %v4331
      %v4359 = vadd.f32 %v4320, %v4331
      %v4360 = vadd.f32 %v4321, %v4331
      %v4361 = vadd.f32 %v4322, %v4331
      %v4362 = vadd.f32 %v4323, %v4331
      %v4363 = vadd.f32 %v4324, %v4331
      %v4364 = vadd.f32 %v4325, %v4331
      %v4365 = vlaneseq
      %v4366 = vand.u32 %v4365, 127
      %vm4367 = vcmp.lt.s32.totalorder %v4366, 8
      %v4368 = vmax.f32 %v4333, 0.0
      %v4369 = vmax.f32 %v4334, 0.0
      %v4370 = vmax.f32 %v4335, 0.0
      %v4371 = vmax.f32 %v4336, 0.0
      %v4372 = vmax.f32 %v4337, 0.0
      %v4373 = vmax.f32 %v4338, 0.0
      %v4374 = vmax.f32 %v4339, 0.0
      %v4375 = vmax.f32 %v4340, 0.0
      %v4376 = vmax.f32 %v4341, 0.0
      %v4377 = vmax.f32 %v4342, 0.0
      %v4378 = vmax.f32 %v4343, 0.0
      %v4379 = vmax.f32 %v4344, 0.0
      %v4380 = vmax.f32 %v4345, 0.0
      %v4381 = vmax.f32 %v4346, 0.0
      %v4382 = vmax.f32 %v4347, 0.0
      %v4383 = vmax.f32 %v4348, 0.0
      %v4384 = vmax.f32 %v4349, 0.0
      %v4385 = vmax.f32 %v4350, 0.0
      %v4386 = vmax.f32 %v4351, 0.0
      %v4387 = vmax.f32 %v4352, 0.0
      %v4388 = vmax.f32 %v4353, 0.0
      %v4389 = vmax.f32 %v4354, 0.0
      %v4390 = vmax.f32 %v4355, 0.0
      %v4391 = vmax.f32 %v4356, 0.0
      %v4392 = vmax.f32 %v4357, 0.0
      %v4393 = vmax.f32 %v4358, 0.0
      %v4394 = vmax.f32 %v4359, 0.0
      %v4395 = vmax.f32 %v4360, 0.0
      %v4396 = vmax.f32 %v4361, 0.0
      %v4397 = vmax.f32 %v4362, 0.0
      %v4398 = vmax.f32 %v4363, 0.0
      %v4399 = vmax.f32 %v4364, 0.0
      %v4400 = vsel %vm4367, %v4368, %v4333
      %v4401 = vsel %vm4367, %v4369, %v4334
      %v4402 = vsel %vm4367, %v4370, %v4335
      %v4403 = vsel %vm4367, %v4371, %v4336
      %v4404 = vsel %vm4367, %v4372, %v4337
      %v4405 = vsel %vm4367, %v4373, %v4338
      %v4406 = vsel %vm4367, %v4374, %v4339
      %v4407 = vsel %vm4367, %v4375, %v4340
      %v4408 = vsel %vm4367, %v4376, %v4341
      %v4409 = vsel %vm4367, %v4377, %v4342
      %v4410 = vsel %vm4367, %v4378, %v4343
      %v4411 = vsel %vm4367, %v4379, %v4344
      %v4412 = vsel %vm4367, %v4380, %v4345
      %v4413 = vsel %vm4367, %v4381, %v4346
      %v4414 = vsel %vm4367, %v4382, %v4347
      %v4415 = vsel %vm4367, %v4383, %v4348
      %v4416 = vsel %vm4367, %v4384, %v4349
      %v4417 = vsel %vm4367, %v4385, %v4350
      %v4418 = vsel %vm4367, %v4386, %v4351
      %v4419 = vsel %vm4367, %v4387, %v4352
      %v4420 = vsel %vm4367, %v4388, %v4353
      %v4421 = vsel %vm4367, %v4389, %v4354
      %v4422 = vsel %vm4367, %v4390, %v4355
      %v4423 = vsel %vm4367, %v4391, %v4356
      %v4424 = vsel %vm4367, %v4392, %v4357
      %v4425 = vsel %vm4367, %v4393, %v4358
      %v4426 = vsel %vm4367, %v4394, %v4359
      %v4427 = vsel %vm4367, %v4395, %v4360
      %v4428 = vsel %vm4367, %v4396, %v4361
      %v4429 = vsel %vm4367, %v4397, %v4362
      %v4430 = vsel %vm4367, %v4398, %v4363
      %v4431 = vsel %vm4367, %v4399, %v4364
      %v4432 = vpack.c.bf16 %v4401, %v4400
      %v4433 = vpack.c.bf16 %v4403, %v4402
      %v4434 = vpack.c.bf16 %v4405, %v4404
      %v4435 = vpack.c.bf16 %v4407, %v4406
      %v4436 = vpack.c.bf16 %v4409, %v4408
      %v4437 = vpack.c.bf16 %v4411, %v4410
      %v4438 = vpack.c.bf16 %v4413, %v4412
      %v4439 = vpack.c.bf16 %v4415, %v4414
      %v4440 = vpack.c.bf16 %v4417, %v4416
      %v4441 = vpack.c.bf16 %v4419, %v4418
      %v4442 = vpack.c.bf16 %v4421, %v4420
      %v4443 = vpack.c.bf16 %v4423, %v4422
      %v4444 = vpack.c.bf16 %v4425, %v4424
      %v4445 = vpack.c.bf16 %v4427, %v4426
      %v4446 = vpack.c.bf16 %v4429, %v4428
      %v4447 = vpack.c.bf16 %v4431, %v4430
      %v4464 = vunpack.c.l.b16 %v4432
      %v4465 = vunpack.c.h.b16 %v4432
      %v4466 = vunpack.c.l.b16 %v4433
      %v4467 = vunpack.c.h.b16 %v4433
      %v4468 = vunpack.c.l.b16 %v4434
      %v4469 = vunpack.c.h.b16 %v4434
      %v4470 = vunpack.c.l.b16 %v4435
      %v4471 = vunpack.c.h.b16 %v4435
      %v4472 = vunpack.c.l.b16 %v4436
      %v4473 = vunpack.c.h.b16 %v4436
      %v4474 = vunpack.c.l.b16 %v4437
      %v4475 = vunpack.c.h.b16 %v4437
      %v4476 = vunpack.c.l.b16 %v4438
      %v4477 = vunpack.c.h.b16 %v4438
      %v4478 = vunpack.c.l.b16 %v4439
      %v4479 = vunpack.c.h.b16 %v4439
      %v4480 = vunpack.c.l.b16 %v4440
      %v4481 = vunpack.c.h.b16 %v4440
      %v4482 = vunpack.c.l.b16 %v4441
      %v4483 = vunpack.c.h.b16 %v4441
      %v4484 = vunpack.c.l.b16 %v4442
      %v4485 = vunpack.c.h.b16 %v4442
      %v4486 = vunpack.c.l.b16 %v4443
      %v4487 = vunpack.c.h.b16 %v4443
      %v4488 = vunpack.c.l.b16 %v4444
      %v4489 = vunpack.c.h.b16 %v4444
      %v4490 = vunpack.c.l.b16 %v4445
      %v4491 = vunpack.c.h.b16 %v4445
      %v4492 = vunpack.c.l.b16 %v4446
      %v4493 = vunpack.c.h.b16 %v4446
      %v4494 = vunpack.c.l.b16 %v4447
      %v4495 = vunpack.c.h.b16 %v4447
      %v4496 = vpack.c.b16 %v4464, %v4464
      %v4497 = vpack.c.b16 %v4465, %v4465
      %v4498 = vpack.c.b16 %v4466, %v4466
      %v4499 = vpack.c.b16 %v4467, %v4467
      %v4500 = vpack.c.b16 %v4468, %v4468
      %v4501 = vpack.c.b16 %v4469, %v4469
      %v4502 = vpack.c.b16 %v4470, %v4470
      %v4503 = vpack.c.b16 %v4471, %v4471
      %v4504 = vpack.c.b16 %v4472, %v4472
      %v4505 = vpack.c.b16 %v4473, %v4473
      %v4506 = vpack.c.b16 %v4474, %v4474
      %v4507 = vpack.c.b16 %v4475, %v4475
      %v4508 = vpack.c.b16 %v4476, %v4476
      %v4509 = vpack.c.b16 %v4477, %v4477
      %v4510 = vpack.c.b16 %v4478, %v4478
      %v4511 = vpack.c.b16 %v4479, %v4479
      %v4512 = vpack.c.b16 %v4480, %v4480
      %v4513 = vpack.c.b16 %v4481, %v4481
      %v4514 = vpack.c.b16 %v4482, %v4482
      %v4515 = vpack.c.b16 %v4483, %v4483
      %v4516 = vpack.c.b16 %v4484, %v4484
      %v4517 = vpack.c.b16 %v4485, %v4485
      %v4518 = vpack.c.b16 %v4486, %v4486
      %v4519 = vpack.c.b16 %v4487, %v4487
      %v4520 = vpack.c.b16 %v4488, %v4488
      %v4521 = vpack.c.b16 %v4489, %v4489
      %v4522 = vpack.c.b16 %v4490, %v4490
      %v4523 = vpack.c.b16 %v4491, %v4491
      %v4524 = vpack.c.b16 %v4492, %v4492
      %v4525 = vpack.c.b16 %v4493, %v4493
      %v4526 = vpack.c.b16 %v4494, %v4494
      %v4527 = vpack.c.b16 %v4495, %v4495
      %vm4560 = vcmask 125952
      %4561 = vst.msk [vmem:[%s197] sm:$0xf] %vm4560, %v4496
      %4562 = vst.msk [vmem:[%s197 + $0x4] sm:$0xf] %vm4560, %v4497
      %4563 = vst.msk [vmem:[%s197 + $0x8] sm:$0xf] %vm4560, %v4498
      %4564 = vst.msk [vmem:[%s197 + $0xc] sm:$0xf] %vm4560, %v4499
      %4565 = vst.msk [vmem:[%s197 + $0x10] sm:$0xf] %vm4560, %v4500
      %4566 = vst.msk [vmem:[%s197 + $0x14] sm:$0xf] %vm4560, %v4501
      %4567 = vst.msk [vmem:[%s197 + $0x18] sm:$0xf] %vm4560, %v4502
      %4568 = vst.msk [vmem:[%s197 + $0x1c] sm:$0xf] %vm4560, %v4503
      %4569 = vst.msk [vmem:[%s197 + $0x20] sm:$0xf] %vm4560, %v4504
      %4570 = vst.msk [vmem:[%s197 + $0x24] sm:$0xf] %vm4560, %v4505
      %4571 = vst.msk [vmem:[%s197 + $0x28] sm:$0xf] %vm4560, %v4506
      %4572 = vst.msk [vmem:[%s197 + $0x2c] sm:$0xf] %vm4560, %v4507
      %4573 = vst.msk [vmem:[%s197 + $0x30] sm:$0xf] %vm4560, %v4508
      %4574 = vst.msk [vmem:[%s197 + $0x34] sm:$0xf] %vm4560, %v4509
      %4575 = vst.msk [vmem:[%s197 + $0x38] sm:$0xf] %vm4560, %v4510
      %4576 = vst.msk [vmem:[%s197 + $0x3c] sm:$0xf] %vm4560, %v4511
      %4577 = vst.msk [vmem:[%s197 + $0x40] sm:$0xf] %vm4560, %v4512
      %4578 = vst.msk [vmem:[%s197 + $0x44] sm:$0xf] %vm4560, %v4513
      %4579 = vst.msk [vmem:[%s197 + $0x48] sm:$0xf] %vm4560, %v4514
      %4580 = vst.msk [vmem:[%s197 + $0x4c] sm:$0xf] %vm4560, %v4515
      %4581 = vst.msk [vmem:[%s197 + $0x50] sm:$0xf] %vm4560, %v4516
      %4582 = vst.msk [vmem:[%s197 + $0x54] sm:$0xf] %vm4560, %v4517
      %4583 = vst.msk [vmem:[%s197 + $0x58] sm:$0xf] %vm4560, %v4518
      %4584 = vst.msk [vmem:[%s197 + $0x5c] sm:$0xf] %vm4560, %v4519
      %4585 = vst.msk [vmem:[%s197 + $0x60] sm:$0xf] %vm4560, %v4520
      %4586 = vst.msk [vmem:[%s197 + $0x64] sm:$0xf] %vm4560, %v4521
      %4587 = vst.msk [vmem:[%s197 + $0x68] sm:$0xf] %vm4560, %v4522
      %4588 = vst.msk [vmem:[%s197 + $0x6c] sm:$0xf] %vm4560, %v4523
      %4589 = vst.msk [vmem:[%s197 + $0x70] sm:$0xf] %vm4560, %v4524
      %4590 = vst.msk [vmem:[%s197 + $0x74] sm:$0xf] %vm4560, %v4525
      %4591 = vst.msk [vmem:[%s197 + $0x78] sm:$0xf] %vm4560, %v4526
      %4592 = vst.msk [vmem:[%s197 + $0x7c] sm:$0xf] %vm4560, %v4527
      %p4593 = scmp.lt.s32.totalorder %s15, 1
      %s4594 = scalar_select %p4593, %s15, 1
      %s4595 = smul.addr %s4594, 32
      %s4596 = smul.addr %s4595, 4
      %s4597 = scalar_lea.vmem %s4, %s4596
      // Predicated region
      $region37: #{residual_basic_forward.2} parent=35 // pred_check
        %p4598 = pneg %p122
      $region38: #{residual_basic_forward.2} parent=35 // pred_check_branch
        %4600 = sbr.rel (%p4598) target = $region40
      $region39: #{residual_basic_forward.2} parent=35 // pred_region
        _
      $region40: #{residual_basic_forward.2} parent=35 // pred_fallthru
        _
    $region36: #{residual_basic_forward.2} parent=5 // pred_fallthru
      _
    %p4601 = scmp.le.s32.totalorder 2, %s10
    // Predicated region
    $region41: #{residual_basic_forward.2} parent=5 // pred_check
      %p4602 = pneg %p4601
    $region42: #{residual_basic_forward.2} parent=5 // pred_check_branch
      %4604 = sbr.rel (%p4602) target = $region44
    $region43: #{residual_basic_forward.2} parent=5 // pred_region
      %s4605 = ssub.s32 %s10, 2
      // Predicated region
      $region45: #{residual_basic_forward.2} parent=43 // pred_check
        %p4606 = pneg %p128
      $region46: #{residual_basic_forward.2} parent=43 // pred_check_branch
        %4608 = sbr.rel (%p4606) target = $region48
      $region47: #{residual_basic_forward.2} parent=43 // pred_region
        %p4609 = scmp.lt.s32.totalorder %s16, 1
        %s4610 = scalar_select %p4609, %s16, 1
        %s4611 = smul.addr %s4610, 32
        %s4612 = smul.addr %s4611, 4
        %s4613 = scalar_lea.vmem %s4, %s4612
      $region48: #{residual_basic_forward.2} parent=43 // pred_fallthru
        _
    $region44: #{residual_basic_forward.2} parent=5 // pred_fallthru
      _
  $region6: #{residual_basic_forward.2} parent=0 // loop_footer
    %s14 = sadd.s32 1, %s10
  $region7: #{residual_basic_forward.2} parent=0 // loop_footer_branch
    %9 = sbr.rel target = $region3
  $region8: #{residual_basic_forward.2} parent=0 // loop_exit
    _

</llo_original>
